<compile_context>
chip_gen: v5e
topology: v5e:2x2
jax: 0.10.0
libtpu: 0.0.40
codegen_flags: <defaults>
</compile_context>

<pallas_src>
import functools

import jax
import jax.numpy as jnp
from jax.experimental import pallas as pl
from jax.experimental.pallas import tpu as pltpu


def _pad_tb(kh):
    """ZeroPad2d top/bottom amounts from the module; pt + pb == kh - 1 always."""
    if kh % 2 == 0:
        return kh // 2, kh // 2 - 1
    return (kh - 1) // 2, (kh - 1) // 2


# ----------------------------------------------------------------------------
# Pallas kernel: ALL towers, whole batch, single invocation (no grid).
# ----------------------------------------------------------------------------
def _fused_kernel(xpe_ref, *refs, kernel_hs, kw, ph, ch, compute_dtype):
    """
    xpe_ref : (N, H, Wp+2)   f32  circularly pre-padded input + 1 extra zero col/side
                                  (the extra cols thread the depthwise zero-pad through)
    refs    : per-tower w1 refs (kh*kw+1, ch)  -- im2col conv1 weight, BN1 scale folded,
                                                  last row = folded conv-bias + BN1 shift
              wmask_ref (W1+2, ch*T) f32       -- zeros on the 2 border cols, ones elsewhere
              wsep_ref  (9*C+1, 2*C) c.d.      -- fused depthwise*pointwise*BN2 weight,
                                                  last row = BN2 shift (ones-column trick)
              o_ref     (N, Hf, Wf*2*C) f32    -- lane-dense output slab (single store)
    """
    T = len(kernel_hs)
    w1_refs = refs[:T]
    wmask_ref, wsep_ref, o_ref = refs[T], refs[T + 1], refs[T + 2]

    N, H, Wpe = xpe_ref.shape
    W1e = Wpe - kw + 1          # = true W1 + 2 (border cols carry the depthwise zero-pad)
    W1 = W1e - 2
    C = T * ch
    C2 = wsep_ref.shape[1]      # = 2 * C

    x = xpe_ref[...]                                         # (N, H, Wp+2) f32

    # --- per tower: Conv2d_Circular8 (+bias) + BN1 as ONE im2col matmul; ZeroPad2d
    #     rows restore every tower to H rows; concat towers on the channel (lane) dim.
    feats = []
    for t, kh in enumerate(kernel_hs):
        H1 = H - kh + 1
        KK = kh * kw + 1
        taps = [x[:, a:a + H1, b:b + W1e] for a in range(kh) for b in range(kw)]
        taps.append(jnp.ones_like(taps[0]))   # ones column -> folded bias / BN1 shift
        patches = jnp.stack(taps, axis=-1).reshape(N * H1, W1e, KK).astype(compute_dtype)
        y = jax.lax.dot_general(
            patches, w1_refs[t][...],
            dimension_numbers=(((2,), (0,)), ((), ())),
            preferred_element_type=jnp.float32)              # (N*H1, W1e, ch), f32 acc
        y = y.reshape(N, H1, W1e, ch)
        pt, pb = _pad_tb(kh)                                 # pt + pb == kh - 1
        pads = []
        if pt > 0:
            pads.append(jnp.zeros((N, pt, W1e, ch), jnp.float32))
        pads.append(y)
        if pb > 0:
            pads.append(jnp.zeros((N, pb, W1e, ch), jnp.float32))
        feats.append(jnp.concatenate(pads, axis=1) if len(pads) > 1 else y)
    y = feats[0] if T == 1 else jnp.concatenate(feats, axis=-1)      # (N, H, W1e, C)

    # --- ReLU + pool_layer = MaxPool2d((ph, 1)) -------------------------------
    y = jnp.maximum(y, 0.0)
    H2 = H // ph
    if ph > 1:
        y = jnp.max(y[:, :H2 * ph].reshape(N, H2, ph, W1e, C), axis=2)
    # --- Dropout2d(0.2): identity in eval mode --------------------------------

    # zero the 2 border columns: they exist only to become the depthwise zero-pad
    y = y * wmask_ref[...]

    # --- SeparableConv2d (3x3 depthwise + 1x1 pointwise) + BN2 + ReLU:
    #     ONE fused im2col matmul, register-resident (no VMEM scratch / RMW loop).
    zrow = jnp.zeros((N, 1, W1e, C), jnp.float32)
    yH = jnp.concatenate([zrow, y, zrow], axis=1)                    # (N, H2+2, W1e, C)
    taps2 = [yH[:, a:a + H2, b:b + W1, :] for a in range(3) for b in range(3)]
    taps2.append(jnp.ones((N, H2, W1, 1), jnp.float32))  # ones -> folded BN2 shift
    patches2 = jnp.concatenate(taps2, axis=-1)                       # (N, H2, W1, 9C+1)
    patches2 = patches2.reshape(N * H2, W1, 9 * C + 1).astype(compute_dtype)
    y2 = jax.lax.dot_general(
        patches2, wsep_ref[...],
        dimension_numbers=(((2,), (0,)), ((), ())),
        preferred_element_type=jnp.float32)                          # (N*H2, W1, C2)
    y2 = jnp.maximum(y2, 0.0).reshape(N, H2, W1, C2)

    # --- final MaxPool2d(2): H pool + W pool in registers, ONE lane-dense store
    Hf, Wf = H2 // 2, W1 // 2
    y2 = jnp.max(y2[:, :Hf * 2].reshape(N, Hf, 2, W1, C2), axis=2)   # (N, Hf, W1, C2)
    cols = [jnp.maximum(y2[:, :, 2 * j, :], y2[:, :, 2 * j + 1, :]) for j in range(Wf)]
    o_ref[...] = jnp.concatenate(cols, axis=-1)                      # (N, Hf, Wf*C2)


# ----------------------------------------------------------------------------
# Wrapper: weight folding + circular pre-pad are layout plumbing, not compute.
# ----------------------------------------------------------------------------
def multikernel_conv2d_grid_forward(x, towers, *, kernels, ch, ph, eps=1e-5,
                                    compute_dtype=jnp.float32):
    """MultiKernelConv2D_grid.forward (eval mode). x: (N, 1, H, W) NCHW."""
    N, cin, H, W = x.shape
    assert cin == 1 and W >= 8
    kws = sorted({int(kw_) for _, kw_ in kernels})
    assert len(kws) == 1, "fused kernel assumes all towers share the kernel width"
    kw = kws[0]
    kernel_hs = tuple(int(kh) for kh, _ in kernels)
    T = len(kernels)
    C, C2 = T * ch, 2 * T * ch

    # Conv2d_Circular8: circular width-pad of the first 8 "electrode" columns,
    # plus ONE extra zero column per side (becomes the depthwise zero-pad in W).
    pwid = round(kw / 2)          # module: pad_LRTB = (round(kw/2), round(kw/2), 0, 0)
    xs = x[:, 0].astype(jnp.float32)                                    # (N, H, W)
    circ, other = xs[..., :8], xs[..., 8:]
    circ = jnp.concatenate([circ[..., 8 - pwid:], circ, circ[..., :pwid]], axis=-1)
    xp = jnp.concatenate([circ, other], axis=-1)                        # (N, H, W+2p)
    zc = jnp.zeros((N, H, 1), jnp.float32)
    xpe = jnp.concatenate([zc, xp, zc], axis=-1)                        # (N, H, W+2p+2)

    Wp = W + 2 * pwid
    W1 = Wp - kw + 1
    W1e = W1 + 2
    H2 = H // ph
    Hf, Wf = H2 // 2, W1 // 2

    # Fold BN1 (+ conv bias) into the im2col conv1 weight (per tower).
    w1_list, wd_cols, wp_cols, b2_cols = [], [], [], []
    for (kh, _), tp in zip(kernels, towers):
        s1 = tp['bn1_g'] / jnp.sqrt(tp['bn1_v'] + eps)
        t1 = (tp['conv1_b'] - tp['bn1_m']) * s1 + tp['bn1_b']
        w1m = tp['conv1_w'].reshape(ch, kh * kw).T * s1[None, :]
        w1_list.append(jnp.concatenate([w1m, t1[None, :]], axis=0)      # (kh*kw+1, ch)
                       .astype(compute_dtype))
        wd_cols.append(tp['dw_w'].reshape(ch, 9).T)                     # (9, ch)
        s2 = tp['bn2_g'] / jnp.sqrt(tp['bn2_v'] + eps)
        wp_cols.append(tp['pw_w'].reshape(2 * ch, ch).T * s2[None, :])  # (ch, 2ch)
        b2_cols.append(tp['bn2_b'] - tp['bn2_m'] * s2)                  # (2ch,)

    # Fused depthwise*pointwise*BN2 weight, block-diagonal over towers:
    #   W_sep[(tap,c), o] = wd[tap, c] * (pw[o, c] * s2[o]);  last row = BN2 shift.
    wd_all = jnp.concatenate(wd_cols, axis=-1)                          # (9, C)
    wp_all = jnp.zeros((C, C2), jnp.float32)
    for t in range(T):
        wp_all = wp_all.at[t * ch:(t + 1) * ch,
                           t * 2 * ch:(t + 1) * 2 * ch].set(wp_cols[t])
    b2_all = jnp.concatenate(b2_cols)                                   # (C2,)
    wsep = (wd_all[:, :, None] * wp_all[None, :, :]).reshape(9 * C, C2)
    wsep = jnp.concatenate([wsep, b2_all[None, :]], axis=0).astype(compute_dtype)

    # Border-column mask (the 2 extra conv1 columns are only the depthwise zero-pad).
    wmask = jnp.ones((W1e, C), jnp.float32).at[0].set(0.0).at[W1e - 1].set(0.0)

    kern = functools.partial(_fused_kernel, kernel_hs=kernel_hs, kw=kw, ph=ph, ch=ch,
                             compute_dtype=compute_dtype)
    out = pl.pallas_call(
        kern,
        out_shape=jax.ShapeDtypeStruct((N, Hf, Wf * C2), jnp.float32),
        in_specs=[pl.BlockSpec(memory_space=pltpu.MemorySpace.VMEM)] * (T + 3),
        out_specs=pl.BlockSpec(memory_space=pltpu.MemorySpace.VMEM),
    )(xpe, *w1_list, wmask, wsep)

    # lane-dense slab -> NHWC -> NCHW (wrapper-side layout plumbing)
    return jnp.transpose(out.reshape(N, Hf, Wf, C2), (0, 3, 1, 2))


# ----------------------------------------------------------------------------
# Pure-JAX (XLA) reference mirroring the PyTorch module in eval mode.
# ----------------------------------------------------------------------------
def _reference_forward(x, towers, *, kernels, ch, ph, eps=1e-5):
    hp = jax.lax.Precision.HIGHEST
    outs = []
    for (kh, kw), tp in zip(kernels, towers):
        pwid = round(kw / 2)
        circ, other = x[..., :8], x[..., 8:]
        circ = jnp.concatenate([circ[..., 8 - pwid:], circ, circ[..., :pwid]], axis=-1)
        y = jnp.concatenate([circ, other], axis=-1)                  # circular width pad
        y = jax.lax.conv_general_dilated(
            y, tp['conv1_w'], (1, 1), 'VALID',
            dimension_numbers=('NCHW', 'OIHW', 'NCHW'), precision=hp)
        y = y + tp['conv1_b'][None, :, None, None]
        y = ((y - tp['bn1_m'][None, :, None, None])
             / jnp.sqrt(tp['bn1_v'][None, :, None, None] + eps)
             * tp['bn1_g'][None, :, None, None] + tp['bn1_b'][None, :, None, None])
        pt, pb = _pad_tb(kh)
        y = jnp.pad(y, ((0, 0), (0, 0), (pt, pb), (0, 0)))           # ZeroPad2d
        y = jnp.maximum(y, 0.0)                                      # ReLU
        y = jax.lax.reduce_window(y, -jnp.inf, jax.lax.max,
                                  (1, 1, ph, 1), (1, 1, ph, 1), 'VALID')
        # Dropout2d(0.2): identity in eval mode.
        y = jax.lax.conv_general_dilated(                            # depthwise 3x3
            y, tp['dw_w'], (1, 1), ((1, 1), (1, 1)),
            dimension_numbers=('NCHW', 'OIHW', 'NCHW'),
            feature_group_count=ch, precision=hp)
        y = jax.lax.conv_general_dilated(                            # pointwise 1x1
            y, tp['pw_w'], (1, 1), 'VALID',
            dimension_numbers=('NCHW', 'OIHW', 'NCHW'), precision=hp)
        y = ((y - tp['bn2_m'][None, :, None, None])
             / jnp.sqrt(tp['bn2_v'][None, :, None, None] + eps)
             * tp['bn2_g'][None, :, None, None] + tp['bn2_b'][None, :, None, None])
        y = jnp.maximum(y, 0.0)
        y = jax.lax.reduce_window(y, -jnp.inf, jax.lax.max,
                                  (1, 1, 2, 2), (1, 1, 2, 2), 'VALID')
        outs.append(y)
    return jnp.concatenate(outs, axis=1)


# ----------------------------------------------------------------------------
# Deterministic parameter construction (PyTorch-like init, eval-mode BN stats).
# ----------------------------------------------------------------------------
def _make_tower_params(key, kh, kw, ch):
    ks = jax.random.split(key, 12)
    f32 = jnp.float32
    b1 = 1.0 / float(kh * kw) ** 0.5          # conv1 kaiming-uniform bound, fan_in = kh*kw
    bd = 1.0 / 3.0                            # depthwise fan_in = 1*3*3
    bp = 1.0 / float(ch) ** 0.5               # pointwise fan_in = ch
    return dict(
        conv1_w=jax.random.uniform(ks[0], (ch, 1, kh, kw), minval=-b1, maxval=b1, dtype=f32),
        conv1_b=jax.random.uniform(ks[1], (ch,), minval=-b1, maxval=b1, dtype=f32),
        bn1_g=1.0 + 0.1 * jax.random.normal(ks[2], (ch,), dtype=f32),
        bn1_b=0.1 * jax.random.normal(ks[3], (ch,), dtype=f32),
        bn1_m=0.1 * jax.random.normal(ks[4], (ch,), dtype=f32),
        bn1_v=1.0 + 0.1 * jax.random.uniform(ks[5], (ch,), dtype=f32),
        dw_w=jax.random.uniform(ks[6], (ch, 1, 3, 3), minval=-bd, maxval=bd, dtype=f32),
        pw_w=jax.random.uniform(ks[7], (2 * ch, ch, 1, 1), minval=-bp, maxval=bp, dtype=f32),
        bn2_g=1.0 + 0.1 * jax.random.normal(ks[8], (2 * ch,), dtype=f32),
        bn2_b=0.1 * jax.random.normal(ks[9], (2 * ch,), dtype=f32),
        bn2_m=0.1 * jax.random.normal(ks[10], (2 * ch,), dtype=f32),
        bn2_v=1.0 + 0.1 * jax.random.uniform(ks[11], (2 * ch,), dtype=f32),
    )


if __name__ == "__main__":
    # Config mirroring the PyTorch module's dict:
    #   act_func=nn.ReLU(), N_multik=4, Kernel_multi_dim=[[3,3],[5,3]],
    #   Pool_Type=nn.MaxPool2d, wnd_len=40 -> pool_layer = MaxPool2d((2, 1)).
    N, H, W = 2, 16, 16
    CH = 4
    KERNELS = ((3, 3), (5, 3))   # same kernel width (required for the channel concat)
    WND_LEN = 40
    PH = int(WND_LEN / 20)

    key = jax.random.PRNGKey(0)
    kx, kp = jax.random.split(key)
    x = jax.random.normal(kx, (N, 1, H, W), dtype=jnp.float32)
    towers = tuple(_make_tower_params(k, kh, kw, CH)
                   for k, (kh, kw) in zip(jax.random.split(kp, len(KERNELS)), KERNELS))

    ref = jax.block_until_ready(
        _reference_forward(x, towers, kernels=KERNELS, ch=CH, ph=PH))

    # f32 (default) path: tight correctness check of the fused kernel.
    out_f32 = jax.block_until_ready(
        multikernel_conv2d_grid_forward(x, towers, kernels=KERNELS, ch=CH, ph=PH,
                                        compute_dtype=jnp.float32))
    KW0 = KERNELS[0][1]
    expected = (N, len(KERNELS) * 2 * CH, (H // PH) // 2,
                (W + 2 * round(KW0 / 2) - KW0 + 1) // 2)
    assert out_f32.shape == ref.shape == expected, (out_f32.shape, ref.shape, expected)
    if not jnp.allclose(out_f32, ref, atol=1e-3, rtol=1e-3):
        raise AssertionError("Pallas MultiKernelConv2D_grid (f32) mismatch vs JAX reference")

    # Optional bf16 matmul-operand path (v6e/v7x); tolerance loosened because the folded
    # bias / BN shifts and the fused depthwise*pointwise products are rounded to bf16.
    out_bf16 = jax.block_until_ready(
        multikernel_conv2d_grid_forward(x, towers, kernels=KERNELS, ch=CH, ph=PH,
                                        compute_dtype=jnp.bfloat16))
    if not jnp.allclose(out_bf16, ref, atol=1e-1, rtol=1e-1):
        raise AssertionError("Pallas MultiKernelConv2D_grid (bf16) mismatch vs JAX reference")

    print("KERNEL_OK")
</pallas_src>

<mosaic_0001>
module attributes {stable_mosaic.version = 11 : i64} {
  func.func @_fused_kernel(%arg0: memref<2x16x22xf32, #tpu.memory_space<vmem>>, %arg1: memref<10x4xf32, #tpu.memory_space<vmem>>, %arg2: memref<16x4xf32, #tpu.memory_space<vmem>>, %arg3: memref<20x8xf32, #tpu.memory_space<vmem>>, %arg4: memref<73x16xf32, #tpu.memory_space<vmem>>, %arg5: memref<2x4x144xf32, #tpu.memory_space<vmem>>) attributes {dimension_semantics = [], scalar_prefetch = 0 : i64, scratch_operands = 0 : i64, tpu.core_type = #tpu.core_type<tc>} {
    %c0 = arith.constant 0 : index
    %c0_0 = arith.constant 0 : index
    %c0_1 = arith.constant 0 : index
    %0 = vector.load %arg0[%c0, %c0_0, %c0_1] : memref<2x16x22xf32, #tpu.memory_space<vmem>>, vector<2x16x22xf32>
    %1 = vector.extract_strided_slice %0 {offsets = [0, 0, 0], sizes = [2, 14, 20], strides = [1, 1, 1]} : vector<2x16x22xf32> to vector<2x14x20xf32>
    %2 = vector.extract_strided_slice %0 {offsets = [0, 0, 1], sizes = [2, 14, 20], strides = [1, 1, 1]} : vector<2x16x22xf32> to vector<2x14x20xf32>
    %3 = vector.extract_strided_slice %0 {offsets = [0, 0, 2], sizes = [2, 14, 20], strides = [1, 1, 1]} : vector<2x16x22xf32> to vector<2x14x20xf32>
    %4 = vector.extract_strided_slice %0 {offsets = [0, 1, 0], sizes = [2, 14, 20], strides = [1, 1, 1]} : vector<2x16x22xf32> to vector<2x14x20xf32>
    %5 = vector.extract_strided_slice %0 {offsets = [0, 1, 1], sizes = [2, 14, 20], strides = [1, 1, 1]} : vector<2x16x22xf32> to vector<2x14x20xf32>
    %6 = vector.extract_strided_slice %0 {offsets = [0, 1, 2], sizes = [2, 14, 20], strides = [1, 1, 1]} : vector<2x16x22xf32> to vector<2x14x20xf32>
    %7 = vector.extract_strided_slice %0 {offsets = [0, 2, 0], sizes = [2, 14, 20], strides = [1, 1, 1]} : vector<2x16x22xf32> to vector<2x14x20xf32>
    %8 = vector.extract_strided_slice %0 {offsets = [0, 2, 1], sizes = [2, 14, 20], strides = [1, 1, 1]} : vector<2x16x22xf32> to vector<2x14x20xf32>
    %9 = vector.extract_strided_slice %0 {offsets = [0, 2, 2], sizes = [2, 14, 20], strides = [1, 1, 1]} : vector<2x16x22xf32> to vector<2x14x20xf32>
    %cst = arith.constant 1.000000e+00 : f32
    %10 = vector.broadcast %cst : f32 to vector<2x14x20xf32>
    %11 = vector.shape_cast %1 : vector<2x14x20xf32> to vector<2x14x20x1xf32>
    %12 = vector.shape_cast %2 : vector<2x14x20xf32> to vector<2x14x20x1xf32>
    %13 = vector.shape_cast %3 : vector<2x14x20xf32> to vector<2x14x20x1xf32>
    %14 = vector.shape_cast %4 : vector<2x14x20xf32> to vector<2x14x20x1xf32>
    %15 = vector.shape_cast %5 : vector<2x14x20xf32> to vector<2x14x20x1xf32>
    %16 = vector.shape_cast %6 : vector<2x14x20xf32> to vector<2x14x20x1xf32>
    %17 = vector.shape_cast %7 : vector<2x14x20xf32> to vector<2x14x20x1xf32>
    %18 = vector.shape_cast %8 : vector<2x14x20xf32> to vector<2x14x20x1xf32>
    %19 = vector.shape_cast %9 : vector<2x14x20xf32> to vector<2x14x20x1xf32>
    %20 = vector.shape_cast %10 : vector<2x14x20xf32> to vector<2x14x20x1xf32>
    %21 = tpu.concatenate %11, %12, %13, %14, %15, %16, %17, %18, %19, %20 in 3 : vector<2x14x20x1xf32>, vector<2x14x20x1xf32>, vector<2x14x20x1xf32>, vector<2x14x20x1xf32>, vector<2x14x20x1xf32>, vector<2x14x20x1xf32>, vector<2x14x20x1xf32>, vector<2x14x20x1xf32>, vector<2x14x20x1xf32>, vector<2x14x20x1xf32> -> vector<2x14x20x10xf32>
    %22 = vector.shape_cast %21 : vector<2x14x20x10xf32> to vector<28x20x10xf32>
    %c0_2 = arith.constant 0 : index
    %c0_3 = arith.constant 0 : index
    %23 = vector.load %arg1[%c0_2, %c0_3] : memref<10x4xf32, #tpu.memory_space<vmem>>, vector<10x4xf32>
    %cst_4 = arith.constant dense<0.000000e+00> : vector<28x20x4xf32>
    %24 = tpu.matmul %22, %23, %cst_4 {dimension_numbers = #tpu.dot_dimension_numbers<[2], [0], [0, 1], [1], [0, 0, 0, 1, 1, 1], [], []>} : vector<28x20x10xf32>, vector<10x4xf32>, vector<28x20x4xf32> -> vector<28x20x4xf32>
    %25 = vector.shape_cast %24 : vector<28x20x4xf32> to vector<2x14x20x4xf32>
    %cst_5 = arith.constant 0.000000e+00 : f32
    %26 = vector.broadcast %cst_5 : f32 to vector<2x1x20x4xf32>
    %cst_6 = arith.constant 0.000000e+00 : f32
    %27 = vector.broadcast %cst_6 : f32 to vector<2x1x20x4xf32>
    %28 = tpu.concatenate %26, %25, %27 in 1 : vector<2x1x20x4xf32>, vector<2x14x20x4xf32>, vector<2x1x20x4xf32> -> vector<2x16x20x4xf32>
    %29 = vector.extract_strided_slice %0 {offsets = [0, 0, 0], sizes = [2, 12, 20], strides = [1, 1, 1]} : vector<2x16x22xf32> to vector<2x12x20xf32>
    %30 = vector.extract_strided_slice %0 {offsets = [0, 0, 1], sizes = [2, 12, 20], strides = [1, 1, 1]} : vector<2x16x22xf32> to vector<2x12x20xf32>
    %31 = vector.extract_strided_slice %0 {offsets = [0, 0, 2], sizes = [2, 12, 20], strides = [1, 1, 1]} : vector<2x16x22xf32> to vector<2x12x20xf32>
    %32 = vector.extract_strided_slice %0 {offsets = [0, 1, 0], sizes = [2, 12, 20], strides = [1, 1, 1]} : vector<2x16x22xf32> to vector<2x12x20xf32>
    %33 = vector.extract_strided_slice %0 {offsets = [0, 1, 1], sizes = [2, 12, 20], strides = [1, 1, 1]} : vector<2x16x22xf32> to vector<2x12x20xf32>
    %34 = vector.extract_strided_slice %0 {offsets = [0, 1, 2], sizes = [2, 12, 20], strides = [1, 1, 1]} : vector<2x16x22xf32> to vector<2x12x20xf32>
    %35 = vector.extract_strided_slice %0 {offsets = [0, 2, 0], sizes = [2, 12, 20], strides = [1, 1, 1]} : vector<2x16x22xf32> to vector<2x12x20xf32>
    %36 = vector.extract_strided_slice %0 {offsets = [0, 2, 1], sizes = [2, 12, 20], strides = [1, 1, 1]} : vector<2x16x22xf32> to vector<2x12x20xf32>
    %37 = vector.extract_strided_slice %0 {offsets = [0, 2, 2], sizes = [2, 12, 20], strides = [1, 1, 1]} : vector<2x16x22xf32> to vector<2x12x20xf32>
    %38 = vector.extract_strided_slice %0 {offsets = [0, 3, 0], sizes = [2, 12, 20], strides = [1, 1, 1]} : vector<2x16x22xf32> to vector<2x12x20xf32>
    %39 = vector.extract_strided_slice %0 {offsets = [0, 3, 1], sizes = [2, 12, 20], strides = [1, 1, 1]} : vector<2x16x22xf32> to vector<2x12x20xf32>
    %40 = vector.extract_strided_slice %0 {offsets = [0, 3, 2], sizes = [2, 12, 20], strides = [1, 1, 1]} : vector<2x16x22xf32> to vector<2x12x20xf32>
    %41 = vector.extract_strided_slice %0 {offsets = [0, 4, 0], sizes = [2, 12, 20], strides = [1, 1, 1]} : vector<2x16x22xf32> to vector<2x12x20xf32>
    %42 = vector.extract_strided_slice %0 {offsets = [0, 4, 1], sizes = [2, 12, 20], strides = [1, 1, 1]} : vector<2x16x22xf32> to vector<2x12x20xf32>
    %43 = vector.extract_strided_slice %0 {offsets = [0, 4, 2], sizes = [2, 12, 20], strides = [1, 1, 1]} : vector<2x16x22xf32> to vector<2x12x20xf32>
    %cst_7 = arith.constant 1.000000e+00 : f32
    %44 = vector.broadcast %cst_7 : f32 to vector<2x12x20xf32>
    %45 = vector.shape_cast %29 : vector<2x12x20xf32> to vector<2x12x20x1xf32>
    %46 = vector.shape_cast %30 : vector<2x12x20xf32> to vector<2x12x20x1xf32>
    %47 = vector.shape_cast %31 : vector<2x12x20xf32> to vector<2x12x20x1xf32>
    %48 = vector.shape_cast %32 : vector<2x12x20xf32> to vector<2x12x20x1xf32>
    %49 = vector.shape_cast %33 : vector<2x12x20xf32> to vector<2x12x20x1xf32>
    %50 = vector.shape_cast %34 : vector<2x12x20xf32> to vector<2x12x20x1xf32>
    %51 = vector.shape_cast %35 : vector<2x12x20xf32> to vector<2x12x20x1xf32>
    %52 = vector.shape_cast %36 : vector<2x12x20xf32> to vector<2x12x20x1xf32>
    %53 = vector.shape_cast %37 : vector<2x12x20xf32> to vector<2x12x20x1xf32>
    %54 = vector.shape_cast %38 : vector<2x12x20xf32> to vector<2x12x20x1xf32>
    %55 = vector.shape_cast %39 : vector<2x12x20xf32> to vector<2x12x20x1xf32>
    %56 = vector.shape_cast %40 : vector<2x12x20xf32> to vector<2x12x20x1xf32>
    %57 = vector.shape_cast %41 : vector<2x12x20xf32> to vector<2x12x20x1xf32>
    %58 = vector.shape_cast %42 : vector<2x12x20xf32> to vector<2x12x20x1xf32>
    %59 = vector.shape_cast %43 : vector<2x12x20xf32> to vector<2x12x20x1xf32>
    %60 = vector.shape_cast %44 : vector<2x12x20xf32> to vector<2x12x20x1xf32>
    %61 = tpu.concatenate %45, %46, %47, %48, %49, %50, %51, %52, %53, %54, %55, %56, %57, %58, %59, %60 in 3 : vector<2x12x20x1xf32>, vector<2x12x20x1xf32>, vector<2x12x20x1xf32>, vector<2x12x20x1xf32>, vector<2x12x20x1xf32>, vector<2x12x20x1xf32>, vector<2x12x20x1xf32>, vector<2x12x20x1xf32>, vector<2x12x20x1xf32>, vector<2x12x20x1xf32>, vector<2x12x20x1xf32>, vector<2x12x20x1xf32>, vector<2x12x20x1xf32>, vector<2x12x20x1xf32>, vector<2x12x20x1xf32>, vector<2x12x20x1xf32> -> vector<2x12x20x16xf32>
    %62 = vector.shape_cast %61 : vector<2x12x20x16xf32> to vector<24x20x16xf32>
    %c0_8 = arith.constant 0 : index
    %c0_9 = arith.constant 0 : index
    %63 = vector.load %arg2[%c0_8, %c0_9] : memref<16x4xf32, #tpu.memory_space<vmem>>, vector<16x4xf32>
    %cst_10 = arith.constant dense<0.000000e+00> : vector<24x20x4xf32>
    %64 = tpu.matmul %62, %63, %cst_10 {dimension_numbers = #tpu.dot_dimension_numbers<[2], [0], [0, 1], [1], [0, 0, 0, 1, 1, 1], [], []>} : vector<24x20x16xf32>, vector<16x4xf32>, vector<24x20x4xf32> -> vector<24x20x4xf32>
    %65 = vector.shape_cast %64 : vector<24x20x4xf32> to vector<2x12x20x4xf32>
    %cst_11 = arith.constant 0.000000e+00 : f32
    %66 = vector.broadcast %cst_11 : f32 to vector<2x2x20x4xf32>
    %cst_12 = arith.constant 0.000000e+00 : f32
    %67 = vector.broadcast %cst_12 : f32 to vector<2x2x20x4xf32>
    %68 = tpu.concatenate %66, %65, %67 in 1 : vector<2x2x20x4xf32>, vector<2x12x20x4xf32>, vector<2x2x20x4xf32> -> vector<2x16x20x4xf32>
    %69 = tpu.concatenate %28, %68 in 3 : vector<2x16x20x4xf32>, vector<2x16x20x4xf32> -> vector<2x16x20x8xf32>
    %cst_13 = arith.constant 0.000000e+00 : f32
    %70 = vector.broadcast %cst_13 : f32 to vector<2x16x20x8xf32>
    %71 = arith.maximumf %69, %70 : vector<2x16x20x8xf32>
    %72 = vector.shape_cast %71 : vector<2x16x20x8xf32> to vector<2x8x2x20x8xf32>
    %cst_14 = arith.constant dense<0xFF800000> : vector<2x8x20x8xf32>
    %73 = vector.multi_reduction <maximumf>, %72, %cst_14 [2] : vector<2x8x2x20x8xf32> to vector<2x8x20x8xf32>
    %c0_15 = arith.constant 0 : index
    %c0_16 = arith.constant 0 : index
    %74 = vector.load %arg3[%c0_15, %c0_16] : memref<20x8xf32, #tpu.memory_space<vmem>>, vector<20x8xf32>
    %75 = vector.shape_cast %74 : vector<20x8xf32> to vector<1x1x20x8xf32>
    %76 = vector.broadcast %75 : vector<1x1x20x8xf32> to vector<2x8x20x8xf32>
    %77 = arith.mulf %73, %76 : vector<2x8x20x8xf32>
    %cst_17 = arith.constant 0.000000e+00 : f32
    %78 = vector.broadcast %cst_17 : f32 to vector<2x1x20x8xf32>
    %79 = tpu.concatenate %78, %77, %78 in 1 : vector<2x1x20x8xf32>, vector<2x8x20x8xf32>, vector<2x1x20x8xf32> -> vector<2x10x20x8xf32>
    %80 = vector.extract_strided_slice %79 {offsets = [0, 0, 0, 0], sizes = [2, 8, 18, 8], strides = [1, 1, 1, 1]} : vector<2x10x20x8xf32> to vector<2x8x18x8xf32>
    %81 = vector.extract_strided_slice %79 {offsets = [0, 0, 1, 0], sizes = [2, 8, 18, 8], strides = [1, 1, 1, 1]} : vector<2x10x20x8xf32> to vector<2x8x18x8xf32>
    %82 = vector.extract_strided_slice %79 {offsets = [0, 0, 2, 0], sizes = [2, 8, 18, 8], strides = [1, 1, 1, 1]} : vector<2x10x20x8xf32> to vector<2x8x18x8xf32>
    %83 = vector.extract_strided_slice %79 {offsets = [0, 1, 0, 0], sizes = [2, 8, 18, 8], strides = [1, 1, 1, 1]} : vector<2x10x20x8xf32> to vector<2x8x18x8xf32>
    %84 = vector.extract_strided_slice %79 {offsets = [0, 1, 1, 0], sizes = [2, 8, 18, 8], strides = [1, 1, 1, 1]} : vector<2x10x20x8xf32> to vector<2x8x18x8xf32>
    %85 = vector.extract_strided_slice %79 {offsets = [0, 1, 2, 0], sizes = [2, 8, 18, 8], strides = [1, 1, 1, 1]} : vector<2x10x20x8xf32> to vector<2x8x18x8xf32>
    %86 = vector.extract_strided_slice %79 {offsets = [0, 2, 0, 0], sizes = [2, 8, 18, 8], strides = [1, 1, 1, 1]} : vector<2x10x20x8xf32> to vector<2x8x18x8xf32>
    %87 = vector.extract_strided_slice %79 {offsets = [0, 2, 1, 0], sizes = [2, 8, 18, 8], strides = [1, 1, 1, 1]} : vector<2x10x20x8xf32> to vector<2x8x18x8xf32>
    %88 = vector.extract_strided_slice %79 {offsets = [0, 2, 2, 0], sizes = [2, 8, 18, 8], strides = [1, 1, 1, 1]} : vector<2x10x20x8xf32> to vector<2x8x18x8xf32>
    %cst_18 = arith.constant 1.000000e+00 : f32
    %89 = vector.broadcast %cst_18 : f32 to vector<2x8x18x1xf32>
    %90 = tpu.concatenate %80, %81, %82, %83, %84, %85, %86, %87, %88, %89 in 3 : vector<2x8x18x8xf32>, vector<2x8x18x8xf32>, vector<2x8x18x8xf32>, vector<2x8x18x8xf32>, vector<2x8x18x8xf32>, vector<2x8x18x8xf32>, vector<2x8x18x8xf32>, vector<2x8x18x8xf32>, vector<2x8x18x8xf32>, vector<2x8x18x1xf32> -> vector<2x8x18x73xf32>
    %91 = vector.shape_cast %90 : vector<2x8x18x73xf32> to vector<16x18x73xf32>
    %c0_19 = arith.constant 0 : index
    %c0_20 = arith.constant 0 : index
    %92 = vector.load %arg4[%c0_19, %c0_20] : memref<73x16xf32, #tpu.memory_space<vmem>>, vector<73x16xf32>
    %cst_21 = arith.constant dense<0.000000e+00> : vector<16x18x16xf32>
    %93 = tpu.matmul %91, %92, %cst_21 {dimension_numbers = #tpu.dot_dimension_numbers<[2], [0], [0, 1], [1], [0, 0, 0, 1, 1, 1], [], []>} : vector<16x18x73xf32>, vector<73x16xf32>, vector<16x18x16xf32> -> vector<16x18x16xf32>
    %cst_22 = arith.constant 0.000000e+00 : f32
    %94 = vector.broadcast %cst_22 : f32 to vector<16x18x16xf32>
    %95 = arith.maximumf %93, %94 : vector<16x18x16xf32>
    %96 = vector.shape_cast %95 : vector<16x18x16xf32> to vector<2x8x18x16xf32>
    %97 = vector.shape_cast %96 : vector<2x8x18x16xf32> to vector<2x4x2x18x16xf32>
    %cst_23 = arith.constant dense<0xFF800000> : vector<2x4x18x16xf32>
    %98 = vector.multi_reduction <maximumf>, %97, %cst_23 [2] : vector<2x4x2x18x16xf32> to vector<2x4x18x16xf32>
    %99 = vector.extract_strided_slice %98 {offsets = [0, 0, 0, 0], sizes = [2, 4, 1, 16], strides = [1, 1, 1, 1]} : vector<2x4x18x16xf32> to vector<2x4x1x16xf32>
    %100 = vector.shape_cast %99 : vector<2x4x1x16xf32> to vector<2x4x16xf32>
    %101 = vector.extract_strided_slice %98 {offsets = [0, 0, 1, 0], sizes = [2, 4, 1, 16], strides = [1, 1, 1, 1]} : vector<2x4x18x16xf32> to vector<2x4x1x16xf32>
    %102 = vector.shape_cast %101 : vector<2x4x1x16xf32> to vector<2x4x16xf32>
    %103 = arith.maximumf %100, %102 : vector<2x4x16xf32>
    %104 = vector.extract_strided_slice %98 {offsets = [0, 0, 2, 0], sizes = [2, 4, 1, 16], strides = [1, 1, 1, 1]} : vector<2x4x18x16xf32> to vector<2x4x1x16xf32>
    %105 = vector.shape_cast %104 : vector<2x4x1x16xf32> to vector<2x4x16xf32>
    %106 = vector.extract_strided_slice %98 {offsets = [0, 0, 3, 0], sizes = [2, 4, 1, 16], strides = [1, 1, 1, 1]} : vector<2x4x18x16xf32> to vector<2x4x1x16xf32>
    %107 = vector.shape_cast %106 : vector<2x4x1x16xf32> to vector<2x4x16xf32>
    %108 = arith.maximumf %105, %107 : vector<2x4x16xf32>
    %109 = vector.extract_strided_slice %98 {offsets = [0, 0, 4, 0], sizes = [2, 4, 1, 16], strides = [1, 1, 1, 1]} : vector<2x4x18x16xf32> to vector<2x4x1x16xf32>
    %110 = vector.shape_cast %109 : vector<2x4x1x16xf32> to vector<2x4x16xf32>
    %111 = vector.extract_strided_slice %98 {offsets = [0, 0, 5, 0], sizes = [2, 4, 1, 16], strides = [1, 1, 1, 1]} : vector<2x4x18x16xf32> to vector<2x4x1x16xf32>
    %112 = vector.shape_cast %111 : vector<2x4x1x16xf32> to vector<2x4x16xf32>
    %113 = arith.maximumf %110, %112 : vector<2x4x16xf32>
    %114 = vector.extract_strided_slice %98 {offsets = [0, 0, 6, 0], sizes = [2, 4, 1, 16], strides = [1, 1, 1, 1]} : vector<2x4x18x16xf32> to vector<2x4x1x16xf32>
    %115 = vector.shape_cast %114 : vector<2x4x1x16xf32> to vector<2x4x16xf32>
    %116 = vector.extract_strided_slice %98 {offsets = [0, 0, 7, 0], sizes = [2, 4, 1, 16], strides = [1, 1, 1, 1]} : vector<2x4x18x16xf32> to vector<2x4x1x16xf32>
    %117 = vector.shape_cast %116 : vector<2x4x1x16xf32> to vector<2x4x16xf32>
    %118 = arith.maximumf %115, %117 : vector<2x4x16xf32>
    %119 = vector.extract_strided_slice %98 {offsets = [0, 0, 8, 0], sizes = [2, 4, 1, 16], strides = [1, 1, 1, 1]} : vector<2x4x18x16xf32> to vector<2x4x1x16xf32>
    %120 = vector.shape_cast %119 : vector<2x4x1x16xf32> to vector<2x4x16xf32>
    %121 = vector.extract_strided_slice %98 {offsets = [0, 0, 9, 0], sizes = [2, 4, 1, 16], strides = [1, 1, 1, 1]} : vector<2x4x18x16xf32> to vector<2x4x1x16xf32>
    %122 = vector.shape_cast %121 : vector<2x4x1x16xf32> to vector<2x4x16xf32>
    %123 = arith.maximumf %120, %122 : vector<2x4x16xf32>
    %124 = vector.extract_strided_slice %98 {offsets = [0, 0, 10, 0], sizes = [2, 4, 1, 16], strides = [1, 1, 1, 1]} : vector<2x4x18x16xf32> to vector<2x4x1x16xf32>
    %125 = vector.shape_cast %124 : vector<2x4x1x16xf32> to vector<2x4x16xf32>
    %126 = vector.extract_strided_slice %98 {offsets = [0, 0, 11, 0], sizes = [2, 4, 1, 16], strides = [1, 1, 1, 1]} : vector<2x4x18x16xf32> to vector<2x4x1x16xf32>
    %127 = vector.shape_cast %126 : vector<2x4x1x16xf32> to vector<2x4x16xf32>
    %128 = arith.maximumf %125, %127 : vector<2x4x16xf32>
    %129 = vector.extract_strided_slice %98 {offsets = [0, 0, 12, 0], sizes = [2, 4, 1, 16], strides = [1, 1, 1, 1]} : vector<2x4x18x16xf32> to vector<2x4x1x16xf32>
    %130 = vector.shape_cast %129 : vector<2x4x1x16xf32> to vector<2x4x16xf32>
    %131 = vector.extract_strided_slice %98 {offsets = [0, 0, 13, 0], sizes = [2, 4, 1, 16], strides = [1, 1, 1, 1]} : vector<2x4x18x16xf32> to vector<2x4x1x16xf32>
    %132 = vector.shape_cast %131 : vector<2x4x1x16xf32> to vector<2x4x16xf32>
    %133 = arith.maximumf %130, %132 : vector<2x4x16xf32>
    %134 = vector.extract_strided_slice %98 {offsets = [0, 0, 14, 0], sizes = [2, 4, 1, 16], strides = [1, 1, 1, 1]} : vector<2x4x18x16xf32> to vector<2x4x1x16xf32>
    %135 = vector.shape_cast %134 : vector<2x4x1x16xf32> to vector<2x4x16xf32>
    %136 = vector.extract_strided_slice %98 {offsets = [0, 0, 15, 0], sizes = [2, 4, 1, 16], strides = [1, 1, 1, 1]} : vector<2x4x18x16xf32> to vector<2x4x1x16xf32>
    %137 = vector.shape_cast %136 : vector<2x4x1x16xf32> to vector<2x4x16xf32>
    %138 = arith.maximumf %135, %137 : vector<2x4x16xf32>
    %139 = vector.extract_strided_slice %98 {offsets = [0, 0, 16, 0], sizes = [2, 4, 1, 16], strides = [1, 1, 1, 1]} : vector<2x4x18x16xf32> to vector<2x4x1x16xf32>
    %140 = vector.shape_cast %139 : vector<2x4x1x16xf32> to vector<2x4x16xf32>
    %141 = vector.extract_strided_slice %98 {offsets = [0, 0, 17, 0], sizes = [2, 4, 1, 16], strides = [1, 1, 1, 1]} : vector<2x4x18x16xf32> to vector<2x4x1x16xf32>
    %142 = vector.shape_cast %141 : vector<2x4x1x16xf32> to vector<2x4x16xf32>
    %143 = arith.maximumf %140, %142 : vector<2x4x16xf32>
    %144 = tpu.concatenate %103, %108, %113, %118, %123, %128, %133, %138, %143 in 2 : vector<2x4x16xf32>, vector<2x4x16xf32>, vector<2x4x16xf32>, vector<2x4x16xf32>, vector<2x4x16xf32>, vector<2x4x16xf32>, vector<2x4x16xf32>, vector<2x4x16xf32>, vector<2x4x16xf32> -> vector<2x4x144xf32>
    %c0_24 = arith.constant 0 : index
    %c0_25 = arith.constant 0 : index
    %c0_26 = arith.constant 0 : index
    %145 = vector.load %arg5[%c0_24, %c0_25, %c0_26] : memref<2x4x144xf32, #tpu.memory_space<vmem>>, vector<2x4x144xf32>
    tpu.vector_store %arg5[%c0_24, %c0_25, %c0_26], %144 {strides = array<i32>} : memref<2x4x144xf32, #tpu.memory_space<vmem>>, vector<2x4x144xf32>,
    return
  }
}

</mosaic_0001>

<llo_original>
// kernel: tpu_custom_call.1
$region0: #{tpu_custom_call.1}
  #allocation0 [shape = 'u32[]', space=smem, size = 0x4, offset = 0x4, fixed_abs, tag = 'smem constant byte address 0x4 - core index']
  #allocation1 [shape = 'u32[72,128]{1,0:T(1,128)}', space=vmem, size = 0x9000, scoped, tag = 'internal scratch']
  %s0 = inlined_call_operand.vmem [shape: f32[2,16,22], index: 0, kind: input, shape index: {}]
  %s1 = inlined_call_operand.vmem [shape: f32[10,4], index: 1, kind: input, shape index: {}]
  %s2 = inlined_call_operand.vmem [shape: f32[16,4], index: 2, kind: input, shape index: {}]
  %s3 = inlined_call_operand.vmem [shape: f32[20,8], index: 3, kind: input, shape index: {}]
  %s4 = inlined_call_operand.vmem [shape: f32[73,16], index: 4, kind: input, shape index: {}]
  %s5 = inlined_call_operand.hbm [shape: f32[2,4,144], index: 5, kind: output, shape index: {}]
  %s6 = sld [smem:[#allocation0]]
  $region30: #{tpu_custom_call.1} parent=0
    _
  %s8 = ssub.s32 1, %s6
  %s9 = scalar_select 0, %s8, %s6
  $region1: #{tpu_custom_call.1} parent=0
    #allocation2 [shape = 'u8[8192]{0}', space=vmem, size = 0x2000, scoped, tag = 'output window, operand 0, single buffered']
    #allocation3 [shape = 's32[1]{0}', space=sflag, size = 0x4, scoped, tag = 'scoped memory for tpu_custom_call.1']
    %10 = vsyncpa [#allocation3], 0
    // Predicated region
    $region2: #{tpu_custom_call.1} parent=1 // pred_check
      _
    $region3: #{tpu_custom_call.1} parent=1 // pred_check_branch
      %12 = sbr.rel (0) target = $region5
    $region4: #{tpu_custom_call.1} parent=1 // pred_region
      _
    $region5: #{tpu_custom_call.1} parent=1 // pred_fallthru
      _
    // Predicated region
    $region6: #{tpu_custom_call.1} parent=1 // pred_check
      _
    $region7: #{tpu_custom_call.1} parent=1 // pred_check_branch
      %14 = sbr.rel (0) target = $region9
    $region8: #{tpu_custom_call.1} parent=1 // pred_region
      _
    $region9: #{tpu_custom_call.1} parent=1 // pred_fallthru
      _
    // Predicated region
    $region10: #{tpu_custom_call.1} parent=1 // pred_check
      _
    $region11: #{tpu_custom_call.1} parent=1 // pred_check_branch
      %16 = sbr.rel (0) target = $region13
    $region12: #{tpu_custom_call.1} parent=1 // pred_region
      _
    $region13: #{tpu_custom_call.1} parent=1 // pred_fallthru
      _
    // Predicated region
    $region14: #{tpu_custom_call.1} parent=1 // pred_check
      _
    $region15: #{tpu_custom_call.1} parent=1 // pred_check_branch
      %18 = sbr.rel (0) target = $region17
    $region16: #{tpu_custom_call.1} parent=1 // pred_region
      _
    $region17: #{tpu_custom_call.1} parent=1 // pred_fallthru
      _
    // Predicated region
    $region18: #{tpu_custom_call.1} parent=1 // pred_check
      _
    $region19: #{tpu_custom_call.1} parent=1 // pred_check_branch
      %20 = sbr.rel (0) target = $region21
    $region20: #{tpu_custom_call.1} parent=1 // pred_region
      _
    $region21: #{tpu_custom_call.1} parent=1 // pred_fallthru
      _
    %v21 = vld [vmem:[%s0] sm:$0xff]
    %v22 = vld [vmem:[%s0 + $0x8] sm:$0xff]
    %v23 = vld [vmem:[%s0 + $0x10] sm:$0xff]
    %v24 = vld [vmem:[%s0 + $0x18] sm:$0xff]
    %v25 = vperm.slane %v21, 0
    %v26 = vlaneseq
    %v27 = vshrl.u32 %v26, 7
    %29 = vset.pattern.permute.xlu0 %v27
    %30 = vperm.xlu0 %29, %v25
    %v31 = vpop.permute.xlu0 %30
    %v32 = vlaneseq
    %v33 = vshrl.u32 %v32, 7
    %v34 = vadd.s32 %v33, 8
    %35 = vset.pattern.permute.xlu0 %v34
    %36 = vperm.xlu0 %35, %v25
    %v37 = vpop.permute.xlu0 %36
    %v38 = vlaneseq
    %v39 = vshrl.u32 %v38, 7
    %v40 = vadd.s32 %v39, 16
    %41 = vset.pattern.permute.xlu0 %v40
    %42 = vperm.xlu0 %41, %v25
    %v43 = vpop.permute.xlu0 %42
    %v44 = vperm.slane %v21, 1
    %v45 = vlaneseq
    %v46 = vshrl.u32 %v45, 7
    %48 = vset.pattern.permute.xlu0 %v46
    %49 = vperm.xlu0 %48, %v44
    %v50 = vpop.permute.xlu0 %49
    %v51 = vlaneseq
    %v52 = vshrl.u32 %v51, 7
    %v53 = vadd.s32 %v52, 8
    %54 = vset.pattern.permute.xlu0 %v53
    %55 = vperm.xlu0 %54, %v44
    %v56 = vpop.permute.xlu0 %55
    %v57 = vlaneseq
    %v58 = vshrl.u32 %v57, 7
    %v59 = vadd.s32 %v58, 16
    %60 = vset.pattern.permute.xlu0 %v59
    %61 = vperm.xlu0 %60, %v44
    %v62 = vpop.permute.xlu0 %61
    %v63 = vperm.slane %v21, 2
    %v64 = vlaneseq
    %v65 = vshrl.u32 %v64, 7
    %67 = vset.pattern.permute.xlu0 %v65
    %68 = vperm.xlu0 %67, %v63
    %v69 = vpop.permute.xlu0 %68
    %v70 = vlaneseq
    %v71 = vshrl.u32 %v70, 7
    %v72 = vadd.s32 %v71, 8
    %73 = vset.pattern.permute.xlu0 %v72
    %74 = vperm.xlu0 %73, %v63
    %v75 = vpop.permute.xlu0 %74
    %v76 = vlaneseq
    %v77 = vshrl.u32 %v76, 7
    %v78 = vadd.s32 %v77, 16
    %79 = vset.pattern.permute.xlu0 %v78
    %80 = vperm.xlu0 %79, %v63
    %v81 = vpop.permute.xlu0 %80
    %v82 = vperm.slane %v21, 3
    %v83 = vlaneseq
    %v84 = vshrl.u32 %v83, 7
    %86 = vset.pattern.permute.xlu0 %v84
    %87 = vperm.xlu0 %86, %v82
    %v88 = vpop.permute.xlu0 %87
    %v89 = vlaneseq
    %v90 = vshrl.u32 %v89, 7
    %v91 = vadd.s32 %v90, 8
    %92 = vset.pattern.permute.xlu0 %v91
    %93 = vperm.xlu0 %92, %v82
    %v94 = vpop.permute.xlu0 %93
    %v95 = vlaneseq
    %v96 = vshrl.u32 %v95, 7
    %v97 = vadd.s32 %v96, 16
    %98 = vset.pattern.permute.xlu0 %v97
    %99 = vperm.xlu0 %98, %v82
    %v100 = vpop.permute.xlu0 %99
    %v101 = vperm.slane %v21, 4
    %v102 = vlaneseq
    %v103 = vshrl.u32 %v102, 7
    %105 = vset.pattern.permute.xlu0 %v103
    %106 = vperm.xlu0 %105, %v101
    %v107 = vpop.permute.xlu0 %106
    %v108 = vlaneseq
    %v109 = vshrl.u32 %v108, 7
    %v110 = vadd.s32 %v109, 8
    %111 = vset.pattern.permute.xlu0 %v110
    %112 = vperm.xlu0 %111, %v101
    %v113 = vpop.permute.xlu0 %112
    %v114 = vlaneseq
    %v115 = vshrl.u32 %v114, 7
    %v116 = vadd.s32 %v115, 16
    %117 = vset.pattern.permute.xlu0 %v116
    %118 = vperm.xlu0 %117, %v101
    %v119 = vpop.permute.xlu0 %118
    %v120 = vperm.slane %v21, 5
    %v121 = vlaneseq
    %v122 = vshrl.u32 %v121, 7
    %124 = vset.pattern.permute.xlu0 %v122
    %125 = vperm.xlu0 %124, %v120
    %v126 = vpop.permute.xlu0 %125
    %v127 = vlaneseq
    %v128 = vshrl.u32 %v127, 7
    %v129 = vadd.s32 %v128, 8
    %130 = vset.pattern.permute.xlu0 %v129
    %131 = vperm.xlu0 %130, %v120
    %v132 = vpop.permute.xlu0 %131
    %v133 = vlaneseq
    %v134 = vshrl.u32 %v133, 7
    %v135 = vadd.s32 %v134, 16
    %136 = vset.pattern.permute.xlu0 %v135
    %137 = vperm.xlu0 %136, %v120
    %v138 = vpop.permute.xlu0 %137
    %v139 = vperm.slane %v21, 6
    %v140 = vlaneseq
    %v141 = vshrl.u32 %v140, 7
    %143 = vset.pattern.permute.xlu0 %v141
    %144 = vperm.xlu0 %143, %v139
    %v145 = vpop.permute.xlu0 %144
    %v146 = vlaneseq
    %v147 = vshrl.u32 %v146, 7
    %v148 = vadd.s32 %v147, 8
    %149 = vset.pattern.permute.xlu0 %v148
    %150 = vperm.xlu0 %149, %v139
    %v151 = vpop.permute.xlu0 %150
    %v152 = vlaneseq
    %v153 = vshrl.u32 %v152, 7
    %v154 = vadd.s32 %v153, 16
    %155 = vset.pattern.permute.xlu0 %v154
    %156 = vperm.xlu0 %155, %v139
    %v157 = vpop.permute.xlu0 %156
    %v158 = vperm.slane %v21, 7
    %v159 = vlaneseq
    %v160 = vshrl.u32 %v159, 7
    %162 = vset.pattern.permute.xlu0 %v160
    %163 = vperm.xlu0 %162, %v158
    %v164 = vpop.permute.xlu0 %163
    %v165 = vlaneseq
    %v166 = vshrl.u32 %v165, 7
    %v167 = vadd.s32 %v166, 8
    %168 = vset.pattern.permute.xlu0 %v167
    %169 = vperm.xlu0 %168, %v158
    %v170 = vpop.permute.xlu0 %169
    %v171 = vlaneseq
    %v172 = vshrl.u32 %v171, 7
    %v173 = vadd.s32 %v172, 16
    %174 = vset.pattern.permute.xlu0 %v173
    %175 = vperm.xlu0 %174, %v158
    %v176 = vpop.permute.xlu0 %175
    %v177 = vperm.slane %v22, 0
    %v178 = vlaneseq
    %v179 = vshrl.u32 %v178, 7
    %181 = vset.pattern.permute.xlu0 %v179
    %182 = vperm.xlu0 %181, %v177
    %v183 = vpop.permute.xlu0 %182
    %v184 = vlaneseq
    %v185 = vshrl.u32 %v184, 7
    %v186 = vadd.s32 %v185, 8
    %187 = vset.pattern.permute.xlu0 %v186
    %188 = vperm.xlu0 %187, %v177
    %v189 = vpop.permute.xlu0 %188
    %v190 = vlaneseq
    %v191 = vshrl.u32 %v190, 7
    %v192 = vadd.s32 %v191, 16
    %193 = vset.pattern.permute.xlu0 %v192
    %194 = vperm.xlu0 %193, %v177
    %v195 = vpop.permute.xlu0 %194
    %v196 = vperm.slane %v22, 1
    %v197 = vlaneseq
    %v198 = vshrl.u32 %v197, 7
    %200 = vset.pattern.permute.xlu0 %v198
    %201 = vperm.xlu0 %200, %v196
    %v202 = vpop.permute.xlu0 %201
    %v203 = vlaneseq
    %v204 = vshrl.u32 %v203, 7
    %v205 = vadd.s32 %v204, 8
    %206 = vset.pattern.permute.xlu0 %v205
    %207 = vperm.xlu0 %206, %v196
    %v208 = vpop.permute.xlu0 %207
    %v209 = vlaneseq
    %v210 = vshrl.u32 %v209, 7
    %v211 = vadd.s32 %v210, 16
    %212 = vset.pattern.permute.xlu0 %v211
    %213 = vperm.xlu0 %212, %v196
    %v214 = vpop.permute.xlu0 %213
    %v215 = vperm.slane %v22, 2
    %v216 = vlaneseq
    %v217 = vshrl.u32 %v216, 7
    %219 = vset.pattern.permute.xlu0 %v217
    %220 = vperm.xlu0 %219, %v215
    %v221 = vpop.permute.xlu0 %220
    %v222 = vlaneseq
    %v223 = vshrl.u32 %v222, 7
    %v224 = vadd.s32 %v223, 8
    %225 = vset.pattern.permute.xlu0 %v224
    %226 = vperm.xlu0 %225, %v215
    %v227 = vpop.permute.xlu0 %226
    %v228 = vlaneseq
    %v229 = vshrl.u32 %v228, 7
    %v230 = vadd.s32 %v229, 16
    %231 = vset.pattern.permute.xlu0 %v230
    %232 = vperm.xlu0 %231, %v215
    %v233 = vpop.permute.xlu0 %232
    %v234 = vperm.slane %v22, 3
    %v235 = vlaneseq
    %v236 = vshrl.u32 %v235, 7
    %238 = vset.pattern.permute.xlu0 %v236
    %239 = vperm.xlu0 %238, %v234
    %v240 = vpop.permute.xlu0 %239
    %v241 = vlaneseq
    %v242 = vshrl.u32 %v241, 7
    %v243 = vadd.s32 %v242, 8
    %244 = vset.pattern.permute.xlu0 %v243
    %245 = vperm.xlu0 %244, %v234
    %v246 = vpop.permute.xlu0 %245
    %v247 = vlaneseq
    %v248 = vshrl.u32 %v247, 7
    %v249 = vadd.s32 %v248, 16
    %250 = vset.pattern.permute.xlu0 %v249
    %251 = vperm.xlu0 %250, %v234
    %v252 = vpop.permute.xlu0 %251
    %v253 = vperm.slane %v22, 4
    %v254 = vlaneseq
    %v255 = vshrl.u32 %v254, 7
    %257 = vset.pattern.permute.xlu0 %v255
    %258 = vperm.xlu0 %257, %v253
    %v259 = vpop.permute.xlu0 %258
    %v260 = vlaneseq
    %v261 = vshrl.u32 %v260, 7
    %v262 = vadd.s32 %v261, 8
    %263 = vset.pattern.permute.xlu0 %v262
    %264 = vperm.xlu0 %263, %v253
    %v265 = vpop.permute.xlu0 %264
    %v266 = vlaneseq
    %v267 = vshrl.u32 %v266, 7
    %v268 = vadd.s32 %v267, 16
    %269 = vset.pattern.permute.xlu0 %v268
    %270 = vperm.xlu0 %269, %v253
    %v271 = vpop.permute.xlu0 %270
    %v272 = vperm.slane %v22, 5
    %v273 = vlaneseq
    %v274 = vshrl.u32 %v273, 7
    %276 = vset.pattern.permute.xlu0 %v274
    %277 = vperm.xlu0 %276, %v272
    %v278 = vpop.permute.xlu0 %277
    %v279 = vlaneseq
    %v280 = vshrl.u32 %v279, 7
    %v281 = vadd.s32 %v280, 8
    %282 = vset.pattern.permute.xlu0 %v281
    %283 = vperm.xlu0 %282, %v272
    %v284 = vpop.permute.xlu0 %283
    %v285 = vlaneseq
    %v286 = vshrl.u32 %v285, 7
    %v287 = vadd.s32 %v286, 16
    %288 = vset.pattern.permute.xlu0 %v287
    %289 = vperm.xlu0 %288, %v272
    %v290 = vpop.permute.xlu0 %289
    %v291 = vperm.slane %v23, 0
    %v292 = vlaneseq
    %v293 = vshrl.u32 %v292, 7
    %295 = vset.pattern.permute.xlu0 %v293
    %296 = vperm.xlu0 %295, %v291
    %v297 = vpop.permute.xlu0 %296
    %v298 = vlaneseq
    %v299 = vshrl.u32 %v298, 7
    %v300 = vadd.s32 %v299, 8
    %301 = vset.pattern.permute.xlu0 %v300
    %302 = vperm.xlu0 %301, %v291
    %v303 = vpop.permute.xlu0 %302
    %v304 = vlaneseq
    %v305 = vshrl.u32 %v304, 7
    %v306 = vadd.s32 %v305, 16
    %307 = vset.pattern.permute.xlu0 %v306
    %308 = vperm.xlu0 %307, %v291
    %v309 = vpop.permute.xlu0 %308
    %v310 = vperm.slane %v23, 1
    %v311 = vlaneseq
    %v312 = vshrl.u32 %v311, 7
    %314 = vset.pattern.permute.xlu0 %v312
    %315 = vperm.xlu0 %314, %v310
    %v316 = vpop.permute.xlu0 %315
    %v317 = vlaneseq
    %v318 = vshrl.u32 %v317, 7
    %v319 = vadd.s32 %v318, 8
    %320 = vset.pattern.permute.xlu0 %v319
    %321 = vperm.xlu0 %320, %v310
    %v322 = vpop.permute.xlu0 %321
    %v323 = vlaneseq
    %v324 = vshrl.u32 %v323, 7
    %v325 = vadd.s32 %v324, 16
    %326 = vset.pattern.permute.xlu0 %v325
    %327 = vperm.xlu0 %326, %v310
    %v328 = vpop.permute.xlu0 %327
    %v329 = vperm.slane %v23, 2
    %v330 = vlaneseq
    %v331 = vshrl.u32 %v330, 7
    %333 = vset.pattern.permute.xlu0 %v331
    %334 = vperm.xlu0 %333, %v329
    %v335 = vpop.permute.xlu0 %334
    %v336 = vlaneseq
    %v337 = vshrl.u32 %v336, 7
    %v338 = vadd.s32 %v337, 8
    %339 = vset.pattern.permute.xlu0 %v338
    %340 = vperm.xlu0 %339, %v329
    %v341 = vpop.permute.xlu0 %340
    %v342 = vlaneseq
    %v343 = vshrl.u32 %v342, 7
    %v344 = vadd.s32 %v343, 16
    %345 = vset.pattern.permute.xlu0 %v344
    %346 = vperm.xlu0 %345, %v329
    %v347 = vpop.permute.xlu0 %346
    %v348 = vperm.slane %v23, 3
    %v349 = vlaneseq
    %v350 = vshrl.u32 %v349, 7
    %352 = vset.pattern.permute.xlu0 %v350
    %353 = vperm.xlu0 %352, %v348
    %v354 = vpop.permute.xlu0 %353
    %v355 = vlaneseq
    %v356 = vshrl.u32 %v355, 7
    %v357 = vadd.s32 %v356, 8
    %358 = vset.pattern.permute.xlu0 %v357
    %359 = vperm.xlu0 %358, %v348
    %v360 = vpop.permute.xlu0 %359
    %v361 = vlaneseq
    %v362 = vshrl.u32 %v361, 7
    %v363 = vadd.s32 %v362, 16
    %364 = vset.pattern.permute.xlu0 %v363
    %365 = vperm.xlu0 %364, %v348
    %v366 = vpop.permute.xlu0 %365
    %v367 = vperm.slane %v23, 4
    %v368 = vlaneseq
    %v369 = vshrl.u32 %v368, 7
    %371 = vset.pattern.permute.xlu0 %v369
    %372 = vperm.xlu0 %371, %v367
    %v373 = vpop.permute.xlu0 %372
    %v374 = vlaneseq
    %v375 = vshrl.u32 %v374, 7
    %v376 = vadd.s32 %v375, 8
    %377 = vset.pattern.permute.xlu0 %v376
    %378 = vperm.xlu0 %377, %v367
    %v379 = vpop.permute.xlu0 %378
    %v380 = vlaneseq
    %v381 = vshrl.u32 %v380, 7
    %v382 = vadd.s32 %v381, 16
    %383 = vset.pattern.permute.xlu0 %v382
    %384 = vperm.xlu0 %383, %v367
    %v385 = vpop.permute.xlu0 %384
    %v386 = vperm.slane %v23, 5
    %v387 = vlaneseq
    %v388 = vshrl.u32 %v387, 7
    %390 = vset.pattern.permute.xlu0 %v388
    %391 = vperm.xlu0 %390, %v386
    %v392 = vpop.permute.xlu0 %391
    %v393 = vlaneseq
    %v394 = vshrl.u32 %v393, 7
    %v395 = vadd.s32 %v394, 8
    %396 = vset.pattern.permute.xlu0 %v395
    %397 = vperm.xlu0 %396, %v386
    %v398 = vpop.permute.xlu0 %397
    %v399 = vlaneseq
    %v400 = vshrl.u32 %v399, 7
    %v401 = vadd.s32 %v400, 16
    %402 = vset.pattern.permute.xlu0 %v401
    %403 = vperm.xlu0 %402, %v386
    %v404 = vpop.permute.xlu0 %403
    %v405 = vperm.slane %v23, 6
    %v406 = vlaneseq
    %v407 = vshrl.u32 %v406, 7
    %409 = vset.pattern.permute.xlu0 %v407
    %410 = vperm.xlu0 %409, %v405
    %v411 = vpop.permute.xlu0 %410
    %v412 = vlaneseq
    %v413 = vshrl.u32 %v412, 7
    %v414 = vadd.s32 %v413, 8
    %415 = vset.pattern.permute.xlu0 %v414
    %416 = vperm.xlu0 %415, %v405
    %v417 = vpop.permute.xlu0 %416
    %v418 = vlaneseq
    %v419 = vshrl.u32 %v418, 7
    %v420 = vadd.s32 %v419, 16
    %421 = vset.pattern.permute.xlu0 %v420
    %422 = vperm.xlu0 %421, %v405
    %v423 = vpop.permute.xlu0 %422
    %v424 = vperm.slane %v23, 7
    %v425 = vlaneseq
    %v426 = vshrl.u32 %v425, 7
    %428 = vset.pattern.permute.xlu0 %v426
    %429 = vperm.xlu0 %428, %v424
    %v430 = vpop.permute.xlu0 %429
    %v431 = vlaneseq
    %v432 = vshrl.u32 %v431, 7
    %v433 = vadd.s32 %v432, 8
    %434 = vset.pattern.permute.xlu0 %v433
    %435 = vperm.xlu0 %434, %v424
    %v436 = vpop.permute.xlu0 %435
    %v437 = vlaneseq
    %v438 = vshrl.u32 %v437, 7
    %v439 = vadd.s32 %v438, 16
    %440 = vset.pattern.permute.xlu0 %v439
    %441 = vperm.xlu0 %440, %v424
    %v442 = vpop.permute.xlu0 %441
    %v443 = vperm.slane %v24, 0
    %v444 = vlaneseq
    %v445 = vshrl.u32 %v444, 7
    %447 = vset.pattern.permute.xlu0 %v445
    %448 = vperm.xlu0 %447, %v443
    %v449 = vpop.permute.xlu0 %448
    %v450 = vlaneseq
    %v451 = vshrl.u32 %v450, 7
    %v452 = vadd.s32 %v451, 8
    %453 = vset.pattern.permute.xlu0 %v452
    %454 = vperm.xlu0 %453, %v443
    %v455 = vpop.permute.xlu0 %454
    %v456 = vlaneseq
    %v457 = vshrl.u32 %v456, 7
    %v458 = vadd.s32 %v457, 16
    %459 = vset.pattern.permute.xlu0 %v458
    %460 = vperm.xlu0 %459, %v443
    %v461 = vpop.permute.xlu0 %460
    %v462 = vperm.slane %v24, 1
    %v463 = vlaneseq
    %v464 = vshrl.u32 %v463, 7
    %466 = vset.pattern.permute.xlu0 %v464
    %467 = vperm.xlu0 %466, %v462
    %v468 = vpop.permute.xlu0 %467
    %v469 = vlaneseq
    %v470 = vshrl.u32 %v469, 7
    %v471 = vadd.s32 %v470, 8
    %472 = vset.pattern.permute.xlu0 %v471
    %473 = vperm.xlu0 %472, %v462
    %v474 = vpop.permute.xlu0 %473
    %v475 = vlaneseq
    %v476 = vshrl.u32 %v475, 7
    %v477 = vadd.s32 %v476, 16
    %478 = vset.pattern.permute.xlu0 %v477
    %479 = vperm.xlu0 %478, %v462
    %v480 = vpop.permute.xlu0 %479
    %v481 = vperm.slane %v24, 2
    %v482 = vlaneseq
    %v483 = vshrl.u32 %v482, 7
    %485 = vset.pattern.permute.xlu0 %v483
    %486 = vperm.xlu0 %485, %v481
    %v487 = vpop.permute.xlu0 %486
    %v488 = vlaneseq
    %v489 = vshrl.u32 %v488, 7
    %v490 = vadd.s32 %v489, 8
    %491 = vset.pattern.permute.xlu0 %v490
    %492 = vperm.xlu0 %491, %v481
    %v493 = vpop.permute.xlu0 %492
    %v494 = vlaneseq
    %v495 = vshrl.u32 %v494, 7
    %v496 = vadd.s32 %v495, 16
    %497 = vset.pattern.permute.xlu0 %v496
    %498 = vperm.xlu0 %497, %v481
    %v499 = vpop.permute.xlu0 %498
    %v500 = vperm.slane %v24, 3
    %v501 = vlaneseq
    %v502 = vshrl.u32 %v501, 7
    %504 = vset.pattern.permute.xlu0 %v502
    %505 = vperm.xlu0 %504, %v500
    %v506 = vpop.permute.xlu0 %505
    %v507 = vlaneseq
    %v508 = vshrl.u32 %v507, 7
    %v509 = vadd.s32 %v508, 8
    %510 = vset.pattern.permute.xlu0 %v509
    %511 = vperm.xlu0 %510, %v500
    %v512 = vpop.permute.xlu0 %511
    %v513 = vlaneseq
    %v514 = vshrl.u32 %v513, 7
    %v515 = vadd.s32 %v514, 16
    %516 = vset.pattern.permute.xlu0 %v515
    %517 = vperm.xlu0 %516, %v500
    %v518 = vpop.permute.xlu0 %517
    %v519 = vperm.slane %v24, 4
    %v520 = vlaneseq
    %v521 = vshrl.u32 %v520, 7
    %523 = vset.pattern.permute.xlu0 %v521
    %524 = vperm.xlu0 %523, %v519
    %v525 = vpop.permute.xlu0 %524
    %v526 = vlaneseq
    %v527 = vshrl.u32 %v526, 7
    %v528 = vadd.s32 %v527, 8
    %529 = vset.pattern.permute.xlu0 %v528
    %530 = vperm.xlu0 %529, %v519
    %v531 = vpop.permute.xlu0 %530
    %v532 = vlaneseq
    %v533 = vshrl.u32 %v532, 7
    %v534 = vadd.s32 %v533, 16
    %535 = vset.pattern.permute.xlu0 %v534
    %536 = vperm.xlu0 %535, %v519
    %v537 = vpop.permute.xlu0 %536
    %v538 = vperm.slane %v24, 5
    %v539 = vlaneseq
    %v540 = vshrl.u32 %v539, 7
    %542 = vset.pattern.permute.xlu0 %v540
    %543 = vperm.xlu0 %542, %v538
    %v544 = vpop.permute.xlu0 %543
    %v545 = vlaneseq
    %v546 = vshrl.u32 %v545, 7
    %v547 = vadd.s32 %v546, 8
    %548 = vset.pattern.permute.xlu0 %v547
    %549 = vperm.xlu0 %548, %v538
    %v550 = vpop.permute.xlu0 %549
    %v551 = vlaneseq
    %v552 = vshrl.u32 %v551, 7
    %v553 = vadd.s32 %v552, 16
    %554 = vset.pattern.permute.xlu0 %v553
    %555 = vperm.xlu0 %554, %v538
    %v556 = vpop.permute.xlu0 %555
    %v557 = vlaneseq
    %v558 = vshrl.u32 %v557, 7
    %v559 = vadd.s32 %v558, 1
    %560 = vset.pattern.permute.xlu0 %v559
    %561 = vperm.xlu0 %560, %v25
    %v562 = vpop.permute.xlu0 %561
    %v563 = vlaneseq
    %v564 = vshrl.u32 %v563, 7
    %v565 = vadd.s32 %v564, 9
    %566 = vset.pattern.permute.xlu0 %v565
    %567 = vperm.xlu0 %566, %v25
    %v568 = vpop.permute.xlu0 %567
    %v569 = vlaneseq
    %v570 = vshrl.u32 %v569, 7
    %v571 = vadd.s32 %v570, 17
    %572 = vset.pattern.permute.xlu0 %v571
    %573 = vperm.xlu0 %572, %v25
    %v574 = vpop.permute.xlu0 %573
    %v575 = vlaneseq
    %v576 = vshrl.u32 %v575, 7
    %v577 = vadd.s32 %v576, 1
    %578 = vset.pattern.permute.xlu0 %v577
    %579 = vperm.xlu0 %578, %v44
    %v580 = vpop.permute.xlu0 %579
    %v581 = vlaneseq
    %v582 = vshrl.u32 %v581, 7
    %v583 = vadd.s32 %v582, 9
    %584 = vset.pattern.permute.xlu0 %v583
    %585 = vperm.xlu0 %584, %v44
    %v586 = vpop.permute.xlu0 %585
    %v587 = vlaneseq
    %v588 = vshrl.u32 %v587, 7
    %v589 = vadd.s32 %v588, 17
    %590 = vset.pattern.permute.xlu0 %v589
    %591 = vperm.xlu0 %590, %v44
    %v592 = vpop.permute.xlu0 %591
    %v593 = vlaneseq
    %v594 = vshrl.u32 %v593, 7
    %v595 = vadd.s32 %v594, 1
    %596 = vset.pattern.permute.xlu0 %v595
    %597 = vperm.xlu0 %596, %v63
    %v598 = vpop.permute.xlu0 %597
    %v599 = vlaneseq
    %v600 = vshrl.u32 %v599, 7
    %v601 = vadd.s32 %v600, 9
    %602 = vset.pattern.permute.xlu0 %v601
    %603 = vperm.xlu0 %602, %v63
    %v604 = vpop.permute.xlu0 %603
    %v605 = vlaneseq
    %v606 = vshrl.u32 %v605, 7
    %v607 = vadd.s32 %v606, 17
    %608 = vset.pattern.permute.xlu0 %v607
    %609 = vperm.xlu0 %608, %v63
    %v610 = vpop.permute.xlu0 %609
    %v611 = vlaneseq
    %v612 = vshrl.u32 %v611, 7
    %v613 = vadd.s32 %v612, 1
    %614 = vset.pattern.permute.xlu0 %v613
    %615 = vperm.xlu0 %614, %v82
    %v616 = vpop.permute.xlu0 %615
    %v617 = vlaneseq
    %v618 = vshrl.u32 %v617, 7
    %v619 = vadd.s32 %v618, 9
    %620 = vset.pattern.permute.xlu0 %v619
    %621 = vperm.xlu0 %620, %v82
    %v622 = vpop.permute.xlu0 %621
    %v623 = vlaneseq
    %v624 = vshrl.u32 %v623, 7
    %v625 = vadd.s32 %v624, 17
    %626 = vset.pattern.permute.xlu0 %v625
    %627 = vperm.xlu0 %626, %v82
    %v628 = vpop.permute.xlu0 %627
    %v629 = vlaneseq
    %v630 = vshrl.u32 %v629, 7
    %v631 = vadd.s32 %v630, 1
    %632 = vset.pattern.permute.xlu0 %v631
    %633 = vperm.xlu0 %632, %v101
    %v634 = vpop.permute.xlu0 %633
    %v635 = vlaneseq
    %v636 = vshrl.u32 %v635, 7
    %v637 = vadd.s32 %v636, 9
    %638 = vset.pattern.permute.xlu0 %v637
    %639 = vperm.xlu0 %638, %v101
    %v640 = vpop.permute.xlu0 %639
    %v641 = vlaneseq
    %v642 = vshrl.u32 %v641, 7
    %v643 = vadd.s32 %v642, 17
    %644 = vset.pattern.permute.xlu0 %v643
    %645 = vperm.xlu0 %644, %v101
    %v646 = vpop.permute.xlu0 %645
    %v647 = vlaneseq
    %v648 = vshrl.u32 %v647, 7
    %v649 = vadd.s32 %v648, 1
    %650 = vset.pattern.permute.xlu0 %v649
    %651 = vperm.xlu0 %650, %v120
    %v652 = vpop.permute.xlu0 %651
    %v653 = vlaneseq
    %v654 = vshrl.u32 %v653, 7
    %v655 = vadd.s32 %v654, 9
    %656 = vset.pattern.permute.xlu0 %v655
    %657 = vperm.xlu0 %656, %v120
    %v658 = vpop.permute.xlu0 %657
    %v659 = vlaneseq
    %v660 = vshrl.u32 %v659, 7
    %v661 = vadd.s32 %v660, 17
    %662 = vset.pattern.permute.xlu0 %v661
    %663 = vperm.xlu0 %662, %v120
    %v664 = vpop.permute.xlu0 %663
    %v665 = vlaneseq
    %v666 = vshrl.u32 %v665, 7
    %v667 = vadd.s32 %v666, 1
    %668 = vset.pattern.permute.xlu0 %v667
    %669 = vperm.xlu0 %668, %v139
    %v670 = vpop.permute.xlu0 %669
    %v671 = vlaneseq
    %v672 = vshrl.u32 %v671, 7
    %v673 = vadd.s32 %v672, 9
    %674 = vset.pattern.permute.xlu0 %v673
    %675 = vperm.xlu0 %674, %v139
    %v676 = vpop.permute.xlu0 %675
    %v677 = vlaneseq
    %v678 = vshrl.u32 %v677, 7
    %v679 = vadd.s32 %v678, 17
    %680 = vset.pattern.permute.xlu0 %v679
    %681 = vperm.xlu0 %680, %v139
    %v682 = vpop.permute.xlu0 %681
    %v683 = vlaneseq
    %v684 = vshrl.u32 %v683, 7
    %v685 = vadd.s32 %v684, 1
    %686 = vset.pattern.permute.xlu0 %v685
    %687 = vperm.xlu0 %686, %v158
    %v688 = vpop.permute.xlu0 %687
    %v689 = vlaneseq
    %v690 = vshrl.u32 %v689, 7
    %v691 = vadd.s32 %v690, 9
    %692 = vset.pattern.permute.xlu0 %v691
    %693 = vperm.xlu0 %692, %v158
    %v694 = vpop.permute.xlu0 %693
    %v695 = vlaneseq
    %v696 = vshrl.u32 %v695, 7
    %v697 = vadd.s32 %v696, 17
    %698 = vset.pattern.permute.xlu0 %v697
    %699 = vperm.xlu0 %698, %v158
    %v700 = vpop.permute.xlu0 %699
    %v701 = vlaneseq
    %v702 = vshrl.u32 %v701, 7
    %v703 = vadd.s32 %v702, 1
    %704 = vset.pattern.permute.xlu0 %v703
    %705 = vperm.xlu0 %704, %v177
    %v706 = vpop.permute.xlu0 %705
    %v707 = vlaneseq
    %v708 = vshrl.u32 %v707, 7
    %v709 = vadd.s32 %v708, 9
    %710 = vset.pattern.permute.xlu0 %v709
    %711 = vperm.xlu0 %710, %v177
    %v712 = vpop.permute.xlu0 %711
    %v713 = vlaneseq
    %v714 = vshrl.u32 %v713, 7
    %v715 = vadd.s32 %v714, 17
    %716 = vset.pattern.permute.xlu0 %v715
    %717 = vperm.xlu0 %716, %v177
    %v718 = vpop.permute.xlu0 %717
    %v719 = vlaneseq
    %v720 = vshrl.u32 %v719, 7
    %v721 = vadd.s32 %v720, 1
    %722 = vset.pattern.permute.xlu0 %v721
    %723 = vperm.xlu0 %722, %v196
    %v724 = vpop.permute.xlu0 %723
    %v725 = vlaneseq
    %v726 = vshrl.u32 %v725, 7
    %v727 = vadd.s32 %v726, 9
    %728 = vset.pattern.permute.xlu0 %v727
    %729 = vperm.xlu0 %728, %v196
    %v730 = vpop.permute.xlu0 %729
    %v731 = vlaneseq
    %v732 = vshrl.u32 %v731, 7
    %v733 = vadd.s32 %v732, 17
    %734 = vset.pattern.permute.xlu0 %v733
    %735 = vperm.xlu0 %734, %v196
    %v736 = vpop.permute.xlu0 %735
    %v737 = vlaneseq
    %v738 = vshrl.u32 %v737, 7
    %v739 = vadd.s32 %v738, 1
    %740 = vset.pattern.permute.xlu0 %v739
    %741 = vperm.xlu0 %740, %v215
    %v742 = vpop.permute.xlu0 %741
    %v743 = vlaneseq
    %v744 = vshrl.u32 %v743, 7
    %v745 = vadd.s32 %v744, 9
    %746 = vset.pattern.permute.xlu0 %v745
    %747 = vperm.xlu0 %746, %v215
    %v748 = vpop.permute.xlu0 %747
    %v749 = vlaneseq
    %v750 = vshrl.u32 %v749, 7
    %v751 = vadd.s32 %v750, 17
    %752 = vset.pattern.permute.xlu0 %v751
    %753 = vperm.xlu0 %752, %v215
    %v754 = vpop.permute.xlu0 %753
    %v755 = vlaneseq
    %v756 = vshrl.u32 %v755, 7
    %v757 = vadd.s32 %v756, 1
    %758 = vset.pattern.permute.xlu0 %v757
    %759 = vperm.xlu0 %758, %v234
    %v760 = vpop.permute.xlu0 %759
    %v761 = vlaneseq
    %v762 = vshrl.u32 %v761, 7
    %v763 = vadd.s32 %v762, 9
    %764 = vset.pattern.permute.xlu0 %v763
    %765 = vperm.xlu0 %764, %v234
    %v766 = vpop.permute.xlu0 %765
    %v767 = vlaneseq
    %v768 = vshrl.u32 %v767, 7
    %v769 = vadd.s32 %v768, 17
    %770 = vset.pattern.permute.xlu0 %v769
    %771 = vperm.xlu0 %770, %v234
    %v772 = vpop.permute.xlu0 %771
    %v773 = vlaneseq
    %v774 = vshrl.u32 %v773, 7
    %v775 = vadd.s32 %v774, 1
    %776 = vset.pattern.permute.xlu0 %v775
    %777 = vperm.xlu0 %776, %v253
    %v778 = vpop.permute.xlu0 %777
    %v779 = vlaneseq
    %v780 = vshrl.u32 %v779, 7
    %v781 = vadd.s32 %v780, 9
    %782 = vset.pattern.permute.xlu0 %v781
    %783 = vperm.xlu0 %782, %v253
    %v784 = vpop.permute.xlu0 %783
    %v785 = vlaneseq
    %v786 = vshrl.u32 %v785, 7
    %v787 = vadd.s32 %v786, 17
    %788 = vset.pattern.permute.xlu0 %v787
    %789 = vperm.xlu0 %788, %v253
    %v790 = vpop.permute.xlu0 %789
    %v791 = vlaneseq
    %v792 = vshrl.u32 %v791, 7
    %v793 = vadd.s32 %v792, 1
    %794 = vset.pattern.permute.xlu0 %v793
    %795 = vperm.xlu0 %794, %v272
    %v796 = vpop.permute.xlu0 %795
    %v797 = vlaneseq
    %v798 = vshrl.u32 %v797, 7
    %v799 = vadd.s32 %v798, 9
    %800 = vset.pattern.permute.xlu0 %v799
    %801 = vperm.xlu0 %800, %v272
    %v802 = vpop.permute.xlu0 %801
    %v803 = vlaneseq
    %v804 = vshrl.u32 %v803, 7
    %v805 = vadd.s32 %v804, 17
    %806 = vset.pattern.permute.xlu0 %v805
    %807 = vperm.xlu0 %806, %v272
    %v808 = vpop.permute.xlu0 %807
    %v809 = vlaneseq
    %v810 = vshrl.u32 %v809, 7
    %v811 = vadd.s32 %v810, 1
    %812 = vset.pattern.permute.xlu0 %v811
    %813 = vperm.xlu0 %812, %v291
    %v814 = vpop.permute.xlu0 %813
    %v815 = vlaneseq
    %v816 = vshrl.u32 %v815, 7
    %v817 = vadd.s32 %v816, 9
    %818 = vset.pattern.permute.xlu0 %v817
    %819 = vperm.xlu0 %818, %v291
    %v820 = vpop.permute.xlu0 %819
    %v821 = vlaneseq
    %v822 = vshrl.u32 %v821, 7
    %v823 = vadd.s32 %v822, 17
    %824 = vset.pattern.permute.xlu0 %v823
    %825 = vperm.xlu0 %824, %v291
    %v826 = vpop.permute.xlu0 %825
    %v827 = vlaneseq
    %v828 = vshrl.u32 %v827, 7
    %v829 = vadd.s32 %v828, 1
    %830 = vset.pattern.permute.xlu0 %v829
    %831 = vperm.xlu0 %830, %v310
    %v832 = vpop.permute.xlu0 %831
    %v833 = vlaneseq
    %v834 = vshrl.u32 %v833, 7
    %v835 = vadd.s32 %v834, 9
    %836 = vset.pattern.permute.xlu0 %v835
    %837 = vperm.xlu0 %836, %v310
    %v838 = vpop.permute.xlu0 %837
    %v839 = vlaneseq
    %v840 = vshrl.u32 %v839, 7
    %v841 = vadd.s32 %v840, 17
    %842 = vset.pattern.permute.xlu0 %v841
    %843 = vperm.xlu0 %842, %v310
    %v844 = vpop.permute.xlu0 %843
    %v845 = vlaneseq
    %v846 = vshrl.u32 %v845, 7
    %v847 = vadd.s32 %v846, 1
    %848 = vset.pattern.permute.xlu0 %v847
    %849 = vperm.xlu0 %848, %v329
    %v850 = vpop.permute.xlu0 %849
    %v851 = vlaneseq
    %v852 = vshrl.u32 %v851, 7
    %v853 = vadd.s32 %v852, 9
    %854 = vset.pattern.permute.xlu0 %v853
    %855 = vperm.xlu0 %854, %v329
    %v856 = vpop.permute.xlu0 %855
    %v857 = vlaneseq
    %v858 = vshrl.u32 %v857, 7
    %v859 = vadd.s32 %v858, 17
    %860 = vset.pattern.permute.xlu0 %v859
    %861 = vperm.xlu0 %860, %v329
    %v862 = vpop.permute.xlu0 %861
    %v863 = vlaneseq
    %v864 = vshrl.u32 %v863, 7
    %v865 = vadd.s32 %v864, 1
    %866 = vset.pattern.permute.xlu0 %v865
    %867 = vperm.xlu0 %866, %v348
    %v868 = vpop.permute.xlu0 %867
    %v869 = vlaneseq
    %v870 = vshrl.u32 %v869, 7
    %v871 = vadd.s32 %v870, 9
    %872 = vset.pattern.permute.xlu0 %v871
    %873 = vperm.xlu0 %872, %v348
    %v874 = vpop.permute.xlu0 %873
    %v875 = vlaneseq
    %v876 = vshrl.u32 %v875, 7
    %v877 = vadd.s32 %v876, 17
    %878 = vset.pattern.permute.xlu0 %v877
    %879 = vperm.xlu0 %878, %v348
    %v880 = vpop.permute.xlu0 %879
    %v881 = vlaneseq
    %v882 = vshrl.u32 %v881, 7
    %v883 = vadd.s32 %v882, 1
    %884 = vset.pattern.permute.xlu0 %v883
    %885 = vperm.xlu0 %884, %v367
    %v886 = vpop.permute.xlu0 %885
    %v887 = vlaneseq
    %v888 = vshrl.u32 %v887, 7
    %v889 = vadd.s32 %v888, 9
    %890 = vset.pattern.permute.xlu0 %v889
    %891 = vperm.xlu0 %890, %v367
    %v892 = vpop.permute.xlu0 %891
    %v893 = vlaneseq
    %v894 = vshrl.u32 %v893, 7
    %v895 = vadd.s32 %v894, 17
    %896 = vset.pattern.permute.xlu0 %v895
    %897 = vperm.xlu0 %896, %v367
    %v898 = vpop.permute.xlu0 %897
    %v899 = vlaneseq
    %v900 = vshrl.u32 %v899, 7
    %v901 = vadd.s32 %v900, 1
    %902 = vset.pattern.permute.xlu0 %v901
    %903 = vperm.xlu0 %902, %v386
    %v904 = vpop.permute.xlu0 %903
    %v905 = vlaneseq
    %v906 = vshrl.u32 %v905, 7
    %v907 = vadd.s32 %v906, 9
    %908 = vset.pattern.permute.xlu0 %v907
    %909 = vperm.xlu0 %908, %v386
    %v910 = vpop.permute.xlu0 %909
    %v911 = vlaneseq
    %v912 = vshrl.u32 %v911, 7
    %v913 = vadd.s32 %v912, 17
    %914 = vset.pattern.permute.xlu0 %v913
    %915 = vperm.xlu0 %914, %v386
    %v916 = vpop.permute.xlu0 %915
    %v917 = vlaneseq
    %v918 = vshrl.u32 %v917, 7
    %v919 = vadd.s32 %v918, 1
    %920 = vset.pattern.permute.xlu0 %v919
    %921 = vperm.xlu0 %920, %v405
    %v922 = vpop.permute.xlu0 %921
    %v923 = vlaneseq
    %v924 = vshrl.u32 %v923, 7
    %v925 = vadd.s32 %v924, 9
    %926 = vset.pattern.permute.xlu0 %v925
    %927 = vperm.xlu0 %926, %v405
    %v928 = vpop.permute.xlu0 %927
    %v929 = vlaneseq
    %v930 = vshrl.u32 %v929, 7
    %v931 = vadd.s32 %v930, 17
    %932 = vset.pattern.permute.xlu0 %v931
    %933 = vperm.xlu0 %932, %v405
    %v934 = vpop.permute.xlu0 %933
    %v935 = vlaneseq
    %v936 = vshrl.u32 %v935, 7
    %v937 = vadd.s32 %v936, 1
    %938 = vset.pattern.permute.xlu0 %v937
    %939 = vperm.xlu0 %938, %v424
    %v940 = vpop.permute.xlu0 %939
    %v941 = vlaneseq
    %v942 = vshrl.u32 %v941, 7
    %v943 = vadd.s32 %v942, 9
    %944 = vset.pattern.permute.xlu0 %v943
    %945 = vperm.xlu0 %944, %v424
    %v946 = vpop.permute.xlu0 %945
    %v947 = vlaneseq
    %v948 = vshrl.u32 %v947, 7
    %v949 = vadd.s32 %v948, 17
    %950 = vset.pattern.permute.xlu0 %v949
    %951 = vperm.xlu0 %950, %v424
    %v952 = vpop.permute.xlu0 %951
    %v953 = vlaneseq
    %v954 = vshrl.u32 %v953, 7
    %v955 = vadd.s32 %v954, 1
    %956 = vset.pattern.permute.xlu0 %v955
    %957 = vperm.xlu0 %956, %v443
    %v958 = vpop.permute.xlu0 %957
    %v959 = vlaneseq
    %v960 = vshrl.u32 %v959, 7
    %v961 = vadd.s32 %v960, 9
    %962 = vset.pattern.permute.xlu0 %v961
    %963 = vperm.xlu0 %962, %v443
    %v964 = vpop.permute.xlu0 %963
    %v965 = vlaneseq
    %v966 = vshrl.u32 %v965, 7
    %v967 = vadd.s32 %v966, 17
    %968 = vset.pattern.permute.xlu0 %v967
    %969 = vperm.xlu0 %968, %v443
    %v970 = vpop.permute.xlu0 %969
    %v971 = vlaneseq
    %v972 = vshrl.u32 %v971, 7
    %v973 = vadd.s32 %v972, 1
    %974 = vset.pattern.permute.xlu0 %v973
    %975 = vperm.xlu0 %974, %v462
    %v976 = vpop.permute.xlu0 %975
    %v977 = vlaneseq
    %v978 = vshrl.u32 %v977, 7
    %v979 = vadd.s32 %v978, 9
    %980 = vset.pattern.permute.xlu0 %v979
    %981 = vperm.xlu0 %980, %v462
    %v982 = vpop.permute.xlu0 %981
    %v983 = vlaneseq
    %v984 = vshrl.u32 %v983, 7
    %v985 = vadd.s32 %v984, 17
    %986 = vset.pattern.permute.xlu0 %v985
    %987 = vperm.xlu0 %986, %v462
    %v988 = vpop.permute.xlu0 %987
    %v989 = vlaneseq
    %v990 = vshrl.u32 %v989, 7
    %v991 = vadd.s32 %v990, 1
    %992 = vset.pattern.permute.xlu0 %v991
    %993 = vperm.xlu0 %992, %v481
    %v994 = vpop.permute.xlu0 %993
    %v995 = vlaneseq
    %v996 = vshrl.u32 %v995, 7
    %v997 = vadd.s32 %v996, 9
    %998 = vset.pattern.permute.xlu0 %v997
    %999 = vperm.xlu0 %998, %v481
    %v1000 = vpop.permute.xlu0 %999
    %v1001 = vlaneseq
    %v1002 = vshrl.u32 %v1001, 7
    %v1003 = vadd.s32 %v1002, 17
    %1004 = vset.pattern.permute.xlu0 %v1003
    %1005 = vperm.xlu0 %1004, %v481
    %v1006 = vpop.permute.xlu0 %1005
    %v1007 = vlaneseq
    %v1008 = vshrl.u32 %v1007, 7
    %v1009 = vadd.s32 %v1008, 1
    %1010 = vset.pattern.permute.xlu0 %v1009
    %1011 = vperm.xlu0 %1010, %v500
    %v1012 = vpop.permute.xlu0 %1011
    %v1013 = vlaneseq
    %v1014 = vshrl.u32 %v1013, 7
    %v1015 = vadd.s32 %v1014, 9
    %1016 = vset.pattern.permute.xlu0 %v1015
    %1017 = vperm.xlu0 %1016, %v500
    %v1018 = vpop.permute.xlu0 %1017
    %v1019 = vlaneseq
    %v1020 = vshrl.u32 %v1019, 7
    %v1021 = vadd.s32 %v1020, 17
    %1022 = vset.pattern.permute.xlu0 %v1021
    %1023 = vperm.xlu0 %1022, %v500
    %v1024 = vpop.permute.xlu0 %1023
    %v1025 = vlaneseq
    %v1026 = vshrl.u32 %v1025, 7
    %v1027 = vadd.s32 %v1026, 1
    %1028 = vset.pattern.permute.xlu0 %v1027
    %1029 = vperm.xlu0 %1028, %v519
    %v1030 = vpop.permute.xlu0 %1029
    %v1031 = vlaneseq
    %v1032 = vshrl.u32 %v1031, 7
    %v1033 = vadd.s32 %v1032, 9
    %1034 = vset.pattern.permute.xlu0 %v1033
    %1035 = vperm.xlu0 %1034, %v519
    %v1036 = vpop.permute.xlu0 %1035
    %v1037 = vlaneseq
    %v1038 = vshrl.u32 %v1037, 7
    %v1039 = vadd.s32 %v1038, 17
    %1040 = vset.pattern.permute.xlu0 %v1039
    %1041 = vperm.xlu0 %1040, %v519
    %v1042 = vpop.permute.xlu0 %1041
    %v1043 = vlaneseq
    %v1044 = vshrl.u32 %v1043, 7
    %v1045 = vadd.s32 %v1044, 1
    %1046 = vset.pattern.permute.xlu0 %v1045
    %1047 = vperm.xlu0 %1046, %v538
    %v1048 = vpop.permute.xlu0 %1047
    %v1049 = vlaneseq
    %v1050 = vshrl.u32 %v1049, 7
    %v1051 = vadd.s32 %v1050, 9
    %1052 = vset.pattern.permute.xlu0 %v1051
    %1053 = vperm.xlu0 %1052, %v538
    %v1054 = vpop.permute.xlu0 %1053
    %v1055 = vlaneseq
    %v1056 = vshrl.u32 %v1055, 7
    %v1057 = vadd.s32 %v1056, 17
    %1058 = vset.pattern.permute.xlu0 %v1057
    %1059 = vperm.xlu0 %1058, %v538
    %v1060 = vpop.permute.xlu0 %1059
    %v1061 = vlaneseq
    %v1062 = vshrl.u32 %v1061, 7
    %v1063 = vadd.s32 %v1062, 2
    %1064 = vset.pattern.permute.xlu0 %v1063
    %1065 = vperm.xlu0 %1064, %v25
    %v1066 = vpop.permute.xlu0 %1065
    %v1067 = vlaneseq
    %v1068 = vshrl.u32 %v1067, 7
    %v1069 = vadd.s32 %v1068, 10
    %1070 = vset.pattern.permute.xlu0 %v1069
    %1071 = vperm.xlu0 %1070, %v25
    %v1072 = vpop.permute.xlu0 %1071
    %v1073 = vlaneseq
    %v1074 = vshrl.u32 %v1073, 7
    %v1075 = vadd.s32 %v1074, 18
    %1076 = vset.pattern.permute.xlu0 %v1075
    %1077 = vperm.xlu0 %1076, %v25
    %v1078 = vpop.permute.xlu0 %1077
    %v1079 = vlaneseq
    %v1080 = vshrl.u32 %v1079, 7
    %v1081 = vadd.s32 %v1080, 2
    %1082 = vset.pattern.permute.xlu0 %v1081
    %1083 = vperm.xlu0 %1082, %v44
    %v1084 = vpop.permute.xlu0 %1083
    %v1085 = vlaneseq
    %v1086 = vshrl.u32 %v1085, 7
    %v1087 = vadd.s32 %v1086, 10
    %1088 = vset.pattern.permute.xlu0 %v1087
    %1089 = vperm.xlu0 %1088, %v44
    %v1090 = vpop.permute.xlu0 %1089
    %v1091 = vlaneseq
    %v1092 = vshrl.u32 %v1091, 7
    %v1093 = vadd.s32 %v1092, 18
    %1094 = vset.pattern.permute.xlu0 %v1093
    %1095 = vperm.xlu0 %1094, %v44
    %v1096 = vpop.permute.xlu0 %1095
    %v1097 = vlaneseq
    %v1098 = vshrl.u32 %v1097, 7
    %v1099 = vadd.s32 %v1098, 2
    %1100 = vset.pattern.permute.xlu0 %v1099
    %1101 = vperm.xlu0 %1100, %v63
    %v1102 = vpop.permute.xlu0 %1101
    %v1103 = vlaneseq
    %v1104 = vshrl.u32 %v1103, 7
    %v1105 = vadd.s32 %v1104, 10
    %1106 = vset.pattern.permute.xlu0 %v1105
    %1107 = vperm.xlu0 %1106, %v63
    %v1108 = vpop.permute.xlu0 %1107
    %v1109 = vlaneseq
    %v1110 = vshrl.u32 %v1109, 7
    %v1111 = vadd.s32 %v1110, 18
    %1112 = vset.pattern.permute.xlu0 %v1111
    %1113 = vperm.xlu0 %1112, %v63
    %v1114 = vpop.permute.xlu0 %1113
    %v1115 = vlaneseq
    %v1116 = vshrl.u32 %v1115, 7
    %v1117 = vadd.s32 %v1116, 2
    %1118 = vset.pattern.permute.xlu0 %v1117
    %1119 = vperm.xlu0 %1118, %v82
    %v1120 = vpop.permute.xlu0 %1119
    %v1121 = vlaneseq
    %v1122 = vshrl.u32 %v1121, 7
    %v1123 = vadd.s32 %v1122, 10
    %1124 = vset.pattern.permute.xlu0 %v1123
    %1125 = vperm.xlu0 %1124, %v82
    %v1126 = vpop.permute.xlu0 %1125
    %v1127 = vlaneseq
    %v1128 = vshrl.u32 %v1127, 7
    %v1129 = vadd.s32 %v1128, 18
    %1130 = vset.pattern.permute.xlu0 %v1129
    %1131 = vperm.xlu0 %1130, %v82
    %v1132 = vpop.permute.xlu0 %1131
    %v1133 = vlaneseq
    %v1134 = vshrl.u32 %v1133, 7
    %v1135 = vadd.s32 %v1134, 2
    %1136 = vset.pattern.permute.xlu0 %v1135
    %1137 = vperm.xlu0 %1136, %v101
    %v1138 = vpop.permute.xlu0 %1137
    %v1139 = vlaneseq
    %v1140 = vshrl.u32 %v1139, 7
    %v1141 = vadd.s32 %v1140, 10
    %1142 = vset.pattern.permute.xlu0 %v1141
    %1143 = vperm.xlu0 %1142, %v101
    %v1144 = vpop.permute.xlu0 %1143
    %v1145 = vlaneseq
    %v1146 = vshrl.u32 %v1145, 7
    %v1147 = vadd.s32 %v1146, 18
    %1148 = vset.pattern.permute.xlu0 %v1147
    %1149 = vperm.xlu0 %1148, %v101
    %v1150 = vpop.permute.xlu0 %1149
    %v1151 = vlaneseq
    %v1152 = vshrl.u32 %v1151, 7
    %v1153 = vadd.s32 %v1152, 2
    %1154 = vset.pattern.permute.xlu0 %v1153
    %1155 = vperm.xlu0 %1154, %v120
    %v1156 = vpop.permute.xlu0 %1155
    %v1157 = vlaneseq
    %v1158 = vshrl.u32 %v1157, 7
    %v1159 = vadd.s32 %v1158, 10
    %1160 = vset.pattern.permute.xlu0 %v1159
    %1161 = vperm.xlu0 %1160, %v120
    %v1162 = vpop.permute.xlu0 %1161
    %v1163 = vlaneseq
    %v1164 = vshrl.u32 %v1163, 7
    %v1165 = vadd.s32 %v1164, 18
    %1166 = vset.pattern.permute.xlu0 %v1165
    %1167 = vperm.xlu0 %1166, %v120
    %v1168 = vpop.permute.xlu0 %1167
    %v1169 = vlaneseq
    %v1170 = vshrl.u32 %v1169, 7
    %v1171 = vadd.s32 %v1170, 2
    %1172 = vset.pattern.permute.xlu0 %v1171
    %1173 = vperm.xlu0 %1172, %v139
    %v1174 = vpop.permute.xlu0 %1173
    %v1175 = vlaneseq
    %v1176 = vshrl.u32 %v1175, 7
    %v1177 = vadd.s32 %v1176, 10
    %1178 = vset.pattern.permute.xlu0 %v1177
    %1179 = vperm.xlu0 %1178, %v139
    %v1180 = vpop.permute.xlu0 %1179
    %v1181 = vlaneseq
    %v1182 = vshrl.u32 %v1181, 7
    %v1183 = vadd.s32 %v1182, 18
    %1184 = vset.pattern.permute.xlu0 %v1183
    %1185 = vperm.xlu0 %1184, %v139
    %v1186 = vpop.permute.xlu0 %1185
    %v1187 = vlaneseq
    %v1188 = vshrl.u32 %v1187, 7
    %v1189 = vadd.s32 %v1188, 2
    %1190 = vset.pattern.permute.xlu0 %v1189
    %1191 = vperm.xlu0 %1190, %v158
    %v1192 = vpop.permute.xlu0 %1191
    %v1193 = vlaneseq
    %v1194 = vshrl.u32 %v1193, 7
    %v1195 = vadd.s32 %v1194, 10
    %1196 = vset.pattern.permute.xlu0 %v1195
    %1197 = vperm.xlu0 %1196, %v158
    %v1198 = vpop.permute.xlu0 %1197
    %v1199 = vlaneseq
    %v1200 = vshrl.u32 %v1199, 7
    %v1201 = vadd.s32 %v1200, 18
    %1202 = vset.pattern.permute.xlu0 %v1201
    %1203 = vperm.xlu0 %1202, %v158
    %v1204 = vpop.permute.xlu0 %1203
    %v1205 = vlaneseq
    %v1206 = vshrl.u32 %v1205, 7
    %v1207 = vadd.s32 %v1206, 2
    %1208 = vset.pattern.permute.xlu0 %v1207
    %1209 = vperm.xlu0 %1208, %v177
    %v1210 = vpop.permute.xlu0 %1209
    %v1211 = vlaneseq
    %v1212 = vshrl.u32 %v1211, 7
    %v1213 = vadd.s32 %v1212, 10
    %1214 = vset.pattern.permute.xlu0 %v1213
    %1215 = vperm.xlu0 %1214, %v177
    %v1216 = vpop.permute.xlu0 %1215
    %v1217 = vlaneseq
    %v1218 = vshrl.u32 %v1217, 7
    %v1219 = vadd.s32 %v1218, 18
    %1220 = vset.pattern.permute.xlu0 %v1219
    %1221 = vperm.xlu0 %1220, %v177
    %v1222 = vpop.permute.xlu0 %1221
    %v1223 = vlaneseq
    %v1224 = vshrl.u32 %v1223, 7
    %v1225 = vadd.s32 %v1224, 2
    %1226 = vset.pattern.permute.xlu0 %v1225
    %1227 = vperm.xlu0 %1226, %v196
    %v1228 = vpop.permute.xlu0 %1227
    %v1229 = vlaneseq
    %v1230 = vshrl.u32 %v1229, 7
    %v1231 = vadd.s32 %v1230, 10
    %1232 = vset.pattern.permute.xlu0 %v1231
    %1233 = vperm.xlu0 %1232, %v196
    %v1234 = vpop.permute.xlu0 %1233
    %v1235 = vlaneseq
    %v1236 = vshrl.u32 %v1235, 7
    %v1237 = vadd.s32 %v1236, 18
    %1238 = vset.pattern.permute.xlu0 %v1237
    %1239 = vperm.xlu0 %1238, %v196
    %v1240 = vpop.permute.xlu0 %1239
    %v1241 = vlaneseq
    %v1242 = vshrl.u32 %v1241, 7
    %v1243 = vadd.s32 %v1242, 2
    %1244 = vset.pattern.permute.xlu0 %v1243
    %1245 = vperm.xlu0 %1244, %v215
    %v1246 = vpop.permute.xlu0 %1245
    %v1247 = vlaneseq
    %v1248 = vshrl.u32 %v1247, 7
    %v1249 = vadd.s32 %v1248, 10
    %1250 = vset.pattern.permute.xlu0 %v1249
    %1251 = vperm.xlu0 %1250, %v215
    %v1252 = vpop.permute.xlu0 %1251
    %v1253 = vlaneseq
    %v1254 = vshrl.u32 %v1253, 7
    %v1255 = vadd.s32 %v1254, 18
    %1256 = vset.pattern.permute.xlu0 %v1255
    %1257 = vperm.xlu0 %1256, %v215
    %v1258 = vpop.permute.xlu0 %1257
    %v1259 = vlaneseq
    %v1260 = vshrl.u32 %v1259, 7
    %v1261 = vadd.s32 %v1260, 2
    %1262 = vset.pattern.permute.xlu0 %v1261
    %1263 = vperm.xlu0 %1262, %v234
    %v1264 = vpop.permute.xlu0 %1263
    %v1265 = vlaneseq
    %v1266 = vshrl.u32 %v1265, 7
    %v1267 = vadd.s32 %v1266, 10
    %1268 = vset.pattern.permute.xlu0 %v1267
    %1269 = vperm.xlu0 %1268, %v234
    %v1270 = vpop.permute.xlu0 %1269
    %v1271 = vlaneseq
    %v1272 = vshrl.u32 %v1271, 7
    %v1273 = vadd.s32 %v1272, 18
    %1274 = vset.pattern.permute.xlu0 %v1273
    %1275 = vperm.xlu0 %1274, %v234
    %v1276 = vpop.permute.xlu0 %1275
    %v1277 = vlaneseq
    %v1278 = vshrl.u32 %v1277, 7
    %v1279 = vadd.s32 %v1278, 2
    %1280 = vset.pattern.permute.xlu0 %v1279
    %1281 = vperm.xlu0 %1280, %v253
    %v1282 = vpop.permute.xlu0 %1281
    %v1283 = vlaneseq
    %v1284 = vshrl.u32 %v1283, 7
    %v1285 = vadd.s32 %v1284, 10
    %1286 = vset.pattern.permute.xlu0 %v1285
    %1287 = vperm.xlu0 %1286, %v253
    %v1288 = vpop.permute.xlu0 %1287
    %v1289 = vlaneseq
    %v1290 = vshrl.u32 %v1289, 7
    %v1291 = vadd.s32 %v1290, 18
    %1292 = vset.pattern.permute.xlu0 %v1291
    %1293 = vperm.xlu0 %1292, %v253
    %v1294 = vpop.permute.xlu0 %1293
    %v1295 = vlaneseq
    %v1296 = vshrl.u32 %v1295, 7
    %v1297 = vadd.s32 %v1296, 2
    %1298 = vset.pattern.permute.xlu0 %v1297
    %1299 = vperm.xlu0 %1298, %v272
    %v1300 = vpop.permute.xlu0 %1299
    %v1301 = vlaneseq
    %v1302 = vshrl.u32 %v1301, 7
    %v1303 = vadd.s32 %v1302, 10
    %1304 = vset.pattern.permute.xlu0 %v1303
    %1305 = vperm.xlu0 %1304, %v272
    %v1306 = vpop.permute.xlu0 %1305
    %v1307 = vlaneseq
    %v1308 = vshrl.u32 %v1307, 7
    %v1309 = vadd.s32 %v1308, 18
    %1310 = vset.pattern.permute.xlu0 %v1309
    %1311 = vperm.xlu0 %1310, %v272
    %v1312 = vpop.permute.xlu0 %1311
    %v1313 = vlaneseq
    %v1314 = vshrl.u32 %v1313, 7
    %v1315 = vadd.s32 %v1314, 2
    %1316 = vset.pattern.permute.xlu0 %v1315
    %1317 = vperm.xlu0 %1316, %v291
    %v1318 = vpop.permute.xlu0 %1317
    %v1319 = vlaneseq
    %v1320 = vshrl.u32 %v1319, 7
    %v1321 = vadd.s32 %v1320, 10
    %1322 = vset.pattern.permute.xlu0 %v1321
    %1323 = vperm.xlu0 %1322, %v291
    %v1324 = vpop.permute.xlu0 %1323
    %v1325 = vlaneseq
    %v1326 = vshrl.u32 %v1325, 7
    %v1327 = vadd.s32 %v1326, 18
    %1328 = vset.pattern.permute.xlu0 %v1327
    %1329 = vperm.xlu0 %1328, %v291
    %v1330 = vpop.permute.xlu0 %1329
    %v1331 = vlaneseq
    %v1332 = vshrl.u32 %v1331, 7
    %v1333 = vadd.s32 %v1332, 2
    %1334 = vset.pattern.permute.xlu0 %v1333
    %1335 = vperm.xlu0 %1334, %v310
    %v1336 = vpop.permute.xlu0 %1335
    %v1337 = vlaneseq
    %v1338 = vshrl.u32 %v1337, 7
    %v1339 = vadd.s32 %v1338, 10
    %1340 = vset.pattern.permute.xlu0 %v1339
    %1341 = vperm.xlu0 %1340, %v310
    %v1342 = vpop.permute.xlu0 %1341
    %v1343 = vlaneseq
    %v1344 = vshrl.u32 %v1343, 7
    %v1345 = vadd.s32 %v1344, 18
    %1346 = vset.pattern.permute.xlu0 %v1345
    %1347 = vperm.xlu0 %1346, %v310
    %v1348 = vpop.permute.xlu0 %1347
    %v1349 = vlaneseq
    %v1350 = vshrl.u32 %v1349, 7
    %v1351 = vadd.s32 %v1350, 2
    %1352 = vset.pattern.permute.xlu0 %v1351
    %1353 = vperm.xlu0 %1352, %v329
    %v1354 = vpop.permute.xlu0 %1353
    %v1355 = vlaneseq
    %v1356 = vshrl.u32 %v1355, 7
    %v1357 = vadd.s32 %v1356, 10
    %1358 = vset.pattern.permute.xlu0 %v1357
    %1359 = vperm.xlu0 %1358, %v329
    %v1360 = vpop.permute.xlu0 %1359
    %v1361 = vlaneseq
    %v1362 = vshrl.u32 %v1361, 7
    %v1363 = vadd.s32 %v1362, 18
    %1364 = vset.pattern.permute.xlu0 %v1363
    %1365 = vperm.xlu0 %1364, %v329
    %v1366 = vpop.permute.xlu0 %1365
    %v1367 = vlaneseq
    %v1368 = vshrl.u32 %v1367, 7
    %v1369 = vadd.s32 %v1368, 2
    %1370 = vset.pattern.permute.xlu0 %v1369
    %1371 = vperm.xlu0 %1370, %v348
    %v1372 = vpop.permute.xlu0 %1371
    %v1373 = vlaneseq
    %v1374 = vshrl.u32 %v1373, 7
    %v1375 = vadd.s32 %v1374, 10
    %1376 = vset.pattern.permute.xlu0 %v1375
    %1377 = vperm.xlu0 %1376, %v348
    %v1378 = vpop.permute.xlu0 %1377
    %v1379 = vlaneseq
    %v1380 = vshrl.u32 %v1379, 7
    %v1381 = vadd.s32 %v1380, 18
    %1382 = vset.pattern.permute.xlu0 %v1381
    %1383 = vperm.xlu0 %1382, %v348
    %v1384 = vpop.permute.xlu0 %1383
    %v1385 = vlaneseq
    %v1386 = vshrl.u32 %v1385, 7
    %v1387 = vadd.s32 %v1386, 2
    %1388 = vset.pattern.permute.xlu0 %v1387
    %1389 = vperm.xlu0 %1388, %v367
    %v1390 = vpop.permute.xlu0 %1389
    %v1391 = vlaneseq
    %v1392 = vshrl.u32 %v1391, 7
    %v1393 = vadd.s32 %v1392, 10
    %1394 = vset.pattern.permute.xlu0 %v1393
    %1395 = vperm.xlu0 %1394, %v367
    %v1396 = vpop.permute.xlu0 %1395
    %v1397 = vlaneseq
    %v1398 = vshrl.u32 %v1397, 7
    %v1399 = vadd.s32 %v1398, 18
    %1400 = vset.pattern.permute.xlu0 %v1399
    %1401 = vperm.xlu0 %1400, %v367
    %v1402 = vpop.permute.xlu0 %1401
    %v1403 = vlaneseq
    %v1404 = vshrl.u32 %v1403, 7
    %v1405 = vadd.s32 %v1404, 2
    %1406 = vset.pattern.permute.xlu0 %v1405
    %1407 = vperm.xlu0 %1406, %v386
    %v1408 = vpop.permute.xlu0 %1407
    %v1409 = vlaneseq
    %v1410 = vshrl.u32 %v1409, 7
    %v1411 = vadd.s32 %v1410, 10
    %1412 = vset.pattern.permute.xlu0 %v1411
    %1413 = vperm.xlu0 %1412, %v386
    %v1414 = vpop.permute.xlu0 %1413
    %v1415 = vlaneseq
    %v1416 = vshrl.u32 %v1415, 7
    %v1417 = vadd.s32 %v1416, 18
    %1418 = vset.pattern.permute.xlu0 %v1417
    %1419 = vperm.xlu0 %1418, %v386
    %v1420 = vpop.permute.xlu0 %1419
    %v1421 = vlaneseq
    %v1422 = vshrl.u32 %v1421, 7
    %v1423 = vadd.s32 %v1422, 2
    %1424 = vset.pattern.permute.xlu0 %v1423
    %1425 = vperm.xlu0 %1424, %v405
    %v1426 = vpop.permute.xlu0 %1425
    %v1427 = vlaneseq
    %v1428 = vshrl.u32 %v1427, 7
    %v1429 = vadd.s32 %v1428, 10
    %1430 = vset.pattern.permute.xlu0 %v1429
    %1431 = vperm.xlu0 %1430, %v405
    %v1432 = vpop.permute.xlu0 %1431
    %v1433 = vlaneseq
    %v1434 = vshrl.u32 %v1433, 7
    %v1435 = vadd.s32 %v1434, 18
    %1436 = vset.pattern.permute.xlu0 %v1435
    %1437 = vperm.xlu0 %1436, %v405
    %v1438 = vpop.permute.xlu0 %1437
    %v1439 = vlaneseq
    %v1440 = vshrl.u32 %v1439, 7
    %v1441 = vadd.s32 %v1440, 2
    %1442 = vset.pattern.permute.xlu0 %v1441
    %1443 = vperm.xlu0 %1442, %v424
    %v1444 = vpop.permute.xlu0 %1443
    %v1445 = vlaneseq
    %v1446 = vshrl.u32 %v1445, 7
    %v1447 = vadd.s32 %v1446, 10
    %1448 = vset.pattern.permute.xlu0 %v1447
    %1449 = vperm.xlu0 %1448, %v424
    %v1450 = vpop.permute.xlu0 %1449
    %v1451 = vlaneseq
    %v1452 = vshrl.u32 %v1451, 7
    %v1453 = vadd.s32 %v1452, 18
    %1454 = vset.pattern.permute.xlu0 %v1453
    %1455 = vperm.xlu0 %1454, %v424
    %v1456 = vpop.permute.xlu0 %1455
    %v1457 = vlaneseq
    %v1458 = vshrl.u32 %v1457, 7
    %v1459 = vadd.s32 %v1458, 2
    %1460 = vset.pattern.permute.xlu0 %v1459
    %1461 = vperm.xlu0 %1460, %v443
    %v1462 = vpop.permute.xlu0 %1461
    %v1463 = vlaneseq
    %v1464 = vshrl.u32 %v1463, 7
    %v1465 = vadd.s32 %v1464, 10
    %1466 = vset.pattern.permute.xlu0 %v1465
    %1467 = vperm.xlu0 %1466, %v443
    %v1468 = vpop.permute.xlu0 %1467
    %v1469 = vlaneseq
    %v1470 = vshrl.u32 %v1469, 7
    %v1471 = vadd.s32 %v1470, 18
    %1472 = vset.pattern.permute.xlu0 %v1471
    %1473 = vperm.xlu0 %1472, %v443
    %v1474 = vpop.permute.xlu0 %1473
    %v1475 = vlaneseq
    %v1476 = vshrl.u32 %v1475, 7
    %v1477 = vadd.s32 %v1476, 2
    %1478 = vset.pattern.permute.xlu0 %v1477
    %1479 = vperm.xlu0 %1478, %v462
    %v1480 = vpop.permute.xlu0 %1479
    %v1481 = vlaneseq
    %v1482 = vshrl.u32 %v1481, 7
    %v1483 = vadd.s32 %v1482, 10
    %1484 = vset.pattern.permute.xlu0 %v1483
    %1485 = vperm.xlu0 %1484, %v462
    %v1486 = vpop.permute.xlu0 %1485
    %v1487 = vlaneseq
    %v1488 = vshrl.u32 %v1487, 7
    %v1489 = vadd.s32 %v1488, 18
    %1490 = vset.pattern.permute.xlu0 %v1489
    %1491 = vperm.xlu0 %1490, %v462
    %v1492 = vpop.permute.xlu0 %1491
    %v1493 = vlaneseq
    %v1494 = vshrl.u32 %v1493, 7
    %v1495 = vadd.s32 %v1494, 2
    %1496 = vset.pattern.permute.xlu0 %v1495
    %1497 = vperm.xlu0 %1496, %v481
    %v1498 = vpop.permute.xlu0 %1497
    %v1499 = vlaneseq
    %v1500 = vshrl.u32 %v1499, 7
    %v1501 = vadd.s32 %v1500, 10
    %1502 = vset.pattern.permute.xlu0 %v1501
    %1503 = vperm.xlu0 %1502, %v481
    %v1504 = vpop.permute.xlu0 %1503
    %v1505 = vlaneseq
    %v1506 = vshrl.u32 %v1505, 7
    %v1507 = vadd.s32 %v1506, 18
    %1508 = vset.pattern.permute.xlu0 %v1507
    %1509 = vperm.xlu0 %1508, %v481
    %v1510 = vpop.permute.xlu0 %1509
    %v1511 = vlaneseq
    %v1512 = vshrl.u32 %v1511, 7
    %v1513 = vadd.s32 %v1512, 2
    %1514 = vset.pattern.permute.xlu0 %v1513
    %1515 = vperm.xlu0 %1514, %v500
    %v1516 = vpop.permute.xlu0 %1515
    %v1517 = vlaneseq
    %v1518 = vshrl.u32 %v1517, 7
    %v1519 = vadd.s32 %v1518, 10
    %1520 = vset.pattern.permute.xlu0 %v1519
    %1521 = vperm.xlu0 %1520, %v500
    %v1522 = vpop.permute.xlu0 %1521
    %v1523 = vlaneseq
    %v1524 = vshrl.u32 %v1523, 7
    %v1525 = vadd.s32 %v1524, 18
    %1526 = vset.pattern.permute.xlu0 %v1525
    %1527 = vperm.xlu0 %1526, %v500
    %v1528 = vpop.permute.xlu0 %1527
    %v1529 = vlaneseq
    %v1530 = vshrl.u32 %v1529, 7
    %v1531 = vadd.s32 %v1530, 2
    %1532 = vset.pattern.permute.xlu0 %v1531
    %1533 = vperm.xlu0 %1532, %v519
    %v1534 = vpop.permute.xlu0 %1533
    %v1535 = vlaneseq
    %v1536 = vshrl.u32 %v1535, 7
    %v1537 = vadd.s32 %v1536, 10
    %1538 = vset.pattern.permute.xlu0 %v1537
    %1539 = vperm.xlu0 %1538, %v519
    %v1540 = vpop.permute.xlu0 %1539
    %v1541 = vlaneseq
    %v1542 = vshrl.u32 %v1541, 7
    %v1543 = vadd.s32 %v1542, 18
    %1544 = vset.pattern.permute.xlu0 %v1543
    %1545 = vperm.xlu0 %1544, %v519
    %v1546 = vpop.permute.xlu0 %1545
    %v1547 = vlaneseq
    %v1548 = vshrl.u32 %v1547, 7
    %v1549 = vadd.s32 %v1548, 2
    %1550 = vset.pattern.permute.xlu0 %v1549
    %1551 = vperm.xlu0 %1550, %v538
    %v1552 = vpop.permute.xlu0 %1551
    %v1553 = vlaneseq
    %v1554 = vshrl.u32 %v1553, 7
    %v1555 = vadd.s32 %v1554, 10
    %1556 = vset.pattern.permute.xlu0 %v1555
    %1557 = vperm.xlu0 %1556, %v538
    %v1558 = vpop.permute.xlu0 %1557
    %v1559 = vlaneseq
    %v1560 = vshrl.u32 %v1559, 7
    %v1561 = vadd.s32 %v1560, 18
    %1562 = vset.pattern.permute.xlu0 %v1561
    %1563 = vperm.xlu0 %1562, %v538
    %v1564 = vpop.permute.xlu0 %1563
    %v1565 = vperm.slane %v22, 6
    %v1566 = vlaneseq
    %v1567 = vshrl.u32 %v1566, 7
    %1569 = vset.pattern.permute.xlu0 %v1567
    %1570 = vperm.xlu0 %1569, %v1565
    %v1571 = vpop.permute.xlu0 %1570
    %v1572 = vlaneseq
    %v1573 = vshrl.u32 %v1572, 7
    %v1574 = vadd.s32 %v1573, 8
    %1575 = vset.pattern.permute.xlu0 %v1574
    %1576 = vperm.xlu0 %1575, %v1565
    %v1577 = vpop.permute.xlu0 %1576
    %v1578 = vlaneseq
    %v1579 = vshrl.u32 %v1578, 7
    %v1580 = vadd.s32 %v1579, 16
    %1581 = vset.pattern.permute.xlu0 %v1580
    %1582 = vperm.xlu0 %1581, %v1565
    %v1583 = vpop.permute.xlu0 %1582
    %v1584 = vperm.slane %v24, 6
    %v1585 = vlaneseq
    %v1586 = vshrl.u32 %v1585, 7
    %1588 = vset.pattern.permute.xlu0 %v1586
    %1589 = vperm.xlu0 %1588, %v1584
    %v1590 = vpop.permute.xlu0 %1589
    %v1591 = vlaneseq
    %v1592 = vshrl.u32 %v1591, 7
    %v1593 = vadd.s32 %v1592, 8
    %1594 = vset.pattern.permute.xlu0 %v1593
    %1595 = vperm.xlu0 %1594, %v1584
    %v1596 = vpop.permute.xlu0 %1595
    %v1597 = vlaneseq
    %v1598 = vshrl.u32 %v1597, 7
    %v1599 = vadd.s32 %v1598, 16
    %1600 = vset.pattern.permute.xlu0 %v1599
    %1601 = vperm.xlu0 %1600, %v1584
    %v1602 = vpop.permute.xlu0 %1601
    %v1603 = vlaneseq
    %v1604 = vshrl.u32 %v1603, 7
    %v1605 = vadd.s32 %v1604, 1
    %1606 = vset.pattern.permute.xlu0 %v1605
    %1607 = vperm.xlu0 %1606, %v1565
    %v1608 = vpop.permute.xlu0 %1607
    %v1609 = vlaneseq
    %v1610 = vshrl.u32 %v1609, 7
    %v1611 = vadd.s32 %v1610, 9
    %1612 = vset.pattern.permute.xlu0 %v1611
    %1613 = vperm.xlu0 %1612, %v1565
    %v1614 = vpop.permute.xlu0 %1613
    %v1615 = vlaneseq
    %v1616 = vshrl.u32 %v1615, 7
    %v1617 = vadd.s32 %v1616, 17
    %1618 = vset.pattern.permute.xlu0 %v1617
    %1619 = vperm.xlu0 %1618, %v1565
    %v1620 = vpop.permute.xlu0 %1619
    %v1621 = vlaneseq
    %v1622 = vshrl.u32 %v1621, 7
    %v1623 = vadd.s32 %v1622, 1
    %1624 = vset.pattern.permute.xlu0 %v1623
    %1625 = vperm.xlu0 %1624, %v1584
    %v1626 = vpop.permute.xlu0 %1625
    %v1627 = vlaneseq
    %v1628 = vshrl.u32 %v1627, 7
    %v1629 = vadd.s32 %v1628, 9
    %1630 = vset.pattern.permute.xlu0 %v1629
    %1631 = vperm.xlu0 %1630, %v1584
    %v1632 = vpop.permute.xlu0 %1631
    %v1633 = vlaneseq
    %v1634 = vshrl.u32 %v1633, 7
    %v1635 = vadd.s32 %v1634, 17
    %1636 = vset.pattern.permute.xlu0 %v1635
    %1637 = vperm.xlu0 %1636, %v1584
    %v1638 = vpop.permute.xlu0 %1637
    %v1639 = vlaneseq
    %v1640 = vshrl.u32 %v1639, 7
    %v1641 = vadd.s32 %v1640, 2
    %1642 = vset.pattern.permute.xlu0 %v1641
    %1643 = vperm.xlu0 %1642, %v1565
    %v1644 = vpop.permute.xlu0 %1643
    %v1645 = vlaneseq
    %v1646 = vshrl.u32 %v1645, 7
    %v1647 = vadd.s32 %v1646, 10
    %1648 = vset.pattern.permute.xlu0 %v1647
    %1649 = vperm.xlu0 %1648, %v1565
    %v1650 = vpop.permute.xlu0 %1649
    %v1651 = vlaneseq
    %v1652 = vshrl.u32 %v1651, 7
    %v1653 = vadd.s32 %v1652, 18
    %1654 = vset.pattern.permute.xlu0 %v1653
    %1655 = vperm.xlu0 %1654, %v1565
    %v1656 = vpop.permute.xlu0 %1655
    %v1657 = vlaneseq
    %v1658 = vshrl.u32 %v1657, 7
    %v1659 = vadd.s32 %v1658, 2
    %1660 = vset.pattern.permute.xlu0 %v1659
    %1661 = vperm.xlu0 %1660, %v1584
    %v1662 = vpop.permute.xlu0 %1661
    %v1663 = vlaneseq
    %v1664 = vshrl.u32 %v1663, 7
    %v1665 = vadd.s32 %v1664, 10
    %1666 = vset.pattern.permute.xlu0 %v1665
    %1667 = vperm.xlu0 %1666, %v1584
    %v1668 = vpop.permute.xlu0 %1667
    %v1669 = vlaneseq
    %v1670 = vshrl.u32 %v1669, 7
    %v1671 = vadd.s32 %v1670, 18
    %1672 = vset.pattern.permute.xlu0 %v1671
    %1673 = vperm.xlu0 %1672, %v1584
    %v1674 = vpop.permute.xlu0 %1673
    %v1675 = vperm.slane %v22, 7
    %v1676 = vlaneseq
    %v1677 = vshrl.u32 %v1676, 7
    %1679 = vset.pattern.permute.xlu0 %v1677
    %1680 = vperm.xlu0 %1679, %v1675
    %v1681 = vpop.permute.xlu0 %1680
    %v1682 = vlaneseq
    %v1683 = vshrl.u32 %v1682, 7
    %v1684 = vadd.s32 %v1683, 8
    %1685 = vset.pattern.permute.xlu0 %v1684
    %1686 = vperm.xlu0 %1685, %v1675
    %v1687 = vpop.permute.xlu0 %1686
    %v1688 = vlaneseq
    %v1689 = vshrl.u32 %v1688, 7
    %v1690 = vadd.s32 %v1689, 16
    %1691 = vset.pattern.permute.xlu0 %v1690
    %1692 = vperm.xlu0 %1691, %v1675
    %v1693 = vpop.permute.xlu0 %1692
    %v1694 = vperm.slane %v24, 7
    %v1695 = vlaneseq
    %v1696 = vshrl.u32 %v1695, 7
    %1698 = vset.pattern.permute.xlu0 %v1696
    %1699 = vperm.xlu0 %1698, %v1694
    %v1700 = vpop.permute.xlu0 %1699
    %v1701 = vlaneseq
    %v1702 = vshrl.u32 %v1701, 7
    %v1703 = vadd.s32 %v1702, 8
    %1704 = vset.pattern.permute.xlu0 %v1703
    %1705 = vperm.xlu0 %1704, %v1694
    %v1706 = vpop.permute.xlu0 %1705
    %v1707 = vlaneseq
    %v1708 = vshrl.u32 %v1707, 7
    %v1709 = vadd.s32 %v1708, 16
    %1710 = vset.pattern.permute.xlu0 %v1709
    %1711 = vperm.xlu0 %1710, %v1694
    %v1712 = vpop.permute.xlu0 %1711
    %v1713 = vlaneseq
    %v1714 = vshrl.u32 %v1713, 7
    %v1715 = vadd.s32 %v1714, 1
    %1716 = vset.pattern.permute.xlu0 %v1715
    %1717 = vperm.xlu0 %1716, %v1675
    %v1718 = vpop.permute.xlu0 %1717
    %v1719 = vlaneseq
    %v1720 = vshrl.u32 %v1719, 7
    %v1721 = vadd.s32 %v1720, 9
    %1722 = vset.pattern.permute.xlu0 %v1721
    %1723 = vperm.xlu0 %1722, %v1675
    %v1724 = vpop.permute.xlu0 %1723
    %v1725 = vlaneseq
    %v1726 = vshrl.u32 %v1725, 7
    %v1727 = vadd.s32 %v1726, 17
    %1728 = vset.pattern.permute.xlu0 %v1727
    %1729 = vperm.xlu0 %1728, %v1675
    %v1730 = vpop.permute.xlu0 %1729
    %v1731 = vlaneseq
    %v1732 = vshrl.u32 %v1731, 7
    %v1733 = vadd.s32 %v1732, 1
    %1734 = vset.pattern.permute.xlu0 %v1733
    %1735 = vperm.xlu0 %1734, %v1694
    %v1736 = vpop.permute.xlu0 %1735
    %v1737 = vlaneseq
    %v1738 = vshrl.u32 %v1737, 7
    %v1739 = vadd.s32 %v1738, 9
    %1740 = vset.pattern.permute.xlu0 %v1739
    %1741 = vperm.xlu0 %1740, %v1694
    %v1742 = vpop.permute.xlu0 %1741
    %v1743 = vlaneseq
    %v1744 = vshrl.u32 %v1743, 7
    %v1745 = vadd.s32 %v1744, 17
    %1746 = vset.pattern.permute.xlu0 %v1745
    %1747 = vperm.xlu0 %1746, %v1694
    %v1748 = vpop.permute.xlu0 %1747
    %v1749 = vlaneseq
    %v1750 = vshrl.u32 %v1749, 7
    %v1751 = vadd.s32 %v1750, 2
    %1752 = vset.pattern.permute.xlu0 %v1751
    %1753 = vperm.xlu0 %1752, %v1675
    %v1754 = vpop.permute.xlu0 %1753
    %v1755 = vlaneseq
    %v1756 = vshrl.u32 %v1755, 7
    %v1757 = vadd.s32 %v1756, 10
    %1758 = vset.pattern.permute.xlu0 %v1757
    %1759 = vperm.xlu0 %1758, %v1675
    %v1760 = vpop.permute.xlu0 %1759
    %v1761 = vlaneseq
    %v1762 = vshrl.u32 %v1761, 7
    %v1763 = vadd.s32 %v1762, 18
    %1764 = vset.pattern.permute.xlu0 %v1763
    %1765 = vperm.xlu0 %1764, %v1675
    %v1766 = vpop.permute.xlu0 %1765
    %v1767 = vlaneseq
    %v1768 = vshrl.u32 %v1767, 7
    %v1769 = vadd.s32 %v1768, 2
    %1770 = vset.pattern.permute.xlu0 %v1769
    %1771 = vperm.xlu0 %1770, %v1694
    %v1772 = vpop.permute.xlu0 %1771
    %v1773 = vlaneseq
    %v1774 = vshrl.u32 %v1773, 7
    %v1775 = vadd.s32 %v1774, 10
    %1776 = vset.pattern.permute.xlu0 %v1775
    %1777 = vperm.xlu0 %1776, %v1694
    %v1778 = vpop.permute.xlu0 %1777
    %v1779 = vlaneseq
    %v1780 = vshrl.u32 %v1779, 7
    %v1781 = vadd.s32 %v1780, 18
    %1782 = vset.pattern.permute.xlu0 %v1781
    %1783 = vperm.xlu0 %1782, %v1694
    %v1784 = vpop.permute.xlu0 %1783
    %vm1785 = vcmask 7168
    %v1786 = vsel %vm1785, %v31, %v562
    %v1787 = vsel %vm1785, %v37, %v568
    %v1788 = vsel %vm1785, %v43, %v574
    %v1789 = vsel %vm1785, %v50, %v580
    %v1790 = vsel %vm1785, %v56, %v586
    %v1791 = vsel %vm1785, %v62, %v592
    %v1792 = vsel %vm1785, %v69, %v598
    %v1793 = vsel %vm1785, %v75, %v604
    %v1794 = vsel %vm1785, %v81, %v610
    %v1795 = vsel %vm1785, %v88, %v616
    %v1796 = vsel %vm1785, %v94, %v622
    %v1797 = vsel %vm1785, %v100, %v628
    %v1798 = vsel %vm1785, %v107, %v634
    %v1799 = vsel %vm1785, %v113, %v640
    %v1800 = vsel %vm1785, %v119, %v646
    %v1801 = vsel %vm1785, %v126, %v652
    %v1802 = vsel %vm1785, %v132, %v658
    %v1803 = vsel %vm1785, %v138, %v664
    %v1804 = vsel %vm1785, %v145, %v670
    %v1805 = vsel %vm1785, %v151, %v676
    %v1806 = vsel %vm1785, %v157, %v682
    %v1807 = vsel %vm1785, %v164, %v688
    %v1808 = vsel %vm1785, %v170, %v694
    %v1809 = vsel %vm1785, %v176, %v700
    %v1810 = vsel %vm1785, %v183, %v706
    %v1811 = vsel %vm1785, %v189, %v712
    %v1812 = vsel %vm1785, %v195, %v718
    %v1813 = vsel %vm1785, %v202, %v724
    %v1814 = vsel %vm1785, %v208, %v730
    %v1815 = vsel %vm1785, %v214, %v736
    %v1816 = vsel %vm1785, %v221, %v742
    %v1817 = vsel %vm1785, %v227, %v748
    %v1818 = vsel %vm1785, %v233, %v754
    %v1819 = vsel %vm1785, %v240, %v760
    %v1820 = vsel %vm1785, %v246, %v766
    %v1821 = vsel %vm1785, %v252, %v772
    %v1822 = vsel %vm1785, %v259, %v778
    %v1823 = vsel %vm1785, %v265, %v784
    %v1824 = vsel %vm1785, %v271, %v790
    %v1825 = vsel %vm1785, %v278, %v796
    %v1826 = vsel %vm1785, %v284, %v802
    %v1827 = vsel %vm1785, %v290, %v808
    %v1828 = vsel %vm1785, %v297, %v814
    %v1829 = vsel %vm1785, %v303, %v820
    %v1830 = vsel %vm1785, %v309, %v826
    %v1831 = vsel %vm1785, %v316, %v832
    %v1832 = vsel %vm1785, %v322, %v838
    %v1833 = vsel %vm1785, %v328, %v844
    %v1834 = vsel %vm1785, %v335, %v850
    %v1835 = vsel %vm1785, %v341, %v856
    %v1836 = vsel %vm1785, %v347, %v862
    %v1837 = vsel %vm1785, %v354, %v868
    %v1838 = vsel %vm1785, %v360, %v874
    %v1839 = vsel %vm1785, %v366, %v880
    %v1840 = vsel %vm1785, %v373, %v886
    %v1841 = vsel %vm1785, %v379, %v892
    %v1842 = vsel %vm1785, %v385, %v898
    %v1843 = vsel %vm1785, %v392, %v904
    %v1844 = vsel %vm1785, %v398, %v910
    %v1845 = vsel %vm1785, %v404, %v916
    %v1846 = vsel %vm1785, %v411, %v922
    %v1847 = vsel %vm1785, %v417, %v928
    %v1848 = vsel %vm1785, %v423, %v934
    %v1849 = vsel %vm1785, %v430, %v940
    %v1850 = vsel %vm1785, %v436, %v946
    %v1851 = vsel %vm1785, %v442, %v952
    %v1852 = vsel %vm1785, %v449, %v958
    %v1853 = vsel %vm1785, %v455, %v964
    %v1854 = vsel %vm1785, %v461, %v970
    %v1855 = vsel %vm1785, %v468, %v976
    %v1856 = vsel %vm1785, %v474, %v982
    %v1857 = vsel %vm1785, %v480, %v988
    %v1858 = vsel %vm1785, %v487, %v994
    %v1859 = vsel %vm1785, %v493, %v1000
    %v1860 = vsel %vm1785, %v499, %v1006
    %v1861 = vsel %vm1785, %v506, %v1012
    %v1862 = vsel %vm1785, %v512, %v1018
    %v1863 = vsel %vm1785, %v518, %v1024
    %v1864 = vsel %vm1785, %v525, %v1030
    %v1865 = vsel %vm1785, %v531, %v1036
    %v1866 = vsel %vm1785, %v537, %v1042
    %v1867 = vsel %vm1785, %v544, %v1048
    %v1868 = vsel %vm1785, %v550, %v1054
    %v1869 = vsel %vm1785, %v556, %v1060
    %vm1870 = vcmask 15360
    %v1871 = vsel %vm1870, %v1786, %v1066
    %v1872 = vsel %vm1870, %v1787, %v1072
    %v1873 = vsel %vm1870, %v1788, %v1078
    %v1874 = vsel %vm1870, %v1789, %v1084
    %v1875 = vsel %vm1870, %v1790, %v1090
    %v1876 = vsel %vm1870, %v1791, %v1096
    %v1877 = vsel %vm1870, %v1792, %v1102
    %v1878 = vsel %vm1870, %v1793, %v1108
    %v1879 = vsel %vm1870, %v1794, %v1114
    %v1880 = vsel %vm1870, %v1795, %v1120
    %v1881 = vsel %vm1870, %v1796, %v1126
    %v1882 = vsel %vm1870, %v1797, %v1132
    %v1883 = vsel %vm1870, %v1798, %v1138
    %v1884 = vsel %vm1870, %v1799, %v1144
    %v1885 = vsel %vm1870, %v1800, %v1150
    %v1886 = vsel %vm1870, %v1801, %v1156
    %v1887 = vsel %vm1870, %v1802, %v1162
    %v1888 = vsel %vm1870, %v1803, %v1168
    %v1889 = vsel %vm1870, %v1804, %v1174
    %v1890 = vsel %vm1870, %v1805, %v1180
    %v1891 = vsel %vm1870, %v1806, %v1186
    %v1892 = vsel %vm1870, %v1807, %v1192
    %v1893 = vsel %vm1870, %v1808, %v1198
    %v1894 = vsel %vm1870, %v1809, %v1204
    %v1895 = vsel %vm1870, %v1810, %v1210
    %v1896 = vsel %vm1870, %v1811, %v1216
    %v1897 = vsel %vm1870, %v1812, %v1222
    %v1898 = vsel %vm1870, %v1813, %v1228
    %v1899 = vsel %vm1870, %v1814, %v1234
    %v1900 = vsel %vm1870, %v1815, %v1240
    %v1901 = vsel %vm1870, %v1816, %v1246
    %v1902 = vsel %vm1870, %v1817, %v1252
    %v1903 = vsel %vm1870, %v1818, %v1258
    %v1904 = vsel %vm1870, %v1819, %v1264
    %v1905 = vsel %vm1870, %v1820, %v1270
    %v1906 = vsel %vm1870, %v1821, %v1276
    %v1907 = vsel %vm1870, %v1822, %v1282
    %v1908 = vsel %vm1870, %v1823, %v1288
    %v1909 = vsel %vm1870, %v1824, %v1294
    %v1910 = vsel %vm1870, %v1825, %v1300
    %v1911 = vsel %vm1870, %v1826, %v1306
    %v1912 = vsel %vm1870, %v1827, %v1312
    %v1913 = vsel %vm1870, %v1828, %v1318
    %v1914 = vsel %vm1870, %v1829, %v1324
    %v1915 = vsel %vm1870, %v1830, %v1330
    %v1916 = vsel %vm1870, %v1831, %v1336
    %v1917 = vsel %vm1870, %v1832, %v1342
    %v1918 = vsel %vm1870, %v1833, %v1348
    %v1919 = vsel %vm1870, %v1834, %v1354
    %v1920 = vsel %vm1870, %v1835, %v1360
    %v1921 = vsel %vm1870, %v1836, %v1366
    %v1922 = vsel %vm1870, %v1837, %v1372
    %v1923 = vsel %vm1870, %v1838, %v1378
    %v1924 = vsel %vm1870, %v1839, %v1384
    %v1925 = vsel %vm1870, %v1840, %v1390
    %v1926 = vsel %vm1870, %v1841, %v1396
    %v1927 = vsel %vm1870, %v1842, %v1402
    %v1928 = vsel %vm1870, %v1843, %v1408
    %v1929 = vsel %vm1870, %v1844, %v1414
    %v1930 = vsel %vm1870, %v1845, %v1420
    %v1931 = vsel %vm1870, %v1846, %v1426
    %v1932 = vsel %vm1870, %v1847, %v1432
    %v1933 = vsel %vm1870, %v1848, %v1438
    %v1934 = vsel %vm1870, %v1849, %v1444
    %v1935 = vsel %vm1870, %v1850, %v1450
    %v1936 = vsel %vm1870, %v1851, %v1456
    %v1937 = vsel %vm1870, %v1852, %v1462
    %v1938 = vsel %vm1870, %v1853, %v1468
    %v1939 = vsel %vm1870, %v1854, %v1474
    %v1940 = vsel %vm1870, %v1855, %v1480
    %v1941 = vsel %vm1870, %v1856, %v1486
    %v1942 = vsel %vm1870, %v1857, %v1492
    %v1943 = vsel %vm1870, %v1858, %v1498
    %v1944 = vsel %vm1870, %v1859, %v1504
    %v1945 = vsel %vm1870, %v1860, %v1510
    %v1946 = vsel %vm1870, %v1861, %v1516
    %v1947 = vsel %vm1870, %v1862, %v1522
    %v1948 = vsel %vm1870, %v1863, %v1528
    %v1949 = vsel %vm1870, %v1864, %v1534
    %v1950 = vsel %vm1870, %v1865, %v1540
    %v1951 = vsel %vm1870, %v1866, %v1546
    %v1952 = vsel %vm1870, %v1867, %v1552
    %v1953 = vsel %vm1870, %v1868, %v1558
    %v1954 = vsel %vm1870, %v1869, %v1564
    %vm1955 = vcmask 23552
    %v1956 = vsel %vm1955, %v1871, %v50
    %v1957 = vsel %vm1955, %v1872, %v56
    %v1958 = vsel %vm1955, %v1873, %v62
    %v1959 = vsel %vm1955, %v1874, %v69
    %v1960 = vsel %vm1955, %v1875, %v75
    %v1961 = vsel %vm1955, %v1876, %v81
    %v1962 = vsel %vm1955, %v1877, %v88
    %v1963 = vsel %vm1955, %v1878, %v94
    %v1964 = vsel %vm1955, %v1879, %v100
    %v1965 = vsel %vm1955, %v1880, %v107
    %v1966 = vsel %vm1955, %v1881, %v113
    %v1967 = vsel %vm1955, %v1882, %v119
    %v1968 = vsel %vm1955, %v1883, %v126
    %v1969 = vsel %vm1955, %v1884, %v132
    %v1970 = vsel %vm1955, %v1885, %v138
    %v1971 = vsel %vm1955, %v1886, %v145
    %v1972 = vsel %vm1955, %v1887, %v151
    %v1973 = vsel %vm1955, %v1888, %v157
    %v1974 = vsel %vm1955, %v1889, %v164
    %v1975 = vsel %vm1955, %v1890, %v170
    %v1976 = vsel %vm1955, %v1891, %v176
    %v1977 = vsel %vm1955, %v1892, %v183
    %v1978 = vsel %vm1955, %v1893, %v189
    %v1979 = vsel %vm1955, %v1894, %v195
    %v1980 = vsel %vm1955, %v1895, %v202
    %v1981 = vsel %vm1955, %v1896, %v208
    %v1982 = vsel %vm1955, %v1897, %v214
    %v1983 = vsel %vm1955, %v1898, %v221
    %v1984 = vsel %vm1955, %v1899, %v227
    %v1985 = vsel %vm1955, %v1900, %v233
    %v1986 = vsel %vm1955, %v1901, %v240
    %v1987 = vsel %vm1955, %v1902, %v246
    %v1988 = vsel %vm1955, %v1903, %v252
    %v1989 = vsel %vm1955, %v1904, %v259
    %v1990 = vsel %vm1955, %v1905, %v265
    %v1991 = vsel %vm1955, %v1906, %v271
    %v1992 = vsel %vm1955, %v1907, %v278
    %v1993 = vsel %vm1955, %v1908, %v284
    %v1994 = vsel %vm1955, %v1909, %v290
    %v1995 = vsel %vm1955, %v1910, %v1571
    %v1996 = vsel %vm1955, %v1911, %v1577
    %v1997 = vsel %vm1955, %v1912, %v1583
    %v1998 = vsel %vm1955, %v1913, %v316
    %v1999 = vsel %vm1955, %v1914, %v322
    %v2000 = vsel %vm1955, %v1915, %v328
    %v2001 = vsel %vm1955, %v1916, %v335
    %v2002 = vsel %vm1955, %v1917, %v341
    %v2003 = vsel %vm1955, %v1918, %v347
    %v2004 = vsel %vm1955, %v1919, %v354
    %v2005 = vsel %vm1955, %v1920, %v360
    %v2006 = vsel %vm1955, %v1921, %v366
    %v2007 = vsel %vm1955, %v1922, %v373
    %v2008 = vsel %vm1955, %v1923, %v379
    %v2009 = vsel %vm1955, %v1924, %v385
    %v2010 = vsel %vm1955, %v1925, %v392
    %v2011 = vsel %vm1955, %v1926, %v398
    %v2012 = vsel %vm1955, %v1927, %v404
    %v2013 = vsel %vm1955, %v1928, %v411
    %v2014 = vsel %vm1955, %v1929, %v417
    %v2015 = vsel %vm1955, %v1930, %v423
    %v2016 = vsel %vm1955, %v1931, %v430
    %v2017 = vsel %vm1955, %v1932, %v436
    %v2018 = vsel %vm1955, %v1933, %v442
    %v2019 = vsel %vm1955, %v1934, %v449
    %v2020 = vsel %vm1955, %v1935, %v455
    %v2021 = vsel %vm1955, %v1936, %v461
    %v2022 = vsel %vm1955, %v1937, %v468
    %v2023 = vsel %vm1955, %v1938, %v474
    %v2024 = vsel %vm1955, %v1939, %v480
    %v2025 = vsel %vm1955, %v1940, %v487
    %v2026 = vsel %vm1955, %v1941, %v493
    %v2027 = vsel %vm1955, %v1942, %v499
    %v2028 = vsel %vm1955, %v1943, %v506
    %v2029 = vsel %vm1955, %v1944, %v512
    %v2030 = vsel %vm1955, %v1945, %v518
    %v2031 = vsel %vm1955, %v1946, %v525
    %v2032 = vsel %vm1955, %v1947, %v531
    %v2033 = vsel %vm1955, %v1948, %v537
    %v2034 = vsel %vm1955, %v1949, %v544
    %v2035 = vsel %vm1955, %v1950, %v550
    %v2036 = vsel %vm1955, %v1951, %v556
    %v2037 = vsel %vm1955, %v1952, %v1590
    %v2038 = vsel %vm1955, %v1953, %v1596
    %v2039 = vsel %vm1955, %v1954, %v1602
    %vm2040 = vcmask 31744
    %v2041 = vsel %vm2040, %v1956, %v580
    %v2042 = vsel %vm2040, %v1957, %v586
    %v2043 = vsel %vm2040, %v1958, %v592
    %v2044 = vsel %vm2040, %v1959, %v598
    %v2045 = vsel %vm2040, %v1960, %v604
    %v2046 = vsel %vm2040, %v1961, %v610
    %v2047 = vsel %vm2040, %v1962, %v616
    %v2048 = vsel %vm2040, %v1963, %v622
    %v2049 = vsel %vm2040, %v1964, %v628
    %v2050 = vsel %vm2040, %v1965, %v634
    %v2051 = vsel %vm2040, %v1966, %v640
    %v2052 = vsel %vm2040, %v1967, %v646
    %v2053 = vsel %vm2040, %v1968, %v652
    %v2054 = vsel %vm2040, %v1969, %v658
    %v2055 = vsel %vm2040, %v1970, %v664
    %v2056 = vsel %vm2040, %v1971, %v670
    %v2057 = vsel %vm2040, %v1972, %v676
    %v2058 = vsel %vm2040, %v1973, %v682
    %v2059 = vsel %vm2040, %v1974, %v688
    %v2060 = vsel %vm2040, %v1975, %v694
    %v2061 = vsel %vm2040, %v1976, %v700
    %v2062 = vsel %vm2040, %v1977, %v706
    %v2063 = vsel %vm2040, %v1978, %v712
    %v2064 = vsel %vm2040, %v1979, %v718
    %v2065 = vsel %vm2040, %v1980, %v724
    %v2066 = vsel %vm2040, %v1981, %v730
    %v2067 = vsel %vm2040, %v1982, %v736
    %v2068 = vsel %vm2040, %v1983, %v742
    %v2069 = vsel %vm2040, %v1984, %v748
    %v2070 = vsel %vm2040, %v1985, %v754
    %v2071 = vsel %vm2040, %v1986, %v760
    %v2072 = vsel %vm2040, %v1987, %v766
    %v2073 = vsel %vm2040, %v1988, %v772
    %v2074 = vsel %vm2040, %v1989, %v778
    %v2075 = vsel %vm2040, %v1990, %v784
    %v2076 = vsel %vm2040, %v1991, %v790
    %v2077 = vsel %vm2040, %v1992, %v796
    %v2078 = vsel %vm2040, %v1993, %v802
    %v2079 = vsel %vm2040, %v1994, %v808
    %v2080 = vsel %vm2040, %v1995, %v1608
    %v2081 = vsel %vm2040, %v1996, %v1614
    %v2082 = vsel %vm2040, %v1997, %v1620
    %v2083 = vsel %vm2040, %v1998, %v832
    %v2084 = vsel %vm2040, %v1999, %v838
    %v2085 = vsel %vm2040, %v2000, %v844
    %v2086 = vsel %vm2040, %v2001, %v850
    %v2087 = vsel %vm2040, %v2002, %v856
    %v2088 = vsel %vm2040, %v2003, %v862
    %v2089 = vsel %vm2040, %v2004, %v868
    %v2090 = vsel %vm2040, %v2005, %v874
    %v2091 = vsel %vm2040, %v2006, %v880
    %v2092 = vsel %vm2040, %v2007, %v886
    %v2093 = vsel %vm2040, %v2008, %v892
    %v2094 = vsel %vm2040, %v2009, %v898
    %v2095 = vsel %vm2040, %v2010, %v904
    %v2096 = vsel %vm2040, %v2011, %v910
    %v2097 = vsel %vm2040, %v2012, %v916
    %v2098 = vsel %vm2040, %v2013, %v922
    %v2099 = vsel %vm2040, %v2014, %v928
    %v2100 = vsel %vm2040, %v2015, %v934
    %v2101 = vsel %vm2040, %v2016, %v940
    %v2102 = vsel %vm2040, %v2017, %v946
    %v2103 = vsel %vm2040, %v2018, %v952
    %v2104 = vsel %vm2040, %v2019, %v958
    %v2105 = vsel %vm2040, %v2020, %v964
    %v2106 = vsel %vm2040, %v2021, %v970
    %v2107 = vsel %vm2040, %v2022, %v976
    %v2108 = vsel %vm2040, %v2023, %v982
    %v2109 = vsel %vm2040, %v2024, %v988
    %v2110 = vsel %vm2040, %v2025, %v994
    %v2111 = vsel %vm2040, %v2026, %v1000
    %v2112 = vsel %vm2040, %v2027, %v1006
    %v2113 = vsel %vm2040, %v2028, %v1012
    %v2114 = vsel %vm2040, %v2029, %v1018
    %v2115 = vsel %vm2040, %v2030, %v1024
    %v2116 = vsel %vm2040, %v2031, %v1030
    %v2117 = vsel %vm2040, %v2032, %v1036
    %v2118 = vsel %vm2040, %v2033, %v1042
    %v2119 = vsel %vm2040, %v2034, %v1048
    %v2120 = vsel %vm2040, %v2035, %v1054
    %v2121 = vsel %vm2040, %v2036, %v1060
    %v2122 = vsel %vm2040, %v2037, %v1626
    %v2123 = vsel %vm2040, %v2038, %v1632
    %v2124 = vsel %vm2040, %v2039, %v1638
    %vm2125 = vcmask 39936
    %v2126 = vsel %vm2125, %v2041, %v1084
    %v2127 = vsel %vm2125, %v2042, %v1090
    %v2128 = vsel %vm2125, %v2043, %v1096
    %v2129 = vsel %vm2125, %v2044, %v1102
    %v2130 = vsel %vm2125, %v2045, %v1108
    %v2131 = vsel %vm2125, %v2046, %v1114
    %v2132 = vsel %vm2125, %v2047, %v1120
    %v2133 = vsel %vm2125, %v2048, %v1126
    %v2134 = vsel %vm2125, %v2049, %v1132
    %v2135 = vsel %vm2125, %v2050, %v1138
    %v2136 = vsel %vm2125, %v2051, %v1144
    %v2137 = vsel %vm2125, %v2052, %v1150
    %v2138 = vsel %vm2125, %v2053, %v1156
    %v2139 = vsel %vm2125, %v2054, %v1162
    %v2140 = vsel %vm2125, %v2055, %v1168
    %v2141 = vsel %vm2125, %v2056, %v1174
    %v2142 = vsel %vm2125, %v2057, %v1180
    %v2143 = vsel %vm2125, %v2058, %v1186
    %v2144 = vsel %vm2125, %v2059, %v1192
    %v2145 = vsel %vm2125, %v2060, %v1198
    %v2146 = vsel %vm2125, %v2061, %v1204
    %v2147 = vsel %vm2125, %v2062, %v1210
    %v2148 = vsel %vm2125, %v2063, %v1216
    %v2149 = vsel %vm2125, %v2064, %v1222
    %v2150 = vsel %vm2125, %v2065, %v1228
    %v2151 = vsel %vm2125, %v2066, %v1234
    %v2152 = vsel %vm2125, %v2067, %v1240
    %v2153 = vsel %vm2125, %v2068, %v1246
    %v2154 = vsel %vm2125, %v2069, %v1252
    %v2155 = vsel %vm2125, %v2070, %v1258
    %v2156 = vsel %vm2125, %v2071, %v1264
    %v2157 = vsel %vm2125, %v2072, %v1270
    %v2158 = vsel %vm2125, %v2073, %v1276
    %v2159 = vsel %vm2125, %v2074, %v1282
    %v2160 = vsel %vm2125, %v2075, %v1288
    %v2161 = vsel %vm2125, %v2076, %v1294
    %v2162 = vsel %vm2125, %v2077, %v1300
    %v2163 = vsel %vm2125, %v2078, %v1306
    %v2164 = vsel %vm2125, %v2079, %v1312
    %v2165 = vsel %vm2125, %v2080, %v1644
    %v2166 = vsel %vm2125, %v2081, %v1650
    %v2167 = vsel %vm2125, %v2082, %v1656
    %v2168 = vsel %vm2125, %v2083, %v1336
    %v2169 = vsel %vm2125, %v2084, %v1342
    %v2170 = vsel %vm2125, %v2085, %v1348
    %v2171 = vsel %vm2125, %v2086, %v1354
    %v2172 = vsel %vm2125, %v2087, %v1360
    %v2173 = vsel %vm2125, %v2088, %v1366
    %v2174 = vsel %vm2125, %v2089, %v1372
    %v2175 = vsel %vm2125, %v2090, %v1378
    %v2176 = vsel %vm2125, %v2091, %v1384
    %v2177 = vsel %vm2125, %v2092, %v1390
    %v2178 = vsel %vm2125, %v2093, %v1396
    %v2179 = vsel %vm2125, %v2094, %v1402
    %v2180 = vsel %vm2125, %v2095, %v1408
    %v2181 = vsel %vm2125, %v2096, %v1414
    %v2182 = vsel %vm2125, %v2097, %v1420
    %v2183 = vsel %vm2125, %v2098, %v1426
    %v2184 = vsel %vm2125, %v2099, %v1432
    %v2185 = vsel %vm2125, %v2100, %v1438
    %v2186 = vsel %vm2125, %v2101, %v1444
    %v2187 = vsel %vm2125, %v2102, %v1450
    %v2188 = vsel %vm2125, %v2103, %v1456
    %v2189 = vsel %vm2125, %v2104, %v1462
    %v2190 = vsel %vm2125, %v2105, %v1468
    %v2191 = vsel %vm2125, %v2106, %v1474
    %v2192 = vsel %vm2125, %v2107, %v1480
    %v2193 = vsel %vm2125, %v2108, %v1486
    %v2194 = vsel %vm2125, %v2109, %v1492
    %v2195 = vsel %vm2125, %v2110, %v1498
    %v2196 = vsel %vm2125, %v2111, %v1504
    %v2197 = vsel %vm2125, %v2112, %v1510
    %v2198 = vsel %vm2125, %v2113, %v1516
    %v2199 = vsel %vm2125, %v2114, %v1522
    %v2200 = vsel %vm2125, %v2115, %v1528
    %v2201 = vsel %vm2125, %v2116, %v1534
    %v2202 = vsel %vm2125, %v2117, %v1540
    %v2203 = vsel %vm2125, %v2118, %v1546
    %v2204 = vsel %vm2125, %v2119, %v1552
    %v2205 = vsel %vm2125, %v2120, %v1558
    %v2206 = vsel %vm2125, %v2121, %v1564
    %v2207 = vsel %vm2125, %v2122, %v1662
    %v2208 = vsel %vm2125, %v2123, %v1668
    %v2209 = vsel %vm2125, %v2124, %v1674
    %vm2210 = vcmask 48128
    %v2211 = vsel %vm2210, %v2126, %v69
    %v2212 = vsel %vm2210, %v2127, %v75
    %v2213 = vsel %vm2210, %v2128, %v81
    %v2214 = vsel %vm2210, %v2129, %v88
    %v2215 = vsel %vm2210, %v2130, %v94
    %v2216 = vsel %vm2210, %v2131, %v100
    %v2217 = vsel %vm2210, %v2132, %v107
    %v2218 = vsel %vm2210, %v2133, %v113
    %v2219 = vsel %vm2210, %v2134, %v119
    %v2220 = vsel %vm2210, %v2135, %v126
    %v2221 = vsel %vm2210, %v2136, %v132
    %v2222 = vsel %vm2210, %v2137, %v138
    %v2223 = vsel %vm2210, %v2138, %v145
    %v2224 = vsel %vm2210, %v2139, %v151
    %v2225 = vsel %vm2210, %v2140, %v157
    %v2226 = vsel %vm2210, %v2141, %v164
    %v2227 = vsel %vm2210, %v2142, %v170
    %v2228 = vsel %vm2210, %v2143, %v176
    %v2229 = vsel %vm2210, %v2144, %v183
    %v2230 = vsel %vm2210, %v2145, %v189
    %v2231 = vsel %vm2210, %v2146, %v195
    %v2232 = vsel %vm2210, %v2147, %v202
    %v2233 = vsel %vm2210, %v2148, %v208
    %v2234 = vsel %vm2210, %v2149, %v214
    %v2235 = vsel %vm2210, %v2150, %v221
    %v2236 = vsel %vm2210, %v2151, %v227
    %v2237 = vsel %vm2210, %v2152, %v233
    %v2238 = vsel %vm2210, %v2153, %v240
    %v2239 = vsel %vm2210, %v2154, %v246
    %v2240 = vsel %vm2210, %v2155, %v252
    %v2241 = vsel %vm2210, %v2156, %v259
    %v2242 = vsel %vm2210, %v2157, %v265
    %v2243 = vsel %vm2210, %v2158, %v271
    %v2244 = vsel %vm2210, %v2159, %v278
    %v2245 = vsel %vm2210, %v2160, %v284
    %v2246 = vsel %vm2210, %v2161, %v290
    %v2247 = vsel %vm2210, %v2162, %v1571
    %v2248 = vsel %vm2210, %v2163, %v1577
    %v2249 = vsel %vm2210, %v2164, %v1583
    %v2250 = vsel %vm2210, %v2165, %v1681
    %v2251 = vsel %vm2210, %v2166, %v1687
    %v2252 = vsel %vm2210, %v2167, %v1693
    %v2253 = vsel %vm2210, %v2168, %v335
    %v2254 = vsel %vm2210, %v2169, %v341
    %v2255 = vsel %vm2210, %v2170, %v347
    %v2256 = vsel %vm2210, %v2171, %v354
    %v2257 = vsel %vm2210, %v2172, %v360
    %v2258 = vsel %vm2210, %v2173, %v366
    %v2259 = vsel %vm2210, %v2174, %v373
    %v2260 = vsel %vm2210, %v2175, %v379
    %v2261 = vsel %vm2210, %v2176, %v385
    %v2262 = vsel %vm2210, %v2177, %v392
    %v2263 = vsel %vm2210, %v2178, %v398
    %v2264 = vsel %vm2210, %v2179, %v404
    %v2265 = vsel %vm2210, %v2180, %v411
    %v2266 = vsel %vm2210, %v2181, %v417
    %v2267 = vsel %vm2210, %v2182, %v423
    %v2268 = vsel %vm2210, %v2183, %v430
    %v2269 = vsel %vm2210, %v2184, %v436
    %v2270 = vsel %vm2210, %v2185, %v442
    %v2271 = vsel %vm2210, %v2186, %v449
    %v2272 = vsel %vm2210, %v2187, %v455
    %v2273 = vsel %vm2210, %v2188, %v461
    %v2274 = vsel %vm2210, %v2189, %v468
    %v2275 = vsel %vm2210, %v2190, %v474
    %v2276 = vsel %vm2210, %v2191, %v480
    %v2277 = vsel %vm2210, %v2192, %v487
    %v2278 = vsel %vm2210, %v2193, %v493
    %v2279 = vsel %vm2210, %v2194, %v499
    %v2280 = vsel %vm2210, %v2195, %v506
    %v2281 = vsel %vm2210, %v2196, %v512
    %v2282 = vsel %vm2210, %v2197, %v518
    %v2283 = vsel %vm2210, %v2198, %v525
    %v2284 = vsel %vm2210, %v2199, %v531
    %v2285 = vsel %vm2210, %v2200, %v537
    %v2286 = vsel %vm2210, %v2201, %v544
    %v2287 = vsel %vm2210, %v2202, %v550
    %v2288 = vsel %vm2210, %v2203, %v556
    %v2289 = vsel %vm2210, %v2204, %v1590
    %v2290 = vsel %vm2210, %v2205, %v1596
    %v2291 = vsel %vm2210, %v2206, %v1602
    %v2292 = vsel %vm2210, %v2207, %v1700
    %v2293 = vsel %vm2210, %v2208, %v1706
    %v2294 = vsel %vm2210, %v2209, %v1712
    %vm2295 = vcmask 56320
    %v2296 = vsel %vm2295, %v2211, %v598
    %v2297 = vsel %vm2295, %v2212, %v604
    %v2298 = vsel %vm2295, %v2213, %v610
    %v2299 = vsel %vm2295, %v2214, %v616
    %v2300 = vsel %vm2295, %v2215, %v622
    %v2301 = vsel %vm2295, %v2216, %v628
    %v2302 = vsel %vm2295, %v2217, %v634
    %v2303 = vsel %vm2295, %v2218, %v640
    %v2304 = vsel %vm2295, %v2219, %v646
    %v2305 = vsel %vm2295, %v2220, %v652
    %v2306 = vsel %vm2295, %v2221, %v658
    %v2307 = vsel %vm2295, %v2222, %v664
    %v2308 = vsel %vm2295, %v2223, %v670
    %v2309 = vsel %vm2295, %v2224, %v676
    %v2310 = vsel %vm2295, %v2225, %v682
    %v2311 = vsel %vm2295, %v2226, %v688
    %v2312 = vsel %vm2295, %v2227, %v694
    %v2313 = vsel %vm2295, %v2228, %v700
    %v2314 = vsel %vm2295, %v2229, %v706
    %v2315 = vsel %vm2295, %v2230, %v712
    %v2316 = vsel %vm2295, %v2231, %v718
    %v2317 = vsel %vm2295, %v2232, %v724
    %v2318 = vsel %vm2295, %v2233, %v730
    %v2319 = vsel %vm2295, %v2234, %v736
    %v2320 = vsel %vm2295, %v2235, %v742
    %v2321 = vsel %vm2295, %v2236, %v748
    %v2322 = vsel %vm2295, %v2237, %v754
    %v2323 = vsel %vm2295, %v2238, %v760
    %v2324 = vsel %vm2295, %v2239, %v766
    %v2325 = vsel %vm2295, %v2240, %v772
    %v2326 = vsel %vm2295, %v2241, %v778
    %v2327 = vsel %vm2295, %v2242, %v784
    %v2328 = vsel %vm2295, %v2243, %v790
    %v2329 = vsel %vm2295, %v2244, %v796
    %v2330 = vsel %vm2295, %v2245, %v802
    %v2331 = vsel %vm2295, %v2246, %v808
    %v2332 = vsel %vm2295, %v2247, %v1608
    %v2333 = vsel %vm2295, %v2248, %v1614
    %v2334 = vsel %vm2295, %v2249, %v1620
    %v2335 = vsel %vm2295, %v2250, %v1718
    %v2336 = vsel %vm2295, %v2251, %v1724
    %v2337 = vsel %vm2295, %v2252, %v1730
    %v2338 = vsel %vm2295, %v2253, %v850
    %v2339 = vsel %vm2295, %v2254, %v856
    %v2340 = vsel %vm2295, %v2255, %v862
    %v2341 = vsel %vm2295, %v2256, %v868
    %v2342 = vsel %vm2295, %v2257, %v874
    %v2343 = vsel %vm2295, %v2258, %v880
    %v2344 = vsel %vm2295, %v2259, %v886
    %v2345 = vsel %vm2295, %v2260, %v892
    %v2346 = vsel %vm2295, %v2261, %v898
    %v2347 = vsel %vm2295, %v2262, %v904
    %v2348 = vsel %vm2295, %v2263, %v910
    %v2349 = vsel %vm2295, %v2264, %v916
    %v2350 = vsel %vm2295, %v2265, %v922
    %v2351 = vsel %vm2295, %v2266, %v928
    %v2352 = vsel %vm2295, %v2267, %v934
    %v2353 = vsel %vm2295, %v2268, %v940
    %v2354 = vsel %vm2295, %v2269, %v946
    %v2355 = vsel %vm2295, %v2270, %v952
    %v2356 = vsel %vm2295, %v2271, %v958
    %v2357 = vsel %vm2295, %v2272, %v964
    %v2358 = vsel %vm2295, %v2273, %v970
    %v2359 = vsel %vm2295, %v2274, %v976
    %v2360 = vsel %vm2295, %v2275, %v982
    %v2361 = vsel %vm2295, %v2276, %v988
    %v2362 = vsel %vm2295, %v2277, %v994
    %v2363 = vsel %vm2295, %v2278, %v1000
    %v2364 = vsel %vm2295, %v2279, %v1006
    %v2365 = vsel %vm2295, %v2280, %v1012
    %v2366 = vsel %vm2295, %v2281, %v1018
    %v2367 = vsel %vm2295, %v2282, %v1024
    %v2368 = vsel %vm2295, %v2283, %v1030
    %v2369 = vsel %vm2295, %v2284, %v1036
    %v2370 = vsel %vm2295, %v2285, %v1042
    %v2371 = vsel %vm2295, %v2286, %v1048
    %v2372 = vsel %vm2295, %v2287, %v1054
    %v2373 = vsel %vm2295, %v2288, %v1060
    %v2374 = vsel %vm2295, %v2289, %v1626
    %v2375 = vsel %vm2295, %v2290, %v1632
    %v2376 = vsel %vm2295, %v2291, %v1638
    %v2377 = vsel %vm2295, %v2292, %v1736
    %v2378 = vsel %vm2295, %v2293, %v1742
    %v2379 = vsel %vm2295, %v2294, %v1748
    %vm2380 = vcmask 64512
    %v2381 = vsel %vm2380, %v2296, %v1102
    %v2382 = vsel %vm2380, %v2297, %v1108
    %v2383 = vsel %vm2380, %v2298, %v1114
    %v2384 = vsel %vm2380, %v2299, %v1120
    %v2385 = vsel %vm2380, %v2300, %v1126
    %v2386 = vsel %vm2380, %v2301, %v1132
    %v2387 = vsel %vm2380, %v2302, %v1138
    %v2388 = vsel %vm2380, %v2303, %v1144
    %v2389 = vsel %vm2380, %v2304, %v1150
    %v2390 = vsel %vm2380, %v2305, %v1156
    %v2391 = vsel %vm2380, %v2306, %v1162
    %v2392 = vsel %vm2380, %v2307, %v1168
    %v2393 = vsel %vm2380, %v2308, %v1174
    %v2394 = vsel %vm2380, %v2309, %v1180
    %v2395 = vsel %vm2380, %v2310, %v1186
    %v2396 = vsel %vm2380, %v2311, %v1192
    %v2397 = vsel %vm2380, %v2312, %v1198
    %v2398 = vsel %vm2380, %v2313, %v1204
    %v2399 = vsel %vm2380, %v2314, %v1210
    %v2400 = vsel %vm2380, %v2315, %v1216
    %v2401 = vsel %vm2380, %v2316, %v1222
    %v2402 = vsel %vm2380, %v2317, %v1228
    %v2403 = vsel %vm2380, %v2318, %v1234
    %v2404 = vsel %vm2380, %v2319, %v1240
    %v2405 = vsel %vm2380, %v2320, %v1246
    %v2406 = vsel %vm2380, %v2321, %v1252
    %v2407 = vsel %vm2380, %v2322, %v1258
    %v2408 = vsel %vm2380, %v2323, %v1264
    %v2409 = vsel %vm2380, %v2324, %v1270
    %v2410 = vsel %vm2380, %v2325, %v1276
    %v2411 = vsel %vm2380, %v2326, %v1282
    %v2412 = vsel %vm2380, %v2327, %v1288
    %v2413 = vsel %vm2380, %v2328, %v1294
    %v2414 = vsel %vm2380, %v2329, %v1300
    %v2415 = vsel %vm2380, %v2330, %v1306
    %v2416 = vsel %vm2380, %v2331, %v1312
    %v2417 = vsel %vm2380, %v2332, %v1644
    %v2418 = vsel %vm2380, %v2333, %v1650
    %v2419 = vsel %vm2380, %v2334, %v1656
    %v2420 = vsel %vm2380, %v2335, %v1754
    %v2421 = vsel %vm2380, %v2336, %v1760
    %v2422 = vsel %vm2380, %v2337, %v1766
    %v2423 = vsel %vm2380, %v2338, %v1354
    %v2424 = vsel %vm2380, %v2339, %v1360
    %v2425 = vsel %vm2380, %v2340, %v1366
    %v2426 = vsel %vm2380, %v2341, %v1372
    %v2427 = vsel %vm2380, %v2342, %v1378
    %v2428 = vsel %vm2380, %v2343, %v1384
    %v2429 = vsel %vm2380, %v2344, %v1390
    %v2430 = vsel %vm2380, %v2345, %v1396
    %v2431 = vsel %vm2380, %v2346, %v1402
    %v2432 = vsel %vm2380, %v2347, %v1408
    %v2433 = vsel %vm2380, %v2348, %v1414
    %v2434 = vsel %vm2380, %v2349, %v1420
    %v2435 = vsel %vm2380, %v2350, %v1426
    %v2436 = vsel %vm2380, %v2351, %v1432
    %v2437 = vsel %vm2380, %v2352, %v1438
    %v2438 = vsel %vm2380, %v2353, %v1444
    %v2439 = vsel %vm2380, %v2354, %v1450
    %v2440 = vsel %vm2380, %v2355, %v1456
    %v2441 = vsel %vm2380, %v2356, %v1462
    %v2442 = vsel %vm2380, %v2357, %v1468
    %v2443 = vsel %vm2380, %v2358, %v1474
    %v2444 = vsel %vm2380, %v2359, %v1480
    %v2445 = vsel %vm2380, %v2360, %v1486
    %v2446 = vsel %vm2380, %v2361, %v1492
    %v2447 = vsel %vm2380, %v2362, %v1498
    %v2448 = vsel %vm2380, %v2363, %v1504
    %v2449 = vsel %vm2380, %v2364, %v1510
    %v2450 = vsel %vm2380, %v2365, %v1516
    %v2451 = vsel %vm2380, %v2366, %v1522
    %v2452 = vsel %vm2380, %v2367, %v1528
    %v2453 = vsel %vm2380, %v2368, %v1534
    %v2454 = vsel %vm2380, %v2369, %v1540
    %v2455 = vsel %vm2380, %v2370, %v1546
    %v2456 = vsel %vm2380, %v2371, %v1552
    %v2457 = vsel %vm2380, %v2372, %v1558
    %v2458 = vsel %vm2380, %v2373, %v1564
    %v2459 = vsel %vm2380, %v2374, %v1662
    %v2460 = vsel %vm2380, %v2375, %v1668
    %v2461 = vsel %vm2380, %v2376, %v1674
    %v2462 = vsel %vm2380, %v2377, %v1772
    %v2463 = vsel %vm2380, %v2378, %v1778
    %v2464 = vsel %vm2380, %v2379, %v1784
    %vm2465 = vcmask 72704
    %v2466 = vsel %vm2465, %v2381, 1.0
    %v2467 = vsel %vm2465, %v2382, 1.0
    %v2468 = vsel %vm2465, %v2383, 1.0
    %v2469 = vsel %vm2465, %v2384, 1.0
    %v2470 = vsel %vm2465, %v2385, 1.0
    %v2471 = vsel %vm2465, %v2386, 1.0
    %v2472 = vsel %vm2465, %v2387, 1.0
    %v2473 = vsel %vm2465, %v2388, 1.0
    %v2474 = vsel %vm2465, %v2389, 1.0
    %v2475 = vsel %vm2465, %v2390, 1.0
    %v2476 = vsel %vm2465, %v2391, 1.0
    %v2477 = vsel %vm2465, %v2392, 1.0
    %v2478 = vsel %vm2465, %v2393, 1.0
    %v2479 = vsel %vm2465, %v2394, 1.0
    %v2480 = vsel %vm2465, %v2395, 1.0
    %v2481 = vsel %vm2465, %v2396, 1.0
    %v2482 = vsel %vm2465, %v2397, 1.0
    %v2483 = vsel %vm2465, %v2398, 1.0
    %v2484 = vsel %vm2465, %v2399, 1.0
    %v2485 = vsel %vm2465, %v2400, 1.0
    %v2486 = vsel %vm2465, %v2401, 1.0
    %v2487 = vsel %vm2465, %v2402, 1.0
    %v2488 = vsel %vm2465, %v2403, 1.0
    %v2489 = vsel %vm2465, %v2404, 1.0
    %v2490 = vsel %vm2465, %v2405, 1.0
    %v2491 = vsel %vm2465, %v2406, 1.0
    %v2492 = vsel %vm2465, %v2407, 1.0
    %v2493 = vsel %vm2465, %v2408, 1.0
    %v2494 = vsel %vm2465, %v2409, 1.0
    %v2495 = vsel %vm2465, %v2410, 1.0
    %v2496 = vsel %vm2465, %v2411, 1.0
    %v2497 = vsel %vm2465, %v2412, 1.0
    %v2498 = vsel %vm2465, %v2413, 1.0
    %v2499 = vsel %vm2465, %v2414, 1.0
    %v2500 = vsel %vm2465, %v2415, 1.0
    %v2501 = vsel %vm2465, %v2416, 1.0
    %v2502 = vsel %vm2465, %v2417, 1.0
    %v2503 = vsel %vm2465, %v2418, 1.0
    %v2504 = vsel %vm2465, %v2419, 1.0
    %v2505 = vsel %vm2465, %v2420, 1.0
    %v2506 = vsel %vm2465, %v2421, 1.0
    %v2507 = vsel %vm2465, %v2422, 1.0
    %v2508 = vsel %vm2465, %v2423, 1.0
    %v2509 = vsel %vm2465, %v2424, 1.0
    %v2510 = vsel %vm2465, %v2425, 1.0
    %v2511 = vsel %vm2465, %v2426, 1.0
    %v2512 = vsel %vm2465, %v2427, 1.0
    %v2513 = vsel %vm2465, %v2428, 1.0
    %v2514 = vsel %vm2465, %v2429, 1.0
    %v2515 = vsel %vm2465, %v2430, 1.0
    %v2516 = vsel %vm2465, %v2431, 1.0
    %v2517 = vsel %vm2465, %v2432, 1.0
    %v2518 = vsel %vm2465, %v2433, 1.0
    %v2519 = vsel %vm2465, %v2434, 1.0
    %v2520 = vsel %vm2465, %v2435, 1.0
    %v2521 = vsel %vm2465, %v2436, 1.0
    %v2522 = vsel %vm2465, %v2437, 1.0
    %v2523 = vsel %vm2465, %v2438, 1.0
    %v2524 = vsel %vm2465, %v2439, 1.0
    %v2525 = vsel %vm2465, %v2440, 1.0
    %v2526 = vsel %vm2465, %v2441, 1.0
    %v2527 = vsel %vm2465, %v2442, 1.0
    %v2528 = vsel %vm2465, %v2443, 1.0
    %v2529 = vsel %vm2465, %v2444, 1.0
    %v2530 = vsel %vm2465, %v2445, 1.0
    %v2531 = vsel %vm2465, %v2446, 1.0
    %v2532 = vsel %vm2465, %v2447, 1.0
    %v2533 = vsel %vm2465, %v2448, 1.0
    %v2534 = vsel %vm2465, %v2449, 1.0
    %v2535 = vsel %vm2465, %v2450, 1.0
    %v2536 = vsel %vm2465, %v2451, 1.0
    %v2537 = vsel %vm2465, %v2452, 1.0
    %v2538 = vsel %vm2465, %v2453, 1.0
    %v2539 = vsel %vm2465, %v2454, 1.0
    %v2540 = vsel %vm2465, %v2455, 1.0
    %v2541 = vsel %vm2465, %v2456, 1.0
    %v2542 = vsel %vm2465, %v2457, 1.0
    %v2543 = vsel %vm2465, %v2458, 1.0
    %v2544 = vsel %vm2465, %v2459, 1.0
    %v2545 = vsel %vm2465, %v2460, 1.0
    %v2546 = vsel %vm2465, %v2461, 1.0
    %v2547 = vsel %vm2465, %v2462, 1.0
    %v2548 = vsel %vm2465, %v2463, 1.0
    %v2549 = vsel %vm2465, %v2464, 1.0
    %v2550 = vld [vmem:[%s1] sm:$0xff]
    %v2551 = vld [vmem:[%s1 + $0x8] sm:$0x3]
    %v2636 = vrot.slane %v2466, 4
    %v2637 = vrot.slane %v2467, 4
    %v2638 = vrot.slane %v2469, 4
    %v2639 = vrot.slane %v2470, 4
    %v2640 = vrot.slane %v2472, 4
    %v2641 = vrot.slane %v2473, 4
    %v2642 = vrot.slane %v2475, 4
    %v2643 = vrot.slane %v2476, 4
    %v2644 = vrot.slane %v2478, 4
    %v2645 = vrot.slane %v2479, 4
    %v2646 = vrot.slane %v2481, 4
    %v2647 = vrot.slane %v2482, 4
    %v2648 = vrot.slane %v2484, 4
    %v2649 = vrot.slane %v2485, 4
    %v2650 = vrot.slane %v2487, 4
    %v2651 = vrot.slane %v2488, 4
    %v2652 = vrot.slane %v2490, 4
    %v2653 = vrot.slane %v2491, 4
    %v2654 = vrot.slane %v2493, 4
    %v2655 = vrot.slane %v2494, 4
    %v2656 = vrot.slane %v2496, 4
    %v2657 = vrot.slane %v2497, 4
    %v2658 = vrot.slane %v2499, 4
    %v2659 = vrot.slane %v2500, 4
    %v2660 = vrot.slane %v2502, 4
    %v2661 = vrot.slane %v2503, 4
    %v2662 = vrot.slane %v2505, 4
    %v2663 = vrot.slane %v2506, 4
    %v2664 = vrot.slane %v2508, 4
    %v2665 = vrot.slane %v2509, 4
    %v2666 = vrot.slane %v2511, 4
    %v2667 = vrot.slane %v2512, 4
    %v2668 = vrot.slane %v2514, 4
    %v2669 = vrot.slane %v2515, 4
    %v2670 = vrot.slane %v2517, 4
    %v2671 = vrot.slane %v2518, 4
    %v2672 = vrot.slane %v2520, 4
    %v2673 = vrot.slane %v2521, 4
    %v2674 = vrot.slane %v2523, 4
    %v2675 = vrot.slane %v2524, 4
    %v2676 = vrot.slane %v2526, 4
    %v2677 = vrot.slane %v2527, 4
    %v2678 = vrot.slane %v2529, 4
    %v2679 = vrot.slane %v2530, 4
    %v2680 = vrot.slane %v2532, 4
    %v2681 = vrot.slane %v2533, 4
    %v2682 = vrot.slane %v2535, 4
    %v2683 = vrot.slane %v2536, 4
    %v2684 = vrot.slane %v2538, 4
    %v2685 = vrot.slane %v2539, 4
    %v2686 = vrot.slane %v2541, 4
    %v2687 = vrot.slane %v2542, 4
    %v2688 = vrot.slane %v2544, 4
    %v2689 = vrot.slane %v2545, 4
    %v2690 = vrot.slane %v2547, 4
    %v2691 = vrot.slane %v2548, 4
    %2692 = vst [vmem:[#allocation1] ss:$2 sm:$0xff] %v2466
    %s2693 = scalar_lea.vmem [#allocation1], 1
    %2694 = vst [vmem:[%s2693] ss:$2 sm:$0xff] %v2636
    %s2695 = scalar_lea.vmem [#allocation1], 16
    %2696 = vst [vmem:[%s2695] ss:$2 sm:$0xff] %v2467
    %s2697 = scalar_lea.vmem [#allocation1], 17
    %2698 = vst [vmem:[%s2697] ss:$2 sm:$0xff] %v2637
    %s2699 = scalar_lea.vmem [#allocation1], 32
    %2700 = vst [vmem:[%s2699] ss:$2 sm:$0xff] %v2468
    %s2701 = scalar_lea.vmem [#allocation1], 33
    %2702 = vst [vmem:[%s2701] ss:$2 sm:$0xff] %v2469
    %s2703 = scalar_lea.vmem [#allocation1], 48
    %2704 = vst [vmem:[%s2703] ss:$2 sm:$0xff] %v2638
    %s2705 = scalar_lea.vmem [#allocation1], 49
    %2706 = vst [vmem:[%s2705] ss:$2 sm:$0xff] %v2470
    %v2707 = vld.sshfl [vmem:[#allocation1] sm:$0xff pattern:$0x75316420]
    %v2708 = vld.sshfl [vmem:[#allocation1 + $0x10] sm:$0xff pattern:$0x75316420]
    %v2709 = vld.sshfl [vmem:[#allocation1 + $0x20] sm:$0xff pattern:$0x75316420]
    %v2710 = vld.sshfl [vmem:[#allocation1 + $0x30] sm:$0xff pattern:$0x75316420]
    %2711 = vst [vmem:[#allocation1] ss:$2 sm:$0xff] %v2639
    %2712 = vst [vmem:[%s2693] ss:$2 sm:$0xff] %v2471
    %2713 = vst [vmem:[%s2695] ss:$2 sm:$0xff] %v2472
    %2714 = vst [vmem:[%s2697] ss:$2 sm:$0xff] %v2640
    %2715 = vst [vmem:[%s2699] ss:$2 sm:$0xff] %v2473
    %2716 = vst [vmem:[%s2701] ss:$2 sm:$0xff] %v2641
    %2717 = vst [vmem:[%s2703] ss:$2 sm:$0xff] %v2474
    %2718 = vst [vmem:[%s2705] ss:$2 sm:$0xff] %v2475
    %v2719 = vld.sshfl [vmem:[#allocation1] sm:$0xff pattern:$0x75316420]
    %v2720 = vld.sshfl [vmem:[#allocation1 + $0x10] sm:$0xff pattern:$0x75316420]
    %v2721 = vld.sshfl [vmem:[#allocation1 + $0x20] sm:$0xff pattern:$0x75316420]
    %v2722 = vld.sshfl [vmem:[#allocation1 + $0x30] sm:$0xff pattern:$0x75316420]
    %2723 = vst [vmem:[#allocation1] ss:$2 sm:$0xff] %v2642
    %2724 = vst [vmem:[%s2693] ss:$2 sm:$0xff] %v2476
    %2725 = vst [vmem:[%s2695] ss:$2 sm:$0xff] %v2643
    %2726 = vst [vmem:[%s2697] ss:$2 sm:$0xff] %v2477
    %2727 = vst [vmem:[%s2699] ss:$2 sm:$0xff] %v2478
    %2728 = vst [vmem:[%s2701] ss:$2 sm:$0xff] %v2644
    %2729 = vst [vmem:[%s2703] ss:$2 sm:$0xff] %v2479
    %2730 = vst [vmem:[%s2705] ss:$2 sm:$0xff] %v2645
    %v2731 = vld.sshfl [vmem:[#allocation1] sm:$0xff pattern:$0x75316420]
    %v2732 = vld.sshfl [vmem:[#allocation1 + $0x10] sm:$0xff pattern:$0x75316420]
    %v2733 = vld.sshfl [vmem:[#allocation1 + $0x20] sm:$0xff pattern:$0x75316420]
    %v2734 = vld.sshfl [vmem:[#allocation1 + $0x30] sm:$0xff pattern:$0x75316420]
    %2735 = vst [vmem:[#allocation1] ss:$2 sm:$0xff] %v2480
    %2736 = vst [vmem:[%s2693] ss:$2 sm:$0xff] %v2481
    %2737 = vst [vmem:[%s2695] ss:$2 sm:$0xff] %v2646
    %2738 = vst [vmem:[%s2697] ss:$2 sm:$0xff] %v2482
    %2739 = vst [vmem:[%s2699] ss:$2 sm:$0xff] %v2647
    %2740 = vst [vmem:[%s2701] ss:$2 sm:$0xff] %v2483
    %2741 = vst [vmem:[%s2703] ss:$2 sm:$0xff] %v2484
    %2742 = vst [vmem:[%s2705] ss:$2 sm:$0xff] %v2648
    %v2743 = vld.sshfl [vmem:[#allocation1] sm:$0xff pattern:$0x75316420]
    %v2744 = vld.sshfl [vmem:[#allocation1 + $0x10] sm:$0xff pattern:$0x75316420]
    %v2745 = vld.sshfl [vmem:[#allocation1 + $0x20] sm:$0xff pattern:$0x75316420]
    %v2746 = vld.sshfl [vmem:[#allocation1 + $0x30] sm:$0xff pattern:$0x75316420]
    %2747 = vst [vmem:[#allocation1] ss:$2 sm:$0xff] %v2485
    %2748 = vst [vmem:[%s2693] ss:$2 sm:$0xff] %v2649
    %2749 = vst [vmem:[%s2695] ss:$2 sm:$0xff] %v2486
    %2750 = vst [vmem:[%s2697] ss:$2 sm:$0xff] %v2487
    %2751 = vst [vmem:[%s2699] ss:$2 sm:$0xff] %v2650
    %2752 = vst [vmem:[%s2701] ss:$2 sm:$0xff] %v2488
    %2753 = vst [vmem:[%s2703] ss:$2 sm:$0xff] %v2651
    %2754 = vst [vmem:[%s2705] ss:$2 sm:$0xff] %v2489
    %v2755 = vld.sshfl [vmem:[#allocation1] sm:$0xff pattern:$0x75316420]
    %v2756 = vld.sshfl [vmem:[#allocation1 + $0x10] sm:$0xff pattern:$0x75316420]
    %v2757 = vld.sshfl [vmem:[#allocation1 + $0x20] sm:$0xff pattern:$0x75316420]
    %v2758 = vld.sshfl [vmem:[#allocation1 + $0x30] sm:$0xff pattern:$0x75316420]
    %2759 = vst [vmem:[#allocation1] ss:$2 sm:$0xff] %v2490
    %2760 = vst [vmem:[%s2693] ss:$2 sm:$0xff] %v2652
    %2761 = vst [vmem:[%s2695] ss:$2 sm:$0xff] %v2491
    %2762 = vst [vmem:[%s2697] ss:$2 sm:$0xff] %v2653
    %2763 = vst [vmem:[%s2699] ss:$2 sm:$0xff] %v2492
    %2764 = vst [vmem:[%s2701] ss:$2 sm:$0xff] %v2493
    %2765 = vst [vmem:[%s2703] ss:$2 sm:$0xff] %v2654
    %2766 = vst [vmem:[%s2705] ss:$2 sm:$0xff] %v2494
    %v2767 = vld.sshfl [vmem:[#allocation1] sm:$0xff pattern:$0x75316420]
    %v2768 = vld.sshfl [vmem:[#allocation1 + $0x10] sm:$0xff pattern:$0x75316420]
    %v2769 = vld.sshfl [vmem:[#allocation1 + $0x20] sm:$0xff pattern:$0x75316420]
    %v2770 = vld.sshfl [vmem:[#allocation1 + $0x30] sm:$0xff pattern:$0x75316420]
    %2771 = vst [vmem:[#allocation1] ss:$2 sm:$0xff] %v2655
    %2772 = vst [vmem:[%s2693] ss:$2 sm:$0xff] %v2495
    %2773 = vst [vmem:[%s2695] ss:$2 sm:$0xff] %v2496
    %2774 = vst [vmem:[%s2697] ss:$2 sm:$0xff] %v2656
    %2775 = vst [vmem:[%s2699] ss:$2 sm:$0xff] %v2497
    %2776 = vst [vmem:[%s2701] ss:$2 sm:$0xff] %v2657
    %2777 = vst [vmem:[%s2703] ss:$2 sm:$0xff] %v2498
    %2778 = vst [vmem:[%s2705] ss:$2 sm:$0xff] %v2499
    %v2779 = vld.sshfl [vmem:[#allocation1] sm:$0xff pattern:$0x75316420]
    %v2780 = vld.sshfl [vmem:[#allocation1 + $0x10] sm:$0xff pattern:$0x75316420]
    %v2781 = vld.sshfl [vmem:[#allocation1 + $0x20] sm:$0xff pattern:$0x75316420]
    %v2782 = vld.sshfl [vmem:[#allocation1 + $0x30] sm:$0xff pattern:$0x75316420]
    %2783 = vst [vmem:[#allocation1] ss:$2 sm:$0xff] %v2658
    %2784 = vst [vmem:[%s2693] ss:$2 sm:$0xff] %v2500
    %2785 = vst [vmem:[%s2695] ss:$2 sm:$0xff] %v2659
    %2786 = vst [vmem:[%s2697] ss:$2 sm:$0xff] %v2501
    %2787 = vst [vmem:[%s2699] ss:$2 sm:$0xff] %v2502
    %2788 = vst [vmem:[%s2701] ss:$2 sm:$0xff] %v2660
    %2789 = vst [vmem:[%s2703] ss:$2 sm:$0xff] %v2503
    %2790 = vst [vmem:[%s2705] ss:$2 sm:$0xff] %v2661
    %v2791 = vld.sshfl [vmem:[#allocation1] sm:$0xff pattern:$0x75316420]
    %v2792 = vld.sshfl [vmem:[#allocation1 + $0x10] sm:$0xff pattern:$0x75316420]
    %v2793 = vld.sshfl [vmem:[#allocation1 + $0x20] sm:$0xff pattern:$0x75316420]
    %v2794 = vld.sshfl [vmem:[#allocation1 + $0x30] sm:$0xff pattern:$0x75316420]
    %2795 = vst [vmem:[#allocation1] ss:$2 sm:$0xff] %v2504
    %2796 = vst [vmem:[%s2693] ss:$2 sm:$0xff] %v2505
    %2797 = vst [vmem:[%s2695] ss:$2 sm:$0xff] %v2662
    %2798 = vst [vmem:[%s2697] ss:$2 sm:$0xff] %v2506
    %2799 = vst [vmem:[%s2699] ss:$2 sm:$0xff] %v2663
    %2800 = vst [vmem:[%s2701] ss:$2 sm:$0xff] %v2507
    %2801 = vst [vmem:[%s2703] ss:$2 sm:$0xff] %v2508
    %2802 = vst [vmem:[%s2705] ss:$2 sm:$0xff] %v2664
    %v2803 = vld.sshfl [vmem:[#allocation1] sm:$0xff pattern:$0x75316420]
    %v2804 = vld.sshfl [vmem:[#allocation1 + $0x10] sm:$0xff pattern:$0x75316420]
    %v2805 = vld.sshfl [vmem:[#allocation1 + $0x20] sm:$0xff pattern:$0x75316420]
    %v2806 = vld.sshfl [vmem:[#allocation1 + $0x30] sm:$0xff pattern:$0x75316420]
    %2807 = vst [vmem:[#allocation1] ss:$2 sm:$0xff] %v2509
    %2808 = vst [vmem:[%s2693] ss:$2 sm:$0xff] %v2665
    %2809 = vst [vmem:[%s2695] ss:$2 sm:$0xff] %v2510
    %2810 = vst [vmem:[%s2697] ss:$2 sm:$0xff] %v2511
    %2811 = vst [vmem:[%s2699] ss:$2 sm:$0xff] %v2666
    %2812 = vst [vmem:[%s2701] ss:$2 sm:$0xff] %v2512
    %2813 = vst [vmem:[%s2703] ss:$2 sm:$0xff] %v2667
    %2814 = vst [vmem:[%s2705] ss:$2 sm:$0xff] %v2513
    %v2815 = vld.sshfl [vmem:[#allocation1] sm:$0xff pattern:$0x75316420]
    %v2816 = vld.sshfl [vmem:[#allocation1 + $0x10] sm:$0xff pattern:$0x75316420]
    %v2817 = vld.sshfl [vmem:[#allocation1 + $0x20] sm:$0xff pattern:$0x75316420]
    %v2818 = vld.sshfl [vmem:[#allocation1 + $0x30] sm:$0xff pattern:$0x75316420]
    %2819 = vst [vmem:[#allocation1] ss:$2 sm:$0xff] %v2514
    %2820 = vst [vmem:[%s2693] ss:$2 sm:$0xff] %v2668
    %2821 = vst [vmem:[%s2695] ss:$2 sm:$0xff] %v2515
    %2822 = vst [vmem:[%s2697] ss:$2 sm:$0xff] %v2669
    %2823 = vst [vmem:[%s2699] ss:$2 sm:$0xff] %v2516
    %2824 = vst [vmem:[%s2701] ss:$2 sm:$0xff] %v2517
    %2825 = vst [vmem:[%s2703] ss:$2 sm:$0xff] %v2670
    %2826 = vst [vmem:[%s2705] ss:$2 sm:$0xff] %v2518
    %v2827 = vld.sshfl [vmem:[#allocation1] sm:$0xff pattern:$0x75316420]
    %v2828 = vld.sshfl [vmem:[#allocation1 + $0x10] sm:$0xff pattern:$0x75316420]
    %v2829 = vld.sshfl [vmem:[#allocation1 + $0x20] sm:$0xff pattern:$0x75316420]
    %v2830 = vld.sshfl [vmem:[#allocation1 + $0x30] sm:$0xff pattern:$0x75316420]
    %2831 = vst [vmem:[#allocation1] ss:$2 sm:$0xff] %v2671
    %2832 = vst [vmem:[%s2693] ss:$2 sm:$0xff] %v2519
    %2833 = vst [vmem:[%s2695] ss:$2 sm:$0xff] %v2520
    %2834 = vst [vmem:[%s2697] ss:$2 sm:$0xff] %v2672
    %2835 = vst [vmem:[%s2699] ss:$2 sm:$0xff] %v2521
    %2836 = vst [vmem:[%s2701] ss:$2 sm:$0xff] %v2673
    %2837 = vst [vmem:[%s2703] ss:$2 sm:$0xff] %v2522
    %2838 = vst [vmem:[%s2705] ss:$2 sm:$0xff] %v2523
    %v2839 = vld.sshfl [vmem:[#allocation1] sm:$0xff pattern:$0x75316420]
    %v2840 = vld.sshfl [vmem:[#allocation1 + $0x10] sm:$0xff pattern:$0x75316420]
    %v2841 = vld.sshfl [vmem:[#allocation1 + $0x20] sm:$0xff pattern:$0x75316420]
    %v2842 = vld.sshfl [vmem:[#allocation1 + $0x30] sm:$0xff pattern:$0x75316420]
    %2843 = vst [vmem:[#allocation1] ss:$2 sm:$0xff] %v2674
    %2844 = vst [vmem:[%s2693] ss:$2 sm:$0xff] %v2524
    %2845 = vst [vmem:[%s2695] ss:$2 sm:$0xff] %v2675
    %2846 = vst [vmem:[%s2697] ss:$2 sm:$0xff] %v2525
    %2847 = vst [vmem:[%s2699] ss:$2 sm:$0xff] %v2526
    %2848 = vst [vmem:[%s2701] ss:$2 sm:$0xff] %v2676
    %2849 = vst [vmem:[%s2703] ss:$2 sm:$0xff] %v2527
    %2850 = vst [vmem:[%s2705] ss:$2 sm:$0xff] %v2677
    %v2851 = vld.sshfl [vmem:[#allocation1] sm:$0xff pattern:$0x75316420]
    %v2852 = vld.sshfl [vmem:[#allocation1 + $0x10] sm:$0xff pattern:$0x75316420]
    %v2853 = vld.sshfl [vmem:[#allocation1 + $0x20] sm:$0xff pattern:$0x75316420]
    %v2854 = vld.sshfl [vmem:[#allocation1 + $0x30] sm:$0xff pattern:$0x75316420]
    %2855 = vst [vmem:[#allocation1] ss:$2 sm:$0xff] %v2528
    %2856 = vst [vmem:[%s2693] ss:$2 sm:$0xff] %v2529
    %2857 = vst [vmem:[%s2695] ss:$2 sm:$0xff] %v2678
    %2858 = vst [vmem:[%s2697] ss:$2 sm:$0xff] %v2530
    %2859 = vst [vmem:[%s2699] ss:$2 sm:$0xff] %v2679
    %2860 = vst [vmem:[%s2701] ss:$2 sm:$0xff] %v2531
    %2861 = vst [vmem:[%s2703] ss:$2 sm:$0xff] %v2532
    %2862 = vst [vmem:[%s2705] ss:$2 sm:$0xff] %v2680
    %v2863 = vld.sshfl [vmem:[#allocation1] sm:$0xff pattern:$0x75316420]
    %v2864 = vld.sshfl [vmem:[#allocation1 + $0x10] sm:$0xff pattern:$0x75316420]
    %v2865 = vld.sshfl [vmem:[#allocation1 + $0x20] sm:$0xff pattern:$0x75316420]
    %v2866 = vld.sshfl [vmem:[#allocation1 + $0x30] sm:$0xff pattern:$0x75316420]
    %2867 = vst [vmem:[#allocation1] ss:$2 sm:$0xff] %v2533
    %2868 = vst [vmem:[%s2693] ss:$2 sm:$0xff] %v2681
    %2869 = vst [vmem:[%s2695] ss:$2 sm:$0xff] %v2534
    %2870 = vst [vmem:[%s2697] ss:$2 sm:$0xff] %v2535
    %2871 = vst [vmem:[%s2699] ss:$2 sm:$0xff] %v2682
    %2872 = vst [vmem:[%s2701] ss:$2 sm:$0xff] %v2536
    %2873 = vst [vmem:[%s2703] ss:$2 sm:$0xff] %v2683
    %2874 = vst [vmem:[%s2705] ss:$2 sm:$0xff] %v2537
    %v2875 = vld.sshfl [vmem:[#allocation1] sm:$0xff pattern:$0x75316420]
    %v2876 = vld.sshfl [vmem:[#allocation1 + $0x10] sm:$0xff pattern:$0x75316420]
    %v2877 = vld.sshfl [vmem:[#allocation1 + $0x20] sm:$0xff pattern:$0x75316420]
    %v2878 = vld.sshfl [vmem:[#allocation1 + $0x30] sm:$0xff pattern:$0x75316420]
    %2879 = vst [vmem:[#allocation1] ss:$2 sm:$0xff] %v2538
    %2880 = vst [vmem:[%s2693] ss:$2 sm:$0xff] %v2684
    %2881 = vst [vmem:[%s2695] ss:$2 sm:$0xff] %v2539
    %2882 = vst [vmem:[%s2697] ss:$2 sm:$0xff] %v2685
    %2883 = vst [vmem:[%s2699] ss:$2 sm:$0xff] %v2540
    %2884 = vst [vmem:[%s2701] ss:$2 sm:$0xff] %v2541
    %2885 = vst [vmem:[%s2703] ss:$2 sm:$0xff] %v2686
    %2886 = vst [vmem:[%s2705] ss:$2 sm:$0xff] %v2542
    %v2887 = vld.sshfl [vmem:[#allocation1] sm:$0xff pattern:$0x75316420]
    %v2888 = vld.sshfl [vmem:[#allocation1 + $0x10] sm:$0xff pattern:$0x75316420]
    %v2889 = vld.sshfl [vmem:[#allocation1 + $0x20] sm:$0xff pattern:$0x75316420]
    %v2890 = vld.sshfl [vmem:[#allocation1 + $0x30] sm:$0xff pattern:$0x75316420]
    %2891 = vst [vmem:[#allocation1] ss:$2 sm:$0xff] %v2687
    %2892 = vst [vmem:[%s2693] ss:$2 sm:$0xff] %v2543
    %2893 = vst [vmem:[%s2695] ss:$2 sm:$0xff] %v2544
    %2894 = vst [vmem:[%s2697] ss:$2 sm:$0xff] %v2688
    %2895 = vst [vmem:[%s2699] ss:$2 sm:$0xff] %v2545
    %2896 = vst [vmem:[%s2701] ss:$2 sm:$0xff] %v2689
    %2897 = vst [vmem:[%s2703] ss:$2 sm:$0xff] %v2546
    %2898 = vst [vmem:[%s2705] ss:$2 sm:$0xff] %v2547
    %v2899 = vld.sshfl [vmem:[#allocation1] sm:$0xff pattern:$0x75316420]
    %v2900 = vld.sshfl [vmem:[#allocation1 + $0x10] sm:$0xff pattern:$0x75316420]
    %v2901 = vld.sshfl [vmem:[#allocation1 + $0x20] sm:$0xff pattern:$0x75316420]
    %v2902 = vld.sshfl [vmem:[#allocation1 + $0x30] sm:$0xff pattern:$0x75316420]
    %2903 = vst [vmem:[#allocation1] ss:$2 sm:$0xff] %v2690
    %2904 = vst [vmem:[%s2693] ss:$2 sm:$0xff] %v2548
    %2905 = vst [vmem:[%s2695] ss:$2 sm:$0xff] %v2691
    %2906 = vst [vmem:[%s2697] ss:$2 sm:$0xff] %v2549
    %v2907 = vld.sshfl [vmem:[#allocation1] sm:$0xff pattern:$0x75316420]
    %v2908 = vld.sshfl [vmem:[#allocation1 + $0x10] sm:$0xff pattern:$0x75316420]
    %vm2909 = vcmask 80896
    %v2910 = vsel %vm2909, %v2707, 0
    %v2912 = vsel %vm2909, %v2708, 0
    %v2914 = vsel %vm2909, %v2709, 0
    %v2916 = vsel %vm2909, %v2710, 0
    %v2918 = vsel %vm2909, %v2719, 0
    %v2920 = vsel %vm2909, %v2720, 0
    %v2922 = vsel %vm2909, %v2721, 0
    %v2924 = vsel %vm2909, %v2722, 0
    %v2926 = vsel %vm2909, %v2731, 0
    %v2928 = vsel %vm2909, %v2732, 0
    %v2930 = vsel %vm2909, %v2733, 0
    %v2932 = vsel %vm2909, %v2734, 0
    %v2934 = vsel %vm2909, %v2743, 0
    %v2936 = vsel %vm2909, %v2744, 0
    %v2938 = vsel %vm2909, %v2745, 0
    %v2940 = vsel %vm2909, %v2746, 0
    %v2942 = vsel %vm2909, %v2755, 0
    %v2944 = vsel %vm2909, %v2756, 0
    %v2946 = vsel %vm2909, %v2757, 0
    %v2948 = vsel %vm2909, %v2758, 0
    %v2950 = vsel %vm2909, %v2767, 0
    %v2952 = vsel %vm2909, %v2768, 0
    %v2954 = vsel %vm2909, %v2769, 0
    %v2956 = vsel %vm2909, %v2770, 0
    %v2958 = vsel %vm2909, %v2779, 0
    %v2960 = vsel %vm2909, %v2780, 0
    %v2962 = vsel %vm2909, %v2781, 0
    %v2964 = vsel %vm2909, %v2782, 0
    %v2966 = vsel %vm2909, %v2791, 0
    %v2968 = vsel %vm2909, %v2792, 0
    %v2970 = vsel %vm2909, %v2793, 0
    %v2972 = vsel %vm2909, %v2794, 0
    %v2974 = vsel %vm2909, %v2803, 0
    %v2976 = vsel %vm2909, %v2804, 0
    %v2978 = vsel %vm2909, %v2805, 0
    %v2980 = vsel %vm2909, %v2806, 0
    %v2982 = vsel %vm2909, %v2815, 0
    %v2984 = vsel %vm2909, %v2816, 0
    %v2986 = vsel %vm2909, %v2817, 0
    %v2988 = vsel %vm2909, %v2818, 0
    %v2990 = vsel %vm2909, %v2827, 0
    %v2992 = vsel %vm2909, %v2828, 0
    %v2994 = vsel %vm2909, %v2829, 0
    %v2996 = vsel %vm2909, %v2830, 0
    %v2998 = vsel %vm2909, %v2839, 0
    %v3000 = vsel %vm2909, %v2840, 0
    %v3002 = vsel %vm2909, %v2841, 0
    %v3004 = vsel %vm2909, %v2842, 0
    %v3006 = vsel %vm2909, %v2851, 0
    %v3008 = vsel %vm2909, %v2852, 0
    %v3010 = vsel %vm2909, %v2853, 0
    %v3012 = vsel %vm2909, %v2854, 0
    %v3014 = vsel %vm2909, %v2863, 0
    %v3016 = vsel %vm2909, %v2864, 0
    %v3018 = vsel %vm2909, %v2865, 0
    %v3020 = vsel %vm2909, %v2866, 0
    %v3022 = vsel %vm2909, %v2875, 0
    %v3024 = vsel %vm2909, %v2876, 0
    %v3026 = vsel %vm2909, %v2877, 0
    %v3028 = vsel %vm2909, %v2878, 0
    %v3030 = vsel %vm2909, %v2887, 0
    %v3032 = vsel %vm2909, %v2888, 0
    %v3034 = vsel %vm2909, %v2889, 0
    %v3036 = vsel %vm2909, %v2890, 0
    %v3038 = vsel %vm2909, %v2899, 0
    %v3040 = vsel %vm2909, %v2900, 0
    %v3042 = vsel %vm2909, %v2901, 0
    %v3044 = vsel %vm2909, %v2902, 0
    %v3046 = vsel %vm2909, %v2907, 0
    %v3048 = vsel %vm2909, %v2908, 0
    %vm3050 = vcmask 1041408
    %v3052 = vsel %vm3050, %v2551, 0
    %3054 = vmatpush.msra.mxu0 0.0
    %3055 = vmatpush.msra.mxu0 0.0
    %3056 = vmatpush.msra.mxu0 0.0
    %3057 = vmatpush.msra.mxu0 0.0
    %3058 = vmatpush.msra.mxu0 0.0
    %3059 = vmatpush.msra.mxu0 0.0
    %3060 = vmatpush.msra.mxu0 0.0
    %3061 = vmatpush.msra.mxu0 0.0
    %3062 = vmatpush.msra.mxu0 0.0
    %3063 = vmatpush.msra.mxu0 0.0
    %3064 = vmatpush.msra.mxu0 0.0
    %3065 = vmatpush.msra.mxu0 0.0
    %3066 = vmatpush.msra.mxu0 0.0
    %3067 = vmatpush.msra.mxu0 0.0
    %3068 = vmatpush.msra.mxu0 %v3052
    %3069 = vmatpush.msra.mxu0 %v2550
    %3070 = vmatmul.f32.gmra.mxu0 %v2910
    %v3071 = vpop.f32.mrf.mxu0
    %v3072 = vadd.f32 0.0, %v3071
    %3073 = vmatmul.f32.gmra.mxu0 %v2912
    %v3074 = vpop.f32.mrf.mxu0
    %v3075 = vadd.f32 0.0, %v3074
    %3076 = vmatmul.f32.gmra.mxu0 %v2914
    %v3077 = vpop.f32.mrf.mxu0
    %v3078 = vadd.f32 0.0, %v3077
    %3079 = vmatmul.f32.gmra.mxu0 %v2916
    %v3080 = vpop.f32.mrf.mxu0
    %v3081 = vadd.f32 0.0, %v3080
    %3082 = vmatmul.f32.gmra.mxu0 %v2918
    %v3083 = vpop.f32.mrf.mxu0
    %v3084 = vadd.f32 0.0, %v3083
    %3085 = vmatmul.f32.gmra.mxu0 %v2920
    %v3086 = vpop.f32.mrf.mxu0
    %v3087 = vadd.f32 0.0, %v3086
    %3088 = vmatmul.f32.gmra.mxu0 %v2922
    %v3089 = vpop.f32.mrf.mxu0
    %v3090 = vadd.f32 0.0, %v3089
    %3091 = vmatmul.f32.gmra.mxu0 %v2924
    %v3092 = vpop.f32.mrf.mxu0
    %v3093 = vadd.f32 0.0, %v3092
    %3094 = vmatmul.f32.gmra.mxu0 %v2926
    %v3095 = vpop.f32.mrf.mxu0
    %v3096 = vadd.f32 0.0, %v3095
    %3097 = vmatmul.f32.gmra.mxu0 %v2928
    %v3098 = vpop.f32.mrf.mxu0
    %v3099 = vadd.f32 0.0, %v3098
    %3100 = vmatmul.f32.gmra.mxu0 %v2930
    %v3101 = vpop.f32.mrf.mxu0
    %v3102 = vadd.f32 0.0, %v3101
    %3103 = vmatmul.f32.gmra.mxu0 %v2932
    %v3104 = vpop.f32.mrf.mxu0
    %v3105 = vadd.f32 0.0, %v3104
    %3106 = vmatmul.f32.gmra.mxu0 %v2934
    %v3107 = vpop.f32.mrf.mxu0
    %v3108 = vadd.f32 0.0, %v3107
    %3109 = vmatmul.f32.gmra.mxu0 %v2936
    %v3110 = vpop.f32.mrf.mxu0
    %v3111 = vadd.f32 0.0, %v3110
    %3112 = vmatmul.f32.gmra.mxu0 %v2938
    %v3113 = vpop.f32.mrf.mxu0
    %v3114 = vadd.f32 0.0, %v3113
    %3115 = vmatmul.f32.gmra.mxu0 %v2940
    %v3116 = vpop.f32.mrf.mxu0
    %v3117 = vadd.f32 0.0, %v3116
    %3118 = vmatmul.f32.gmra.mxu0 %v2942
    %v3119 = vpop.f32.mrf.mxu0
    %v3120 = vadd.f32 0.0, %v3119
    %3121 = vmatmul.f32.gmra.mxu0 %v2944
    %v3122 = vpop.f32.mrf.mxu0
    %v3123 = vadd.f32 0.0, %v3122
    %3124 = vmatmul.f32.gmra.mxu0 %v2946
    %v3125 = vpop.f32.mrf.mxu0
    %v3126 = vadd.f32 0.0, %v3125
    %3127 = vmatmul.f32.gmra.mxu0 %v2948
    %v3128 = vpop.f32.mrf.mxu0
    %v3129 = vadd.f32 0.0, %v3128
    %3130 = vmatmul.f32.gmra.mxu0 %v2950
    %v3131 = vpop.f32.mrf.mxu0
    %v3132 = vadd.f32 0.0, %v3131
    %3133 = vmatmul.f32.gmra.mxu0 %v2952
    %v3134 = vpop.f32.mrf.mxu0
    %v3135 = vadd.f32 0.0, %v3134
    %3136 = vmatmul.f32.gmra.mxu0 %v2954
    %v3137 = vpop.f32.mrf.mxu0
    %v3138 = vadd.f32 0.0, %v3137
    %3139 = vmatmul.f32.gmra.mxu0 %v2956
    %v3140 = vpop.f32.mrf.mxu0
    %v3141 = vadd.f32 0.0, %v3140
    %3142 = vmatmul.f32.gmra.mxu0 %v2958
    %v3143 = vpop.f32.mrf.mxu0
    %v3144 = vadd.f32 0.0, %v3143
    %3145 = vmatmul.f32.gmra.mxu0 %v2960
    %v3146 = vpop.f32.mrf.mxu0
    %v3147 = vadd.f32 0.0, %v3146
    %3148 = vmatmul.f32.gmra.mxu0 %v2962
    %v3149 = vpop.f32.mrf.mxu0
    %v3150 = vadd.f32 0.0, %v3149
    %3151 = vmatmul.f32.gmra.mxu0 %v2964
    %v3152 = vpop.f32.mrf.mxu0
    %v3153 = vadd.f32 0.0, %v3152
    %3154 = vmatmul.f32.gmra.mxu0 %v2966
    %v3155 = vpop.f32.mrf.mxu0
    %v3156 = vadd.f32 0.0, %v3155
    %3157 = vmatmul.f32.gmra.mxu0 %v2968
    %v3158 = vpop.f32.mrf.mxu0
    %v3159 = vadd.f32 0.0, %v3158
    %3160 = vmatmul.f32.gmra.mxu0 %v2970
    %v3161 = vpop.f32.mrf.mxu0
    %v3162 = vadd.f32 0.0, %v3161
    %3163 = vmatmul.f32.gmra.mxu0 %v2972
    %v3164 = vpop.f32.mrf.mxu0
    %v3165 = vadd.f32 0.0, %v3164
    %3166 = vmatmul.f32.gmra.mxu0 %v2974
    %v3167 = vpop.f32.mrf.mxu0
    %v3168 = vadd.f32 0.0, %v3167
    %3169 = vmatmul.f32.gmra.mxu0 %v2976
    %v3170 = vpop.f32.mrf.mxu0
    %v3171 = vadd.f32 0.0, %v3170
    %3172 = vmatmul.f32.gmra.mxu0 %v2978
    %v3173 = vpop.f32.mrf.mxu0
    %v3174 = vadd.f32 0.0, %v3173
    %3175 = vmatmul.f32.gmra.mxu0 %v2980
    %v3176 = vpop.f32.mrf.mxu0
    %v3177 = vadd.f32 0.0, %v3176
    %3178 = vmatmul.f32.gmra.mxu0 %v2982
    %v3179 = vpop.f32.mrf.mxu0
    %v3180 = vadd.f32 0.0, %v3179
    %3181 = vmatmul.f32.gmra.mxu0 %v2984
    %v3182 = vpop.f32.mrf.mxu0
    %v3183 = vadd.f32 0.0, %v3182
    %3184 = vmatmul.f32.gmra.mxu0 %v2986
    %v3185 = vpop.f32.mrf.mxu0
    %v3186 = vadd.f32 0.0, %v3185
    %3187 = vmatmul.f32.gmra.mxu0 %v2988
    %v3188 = vpop.f32.mrf.mxu0
    %v3189 = vadd.f32 0.0, %v3188
    %3190 = vmatmul.f32.gmra.mxu0 %v2990
    %v3191 = vpop.f32.mrf.mxu0
    %v3192 = vadd.f32 0.0, %v3191
    %3193 = vmatmul.f32.gmra.mxu0 %v2992
    %v3194 = vpop.f32.mrf.mxu0
    %v3195 = vadd.f32 0.0, %v3194
    %3196 = vmatmul.f32.gmra.mxu0 %v2994
    %v3197 = vpop.f32.mrf.mxu0
    %v3198 = vadd.f32 0.0, %v3197
    %3199 = vmatmul.f32.gmra.mxu0 %v2996
    %v3200 = vpop.f32.mrf.mxu0
    %v3201 = vadd.f32 0.0, %v3200
    %3202 = vmatmul.f32.gmra.mxu0 %v2998
    %v3203 = vpop.f32.mrf.mxu0
    %v3204 = vadd.f32 0.0, %v3203
    %3205 = vmatmul.f32.gmra.mxu0 %v3000
    %v3206 = vpop.f32.mrf.mxu0
    %v3207 = vadd.f32 0.0, %v3206
    %3208 = vmatmul.f32.gmra.mxu0 %v3002
    %v3209 = vpop.f32.mrf.mxu0
    %v3210 = vadd.f32 0.0, %v3209
    %3211 = vmatmul.f32.gmra.mxu0 %v3004
    %v3212 = vpop.f32.mrf.mxu0
    %v3213 = vadd.f32 0.0, %v3212
    %3214 = vmatmul.f32.gmra.mxu0 %v3006
    %v3215 = vpop.f32.mrf.mxu0
    %v3216 = vadd.f32 0.0, %v3215
    %3217 = vmatmul.f32.gmra.mxu0 %v3008
    %v3218 = vpop.f32.mrf.mxu0
    %v3219 = vadd.f32 0.0, %v3218
    %3220 = vmatmul.f32.gmra.mxu0 %v3010
    %v3221 = vpop.f32.mrf.mxu0
    %v3222 = vadd.f32 0.0, %v3221
    %3223 = vmatmul.f32.gmra.mxu0 %v3012
    %v3224 = vpop.f32.mrf.mxu0
    %v3225 = vadd.f32 0.0, %v3224
    %3226 = vmatmul.f32.gmra.mxu0 %v3014
    %v3227 = vpop.f32.mrf.mxu0
    %v3228 = vadd.f32 0.0, %v3227
    %3229 = vmatmul.f32.gmra.mxu0 %v3016
    %v3230 = vpop.f32.mrf.mxu0
    %v3231 = vadd.f32 0.0, %v3230
    %3232 = vmatmul.f32.gmra.mxu0 %v3018
    %v3233 = vpop.f32.mrf.mxu0
    %v3234 = vadd.f32 0.0, %v3233
    %3235 = vmatmul.f32.gmra.mxu0 %v3020
    %v3236 = vpop.f32.mrf.mxu0
    %v3237 = vadd.f32 0.0, %v3236
    %3238 = vmatmul.f32.gmra.mxu0 %v3022
    %v3239 = vpop.f32.mrf.mxu0
    %v3240 = vadd.f32 0.0, %v3239
    %3241 = vmatmul.f32.gmra.mxu0 %v3024
    %v3242 = vpop.f32.mrf.mxu0
    %v3243 = vadd.f32 0.0, %v3242
    %3244 = vmatmul.f32.gmra.mxu0 %v3026
    %v3245 = vpop.f32.mrf.mxu0
    %v3246 = vadd.f32 0.0, %v3245
    %3247 = vmatmul.f32.gmra.mxu0 %v3028
    %v3248 = vpop.f32.mrf.mxu0
    %v3249 = vadd.f32 0.0, %v3248
    %3250 = vmatmul.f32.gmra.mxu0 %v3030
    %v3251 = vpop.f32.mrf.mxu0
    %v3252 = vadd.f32 0.0, %v3251
    %3253 = vmatmul.f32.gmra.mxu0 %v3032
    %v3254 = vpop.f32.mrf.mxu0
    %v3255 = vadd.f32 0.0, %v3254
    %3256 = vmatmul.f32.gmra.mxu0 %v3034
    %v3257 = vpop.f32.mrf.mxu0
    %v3258 = vadd.f32 0.0, %v3257
    %3259 = vmatmul.f32.gmra.mxu0 %v3036
    %v3260 = vpop.f32.mrf.mxu0
    %v3261 = vadd.f32 0.0, %v3260
    %3262 = vmatmul.f32.gmra.mxu0 %v3038
    %v3263 = vpop.f32.mrf.mxu0
    %v3264 = vadd.f32 0.0, %v3263
    %3265 = vmatmul.f32.gmra.mxu0 %v3040
    %v3266 = vpop.f32.mrf.mxu0
    %v3267 = vadd.f32 0.0, %v3266
    %3268 = vmatmul.f32.gmra.mxu0 %v3042
    %v3269 = vpop.f32.mrf.mxu0
    %v3270 = vadd.f32 0.0, %v3269
    %3271 = vmatmul.f32.gmra.mxu0 %v3044
    %v3272 = vpop.f32.mrf.mxu0
    %v3273 = vadd.f32 0.0, %v3272
    %3274 = vmatmul.f32.gmra.mxu0 %v3046
    %v3275 = vpop.f32.mrf.mxu0
    %v3276 = vadd.f32 0.0, %v3275
    %3277 = vmatmul.f32.gmra.mxu0 %v3048
    %v3278 = vpop.f32.mrf.mxu0
    %v3279 = vadd.f32 0.0, %v3278
    %3280 = vdwg.mxu0
    %v3351 = vrot.slane %v3072, 4
    %v3352 = vrot.slane %v3075, 4
    %v3353 = vrot.slane %v3078, 4
    %v3354 = vrot.slane %v3081, 4
    %v3355 = vrot.slane %v3084, 4
    %v3356 = vrot.slane %v3087, 4
    %v3357 = vrot.slane %v3090, 4
    %v3358 = vrot.slane %v3093, 4
    %v3359 = vrot.slane %v3096, 4
    %v3360 = vrot.slane %v3099, 4
    %v3361 = vrot.slane %v3102, 4
    %v3362 = vrot.slane %v3105, 4
    %v3363 = vrot.slane %v3108, 4
    %v3364 = vrot.slane %v3111, 4
    %v3365 = vrot.slane %v3114, 4
    %v3366 = vrot.slane %v3117, 4
    %v3367 = vrot.slane %v3120, 4
    %v3368 = vrot.slane %v3123, 4
    %v3369 = vrot.slane %v3126, 4
    %v3370 = vrot.slane %v3129, 4
    %v3371 = vrot.slane %v3132, 4
    %v3372 = vrot.slane %v3135, 4
    %v3373 = vrot.slane %v3138, 4
    %v3374 = vrot.slane %v3141, 4
    %v3375 = vrot.slane %v3144, 4
    %v3376 = vrot.slane %v3147, 4
    %v3377 = vrot.slane %v3150, 4
    %v3378 = vrot.slane %v3153, 4
    %v3379 = vrot.slane %v3156, 4
    %v3380 = vrot.slane %v3159, 4
    %v3381 = vrot.slane %v3162, 4
    %v3382 = vrot.slane %v3165, 4
    %v3383 = vrot.slane %v3168, 4
    %v3384 = vrot.slane %v3171, 4
    %v3385 = vrot.slane %v3174, 4
    %v3386 = vrot.slane %v3177, 4
    %v3387 = vrot.slane %v3180, 4
    %v3388 = vrot.slane %v3183, 4
    %v3389 = vrot.slane %v3186, 4
    %v3390 = vrot.slane %v3189, 4
    %v3391 = vrot.slane %v3192, 4
    %v3392 = vrot.slane %v3195, 4
    %v3393 = vrot.slane %v3198, 4
    %v3394 = vrot.slane %v3201, 4
    %v3395 = vrot.slane %v3204, 4
    %v3396 = vrot.slane %v3207, 4
    %v3397 = vrot.slane %v3210, 4
    %v3398 = vrot.slane %v3213, 4
    %v3399 = vrot.slane %v3216, 4
    %v3400 = vrot.slane %v3219, 4
    %v3401 = vrot.slane %v3222, 4
    %v3402 = vrot.slane %v3225, 4
    %v3403 = vrot.slane %v3228, 4
    %v3404 = vrot.slane %v3231, 4
    %v3405 = vrot.slane %v3234, 4
    %v3406 = vrot.slane %v3237, 4
    %v3407 = vrot.slane %v3240, 4
    %v3408 = vrot.slane %v3243, 4
    %v3409 = vrot.slane %v3246, 4
    %v3410 = vrot.slane %v3249, 4
    %v3411 = vrot.slane %v3252, 4
    %v3412 = vrot.slane %v3255, 4
    %v3413 = vrot.slane %v3258, 4
    %v3414 = vrot.slane %v3261, 4
    %v3415 = vrot.slane %v3264, 4
    %v3416 = vrot.slane %v3267, 4
    %v3417 = vrot.slane %v3270, 4
    %v3418 = vrot.slane %v3273, 4
    %v3419 = vrot.slane %v3276, 4
    %v3420 = vrot.slane %v3279, 4
    %3421 = vst [vmem:[#allocation1] ss:$2 sm:$0xff] %v3072
    %s3422 = scalar_lea.vmem [#allocation1], 1
    %3423 = vst [vmem:[%s3422] ss:$2 sm:$0xff] %v3351
    %s3424 = scalar_lea.vmem [#allocation1], 16
    %3425 = vst [vmem:[%s3424] ss:$2 sm:$0xff] %v3075
    %s3426 = scalar_lea.vmem [#allocation1], 17
    %3427 = vst [vmem:[%s3426] ss:$2 sm:$0xff] %v3352
    %s3428 = scalar_lea.vmem [#allocation1], 32
    %3429 = vst [vmem:[%s3428] ss:$2 sm:$0xff] %v3078
    %v3430 = vld.sshfl [vmem:[#allocation1] sm:$0xff pattern:$0x75316420]
    %v3431 = vld.sshfl [vmem:[#allocation1 + $0x10] sm:$0xff pattern:$0x75316420]
    %v3432 = vld.sshfl [vmem:[#allocation1 + $0x20] sm:$0xff pattern:$0x75316420]
    %s3433 = scalar_lea.vmem [#allocation1], 48
    %3434 = vst [vmem:[%s3433] ss:$2 sm:$0xff] %v3353
    %s3435 = scalar_lea.vmem [#allocation1], 49
    %3436 = vst [vmem:[%s3435] ss:$2 sm:$0xff] %v3081
    %v3437 = vld.sshfl [vmem:[#allocation1 + $0x30] sm:$0xff pattern:$0x75316420]
    %3438 = vst [vmem:[#allocation1] ss:$2 sm:$0xff] %v3354
    %3439 = vst [vmem:[%s3422] ss:$2 sm:$0xff] %v3084
    %3440 = vst [vmem:[%s3424] ss:$2 sm:$0xff] %v3355
    %v3441 = vld.sshfl [vmem:[#allocation1] sm:$0xff pattern:$0x75316420]
    %v3442 = vld.sshfl [vmem:[#allocation1 + $0x10] sm:$0xff pattern:$0x75316420]
    %3443 = vst [vmem:[%s3428] ss:$2 sm:$0xff] %v3087
    %s3444 = scalar_lea.vmem [#allocation1], 33
    %3445 = vst [vmem:[%s3444] ss:$2 sm:$0xff] %v3356
    %3446 = vst [vmem:[%s3433] ss:$2 sm:$0xff] %v3090
    %3447 = vst [vmem:[%s3435] ss:$2 sm:$0xff] %v3357
    %v3448 = vld.sshfl [vmem:[#allocation1 + $0x20] sm:$0xff pattern:$0x75316420]
    %v3449 = vld.sshfl [vmem:[#allocation1 + $0x30] sm:$0xff pattern:$0x75316420]
    %3450 = vst [vmem:[#allocation1] ss:$2 sm:$0xff] %v3093
    %v3451 = vld.sshfl [vmem:[#allocation1] sm:$0xff pattern:$0x75316420]
    %3452 = vst [vmem:[%s3424] ss:$2 sm:$0xff] %v3358
    %3453 = vst [vmem:[%s3426] ss:$2 sm:$0xff] %v3096
    %3454 = vst [vmem:[%s3428] ss:$2 sm:$0xff] %v3359
    %3455 = vst [vmem:[%s3444] ss:$2 sm:$0xff] %v3099
    %3456 = vst [vmem:[%s3433] ss:$2 sm:$0xff] %v3360
    %v3457 = vld.sshfl [vmem:[#allocation1 + $0x10] sm:$0xff pattern:$0x75316420]
    %v3458 = vld.sshfl [vmem:[#allocation1 + $0x20] sm:$0xff pattern:$0x75316420]
    %v3459 = vld.sshfl [vmem:[#allocation1 + $0x30] sm:$0xff pattern:$0x75316420]
    %3460 = vst [vmem:[#allocation1] ss:$2 sm:$0xff] %v3102
    %3461 = vst [vmem:[%s3422] ss:$2 sm:$0xff] %v3361
    %3462 = vst [vmem:[%s3424] ss:$2 sm:$0xff] %v3105
    %3463 = vst [vmem:[%s3426] ss:$2 sm:$0xff] %v3362
    %3464 = vst [vmem:[%s3428] ss:$2 sm:$0xff] %v3108
    %v3465 = vld.sshfl [vmem:[#allocation1] sm:$0xff pattern:$0x75316420]
    %v3466 = vld.sshfl [vmem:[#allocation1 + $0x10] sm:$0xff pattern:$0x75316420]
    %v3467 = vld.sshfl [vmem:[#allocation1 + $0x20] sm:$0xff pattern:$0x75316420]
    %3468 = vst [vmem:[%s3433] ss:$2 sm:$0xff] %v3363
    %3469 = vst [vmem:[%s3435] ss:$2 sm:$0xff] %v3111
    %v3470 = vld.sshfl [vmem:[#allocation1 + $0x30] sm:$0xff pattern:$0x75316420]
    %3471 = vst [vmem:[#allocation1] ss:$2 sm:$0xff] %v3364
    %3472 = vst [vmem:[%s3422] ss:$2 sm:$0xff] %v3114
    %3473 = vst [vmem:[%s3424] ss:$2 sm:$0xff] %v3365
    %v3474 = vld.sshfl [vmem:[#allocation1] sm:$0xff pattern:$0x75316420]
    %v3475 = vld.sshfl [vmem:[#allocation1 + $0x10] sm:$0xff pattern:$0x75316420]
    %3476 = vst [vmem:[%s3428] ss:$2 sm:$0xff] %v3117
    %3477 = vst [vmem:[%s3444] ss:$2 sm:$0xff] %v3366
    %3478 = vst [vmem:[%s3433] ss:$2 sm:$0xff] %v3120
    %3479 = vst [vmem:[%s3435] ss:$2 sm:$0xff] %v3367
    %v3480 = vld.sshfl [vmem:[#allocation1 + $0x20] sm:$0xff pattern:$0x75316420]
    %v3481 = vld.sshfl [vmem:[#allocation1 + $0x30] sm:$0xff pattern:$0x75316420]
    %3482 = vst [vmem:[#allocation1] ss:$2 sm:$0xff] %v3123
    %v3483 = vld.sshfl [vmem:[#allocation1] sm:$0xff pattern:$0x75316420]
    %3484 = vst [vmem:[%s3424] ss:$2 sm:$0xff] %v3368
    %3485 = vst [vmem:[%s3426] ss:$2 sm:$0xff] %v3126
    %3486 = vst [vmem:[%s3428] ss:$2 sm:$0xff] %v3369
    %3487 = vst [vmem:[%s3444] ss:$2 sm:$0xff] %v3129
    %3488 = vst [vmem:[%s3433] ss:$2 sm:$0xff] %v3370
    %v3489 = vld.sshfl [vmem:[#allocation1 + $0x10] sm:$0xff pattern:$0x75316420]
    %v3490 = vld.sshfl [vmem:[#allocation1 + $0x20] sm:$0xff pattern:$0x75316420]
    %v3491 = vld.sshfl [vmem:[#allocation1 + $0x30] sm:$0xff pattern:$0x75316420]
    %3492 = vst [vmem:[#allocation1] ss:$2 sm:$0xff] %v3132
    %3493 = vst [vmem:[%s3422] ss:$2 sm:$0xff] %v3371
    %3494 = vst [vmem:[%s3424] ss:$2 sm:$0xff] %v3135
    %3495 = vst [vmem:[%s3426] ss:$2 sm:$0xff] %v3372
    %3496 = vst [vmem:[%s3428] ss:$2 sm:$0xff] %v3138
    %v3497 = vld.sshfl [vmem:[#allocation1] sm:$0xff pattern:$0x75316420]
    %v3498 = vld.sshfl [vmem:[#allocation1 + $0x10] sm:$0xff pattern:$0x75316420]
    %v3499 = vld.sshfl [vmem:[#allocation1 + $0x20] sm:$0xff pattern:$0x75316420]
    %3500 = vst [vmem:[%s3433] ss:$2 sm:$0xff] %v3373
    %3501 = vst [vmem:[%s3435] ss:$2 sm:$0xff] %v3141
    %v3502 = vld.sshfl [vmem:[#allocation1 + $0x30] sm:$0xff pattern:$0x75316420]
    %3503 = vst [vmem:[#allocation1] ss:$2 sm:$0xff] %v3374
    %3504 = vst [vmem:[%s3422] ss:$2 sm:$0xff] %v3144
    %3505 = vst [vmem:[%s3424] ss:$2 sm:$0xff] %v3375
    %v3506 = vld.sshfl [vmem:[#allocation1] sm:$0xff pattern:$0x75316420]
    %v3507 = vld.sshfl [vmem:[#allocation1 + $0x10] sm:$0xff pattern:$0x75316420]
    %3508 = vst [vmem:[%s3428] ss:$2 sm:$0xff] %v3147
    %3509 = vst [vmem:[%s3444] ss:$2 sm:$0xff] %v3376
    %3510 = vst [vmem:[%s3433] ss:$2 sm:$0xff] %v3150
    %3511 = vst [vmem:[%s3435] ss:$2 sm:$0xff] %v3377
    %v3512 = vld.sshfl [vmem:[#allocation1 + $0x20] sm:$0xff pattern:$0x75316420]
    %v3513 = vld.sshfl [vmem:[#allocation1 + $0x30] sm:$0xff pattern:$0x75316420]
    %3514 = vst [vmem:[#allocation1] ss:$2 sm:$0xff] %v3153
    %v3515 = vld.sshfl [vmem:[#allocation1] sm:$0xff pattern:$0x75316420]
    %3516 = vst [vmem:[%s3424] ss:$2 sm:$0xff] %v3378
    %3517 = vst [vmem:[%s3426] ss:$2 sm:$0xff] %v3156
    %3518 = vst [vmem:[%s3428] ss:$2 sm:$0xff] %v3379
    %3519 = vst [vmem:[%s3444] ss:$2 sm:$0xff] %v3159
    %3520 = vst [vmem:[%s3433] ss:$2 sm:$0xff] %v3380
    %v3521 = vld.sshfl [vmem:[#allocation1 + $0x10] sm:$0xff pattern:$0x75316420]
    %v3522 = vld.sshfl [vmem:[#allocation1 + $0x20] sm:$0xff pattern:$0x75316420]
    %v3523 = vld.sshfl [vmem:[#allocation1 + $0x30] sm:$0xff pattern:$0x75316420]
    %3524 = vst [vmem:[#allocation1] ss:$2 sm:$0xff] %v3162
    %3525 = vst [vmem:[%s3422] ss:$2 sm:$0xff] %v3381
    %3526 = vst [vmem:[%s3424] ss:$2 sm:$0xff] %v3165
    %3527 = vst [vmem:[%s3426] ss:$2 sm:$0xff] %v3382
    %3528 = vst [vmem:[%s3428] ss:$2 sm:$0xff] %v3168
    %v3529 = vld.sshfl [vmem:[#allocation1] sm:$0xff pattern:$0x75316420]
    %v3530 = vld.sshfl [vmem:[#allocation1 + $0x10] sm:$0xff pattern:$0x75316420]
    %v3531 = vld.sshfl [vmem:[#allocation1 + $0x20] sm:$0xff pattern:$0x75316420]
    %3532 = vst [vmem:[%s3433] ss:$2 sm:$0xff] %v3383
    %3533 = vst [vmem:[%s3435] ss:$2 sm:$0xff] %v3171
    %v3534 = vld.sshfl [vmem:[#allocation1 + $0x30] sm:$0xff pattern:$0x75316420]
    %3535 = vst [vmem:[#allocation1] ss:$2 sm:$0xff] %v3384
    %3536 = vst [vmem:[%s3422] ss:$2 sm:$0xff] %v3174
    %3537 = vst [vmem:[%s3424] ss:$2 sm:$0xff] %v3385
    %v3538 = vld.sshfl [vmem:[#allocation1] sm:$0xff pattern:$0x75316420]
    %v3539 = vld.sshfl [vmem:[#allocation1 + $0x10] sm:$0xff pattern:$0x75316420]
    %3540 = vst [vmem:[%s3428] ss:$2 sm:$0xff] %v3177
    %3541 = vst [vmem:[%s3444] ss:$2 sm:$0xff] %v3386
    %3542 = vst [vmem:[%s3433] ss:$2 sm:$0xff] %v3180
    %3543 = vst [vmem:[%s3435] ss:$2 sm:$0xff] %v3387
    %v3544 = vld.sshfl [vmem:[#allocation1 + $0x20] sm:$0xff pattern:$0x75316420]
    %v3545 = vld.sshfl [vmem:[#allocation1 + $0x30] sm:$0xff pattern:$0x75316420]
    %3546 = vst [vmem:[#allocation1] ss:$2 sm:$0xff] %v3183
    %v3547 = vld.sshfl [vmem:[#allocation1] sm:$0xff pattern:$0x75316420]
    %3548 = vst [vmem:[%s3424] ss:$2 sm:$0xff] %v3388
    %3549 = vst [vmem:[%s3426] ss:$2 sm:$0xff] %v3186
    %3550 = vst [vmem:[%s3428] ss:$2 sm:$0xff] %v3389
    %3551 = vst [vmem:[%s3444] ss:$2 sm:$0xff] %v3189
    %3552 = vst [vmem:[%s3433] ss:$2 sm:$0xff] %v3390
    %v3553 = vld.sshfl [vmem:[#allocation1 + $0x10] sm:$0xff pattern:$0x75316420]
    %v3554 = vld.sshfl [vmem:[#allocation1 + $0x20] sm:$0xff pattern:$0x75316420]
    %v3555 = vld.sshfl [vmem:[#allocation1 + $0x30] sm:$0xff pattern:$0x75316420]
    %3556 = vst [vmem:[#allocation1] ss:$2 sm:$0xff] %v3192
    %3557 = vst [vmem:[%s3422] ss:$2 sm:$0xff] %v3391
    %3558 = vst [vmem:[%s3424] ss:$2 sm:$0xff] %v3195
    %3559 = vst [vmem:[%s3426] ss:$2 sm:$0xff] %v3392
    %3560 = vst [vmem:[%s3428] ss:$2 sm:$0xff] %v3198
    %v3561 = vld.sshfl [vmem:[#allocation1] sm:$0xff pattern:$0x75316420]
    %v3562 = vld.sshfl [vmem:[#allocation1 + $0x10] sm:$0xff pattern:$0x75316420]
    %v3563 = vld.sshfl [vmem:[#allocation1 + $0x20] sm:$0xff pattern:$0x75316420]
    %3564 = vst [vmem:[%s3433] ss:$2 sm:$0xff] %v3393
    %3565 = vst [vmem:[%s3435] ss:$2 sm:$0xff] %v3201
    %v3566 = vld.sshfl [vmem:[#allocation1 + $0x30] sm:$0xff pattern:$0x75316420]
    %3567 = vst [vmem:[#allocation1] ss:$2 sm:$0xff] %v3394
    %3568 = vst [vmem:[%s3422] ss:$2 sm:$0xff] %v3204
    %3569 = vst [vmem:[%s3424] ss:$2 sm:$0xff] %v3395
    %v3570 = vld.sshfl [vmem:[#allocation1] sm:$0xff pattern:$0x75316420]
    %v3571 = vld.sshfl [vmem:[#allocation1 + $0x10] sm:$0xff pattern:$0x75316420]
    %3572 = vst [vmem:[%s3428] ss:$2 sm:$0xff] %v3207
    %3573 = vst [vmem:[%s3444] ss:$2 sm:$0xff] %v3396
    %3574 = vst [vmem:[%s3433] ss:$2 sm:$0xff] %v3210
    %3575 = vst [vmem:[%s3435] ss:$2 sm:$0xff] %v3397
    %v3576 = vld.sshfl [vmem:[#allocation1 + $0x20] sm:$0xff pattern:$0x75316420]
    %v3577 = vld.sshfl [vmem:[#allocation1 + $0x30] sm:$0xff pattern:$0x75316420]
    %3578 = vst [vmem:[#allocation1] ss:$2 sm:$0xff] %v3213
    %v3579 = vld.sshfl [vmem:[#allocation1] sm:$0xff pattern:$0x75316420]
    %3580 = vst [vmem:[%s3424] ss:$2 sm:$0xff] %v3398
    %3581 = vst [vmem:[%s3426] ss:$2 sm:$0xff] %v3216
    %3582 = vst [vmem:[%s3428] ss:$2 sm:$0xff] %v3399
    %3583 = vst [vmem:[%s3444] ss:$2 sm:$0xff] %v3219
    %3584 = vst [vmem:[%s3433] ss:$2 sm:$0xff] %v3400
    %v3585 = vld.sshfl [vmem:[#allocation1 + $0x10] sm:$0xff pattern:$0x75316420]
    %v3586 = vld.sshfl [vmem:[#allocation1 + $0x20] sm:$0xff pattern:$0x75316420]
    %v3587 = vld.sshfl [vmem:[#allocation1 + $0x30] sm:$0xff pattern:$0x75316420]
    %3588 = vst [vmem:[#allocation1] ss:$2 sm:$0xff] %v3222
    %3589 = vst [vmem:[%s3422] ss:$2 sm:$0xff] %v3401
    %3590 = vst [vmem:[%s3424] ss:$2 sm:$0xff] %v3225
    %3591 = vst [vmem:[%s3426] ss:$2 sm:$0xff] %v3402
    %3592 = vst [vmem:[%s3428] ss:$2 sm:$0xff] %v3228
    %v3593 = vld.sshfl [vmem:[#allocation1] sm:$0xff pattern:$0x75316420]
    %v3594 = vld.sshfl [vmem:[#allocation1 + $0x10] sm:$0xff pattern:$0x75316420]
    %v3595 = vld.sshfl [vmem:[#allocation1 + $0x20] sm:$0xff pattern:$0x75316420]
    %3596 = vst [vmem:[%s3433] ss:$2 sm:$0xff] %v3403
    %3597 = vst [vmem:[%s3435] ss:$2 sm:$0xff] %v3231
    %v3598 = vld.sshfl [vmem:[#allocation1 + $0x30] sm:$0xff pattern:$0x75316420]
    %3599 = vst [vmem:[#allocation1] ss:$2 sm:$0xff] %v3404
    %3600 = vst [vmem:[%s3422] ss:$2 sm:$0xff] %v3234
    %3601 = vst [vmem:[%s3424] ss:$2 sm:$0xff] %v3405
    %v3602 = vld.sshfl [vmem:[#allocation1] sm:$0xff pattern:$0x75316420]
    %v3603 = vld.sshfl [vmem:[#allocation1 + $0x10] sm:$0xff pattern:$0x75316420]
    %3604 = vst [vmem:[%s3428] ss:$2 sm:$0xff] %v3237
    %3605 = vst [vmem:[%s3444] ss:$2 sm:$0xff] %v3406
    %3606 = vst [vmem:[%s3433] ss:$2 sm:$0xff] %v3240
    %3607 = vst [vmem:[%s3435] ss:$2 sm:$0xff] %v3407
    %v3608 = vld.sshfl [vmem:[#allocation1 + $0x20] sm:$0xff pattern:$0x75316420]
    %v3609 = vld.sshfl [vmem:[#allocation1 + $0x30] sm:$0xff pattern:$0x75316420]
    %3610 = vst [vmem:[#allocation1] ss:$2 sm:$0xff] %v3243
    %v3611 = vld.sshfl [vmem:[#allocation1] sm:$0xff pattern:$0x75316420]
    %3612 = vst [vmem:[%s3424] ss:$2 sm:$0xff] %v3408
    %3613 = vst [vmem:[%s3426] ss:$2 sm:$0xff] %v3246
    %3614 = vst [vmem:[%s3428] ss:$2 sm:$0xff] %v3409
    %3615 = vst [vmem:[%s3444] ss:$2 sm:$0xff] %v3249
    %3616 = vst [vmem:[%s3433] ss:$2 sm:$0xff] %v3410
    %v3617 = vld.sshfl [vmem:[#allocation1 + $0x10] sm:$0xff pattern:$0x75316420]
    %v3618 = vld.sshfl [vmem:[#allocation1 + $0x20] sm:$0xff pattern:$0x75316420]
    %v3619 = vld.sshfl [vmem:[#allocation1 + $0x30] sm:$0xff pattern:$0x75316420]
    %3620 = vst [vmem:[#allocation1] ss:$2 sm:$0xff] %v3252
    %3621 = vst [vmem:[%s3422] ss:$2 sm:$0xff] %v3411
    %3622 = vst [vmem:[%s3424] ss:$2 sm:$0xff] %v3255
    %3623 = vst [vmem:[%s3426] ss:$2 sm:$0xff] %v3412
    %3624 = vst [vmem:[%s3428] ss:$2 sm:$0xff] %v3258
    %v3625 = vld.sshfl [vmem:[#allocation1] sm:$0xff pattern:$0x75316420]
    %v3626 = vld.sshfl [vmem:[#allocation1 + $0x10] sm:$0xff pattern:$0x75316420]
    %v3627 = vld.sshfl [vmem:[#allocation1 + $0x20] sm:$0xff pattern:$0x75316420]
    %3628 = vst [vmem:[%s3433] ss:$2 sm:$0xff] %v3413
    %3629 = vst [vmem:[%s3435] ss:$2 sm:$0xff] %v3261
    %v3630 = vld.sshfl [vmem:[#allocation1 + $0x30] sm:$0xff pattern:$0x75316420]
    %3631 = vst [vmem:[#allocation1] ss:$2 sm:$0xff] %v3414
    %3632 = vst [vmem:[%s3422] ss:$2 sm:$0xff] %v3264
    %3633 = vst [vmem:[%s3424] ss:$2 sm:$0xff] %v3415
    %v3634 = vld.sshfl [vmem:[#allocation1] sm:$0xff pattern:$0x75316420]
    %v3635 = vld.sshfl [vmem:[#allocation1 + $0x10] sm:$0xff pattern:$0x75316420]
    %3636 = vst [vmem:[%s3428] ss:$2 sm:$0xff] %v3267
    %3637 = vst [vmem:[%s3444] ss:$2 sm:$0xff] %v3416
    %3638 = vst [vmem:[%s3433] ss:$2 sm:$0xff] %v3270
    %3639 = vst [vmem:[%s3435] ss:$2 sm:$0xff] %v3417
    %v3640 = vld.sshfl [vmem:[#allocation1 + $0x20] sm:$0xff pattern:$0x75316420]
    %v3641 = vld.sshfl [vmem:[#allocation1 + $0x30] sm:$0xff pattern:$0x75316420]
    %3642 = vst [vmem:[#allocation1] ss:$2 sm:$0xff] %v3273
    %v3643 = vld.sshfl [vmem:[#allocation1] sm:$0xff pattern:$0x75316420]
    %3644 = vst [vmem:[%s3424] ss:$2 sm:$0xff] %v3418
    %3645 = vst [vmem:[%s3426] ss:$2 sm:$0xff] %v3276
    %3646 = vst [vmem:[%s3428] ss:$2 sm:$0xff] %v3419
    %3647 = vst [vmem:[%s3444] ss:$2 sm:$0xff] %v3279
    %3648 = vst [vmem:[%s3433] ss:$2 sm:$0xff] %v3420
    %v3649 = vld.sshfl [vmem:[#allocation1 + $0x10] sm:$0xff pattern:$0x75316420]
    %v3650 = vld.sshfl [vmem:[#allocation1 + $0x20] sm:$0xff pattern:$0x75316420]
    %v3651 = vld.sshfl [vmem:[#allocation1 + $0x30] sm:$0xff pattern:$0x75316420]
    %v3736 = vsel %vm2465, %v2381, %v88
    %v3737 = vsel %vm2465, %v2382, %v94
    %v3738 = vsel %vm2465, %v2383, %v100
    %v3739 = vsel %vm2465, %v2384, %v107
    %v3740 = vsel %vm2465, %v2385, %v113
    %v3741 = vsel %vm2465, %v2386, %v119
    %v3742 = vsel %vm2465, %v2387, %v126
    %v3743 = vsel %vm2465, %v2388, %v132
    %v3744 = vsel %vm2465, %v2389, %v138
    %v3745 = vsel %vm2465, %v2390, %v145
    %v3746 = vsel %vm2465, %v2391, %v151
    %v3747 = vsel %vm2465, %v2392, %v157
    %v3748 = vsel %vm2465, %v2393, %v164
    %v3749 = vsel %vm2465, %v2394, %v170
    %v3750 = vsel %vm2465, %v2395, %v176
    %v3751 = vsel %vm2465, %v2396, %v183
    %v3752 = vsel %vm2465, %v2397, %v189
    %v3753 = vsel %vm2465, %v2398, %v195
    %v3754 = vsel %vm2465, %v2399, %v202
    %v3755 = vsel %vm2465, %v2400, %v208
    %v3756 = vsel %vm2465, %v2401, %v214
    %v3757 = vsel %vm2465, %v2402, %v221
    %v3758 = vsel %vm2465, %v2403, %v227
    %v3759 = vsel %vm2465, %v2404, %v233
    %v3760 = vsel %vm2465, %v2405, %v240
    %v3761 = vsel %vm2465, %v2406, %v246
    %v3762 = vsel %vm2465, %v2407, %v252
    %v3763 = vsel %vm2465, %v2408, %v259
    %v3764 = vsel %vm2465, %v2409, %v265
    %v3765 = vsel %vm2465, %v2410, %v271
    %v3766 = vsel %vm2465, %v2411, %v278
    %v3767 = vsel %vm2465, %v2412, %v284
    %v3768 = vsel %vm2465, %v2413, %v290
    %v3769 = vsel %vm2465, %v2414, %v1571
    %v3770 = vsel %vm2465, %v2415, %v1577
    %v3771 = vsel %vm2465, %v2416, %v1583
    %v3772 = vsel %vm2465, %v2423, %v354
    %v3773 = vsel %vm2465, %v2424, %v360
    %v3774 = vsel %vm2465, %v2425, %v366
    %v3775 = vsel %vm2465, %v2426, %v373
    %v3776 = vsel %vm2465, %v2427, %v379
    %v3777 = vsel %vm2465, %v2428, %v385
    %v3778 = vsel %vm2465, %v2429, %v392
    %v3779 = vsel %vm2465, %v2430, %v398
    %v3780 = vsel %vm2465, %v2431, %v404
    %v3781 = vsel %vm2465, %v2432, %v411
    %v3782 = vsel %vm2465, %v2433, %v417
    %v3783 = vsel %vm2465, %v2434, %v423
    %v3784 = vsel %vm2465, %v2435, %v430
    %v3785 = vsel %vm2465, %v2436, %v436
    %v3786 = vsel %vm2465, %v2437, %v442
    %v3787 = vsel %vm2465, %v2438, %v449
    %v3788 = vsel %vm2465, %v2439, %v455
    %v3789 = vsel %vm2465, %v2440, %v461
    %v3790 = vsel %vm2465, %v2441, %v468
    %v3791 = vsel %vm2465, %v2442, %v474
    %v3792 = vsel %vm2465, %v2443, %v480
    %v3793 = vsel %vm2465, %v2444, %v487
    %v3794 = vsel %vm2465, %v2445, %v493
    %v3795 = vsel %vm2465, %v2446, %v499
    %v3796 = vsel %vm2465, %v2447, %v506
    %v3797 = vsel %vm2465, %v2448, %v512
    %v3798 = vsel %vm2465, %v2449, %v518
    %v3799 = vsel %vm2465, %v2450, %v525
    %v3800 = vsel %vm2465, %v2451, %v531
    %v3801 = vsel %vm2465, %v2452, %v537
    %v3802 = vsel %vm2465, %v2453, %v544
    %v3803 = vsel %vm2465, %v2454, %v550
    %v3804 = vsel %vm2465, %v2455, %v556
    %v3805 = vsel %vm2465, %v2456, %v1590
    %v3806 = vsel %vm2465, %v2457, %v1596
    %v3807 = vsel %vm2465, %v2458, %v1602
    %v3808 = vsel %vm2909, %v3736, %v616
    %v3809 = vsel %vm2909, %v3737, %v622
    %v3810 = vsel %vm2909, %v3738, %v628
    %v3811 = vsel %vm2909, %v3739, %v634
    %v3812 = vsel %vm2909, %v3740, %v640
    %v3813 = vsel %vm2909, %v3741, %v646
    %v3814 = vsel %vm2909, %v3742, %v652
    %v3815 = vsel %vm2909, %v3743, %v658
    %v3816 = vsel %vm2909, %v3744, %v664
    %v3817 = vsel %vm2909, %v3745, %v670
    %v3818 = vsel %vm2909, %v3746, %v676
    %v3819 = vsel %vm2909, %v3747, %v682
    %v3820 = vsel %vm2909, %v3748, %v688
    %v3821 = vsel %vm2909, %v3749, %v694
    %v3822 = vsel %vm2909, %v3750, %v700
    %v3823 = vsel %vm2909, %v3751, %v706
    %v3824 = vsel %vm2909, %v3752, %v712
    %v3825 = vsel %vm2909, %v3753, %v718
    %v3826 = vsel %vm2909, %v3754, %v724
    %v3827 = vsel %vm2909, %v3755, %v730
    %v3828 = vsel %vm2909, %v3756, %v736
    %v3829 = vsel %vm2909, %v3757, %v742
    %v3830 = vsel %vm2909, %v3758, %v748
    %v3831 = vsel %vm2909, %v3759, %v754
    %v3832 = vsel %vm2909, %v3760, %v760
    %v3833 = vsel %vm2909, %v3761, %v766
    %v3834 = vsel %vm2909, %v3762, %v772
    %v3835 = vsel %vm2909, %v3763, %v778
    %v3836 = vsel %vm2909, %v3764, %v784
    %v3837 = vsel %vm2909, %v3765, %v790
    %v3838 = vsel %vm2909, %v3766, %v796
    %v3839 = vsel %vm2909, %v3767, %v802
    %v3840 = vsel %vm2909, %v3768, %v808
    %v3841 = vsel %vm2909, %v3769, %v1608
    %v3842 = vsel %vm2909, %v3770, %v1614
    %v3843 = vsel %vm2909, %v3771, %v1620
    %v3844 = vsel %vm2909, %v3772, %v868
    %v3845 = vsel %vm2909, %v3773, %v874
    %v3846 = vsel %vm2909, %v3774, %v880
    %v3847 = vsel %vm2909, %v3775, %v886
    %v3848 = vsel %vm2909, %v3776, %v892
    %v3849 = vsel %vm2909, %v3777, %v898
    %v3850 = vsel %vm2909, %v3778, %v904
    %v3851 = vsel %vm2909, %v3779, %v910
    %v3852 = vsel %vm2909, %v3780, %v916
    %v3853 = vsel %vm2909, %v3781, %v922
    %v3854 = vsel %vm2909, %v3782, %v928
    %v3855 = vsel %vm2909, %v3783, %v934
    %v3856 = vsel %vm2909, %v3784, %v940
    %v3857 = vsel %vm2909, %v3785, %v946
    %v3858 = vsel %vm2909, %v3786, %v952
    %v3859 = vsel %vm2909, %v3787, %v958
    %v3860 = vsel %vm2909, %v3788, %v964
    %v3861 = vsel %vm2909, %v3789, %v970
    %v3862 = vsel %vm2909, %v3790, %v976
    %v3863 = vsel %vm2909, %v3791, %v982
    %v3864 = vsel %vm2909, %v3792, %v988
    %v3865 = vsel %vm2909, %v3793, %v994
    %v3866 = vsel %vm2909, %v3794, %v1000
    %v3867 = vsel %vm2909, %v3795, %v1006
    %v3868 = vsel %vm2909, %v3796, %v1012
    %v3869 = vsel %vm2909, %v3797, %v1018
    %v3870 = vsel %vm2909, %v3798, %v1024
    %v3871 = vsel %vm2909, %v3799, %v1030
    %v3872 = vsel %vm2909, %v3800, %v1036
    %v3873 = vsel %vm2909, %v3801, %v1042
    %v3874 = vsel %vm2909, %v3802, %v1048
    %v3875 = vsel %vm2909, %v3803, %v1054
    %v3876 = vsel %vm2909, %v3804, %v1060
    %v3877 = vsel %vm2909, %v3805, %v1626
    %v3878 = vsel %vm2909, %v3806, %v1632
    %v3879 = vsel %vm2909, %v3807, %v1638
    %vm3880 = vcmask 89088
    %v3881 = vsel %vm3880, %v3808, %v1120
    %v3882 = vsel %vm3880, %v3809, %v1126
    %v3883 = vsel %vm3880, %v3810, %v1132
    %v3884 = vsel %vm3880, %v3811, %v1138
    %v3885 = vsel %vm3880, %v3812, %v1144
    %v3886 = vsel %vm3880, %v3813, %v1150
    %v3887 = vsel %vm3880, %v3814, %v1156
    %v3888 = vsel %vm3880, %v3815, %v1162
    %v3889 = vsel %vm3880, %v3816, %v1168
    %v3890 = vsel %vm3880, %v3817, %v1174
    %v3891 = vsel %vm3880, %v3818, %v1180
    %v3892 = vsel %vm3880, %v3819, %v1186
    %v3893 = vsel %vm3880, %v3820, %v1192
    %v3894 = vsel %vm3880, %v3821, %v1198
    %v3895 = vsel %vm3880, %v3822, %v1204
    %v3896 = vsel %vm3880, %v3823, %v1210
    %v3897 = vsel %vm3880, %v3824, %v1216
    %v3898 = vsel %vm3880, %v3825, %v1222
    %v3899 = vsel %vm3880, %v3826, %v1228
    %v3900 = vsel %vm3880, %v3827, %v1234
    %v3901 = vsel %vm3880, %v3828, %v1240
    %v3902 = vsel %vm3880, %v3829, %v1246
    %v3903 = vsel %vm3880, %v3830, %v1252
    %v3904 = vsel %vm3880, %v3831, %v1258
    %v3905 = vsel %vm3880, %v3832, %v1264
    %v3906 = vsel %vm3880, %v3833, %v1270
    %v3907 = vsel %vm3880, %v3834, %v1276
    %v3908 = vsel %vm3880, %v3835, %v1282
    %v3909 = vsel %vm3880, %v3836, %v1288
    %v3910 = vsel %vm3880, %v3837, %v1294
    %v3911 = vsel %vm3880, %v3838, %v1300
    %v3912 = vsel %vm3880, %v3839, %v1306
    %v3913 = vsel %vm3880, %v3840, %v1312
    %v3914 = vsel %vm3880, %v3841, %v1644
    %v3915 = vsel %vm3880, %v3842, %v1650
    %v3916 = vsel %vm3880, %v3843, %v1656
    %v3917 = vsel %vm3880, %v3844, %v1372
    %v3918 = vsel %vm3880, %v3845, %v1378
    %v3919 = vsel %vm3880, %v3846, %v1384
    %v3920 = vsel %vm3880, %v3847, %v1390
    %v3921 = vsel %vm3880, %v3848, %v1396
    %v3922 = vsel %vm3880, %v3849, %v1402
    %v3923 = vsel %vm3880, %v3850, %v1408
    %v3924 = vsel %vm3880, %v3851, %v1414
    %v3925 = vsel %vm3880, %v3852, %v1420
    %v3926 = vsel %vm3880, %v3853, %v1426
    %v3927 = vsel %vm3880, %v3854, %v1432
    %v3928 = vsel %vm3880, %v3855, %v1438
    %v3929 = vsel %vm3880, %v3856, %v1444
    %v3930 = vsel %vm3880, %v3857, %v1450
    %v3931 = vsel %vm3880, %v3858, %v1456
    %v3932 = vsel %vm3880, %v3859, %v1462
    %v3933 = vsel %vm3880, %v3860, %v1468
    %v3934 = vsel %vm3880, %v3861, %v1474
    %v3935 = vsel %vm3880, %v3862, %v1480
    %v3936 = vsel %vm3880, %v3863, %v1486
    %v3937 = vsel %vm3880, %v3864, %v1492
    %v3938 = vsel %vm3880, %v3865, %v1498
    %v3939 = vsel %vm3880, %v3866, %v1504
    %v3940 = vsel %vm3880, %v3867, %v1510
    %v3941 = vsel %vm3880, %v3868, %v1516
    %v3942 = vsel %vm3880, %v3869, %v1522
    %v3943 = vsel %vm3880, %v3870, %v1528
    %v3944 = vsel %vm3880, %v3871, %v1534
    %v3945 = vsel %vm3880, %v3872, %v1540
    %v3946 = vsel %vm3880, %v3873, %v1546
    %v3947 = vsel %vm3880, %v3874, %v1552
    %v3948 = vsel %vm3880, %v3875, %v1558
    %v3949 = vsel %vm3880, %v3876, %v1564
    %v3950 = vsel %vm3880, %v3877, %v1662
    %v3951 = vsel %vm3880, %v3878, %v1668
    %v3952 = vsel %vm3880, %v3879, %v1674
    %vm3953 = vcmask 97280
    %v3954 = vsel %vm3953, %v3881, %v107
    %v3955 = vsel %vm3953, %v3882, %v113
    %v3956 = vsel %vm3953, %v3883, %v119
    %v3957 = vsel %vm3953, %v3884, %v126
    %v3958 = vsel %vm3953, %v3885, %v132
    %v3959 = vsel %vm3953, %v3886, %v138
    %v3960 = vsel %vm3953, %v3887, %v145
    %v3961 = vsel %vm3953, %v3888, %v151
    %v3962 = vsel %vm3953, %v3889, %v157
    %v3963 = vsel %vm3953, %v3890, %v164
    %v3964 = vsel %vm3953, %v3891, %v170
    %v3965 = vsel %vm3953, %v3892, %v176
    %v3966 = vsel %vm3953, %v3893, %v183
    %v3967 = vsel %vm3953, %v3894, %v189
    %v3968 = vsel %vm3953, %v3895, %v195
    %v3969 = vsel %vm3953, %v3896, %v202
    %v3970 = vsel %vm3953, %v3897, %v208
    %v3971 = vsel %vm3953, %v3898, %v214
    %v3972 = vsel %vm3953, %v3899, %v221
    %v3973 = vsel %vm3953, %v3900, %v227
    %v3974 = vsel %vm3953, %v3901, %v233
    %v3975 = vsel %vm3953, %v3902, %v240
    %v3976 = vsel %vm3953, %v3903, %v246
    %v3977 = vsel %vm3953, %v3904, %v252
    %v3978 = vsel %vm3953, %v3905, %v259
    %v3979 = vsel %vm3953, %v3906, %v265
    %v3980 = vsel %vm3953, %v3907, %v271
    %v3981 = vsel %vm3953, %v3908, %v278
    %v3982 = vsel %vm3953, %v3909, %v284
    %v3983 = vsel %vm3953, %v3910, %v290
    %v3984 = vsel %vm3953, %v3911, %v1571
    %v3985 = vsel %vm3953, %v3912, %v1577
    %v3986 = vsel %vm3953, %v3913, %v1583
    %v3987 = vsel %vm3953, %v3914, %v1681
    %v3988 = vsel %vm3953, %v3915, %v1687
    %v3989 = vsel %vm3953, %v3916, %v1693
    %v3990 = vsel %vm3953, %v3917, %v373
    %v3991 = vsel %vm3953, %v3918, %v379
    %v3992 = vsel %vm3953, %v3919, %v385
    %v3993 = vsel %vm3953, %v3920, %v392
    %v3994 = vsel %vm3953, %v3921, %v398
    %v3995 = vsel %vm3953, %v3922, %v404
    %v3996 = vsel %vm3953, %v3923, %v411
    %v3997 = vsel %vm3953, %v3924, %v417
    %v3998 = vsel %vm3953, %v3925, %v423
    %v3999 = vsel %vm3953, %v3926, %v430
    %v4000 = vsel %vm3953, %v3927, %v436
    %v4001 = vsel %vm3953, %v3928, %v442
    %v4002 = vsel %vm3953, %v3929, %v449
    %v4003 = vsel %vm3953, %v3930, %v455
    %v4004 = vsel %vm3953, %v3931, %v461
    %v4005 = vsel %vm3953, %v3932, %v468
    %v4006 = vsel %vm3953, %v3933, %v474
    %v4007 = vsel %vm3953, %v3934, %v480
    %v4008 = vsel %vm3953, %v3935, %v487
    %v4009 = vsel %vm3953, %v3936, %v493
    %v4010 = vsel %vm3953, %v3937, %v499
    %v4011 = vsel %vm3953, %v3938, %v506
    %v4012 = vsel %vm3953, %v3939, %v512
    %v4013 = vsel %vm3953, %v3940, %v518
    %v4014 = vsel %vm3953, %v3941, %v525
    %v4015 = vsel %vm3953, %v3942, %v531
    %v4016 = vsel %vm3953, %v3943, %v537
    %v4017 = vsel %vm3953, %v3944, %v544
    %v4018 = vsel %vm3953, %v3945, %v550
    %v4019 = vsel %vm3953, %v3946, %v556
    %v4020 = vsel %vm3953, %v3947, %v1590
    %v4021 = vsel %vm3953, %v3948, %v1596
    %v4022 = vsel %vm3953, %v3949, %v1602
    %v4023 = vsel %vm3953, %v3950, %v1700
    %v4024 = vsel %vm3953, %v3951, %v1706
    %v4025 = vsel %vm3953, %v3952, %v1712
    %vm4026 = vcmask 105472
    %v4027 = vsel %vm4026, %v3954, %v634
    %v4028 = vsel %vm4026, %v3955, %v640
    %v4029 = vsel %vm4026, %v3956, %v646
    %v4030 = vsel %vm4026, %v3957, %v652
    %v4031 = vsel %vm4026, %v3958, %v658
    %v4032 = vsel %vm4026, %v3959, %v664
    %v4033 = vsel %vm4026, %v3960, %v670
    %v4034 = vsel %vm4026, %v3961, %v676
    %v4035 = vsel %vm4026, %v3962, %v682
    %v4036 = vsel %vm4026, %v3963, %v688
    %v4037 = vsel %vm4026, %v3964, %v694
    %v4038 = vsel %vm4026, %v3965, %v700
    %v4039 = vsel %vm4026, %v3966, %v706
    %v4040 = vsel %vm4026, %v3967, %v712
    %v4041 = vsel %vm4026, %v3968, %v718
    %v4042 = vsel %vm4026, %v3969, %v724
    %v4043 = vsel %vm4026, %v3970, %v730
    %v4044 = vsel %vm4026, %v3971, %v736
    %v4045 = vsel %vm4026, %v3972, %v742
    %v4046 = vsel %vm4026, %v3973, %v748
    %v4047 = vsel %vm4026, %v3974, %v754
    %v4048 = vsel %vm4026, %v3975, %v760
    %v4049 = vsel %vm4026, %v3976, %v766
    %v4050 = vsel %vm4026, %v3977, %v772
    %v4051 = vsel %vm4026, %v3978, %v778
    %v4052 = vsel %vm4026, %v3979, %v784
    %v4053 = vsel %vm4026, %v3980, %v790
    %v4054 = vsel %vm4026, %v3981, %v796
    %v4055 = vsel %vm4026, %v3982, %v802
    %v4056 = vsel %vm4026, %v3983, %v808
    %v4057 = vsel %vm4026, %v3984, %v1608
    %v4058 = vsel %vm4026, %v3985, %v1614
    %v4059 = vsel %vm4026, %v3986, %v1620
    %v4060 = vsel %vm4026, %v3987, %v1718
    %v4061 = vsel %vm4026, %v3988, %v1724
    %v4062 = vsel %vm4026, %v3989, %v1730
    %v4063 = vsel %vm4026, %v3990, %v886
    %v4064 = vsel %vm4026, %v3991, %v892
    %v4065 = vsel %vm4026, %v3992, %v898
    %v4066 = vsel %vm4026, %v3993, %v904
    %v4067 = vsel %vm4026, %v3994, %v910
    %v4068 = vsel %vm4026, %v3995, %v916
    %v4069 = vsel %vm4026, %v3996, %v922
    %v4070 = vsel %vm4026, %v3997, %v928
    %v4071 = vsel %vm4026, %v3998, %v934
    %v4072 = vsel %vm4026, %v3999, %v940
    %v4073 = vsel %vm4026, %v4000, %v946
    %v4074 = vsel %vm4026, %v4001, %v952
    %v4075 = vsel %vm4026, %v4002, %v958
    %v4076 = vsel %vm4026, %v4003, %v964
    %v4077 = vsel %vm4026, %v4004, %v970
    %v4078 = vsel %vm4026, %v4005, %v976
    %v4079 = vsel %vm4026, %v4006, %v982
    %v4080 = vsel %vm4026, %v4007, %v988
    %v4081 = vsel %vm4026, %v4008, %v994
    %v4082 = vsel %vm4026, %v4009, %v1000
    %v4083 = vsel %vm4026, %v4010, %v1006
    %v4084 = vsel %vm4026, %v4011, %v1012
    %v4085 = vsel %vm4026, %v4012, %v1018
    %v4086 = vsel %vm4026, %v4013, %v1024
    %v4087 = vsel %vm4026, %v4014, %v1030
    %v4088 = vsel %vm4026, %v4015, %v1036
    %v4089 = vsel %vm4026, %v4016, %v1042
    %v4090 = vsel %vm4026, %v4017, %v1048
    %v4091 = vsel %vm4026, %v4018, %v1054
    %v4092 = vsel %vm4026, %v4019, %v1060
    %v4093 = vsel %vm4026, %v4020, %v1626
    %v4094 = vsel %vm4026, %v4021, %v1632
    %v4095 = vsel %vm4026, %v4022, %v1638
    %v4096 = vsel %vm4026, %v4023, %v1736
    %v4097 = vsel %vm4026, %v4024, %v1742
    %v4098 = vsel %vm4026, %v4025, %v1748
    %vm4099 = vcmask 113664
    %v4100 = vsel %vm4099, %v4027, %v1138
    %v4101 = vsel %vm4099, %v4028, %v1144
    %v4102 = vsel %vm4099, %v4029, %v1150
    %v4103 = vsel %vm4099, %v4030, %v1156
    %v4104 = vsel %vm4099, %v4031, %v1162
    %v4105 = vsel %vm4099, %v4032, %v1168
    %v4106 = vsel %vm4099, %v4033, %v1174
    %v4107 = vsel %vm4099, %v4034, %v1180
    %v4108 = vsel %vm4099, %v4035, %v1186
    %v4109 = vsel %vm4099, %v4036, %v1192
    %v4110 = vsel %vm4099, %v4037, %v1198
    %v4111 = vsel %vm4099, %v4038, %v1204
    %v4112 = vsel %vm4099, %v4039, %v1210
    %v4113 = vsel %vm4099, %v4040, %v1216
    %v4114 = vsel %vm4099, %v4041, %v1222
    %v4115 = vsel %vm4099, %v4042, %v1228
    %v4116 = vsel %vm4099, %v4043, %v1234
    %v4117 = vsel %vm4099, %v4044, %v1240
    %v4118 = vsel %vm4099, %v4045, %v1246
    %v4119 = vsel %vm4099, %v4046, %v1252
    %v4120 = vsel %vm4099, %v4047, %v1258
    %v4121 = vsel %vm4099, %v4048, %v1264
    %v4122 = vsel %vm4099, %v4049, %v1270
    %v4123 = vsel %vm4099, %v4050, %v1276
    %v4124 = vsel %vm4099, %v4051, %v1282
    %v4125 = vsel %vm4099, %v4052, %v1288
    %v4126 = vsel %vm4099, %v4053, %v1294
    %v4127 = vsel %vm4099, %v4054, %v1300
    %v4128 = vsel %vm4099, %v4055, %v1306
    %v4129 = vsel %vm4099, %v4056, %v1312
    %v4130 = vsel %vm4099, %v4057, %v1644
    %v4131 = vsel %vm4099, %v4058, %v1650
    %v4132 = vsel %vm4099, %v4059, %v1656
    %v4133 = vsel %vm4099, %v4060, %v1754
    %v4134 = vsel %vm4099, %v4061, %v1760
    %v4135 = vsel %vm4099, %v4062, %v1766
    %v4136 = vsel %vm4099, %v4063, %v1390
    %v4137 = vsel %vm4099, %v4064, %v1396
    %v4138 = vsel %vm4099, %v4065, %v1402
    %v4139 = vsel %vm4099, %v4066, %v1408
    %v4140 = vsel %vm4099, %v4067, %v1414
    %v4141 = vsel %vm4099, %v4068, %v1420
    %v4142 = vsel %vm4099, %v4069, %v1426
    %v4143 = vsel %vm4099, %v4070, %v1432
    %v4144 = vsel %vm4099, %v4071, %v1438
    %v4145 = vsel %vm4099, %v4072, %v1444
    %v4146 = vsel %vm4099, %v4073, %v1450
    %v4147 = vsel %vm4099, %v4074, %v1456
    %v4148 = vsel %vm4099, %v4075, %v1462
    %v4149 = vsel %vm4099, %v4076, %v1468
    %v4150 = vsel %vm4099, %v4077, %v1474
    %v4151 = vsel %vm4099, %v4078, %v1480
    %v4152 = vsel %vm4099, %v4079, %v1486
    %v4153 = vsel %vm4099, %v4080, %v1492
    %v4154 = vsel %vm4099, %v4081, %v1498
    %v4155 = vsel %vm4099, %v4082, %v1504
    %v4156 = vsel %vm4099, %v4083, %v1510
    %v4157 = vsel %vm4099, %v4084, %v1516
    %v4158 = vsel %vm4099, %v4085, %v1522
    %v4159 = vsel %vm4099, %v4086, %v1528
    %v4160 = vsel %vm4099, %v4087, %v1534
    %v4161 = vsel %vm4099, %v4088, %v1540
    %v4162 = vsel %vm4099, %v4089, %v1546
    %v4163 = vsel %vm4099, %v4090, %v1552
    %v4164 = vsel %vm4099, %v4091, %v1558
    %v4165 = vsel %vm4099, %v4092, %v1564
    %v4166 = vsel %vm4099, %v4093, %v1662
    %v4167 = vsel %vm4099, %v4094, %v1668
    %v4168 = vsel %vm4099, %v4095, %v1674
    %v4169 = vsel %vm4099, %v4096, %v1772
    %v4170 = vsel %vm4099, %v4097, %v1778
    %v4171 = vsel %vm4099, %v4098, %v1784
    %vm4172 = vcmask 121856
    %v4173 = vsel %vm4172, %v4100, 1.0
    %v4174 = vsel %vm4172, %v4101, 1.0
    %v4175 = vsel %vm4172, %v4102, 1.0
    %v4176 = vsel %vm4172, %v4103, 1.0
    %v4177 = vsel %vm4172, %v4104, 1.0
    %v4178 = vsel %vm4172, %v4105, 1.0
    %v4179 = vsel %vm4172, %v4106, 1.0
    %v4180 = vsel %vm4172, %v4107, 1.0
    %v4181 = vsel %vm4172, %v4108, 1.0
    %v4182 = vsel %vm4172, %v4109, 1.0
    %v4183 = vsel %vm4172, %v4110, 1.0
    %v4184 = vsel %vm4172, %v4111, 1.0
    %v4185 = vsel %vm4172, %v4112, 1.0
    %v4186 = vsel %vm4172, %v4113, 1.0
    %v4187 = vsel %vm4172, %v4114, 1.0
    %v4188 = vsel %vm4172, %v4115, 1.0
    %v4189 = vsel %vm4172, %v4116, 1.0
    %v4190 = vsel %vm4172, %v4117, 1.0
    %v4191 = vsel %vm4172, %v4118, 1.0
    %v4192 = vsel %vm4172, %v4119, 1.0
    %v4193 = vsel %vm4172, %v4120, 1.0
    %v4194 = vsel %vm4172, %v4121, 1.0
    %v4195 = vsel %vm4172, %v4122, 1.0
    %v4196 = vsel %vm4172, %v4123, 1.0
    %v4197 = vsel %vm4172, %v4124, 1.0
    %v4198 = vsel %vm4172, %v4125, 1.0
    %v4199 = vsel %vm4172, %v4126, 1.0
    %v4200 = vsel %vm4172, %v4127, 1.0
    %v4201 = vsel %vm4172, %v4128, 1.0
    %v4202 = vsel %vm4172, %v4129, 1.0
    %v4203 = vsel %vm4172, %v4130, 1.0
    %v4204 = vsel %vm4172, %v4131, 1.0
    %v4205 = vsel %vm4172, %v4132, 1.0
    %v4206 = vsel %vm4172, %v4133, 1.0
    %v4207 = vsel %vm4172, %v4134, 1.0
    %v4208 = vsel %vm4172, %v4135, 1.0
    %v4209 = vsel %vm4172, %v4136, 1.0
    %v4210 = vsel %vm4172, %v4137, 1.0
    %v4211 = vsel %vm4172, %v4138, 1.0
    %v4212 = vsel %vm4172, %v4139, 1.0
    %v4213 = vsel %vm4172, %v4140, 1.0
    %v4214 = vsel %vm4172, %v4141, 1.0
    %v4215 = vsel %vm4172, %v4142, 1.0
    %v4216 = vsel %vm4172, %v4143, 1.0
    %v4217 = vsel %vm4172, %v4144, 1.0
    %v4218 = vsel %vm4172, %v4145, 1.0
    %v4219 = vsel %vm4172, %v4146, 1.0
    %v4220 = vsel %vm4172, %v4147, 1.0
    %v4221 = vsel %vm4172, %v4148, 1.0
    %v4222 = vsel %vm4172, %v4149, 1.0
    %v4223 = vsel %vm4172, %v4150, 1.0
    %v4224 = vsel %vm4172, %v4151, 1.0
    %v4225 = vsel %vm4172, %v4152, 1.0
    %v4226 = vsel %vm4172, %v4153, 1.0
    %v4227 = vsel %vm4172, %v4154, 1.0
    %v4228 = vsel %vm4172, %v4155, 1.0
    %v4229 = vsel %vm4172, %v4156, 1.0
    %v4230 = vsel %vm4172, %v4157, 1.0
    %v4231 = vsel %vm4172, %v4158, 1.0
    %v4232 = vsel %vm4172, %v4159, 1.0
    %v4233 = vsel %vm4172, %v4160, 1.0
    %v4234 = vsel %vm4172, %v4161, 1.0
    %v4235 = vsel %vm4172, %v4162, 1.0
    %v4236 = vsel %vm4172, %v4163, 1.0
    %v4237 = vsel %vm4172, %v4164, 1.0
    %v4238 = vsel %vm4172, %v4165, 1.0
    %v4239 = vsel %vm4172, %v4166, 1.0
    %v4240 = vsel %vm4172, %v4167, 1.0
    %v4241 = vsel %vm4172, %v4168, 1.0
    %v4242 = vsel %vm4172, %v4169, 1.0
    %v4243 = vsel %vm4172, %v4170, 1.0
    %v4244 = vsel %vm4172, %v4171, 1.0
    %v4245 = vld [vmem:[%s2] sm:$0xff]
    %v4246 = vld [vmem:[%s2 + $0x8] sm:$0xff]
    %v4319 = vrot.slane %v4173, 4
    %v4320 = vrot.slane %v4174, 4
    %v4321 = vrot.slane %v4176, 4
    %v4322 = vrot.slane %v4177, 4
    %v4323 = vrot.slane %v4179, 4
    %v4324 = vrot.slane %v4180, 4
    %v4325 = vrot.slane %v4182, 4
    %v4326 = vrot.slane %v4183, 4
    %v4327 = vrot.slane %v4185, 4
    %v4328 = vrot.slane %v4186, 4
    %v4329 = vrot.slane %v4188, 4
    %v4330 = vrot.slane %v4189, 4
    %v4331 = vrot.slane %v4191, 4
    %v4332 = vrot.slane %v4192, 4
    %v4333 = vrot.slane %v4194, 4
    %v4334 = vrot.slane %v4195, 4
    %v4335 = vrot.slane %v4197, 4
    %v4336 = vrot.slane %v4198, 4
    %v4337 = vrot.slane %v4200, 4
    %v4338 = vrot.slane %v4201, 4
    %v4339 = vrot.slane %v4203, 4
    %v4340 = vrot.slane %v4204, 4
    %v4341 = vrot.slane %v4206, 4
    %v4342 = vrot.slane %v4207, 4
    %v4343 = vrot.slane %v4209, 4
    %v4344 = vrot.slane %v4210, 4
    %v4345 = vrot.slane %v4212, 4
    %v4346 = vrot.slane %v4213, 4
    %v4347 = vrot.slane %v4215, 4
    %v4348 = vrot.slane %v4216, 4
    %v4349 = vrot.slane %v4218, 4
    %v4350 = vrot.slane %v4219, 4
    %v4351 = vrot.slane %v4221, 4
    %v4352 = vrot.slane %v4222, 4
    %v4353 = vrot.slane %v4224, 4
    %v4354 = vrot.slane %v4225, 4
    %v4355 = vrot.slane %v4227, 4
    %v4356 = vrot.slane %v4228, 4
    %v4357 = vrot.slane %v4230, 4
    %v4358 = vrot.slane %v4231, 4
    %v4359 = vrot.slane %v4233, 4
    %v4360 = vrot.slane %v4234, 4
    %v4361 = vrot.slane %v4236, 4
    %v4362 = vrot.slane %v4237, 4
    %v4363 = vrot.slane %v4239, 4
    %v4364 = vrot.slane %v4240, 4
    %v4365 = vrot.slane %v4242, 4
    %v4366 = vrot.slane %v4243, 4
    %4367 = vst [vmem:[#allocation1] ss:$2 sm:$0xff] %v4173
    %s4368 = scalar_lea.vmem [#allocation1], 1
    %4369 = vst [vmem:[%s4368] ss:$2 sm:$0xff] %v4319
    %s4370 = scalar_lea.vmem [#allocation1], 16
    %4371 = vst [vmem:[%s4370] ss:$2 sm:$0xff] %v4174
    %s4372 = scalar_lea.vmem [#allocation1], 17
    %4373 = vst [vmem:[%s4372] ss:$2 sm:$0xff] %v4320
    %s4374 = scalar_lea.vmem [#allocation1], 32
    %4375 = vst [vmem:[%s4374] ss:$2 sm:$0xff] %v4175
    %s4376 = scalar_lea.vmem [#allocation1], 33
    %4377 = vst [vmem:[%s4376] ss:$2 sm:$0xff] %v4176
    %s4378 = scalar_lea.vmem [#allocation1], 48
    %4379 = vst [vmem:[%s4378] ss:$2 sm:$0xff] %v4321
    %s4380 = scalar_lea.vmem [#allocation1], 49
    %4381 = vst [vmem:[%s4380] ss:$2 sm:$0xff] %v4177
    %v4382 = vld.sshfl [vmem:[#allocation1] sm:$0xff pattern:$0x75316420]
    %v4383 = vld.sshfl [vmem:[#allocation1 + $0x10] sm:$0xff pattern:$0x75316420]
    %v4384 = vld.sshfl [vmem:[#allocation1 + $0x20] sm:$0xff pattern:$0x75316420]
    %v4385 = vld.sshfl [vmem:[#allocation1 + $0x30] sm:$0xff pattern:$0x75316420]
    %4386 = vst [vmem:[#allocation1] ss:$2 sm:$0xff] %v4322
    %4387 = vst [vmem:[%s4368] ss:$2 sm:$0xff] %v4178
    %4388 = vst [vmem:[%s4370] ss:$2 sm:$0xff] %v4179
    %4389 = vst [vmem:[%s4372] ss:$2 sm:$0xff] %v4323
    %4390 = vst [vmem:[%s4374] ss:$2 sm:$0xff] %v4180
    %4391 = vst [vmem:[%s4376] ss:$2 sm:$0xff] %v4324
    %4392 = vst [vmem:[%s4378] ss:$2 sm:$0xff] %v4181
    %4393 = vst [vmem:[%s4380] ss:$2 sm:$0xff] %v4182
    %v4394 = vld.sshfl [vmem:[#allocation1] sm:$0xff pattern:$0x75316420]
    %v4395 = vld.sshfl [vmem:[#allocation1 + $0x10] sm:$0xff pattern:$0x75316420]
    %v4396 = vld.sshfl [vmem:[#allocation1 + $0x20] sm:$0xff pattern:$0x75316420]
    %v4397 = vld.sshfl [vmem:[#allocation1 + $0x30] sm:$0xff pattern:$0x75316420]
    %4398 = vst [vmem:[#allocation1] ss:$2 sm:$0xff] %v4325
    %4399 = vst [vmem:[%s4368] ss:$2 sm:$0xff] %v4183
    %4400 = vst [vmem:[%s4370] ss:$2 sm:$0xff] %v4326
    %4401 = vst [vmem:[%s4372] ss:$2 sm:$0xff] %v4184
    %4402 = vst [vmem:[%s4374] ss:$2 sm:$0xff] %v4185
    %4403 = vst [vmem:[%s4376] ss:$2 sm:$0xff] %v4327
    %4404 = vst [vmem:[%s4378] ss:$2 sm:$0xff] %v4186
    %4405 = vst [vmem:[%s4380] ss:$2 sm:$0xff] %v4328
    %v4406 = vld.sshfl [vmem:[#allocation1] sm:$0xff pattern:$0x75316420]
    %v4407 = vld.sshfl [vmem:[#allocation1 + $0x10] sm:$0xff pattern:$0x75316420]
    %v4408 = vld.sshfl [vmem:[#allocation1 + $0x20] sm:$0xff pattern:$0x75316420]
    %v4409 = vld.sshfl [vmem:[#allocation1 + $0x30] sm:$0xff pattern:$0x75316420]
    %4410 = vst [vmem:[#allocation1] ss:$2 sm:$0xff] %v4187
    %4411 = vst [vmem:[%s4368] ss:$2 sm:$0xff] %v4188
    %4412 = vst [vmem:[%s4370] ss:$2 sm:$0xff] %v4329
    %4413 = vst [vmem:[%s4372] ss:$2 sm:$0xff] %v4189
    %4414 = vst [vmem:[%s4374] ss:$2 sm:$0xff] %v4330
    %4415 = vst [vmem:[%s4376] ss:$2 sm:$0xff] %v4190
    %4416 = vst [vmem:[%s4378] ss:$2 sm:$0xff] %v4191
    %4417 = vst [vmem:[%s4380] ss:$2 sm:$0xff] %v4331
    %v4418 = vld.sshfl [vmem:[#allocation1] sm:$0xff pattern:$0x75316420]
    %v4419 = vld.sshfl [vmem:[#allocation1 + $0x10] sm:$0xff pattern:$0x75316420]
    %v4420 = vld.sshfl [vmem:[#allocation1 + $0x20] sm:$0xff pattern:$0x75316420]
    %v4421 = vld.sshfl [vmem:[#allocation1 + $0x30] sm:$0xff pattern:$0x75316420]
    %4422 = vst [vmem:[#allocation1] ss:$2 sm:$0xff] %v4192
    %4423 = vst [vmem:[%s4368] ss:$2 sm:$0xff] %v4332
    %4424 = vst [vmem:[%s4370] ss:$2 sm:$0xff] %v4193
    %4425 = vst [vmem:[%s4372] ss:$2 sm:$0xff] %v4194
    %4426 = vst [vmem:[%s4374] ss:$2 sm:$0xff] %v4333
    %4427 = vst [vmem:[%s4376] ss:$2 sm:$0xff] %v4195
    %4428 = vst [vmem:[%s4378] ss:$2 sm:$0xff] %v4334
    %4429 = vst [vmem:[%s4380] ss:$2 sm:$0xff] %v4196
    %v4430 = vld.sshfl [vmem:[#allocation1] sm:$0xff pattern:$0x75316420]
    %v4431 = vld.sshfl [vmem:[#allocation1 + $0x10] sm:$0xff pattern:$0x75316420]
    %v4432 = vld.sshfl [vmem:[#allocation1 + $0x20] sm:$0xff pattern:$0x75316420]
    %v4433 = vld.sshfl [vmem:[#allocation1 + $0x30] sm:$0xff pattern:$0x75316420]
    %4434 = vst [vmem:[#allocation1] ss:$2 sm:$0xff] %v4197
    %4435 = vst [vmem:[%s4368] ss:$2 sm:$0xff] %v4335
    %4436 = vst [vmem:[%s4370] ss:$2 sm:$0xff] %v4198
    %4437 = vst [vmem:[%s4372] ss:$2 sm:$0xff] %v4336
    %4438 = vst [vmem:[%s4374] ss:$2 sm:$0xff] %v4199
    %4439 = vst [vmem:[%s4376] ss:$2 sm:$0xff] %v4200
    %4440 = vst [vmem:[%s4378] ss:$2 sm:$0xff] %v4337
    %4441 = vst [vmem:[%s4380] ss:$2 sm:$0xff] %v4201
    %v4442 = vld.sshfl [vmem:[#allocation1] sm:$0xff pattern:$0x75316420]
    %v4443 = vld.sshfl [vmem:[#allocation1 + $0x10] sm:$0xff pattern:$0x75316420]
    %v4444 = vld.sshfl [vmem:[#allocation1 + $0x20] sm:$0xff pattern:$0x75316420]
    %v4445 = vld.sshfl [vmem:[#allocation1 + $0x30] sm:$0xff pattern:$0x75316420]
    %4446 = vst [vmem:[#allocation1] ss:$2 sm:$0xff] %v4338
    %4447 = vst [vmem:[%s4368] ss:$2 sm:$0xff] %v4202
    %4448 = vst [vmem:[%s4370] ss:$2 sm:$0xff] %v4203
    %4449 = vst [vmem:[%s4372] ss:$2 sm:$0xff] %v4339
    %4450 = vst [vmem:[%s4374] ss:$2 sm:$0xff] %v4204
    %4451 = vst [vmem:[%s4376] ss:$2 sm:$0xff] %v4340
    %4452 = vst [vmem:[%s4378] ss:$2 sm:$0xff] %v4205
    %4453 = vst [vmem:[%s4380] ss:$2 sm:$0xff] %v4206
    %v4454 = vld.sshfl [vmem:[#allocation1] sm:$0xff pattern:$0x75316420]
    %v4455 = vld.sshfl [vmem:[#allocation1 + $0x10] sm:$0xff pattern:$0x75316420]
    %v4456 = vld.sshfl [vmem:[#allocation1 + $0x20] sm:$0xff pattern:$0x75316420]
    %v4457 = vld.sshfl [vmem:[#allocation1 + $0x30] sm:$0xff pattern:$0x75316420]
    %4458 = vst [vmem:[#allocation1] ss:$2 sm:$0xff] %v4341
    %4459 = vst [vmem:[%s4368] ss:$2 sm:$0xff] %v4207
    %4460 = vst [vmem:[%s4370] ss:$2 sm:$0xff] %v4342
    %4461 = vst [vmem:[%s4372] ss:$2 sm:$0xff] %v4208
    %4462 = vst [vmem:[%s4374] ss:$2 sm:$0xff] %v4209
    %4463 = vst [vmem:[%s4376] ss:$2 sm:$0xff] %v4343
    %4464 = vst [vmem:[%s4378] ss:$2 sm:$0xff] %v4210
    %4465 = vst [vmem:[%s4380] ss:$2 sm:$0xff] %v4344
    %v4466 = vld.sshfl [vmem:[#allocation1] sm:$0xff pattern:$0x75316420]
    %v4467 = vld.sshfl [vmem:[#allocation1 + $0x10] sm:$0xff pattern:$0x75316420]
    %v4468 = vld.sshfl [vmem:[#allocation1 + $0x20] sm:$0xff pattern:$0x75316420]
    %v4469 = vld.sshfl [vmem:[#allocation1 + $0x30] sm:$0xff pattern:$0x75316420]
    %4470 = vst [vmem:[#allocation1] ss:$2 sm:$0xff] %v4211
    %4471 = vst [vmem:[%s4368] ss:$2 sm:$0xff] %v4212
    %4472 = vst [vmem:[%s4370] ss:$2 sm:$0xff] %v4345
    %4473 = vst [vmem:[%s4372] ss:$2 sm:$0xff] %v4213
    %4474 = vst [vmem:[%s4374] ss:$2 sm:$0xff] %v4346
    %4475 = vst [vmem:[%s4376] ss:$2 sm:$0xff] %v4214
    %4476 = vst [vmem:[%s4378] ss:$2 sm:$0xff] %v4215
    %4477 = vst [vmem:[%s4380] ss:$2 sm:$0xff] %v4347
    %v4478 = vld.sshfl [vmem:[#allocation1] sm:$0xff pattern:$0x75316420]
    %v4479 = vld.sshfl [vmem:[#allocation1 + $0x10] sm:$0xff pattern:$0x75316420]
    %v4480 = vld.sshfl [vmem:[#allocation1 + $0x20] sm:$0xff pattern:$0x75316420]
    %v4481 = vld.sshfl [vmem:[#allocation1 + $0x30] sm:$0xff pattern:$0x75316420]
    %4482 = vst [vmem:[#allocation1] ss:$2 sm:$0xff] %v4216
    %4483 = vst [vmem:[%s4368] ss:$2 sm:$0xff] %v4348
    %4484 = vst [vmem:[%s4370] ss:$2 sm:$0xff] %v4217
    %4485 = vst [vmem:[%s4372] ss:$2 sm:$0xff] %v4218
    %4486 = vst [vmem:[%s4374] ss:$2 sm:$0xff] %v4349
    %4487 = vst [vmem:[%s4376] ss:$2 sm:$0xff] %v4219
    %4488 = vst [vmem:[%s4378] ss:$2 sm:$0xff] %v4350
    %4489 = vst [vmem:[%s4380] ss:$2 sm:$0xff] %v4220
    %v4490 = vld.sshfl [vmem:[#allocation1] sm:$0xff pattern:$0x75316420]
    %v4491 = vld.sshfl [vmem:[#allocation1 + $0x10] sm:$0xff pattern:$0x75316420]
    %v4492 = vld.sshfl [vmem:[#allocation1 + $0x20] sm:$0xff pattern:$0x75316420]
    %v4493 = vld.sshfl [vmem:[#allocation1 + $0x30] sm:$0xff pattern:$0x75316420]
    %4494 = vst [vmem:[#allocation1] ss:$2 sm:$0xff] %v4221
    %4495 = vst [vmem:[%s4368] ss:$2 sm:$0xff] %v4351
    %4496 = vst [vmem:[%s4370] ss:$2 sm:$0xff] %v4222
    %4497 = vst [vmem:[%s4372] ss:$2 sm:$0xff] %v4352
    %4498 = vst [vmem:[%s4374] ss:$2 sm:$0xff] %v4223
    %4499 = vst [vmem:[%s4376] ss:$2 sm:$0xff] %v4224
    %4500 = vst [vmem:[%s4378] ss:$2 sm:$0xff] %v4353
    %4501 = vst [vmem:[%s4380] ss:$2 sm:$0xff] %v4225
    %v4502 = vld.sshfl [vmem:[#allocation1] sm:$0xff pattern:$0x75316420]
    %v4503 = vld.sshfl [vmem:[#allocation1 + $0x10] sm:$0xff pattern:$0x75316420]
    %v4504 = vld.sshfl [vmem:[#allocation1 + $0x20] sm:$0xff pattern:$0x75316420]
    %v4505 = vld.sshfl [vmem:[#allocation1 + $0x30] sm:$0xff pattern:$0x75316420]
    %4506 = vst [vmem:[#allocation1] ss:$2 sm:$0xff] %v4354
    %4507 = vst [vmem:[%s4368] ss:$2 sm:$0xff] %v4226
    %4508 = vst [vmem:[%s4370] ss:$2 sm:$0xff] %v4227
    %4509 = vst [vmem:[%s4372] ss:$2 sm:$0xff] %v4355
    %4510 = vst [vmem:[%s4374] ss:$2 sm:$0xff] %v4228
    %4511 = vst [vmem:[%s4376] ss:$2 sm:$0xff] %v4356
    %4512 = vst [vmem:[%s4378] ss:$2 sm:$0xff] %v4229
    %4513 = vst [vmem:[%s4380] ss:$2 sm:$0xff] %v4230
    %v4514 = vld.sshfl [vmem:[#allocation1] sm:$0xff pattern:$0x75316420]
    %v4515 = vld.sshfl [vmem:[#allocation1 + $0x10] sm:$0xff pattern:$0x75316420]
    %v4516 = vld.sshfl [vmem:[#allocation1 + $0x20] sm:$0xff pattern:$0x75316420]
    %v4517 = vld.sshfl [vmem:[#allocation1 + $0x30] sm:$0xff pattern:$0x75316420]
    %4518 = vst [vmem:[#allocation1] ss:$2 sm:$0xff] %v4357
    %4519 = vst [vmem:[%s4368] ss:$2 sm:$0xff] %v4231
    %4520 = vst [vmem:[%s4370] ss:$2 sm:$0xff] %v4358
    %4521 = vst [vmem:[%s4372] ss:$2 sm:$0xff] %v4232
    %4522 = vst [vmem:[%s4374] ss:$2 sm:$0xff] %v4233
    %4523 = vst [vmem:[%s4376] ss:$2 sm:$0xff] %v4359
    %4524 = vst [vmem:[%s4378] ss:$2 sm:$0xff] %v4234
    %4525 = vst [vmem:[%s4380] ss:$2 sm:$0xff] %v4360
    %v4526 = vld.sshfl [vmem:[#allocation1] sm:$0xff pattern:$0x75316420]
    %v4527 = vld.sshfl [vmem:[#allocation1 + $0x10] sm:$0xff pattern:$0x75316420]
    %v4528 = vld.sshfl [vmem:[#allocation1 + $0x20] sm:$0xff pattern:$0x75316420]
    %v4529 = vld.sshfl [vmem:[#allocation1 + $0x30] sm:$0xff pattern:$0x75316420]
    %4530 = vst [vmem:[#allocation1] ss:$2 sm:$0xff] %v4235
    %4531 = vst [vmem:[%s4368] ss:$2 sm:$0xff] %v4236
    %4532 = vst [vmem:[%s4370] ss:$2 sm:$0xff] %v4361
    %4533 = vst [vmem:[%s4372] ss:$2 sm:$0xff] %v4237
    %4534 = vst [vmem:[%s4374] ss:$2 sm:$0xff] %v4362
    %4535 = vst [vmem:[%s4376] ss:$2 sm:$0xff] %v4238
    %4536 = vst [vmem:[%s4378] ss:$2 sm:$0xff] %v4239
    %4537 = vst [vmem:[%s4380] ss:$2 sm:$0xff] %v4363
    %v4538 = vld.sshfl [vmem:[#allocation1] sm:$0xff pattern:$0x75316420]
    %v4539 = vld.sshfl [vmem:[#allocation1 + $0x10] sm:$0xff pattern:$0x75316420]
    %v4540 = vld.sshfl [vmem:[#allocation1 + $0x20] sm:$0xff pattern:$0x75316420]
    %v4541 = vld.sshfl [vmem:[#allocation1 + $0x30] sm:$0xff pattern:$0x75316420]
    %4542 = vst [vmem:[#allocation1] ss:$2 sm:$0xff] %v4240
    %4543 = vst [vmem:[%s4368] ss:$2 sm:$0xff] %v4364
    %4544 = vst [vmem:[%s4370] ss:$2 sm:$0xff] %v4241
    %4545 = vst [vmem:[%s4372] ss:$2 sm:$0xff] %v4242
    %4546 = vst [vmem:[%s4374] ss:$2 sm:$0xff] %v4365
    %4547 = vst [vmem:[%s4376] ss:$2 sm:$0xff] %v4243
    %4548 = vst [vmem:[%s4378] ss:$2 sm:$0xff] %v4366
    %4549 = vst [vmem:[%s4380] ss:$2 sm:$0xff] %v4244
    %v4550 = vld.sshfl [vmem:[#allocation1] sm:$0xff pattern:$0x75316420]
    %v4551 = vld.sshfl [vmem:[#allocation1 + $0x10] sm:$0xff pattern:$0x75316420]
    %v4552 = vld.sshfl [vmem:[#allocation1 + $0x20] sm:$0xff pattern:$0x75316420]
    %v4553 = vld.sshfl [vmem:[#allocation1 + $0x30] sm:$0xff pattern:$0x75316420]
    %vm4554 = vcmask 130048
    %v4555 = vsel %vm4554, %v4382, 0
    %v4557 = vsel %vm4554, %v4383, 0
    %v4559 = vsel %vm4554, %v4384, 0
    %v4561 = vsel %vm4554, %v4385, 0
    %v4563 = vsel %vm4554, %v4394, 0
    %v4565 = vsel %vm4554, %v4395, 0
    %v4567 = vsel %vm4554, %v4396, 0
    %v4569 = vsel %vm4554, %v4397, 0
    %v4571 = vsel %vm4554, %v4406, 0
    %v4573 = vsel %vm4554, %v4407, 0
    %v4575 = vsel %vm4554, %v4408, 0
    %v4577 = vsel %vm4554, %v4409, 0
    %v4579 = vsel %vm4554, %v4418, 0
    %v4581 = vsel %vm4554, %v4419, 0
    %v4583 = vsel %vm4554, %v4420, 0
    %v4585 = vsel %vm4554, %v4421, 0
    %v4587 = vsel %vm4554, %v4430, 0
    %v4589 = vsel %vm4554, %v4431, 0
    %v4591 = vsel %vm4554, %v4432, 0
    %v4593 = vsel %vm4554, %v4433, 0
    %v4595 = vsel %vm4554, %v4442, 0
    %v4597 = vsel %vm4554, %v4443, 0
    %v4599 = vsel %vm4554, %v4444, 0
    %v4601 = vsel %vm4554, %v4445, 0
    %v4603 = vsel %vm4554, %v4454, 0
    %v4605 = vsel %vm4554, %v4455, 0
    %v4607 = vsel %vm4554, %v4456, 0
    %v4609 = vsel %vm4554, %v4457, 0
    %v4611 = vsel %vm4554, %v4466, 0
    %v4613 = vsel %vm4554, %v4467, 0
    %v4615 = vsel %vm4554, %v4468, 0
    %v4617 = vsel %vm4554, %v4469, 0
    %v4619 = vsel %vm4554, %v4478, 0
    %v4621 = vsel %vm4554, %v4479, 0
    %v4623 = vsel %vm4554, %v4480, 0
    %v4625 = vsel %vm4554, %v4481, 0
    %v4627 = vsel %vm4554, %v4490, 0
    %v4629 = vsel %vm4554, %v4491, 0
    %v4631 = vsel %vm4554, %v4492, 0
    %v4633 = vsel %vm4554, %v4493, 0
    %v4635 = vsel %vm4554, %v4502, 0
    %v4637 = vsel %vm4554, %v4503, 0
    %v4639 = vsel %vm4554, %v4504, 0
    %v4641 = vsel %vm4554, %v4505, 0
    %v4643 = vsel %vm4554, %v4514, 0
    %v4645 = vsel %vm4554, %v4515, 0
    %v4647 = vsel %vm4554, %v4516, 0
    %v4649 = vsel %vm4554, %v4517, 0
    %v4651 = vsel %vm4554, %v4526, 0
    %v4653 = vsel %vm4554, %v4527, 0
    %v4655 = vsel %vm4554, %v4528, 0
    %v4657 = vsel %vm4554, %v4529, 0
    %v4659 = vsel %vm4554, %v4538, 0
    %v4661 = vsel %vm4554, %v4539, 0
    %v4663 = vsel %vm4554, %v4540, 0
    %v4665 = vsel %vm4554, %v4541, 0
    %v4667 = vsel %vm4554, %v4550, 0
    %v4669 = vsel %vm4554, %v4551, 0
    %v4671 = vsel %vm4554, %v4552, 0
    %v4673 = vsel %vm4554, %v4553, 0
    %4675 = vmatpush.msra.mxu0 0.0
    %4676 = vmatpush.msra.mxu0 0.0
    %4677 = vmatpush.msra.mxu0 0.0
    %4678 = vmatpush.msra.mxu0 0.0
    %4679 = vmatpush.msra.mxu0 0.0
    %4680 = vmatpush.msra.mxu0 0.0
    %4681 = vmatpush.msra.mxu0 0.0
    %4682 = vmatpush.msra.mxu0 0.0
    %4683 = vmatpush.msra.mxu0 0.0
    %4684 = vmatpush.msra.mxu0 0.0
    %4685 = vmatpush.msra.mxu0 0.0
    %4686 = vmatpush.msra.mxu0 0.0
    %4687 = vmatpush.msra.mxu0 0.0
    %4688 = vmatpush.msra.mxu0 0.0
    %4689 = vmatpush.msra.mxu0 %v4246
    %4690 = vmatpush.msra.mxu0 %v4245
    %4691 = vmatmul.f32.gmra.mxu0 %v4555
    %v4692 = vpop.f32.mrf.mxu0
    %v4693 = vadd.f32 0.0, %v4692
    %4694 = vmatmul.f32.gmra.mxu0 %v4557
    %v4695 = vpop.f32.mrf.mxu0
    %v4696 = vadd.f32 0.0, %v4695
    %4697 = vmatmul.f32.gmra.mxu0 %v4559
    %v4698 = vpop.f32.mrf.mxu0
    %v4699 = vadd.f32 0.0, %v4698
    %4700 = vmatmul.f32.gmra.mxu0 %v4561
    %v4701 = vpop.f32.mrf.mxu0
    %v4702 = vadd.f32 0.0, %v4701
    %4703 = vmatmul.f32.gmra.mxu0 %v4563
    %v4704 = vpop.f32.mrf.mxu0
    %v4705 = vadd.f32 0.0, %v4704
    %4706 = vmatmul.f32.gmra.mxu0 %v4565
    %v4707 = vpop.f32.mrf.mxu0
    %v4708 = vadd.f32 0.0, %v4707
    %4709 = vmatmul.f32.gmra.mxu0 %v4567
    %v4710 = vpop.f32.mrf.mxu0
    %v4711 = vadd.f32 0.0, %v4710
    %4712 = vmatmul.f32.gmra.mxu0 %v4569
    %v4713 = vpop.f32.mrf.mxu0
    %v4714 = vadd.f32 0.0, %v4713
    %4715 = vmatmul.f32.gmra.mxu0 %v4571
    %v4716 = vpop.f32.mrf.mxu0
    %v4717 = vadd.f32 0.0, %v4716
    %4718 = vmatmul.f32.gmra.mxu0 %v4573
    %v4719 = vpop.f32.mrf.mxu0
    %v4720 = vadd.f32 0.0, %v4719
    %4721 = vmatmul.f32.gmra.mxu0 %v4575
    %v4722 = vpop.f32.mrf.mxu0
    %v4723 = vadd.f32 0.0, %v4722
    %4724 = vmatmul.f32.gmra.mxu0 %v4577
    %v4725 = vpop.f32.mrf.mxu0
    %v4726 = vadd.f32 0.0, %v4725
    %4727 = vmatmul.f32.gmra.mxu0 %v4579
    %v4728 = vpop.f32.mrf.mxu0
    %v4729 = vadd.f32 0.0, %v4728
    %4730 = vmatmul.f32.gmra.mxu0 %v4581
    %v4731 = vpop.f32.mrf.mxu0
    %v4732 = vadd.f32 0.0, %v4731
    %4733 = vmatmul.f32.gmra.mxu0 %v4583
    %v4734 = vpop.f32.mrf.mxu0
    %v4735 = vadd.f32 0.0, %v4734
    %4736 = vmatmul.f32.gmra.mxu0 %v4585
    %v4737 = vpop.f32.mrf.mxu0
    %v4738 = vadd.f32 0.0, %v4737
    %4739 = vmatmul.f32.gmra.mxu0 %v4587
    %v4740 = vpop.f32.mrf.mxu0
    %v4741 = vadd.f32 0.0, %v4740
    %4742 = vmatmul.f32.gmra.mxu0 %v4589
    %v4743 = vpop.f32.mrf.mxu0
    %v4744 = vadd.f32 0.0, %v4743
    %4745 = vmatmul.f32.gmra.mxu0 %v4591
    %v4746 = vpop.f32.mrf.mxu0
    %v4747 = vadd.f32 0.0, %v4746
    %4748 = vmatmul.f32.gmra.mxu0 %v4593
    %v4749 = vpop.f32.mrf.mxu0
    %v4750 = vadd.f32 0.0, %v4749
    %4751 = vmatmul.f32.gmra.mxu0 %v4595
    %v4752 = vpop.f32.mrf.mxu0
    %v4753 = vadd.f32 0.0, %v4752
    %4754 = vmatmul.f32.gmra.mxu0 %v4597
    %v4755 = vpop.f32.mrf.mxu0
    %v4756 = vadd.f32 0.0, %v4755
    %4757 = vmatmul.f32.gmra.mxu0 %v4599
    %v4758 = vpop.f32.mrf.mxu0
    %v4759 = vadd.f32 0.0, %v4758
    %4760 = vmatmul.f32.gmra.mxu0 %v4601
    %v4761 = vpop.f32.mrf.mxu0
    %v4762 = vadd.f32 0.0, %v4761
    %4763 = vmatmul.f32.gmra.mxu0 %v4603
    %v4764 = vpop.f32.mrf.mxu0
    %v4765 = vadd.f32 0.0, %v4764
    %4766 = vmatmul.f32.gmra.mxu0 %v4605
    %v4767 = vpop.f32.mrf.mxu0
    %v4768 = vadd.f32 0.0, %v4767
    %4769 = vmatmul.f32.gmra.mxu0 %v4607
    %v4770 = vpop.f32.mrf.mxu0
    %v4771 = vadd.f32 0.0, %v4770
    %4772 = vmatmul.f32.gmra.mxu0 %v4609
    %v4773 = vpop.f32.mrf.mxu0
    %v4774 = vadd.f32 0.0, %v4773
    %4775 = vmatmul.f32.gmra.mxu0 %v4611
    %v4776 = vpop.f32.mrf.mxu0
    %v4777 = vadd.f32 0.0, %v4776
    %4778 = vmatmul.f32.gmra.mxu0 %v4613
    %v4779 = vpop.f32.mrf.mxu0
    %v4780 = vadd.f32 0.0, %v4779
    %4781 = vmatmul.f32.gmra.mxu0 %v4615
    %v4782 = vpop.f32.mrf.mxu0
    %v4783 = vadd.f32 0.0, %v4782
    %4784 = vmatmul.f32.gmra.mxu0 %v4617
    %v4785 = vpop.f32.mrf.mxu0
    %v4786 = vadd.f32 0.0, %v4785
    %4787 = vmatmul.f32.gmra.mxu0 %v4619
    %v4788 = vpop.f32.mrf.mxu0
    %v4789 = vadd.f32 0.0, %v4788
    %4790 = vmatmul.f32.gmra.mxu0 %v4621
    %v4791 = vpop.f32.mrf.mxu0
    %v4792 = vadd.f32 0.0, %v4791
    %4793 = vmatmul.f32.gmra.mxu0 %v4623
    %v4794 = vpop.f32.mrf.mxu0
    %v4795 = vadd.f32 0.0, %v4794
    %4796 = vmatmul.f32.gmra.mxu0 %v4625
    %v4797 = vpop.f32.mrf.mxu0
    %v4798 = vadd.f32 0.0, %v4797
    %4799 = vmatmul.f32.gmra.mxu0 %v4627
    %v4800 = vpop.f32.mrf.mxu0
    %v4801 = vadd.f32 0.0, %v4800
    %4802 = vmatmul.f32.gmra.mxu0 %v4629
    %v4803 = vpop.f32.mrf.mxu0
    %v4804 = vadd.f32 0.0, %v4803
    %4805 = vmatmul.f32.gmra.mxu0 %v4631
    %v4806 = vpop.f32.mrf.mxu0
    %v4807 = vadd.f32 0.0, %v4806
    %4808 = vmatmul.f32.gmra.mxu0 %v4633
    %v4809 = vpop.f32.mrf.mxu0
    %v4810 = vadd.f32 0.0, %v4809
    %4811 = vmatmul.f32.gmra.mxu0 %v4635
    %v4812 = vpop.f32.mrf.mxu0
    %v4813 = vadd.f32 0.0, %v4812
    %4814 = vmatmul.f32.gmra.mxu0 %v4637
    %v4815 = vpop.f32.mrf.mxu0
    %v4816 = vadd.f32 0.0, %v4815
    %4817 = vmatmul.f32.gmra.mxu0 %v4639
    %v4818 = vpop.f32.mrf.mxu0
    %v4819 = vadd.f32 0.0, %v4818
    %4820 = vmatmul.f32.gmra.mxu0 %v4641
    %v4821 = vpop.f32.mrf.mxu0
    %v4822 = vadd.f32 0.0, %v4821
    %4823 = vmatmul.f32.gmra.mxu0 %v4643
    %v4824 = vpop.f32.mrf.mxu0
    %v4825 = vadd.f32 0.0, %v4824
    %4826 = vmatmul.f32.gmra.mxu0 %v4645
    %v4827 = vpop.f32.mrf.mxu0
    %v4828 = vadd.f32 0.0, %v4827
    %4829 = vmatmul.f32.gmra.mxu0 %v4647
    %v4830 = vpop.f32.mrf.mxu0
    %v4831 = vadd.f32 0.0, %v4830
    %4832 = vmatmul.f32.gmra.mxu0 %v4649
    %v4833 = vpop.f32.mrf.mxu0
    %v4834 = vadd.f32 0.0, %v4833
    %4835 = vmatmul.f32.gmra.mxu0 %v4651
    %v4836 = vpop.f32.mrf.mxu0
    %v4837 = vadd.f32 0.0, %v4836
    %4838 = vmatmul.f32.gmra.mxu0 %v4653
    %v4839 = vpop.f32.mrf.mxu0
    %v4840 = vadd.f32 0.0, %v4839
    %4841 = vmatmul.f32.gmra.mxu0 %v4655
    %v4842 = vpop.f32.mrf.mxu0
    %v4843 = vadd.f32 0.0, %v4842
    %4844 = vmatmul.f32.gmra.mxu0 %v4657
    %v4845 = vpop.f32.mrf.mxu0
    %v4846 = vadd.f32 0.0, %v4845
    %4847 = vmatmul.f32.gmra.mxu0 %v4659
    %v4848 = vpop.f32.mrf.mxu0
    %v4849 = vadd.f32 0.0, %v4848
    %4850 = vmatmul.f32.gmra.mxu0 %v4661
    %v4851 = vpop.f32.mrf.mxu0
    %v4852 = vadd.f32 0.0, %v4851
    %4853 = vmatmul.f32.gmra.mxu0 %v4663
    %v4854 = vpop.f32.mrf.mxu0
    %v4855 = vadd.f32 0.0, %v4854
    %4856 = vmatmul.f32.gmra.mxu0 %v4665
    %v4857 = vpop.f32.mrf.mxu0
    %v4858 = vadd.f32 0.0, %v4857
    %4859 = vmatmul.f32.gmra.mxu0 %v4667
    %v4860 = vpop.f32.mrf.mxu0
    %v4861 = vadd.f32 0.0, %v4860
    %4862 = vmatmul.f32.gmra.mxu0 %v4669
    %v4863 = vpop.f32.mrf.mxu0
    %v4864 = vadd.f32 0.0, %v4863
    %4865 = vmatmul.f32.gmra.mxu0 %v4671
    %v4866 = vpop.f32.mrf.mxu0
    %v4867 = vadd.f32 0.0, %v4866
    %4868 = vmatmul.f32.gmra.mxu0 %v4673
    %v4869 = vpop.f32.mrf.mxu0
    %v4870 = vadd.f32 0.0, %v4869
    %4871 = vdwg.mxu0
    %v4932 = vrot.slane %v4693, 4
    %v4933 = vrot.slane %v4696, 4
    %v4934 = vrot.slane %v4699, 4
    %v4935 = vrot.slane %v4702, 4
    %v4936 = vrot.slane %v4705, 4
    %v4937 = vrot.slane %v4708, 4
    %v4938 = vrot.slane %v4711, 4
    %v4939 = vrot.slane %v4714, 4
    %v4940 = vrot.slane %v4717, 4
    %v4941 = vrot.slane %v4720, 4
    %v4942 = vrot.slane %v4723, 4
    %v4943 = vrot.slane %v4726, 4
    %v4944 = vrot.slane %v4729, 4
    %v4945 = vrot.slane %v4732, 4
    %v4946 = vrot.slane %v4735, 4
    %v4947 = vrot.slane %v4738, 4
    %v4948 = vrot.slane %v4741, 4
    %v4949 = vrot.slane %v4744, 4
    %v4950 = vrot.slane %v4747, 4
    %v4951 = vrot.slane %v4750, 4
    %v4952 = vrot.slane %v4753, 4
    %v4953 = vrot.slane %v4756, 4
    %v4954 = vrot.slane %v4759, 4
    %v4955 = vrot.slane %v4762, 4
    %v4956 = vrot.slane %v4765, 4
    %v4957 = vrot.slane %v4768, 4
    %v4958 = vrot.slane %v4771, 4
    %v4959 = vrot.slane %v4774, 4
    %v4960 = vrot.slane %v4777, 4
    %v4961 = vrot.slane %v4780, 4
    %v4962 = vrot.slane %v4783, 4
    %v4963 = vrot.slane %v4786, 4
    %v4964 = vrot.slane %v4789, 4
    %v4965 = vrot.slane %v4792, 4
    %v4966 = vrot.slane %v4795, 4
    %v4967 = vrot.slane %v4798, 4
    %v4968 = vrot.slane %v4801, 4
    %v4969 = vrot.slane %v4804, 4
    %v4970 = vrot.slane %v4807, 4
    %v4971 = vrot.slane %v4810, 4
    %v4972 = vrot.slane %v4813, 4
    %v4973 = vrot.slane %v4816, 4
    %v4974 = vrot.slane %v4819, 4
    %v4975 = vrot.slane %v4822, 4
    %v4976 = vrot.slane %v4825, 4
    %v4977 = vrot.slane %v4828, 4
    %v4978 = vrot.slane %v4831, 4
    %v4979 = vrot.slane %v4834, 4
    %v4980 = vrot.slane %v4837, 4
    %v4981 = vrot.slane %v4840, 4
    %v4982 = vrot.slane %v4843, 4
    %v4983 = vrot.slane %v4846, 4
    %v4984 = vrot.slane %v4849, 4
    %v4985 = vrot.slane %v4852, 4
    %v4986 = vrot.slane %v4855, 4
    %v4987 = vrot.slane %v4858, 4
    %v4988 = vrot.slane %v4861, 4
    %v4989 = vrot.slane %v4864, 4
    %v4990 = vrot.slane %v4867, 4
    %v4991 = vrot.slane %v4870, 4
    %4992 = vst [vmem:[#allocation1] ss:$2 sm:$0xff] %v4693
    %s4993 = scalar_lea.vmem [#allocation1], 1
    %4994 = vst [vmem:[%s4993] ss:$2 sm:$0xff] %v4932
    %s4995 = scalar_lea.vmem [#allocation1], 16
    %4996 = vst [vmem:[%s4995] ss:$2 sm:$0xff] %v4696
    %s4997 = scalar_lea.vmem [#allocation1], 17
    %4998 = vst [vmem:[%s4997] ss:$2 sm:$0xff] %v4933
    %s4999 = scalar_lea.vmem [#allocation1], 32
    %5000 = vst [vmem:[%s4999] ss:$2 sm:$0xff] %v4699
    %v5001 = vld.sshfl [vmem:[#allocation1] sm:$0xff pattern:$0x75316420]
    %v5002 = vld.sshfl [vmem:[#allocation1 + $0x10] sm:$0xff pattern:$0x75316420]
    %v5003 = vld.sshfl [vmem:[#allocation1 + $0x20] sm:$0xff pattern:$0x75316420]
    %s5004 = scalar_lea.vmem [#allocation1], 48
    %5005 = vst [vmem:[%s5004] ss:$2 sm:$0xff] %v4934
    %s5006 = scalar_lea.vmem [#allocation1], 49
    %5007 = vst [vmem:[%s5006] ss:$2 sm:$0xff] %v4702
    %v5008 = vld.sshfl [vmem:[#allocation1 + $0x30] sm:$0xff pattern:$0x75316420]
    %5009 = vst [vmem:[#allocation1] ss:$2 sm:$0xff] %v4935
    %5010 = vst [vmem:[%s4993] ss:$2 sm:$0xff] %v4705
    %5011 = vst [vmem:[%s4995] ss:$2 sm:$0xff] %v4936
    %v5012 = vld.sshfl [vmem:[#allocation1] sm:$0xff pattern:$0x75316420]
    %v5013 = vld.sshfl [vmem:[#allocation1 + $0x10] sm:$0xff pattern:$0x75316420]
    %5014 = vst [vmem:[%s4999] ss:$2 sm:$0xff] %v4708
    %s5015 = scalar_lea.vmem [#allocation1], 33
    %5016 = vst [vmem:[%s5015] ss:$2 sm:$0xff] %v4937
    %5017 = vst [vmem:[%s5004] ss:$2 sm:$0xff] %v4711
    %5018 = vst [vmem:[%s5006] ss:$2 sm:$0xff] %v4938
    %v5019 = vld.sshfl [vmem:[#allocation1 + $0x20] sm:$0xff pattern:$0x75316420]
    %v5020 = vld.sshfl [vmem:[#allocation1 + $0x30] sm:$0xff pattern:$0x75316420]
    %5021 = vst [vmem:[#allocation1] ss:$2 sm:$0xff] %v4714
    %v5022 = vld.sshfl [vmem:[#allocation1] sm:$0xff pattern:$0x75316420]
    %5023 = vst [vmem:[%s4995] ss:$2 sm:$0xff] %v4939
    %5024 = vst [vmem:[%s4997] ss:$2 sm:$0xff] %v4717
    %5025 = vst [vmem:[%s4999] ss:$2 sm:$0xff] %v4940
    %5026 = vst [vmem:[%s5015] ss:$2 sm:$0xff] %v4720
    %5027 = vst [vmem:[%s5004] ss:$2 sm:$0xff] %v4941
    %v5028 = vld.sshfl [vmem:[#allocation1 + $0x10] sm:$0xff pattern:$0x75316420]
    %v5029 = vld.sshfl [vmem:[#allocation1 + $0x20] sm:$0xff pattern:$0x75316420]
    %v5030 = vld.sshfl [vmem:[#allocation1 + $0x30] sm:$0xff pattern:$0x75316420]
    %5031 = vst [vmem:[#allocation1] ss:$2 sm:$0xff] %v4723
    %5032 = vst [vmem:[%s4993] ss:$2 sm:$0xff] %v4942
    %5033 = vst [vmem:[%s4995] ss:$2 sm:$0xff] %v4726
    %5034 = vst [vmem:[%s4997] ss:$2 sm:$0xff] %v4943
    %5035 = vst [vmem:[%s4999] ss:$2 sm:$0xff] %v4729
    %v5036 = vld.sshfl [vmem:[#allocation1] sm:$0xff pattern:$0x75316420]
    %v5037 = vld.sshfl [vmem:[#allocation1 + $0x10] sm:$0xff pattern:$0x75316420]
    %v5038 = vld.sshfl [vmem:[#allocation1 + $0x20] sm:$0xff pattern:$0x75316420]
    %5039 = vst [vmem:[%s5004] ss:$2 sm:$0xff] %v4944
    %5040 = vst [vmem:[%s5006] ss:$2 sm:$0xff] %v4732
    %v5041 = vld.sshfl [vmem:[#allocation1 + $0x30] sm:$0xff pattern:$0x75316420]
    %5042 = vst [vmem:[#allocation1] ss:$2 sm:$0xff] %v4945
    %5043 = vst [vmem:[%s4993] ss:$2 sm:$0xff] %v4735
    %5044 = vst [vmem:[%s4995] ss:$2 sm:$0xff] %v4946
    %v5045 = vld.sshfl [vmem:[#allocation1] sm:$0xff pattern:$0x75316420]
    %v5046 = vld.sshfl [vmem:[#allocation1 + $0x10] sm:$0xff pattern:$0x75316420]
    %5047 = vst [vmem:[%s4999] ss:$2 sm:$0xff] %v4738
    %5048 = vst [vmem:[%s5015] ss:$2 sm:$0xff] %v4947
    %5049 = vst [vmem:[%s5004] ss:$2 sm:$0xff] %v4741
    %5050 = vst [vmem:[%s5006] ss:$2 sm:$0xff] %v4948
    %v5051 = vld.sshfl [vmem:[#allocation1 + $0x20] sm:$0xff pattern:$0x75316420]
    %v5052 = vld.sshfl [vmem:[#allocation1 + $0x30] sm:$0xff pattern:$0x75316420]
    %5053 = vst [vmem:[#allocation1] ss:$2 sm:$0xff] %v4744
    %v5054 = vld.sshfl [vmem:[#allocation1] sm:$0xff pattern:$0x75316420]
    %5055 = vst [vmem:[%s4995] ss:$2 sm:$0xff] %v4949
    %5056 = vst [vmem:[%s4997] ss:$2 sm:$0xff] %v4747
    %5057 = vst [vmem:[%s4999] ss:$2 sm:$0xff] %v4950
    %5058 = vst [vmem:[%s5015] ss:$2 sm:$0xff] %v4750
    %5059 = vst [vmem:[%s5004] ss:$2 sm:$0xff] %v4951
    %v5060 = vld.sshfl [vmem:[#allocation1 + $0x10] sm:$0xff pattern:$0x75316420]
    %v5061 = vld.sshfl [vmem:[#allocation1 + $0x20] sm:$0xff pattern:$0x75316420]
    %v5062 = vld.sshfl [vmem:[#allocation1 + $0x30] sm:$0xff pattern:$0x75316420]
    %5063 = vst [vmem:[#allocation1] ss:$2 sm:$0xff] %v4753
    %5064 = vst [vmem:[%s4993] ss:$2 sm:$0xff] %v4952
    %5065 = vst [vmem:[%s4995] ss:$2 sm:$0xff] %v4756
    %5066 = vst [vmem:[%s4997] ss:$2 sm:$0xff] %v4953
    %5067 = vst [vmem:[%s4999] ss:$2 sm:$0xff] %v4759
    %v5068 = vld.sshfl [vmem:[#allocation1] sm:$0xff pattern:$0x75316420]
    %v5069 = vld.sshfl [vmem:[#allocation1 + $0x10] sm:$0xff pattern:$0x75316420]
    %v5070 = vld.sshfl [vmem:[#allocation1 + $0x20] sm:$0xff pattern:$0x75316420]
    %5071 = vst [vmem:[%s5004] ss:$2 sm:$0xff] %v4954
    %5072 = vst [vmem:[%s5006] ss:$2 sm:$0xff] %v4762
    %v5073 = vld.sshfl [vmem:[#allocation1 + $0x30] sm:$0xff pattern:$0x75316420]
    %5074 = vst [vmem:[#allocation1] ss:$2 sm:$0xff] %v4955
    %5075 = vst [vmem:[%s4993] ss:$2 sm:$0xff] %v4765
    %5076 = vst [vmem:[%s4995] ss:$2 sm:$0xff] %v4956
    %v5077 = vld.sshfl [vmem:[#allocation1] sm:$0xff pattern:$0x75316420]
    %v5078 = vld.sshfl [vmem:[#allocation1 + $0x10] sm:$0xff pattern:$0x75316420]
    %5079 = vst [vmem:[%s4999] ss:$2 sm:$0xff] %v4768
    %5080 = vst [vmem:[%s5015] ss:$2 sm:$0xff] %v4957
    %5081 = vst [vmem:[%s5004] ss:$2 sm:$0xff] %v4771
    %5082 = vst [vmem:[%s5006] ss:$2 sm:$0xff] %v4958
    %v5083 = vld.sshfl [vmem:[#allocation1 + $0x20] sm:$0xff pattern:$0x75316420]
    %v5084 = vld.sshfl [vmem:[#allocation1 + $0x30] sm:$0xff pattern:$0x75316420]
    %5085 = vst [vmem:[#allocation1] ss:$2 sm:$0xff] %v4774
    %v5086 = vld.sshfl [vmem:[#allocation1] sm:$0xff pattern:$0x75316420]
    %5087 = vst [vmem:[%s4995] ss:$2 sm:$0xff] %v4959
    %5088 = vst [vmem:[%s4997] ss:$2 sm:$0xff] %v4777
    %5089 = vst [vmem:[%s4999] ss:$2 sm:$0xff] %v4960
    %5090 = vst [vmem:[%s5015] ss:$2 sm:$0xff] %v4780
    %5091 = vst [vmem:[%s5004] ss:$2 sm:$0xff] %v4961
    %v5092 = vld.sshfl [vmem:[#allocation1 + $0x10] sm:$0xff pattern:$0x75316420]
    %v5093 = vld.sshfl [vmem:[#allocation1 + $0x20] sm:$0xff pattern:$0x75316420]
    %v5094 = vld.sshfl [vmem:[#allocation1 + $0x30] sm:$0xff pattern:$0x75316420]
    %5095 = vst [vmem:[#allocation1] ss:$2 sm:$0xff] %v4783
    %5096 = vst [vmem:[%s4993] ss:$2 sm:$0xff] %v4962
    %5097 = vst [vmem:[%s4995] ss:$2 sm:$0xff] %v4786
    %5098 = vst [vmem:[%s4997] ss:$2 sm:$0xff] %v4963
    %5099 = vst [vmem:[%s4999] ss:$2 sm:$0xff] %v4789
    %v5100 = vld.sshfl [vmem:[#allocation1] sm:$0xff pattern:$0x75316420]
    %v5101 = vld.sshfl [vmem:[#allocation1 + $0x10] sm:$0xff pattern:$0x75316420]
    %v5102 = vld.sshfl [vmem:[#allocation1 + $0x20] sm:$0xff pattern:$0x75316420]
    %5103 = vst [vmem:[%s5004] ss:$2 sm:$0xff] %v4964
    %5104 = vst [vmem:[%s5006] ss:$2 sm:$0xff] %v4792
    %v5105 = vld.sshfl [vmem:[#allocation1 + $0x30] sm:$0xff pattern:$0x75316420]
    %5106 = vst [vmem:[#allocation1] ss:$2 sm:$0xff] %v4965
    %5107 = vst [vmem:[%s4993] ss:$2 sm:$0xff] %v4795
    %5108 = vst [vmem:[%s4995] ss:$2 sm:$0xff] %v4966
    %v5109 = vld.sshfl [vmem:[#allocation1] sm:$0xff pattern:$0x75316420]
    %v5110 = vld.sshfl [vmem:[#allocation1 + $0x10] sm:$0xff pattern:$0x75316420]
    %5111 = vst [vmem:[%s4999] ss:$2 sm:$0xff] %v4798
    %5112 = vst [vmem:[%s5015] ss:$2 sm:$0xff] %v4967
    %5113 = vst [vmem:[%s5004] ss:$2 sm:$0xff] %v4801
    %5114 = vst [vmem:[%s5006] ss:$2 sm:$0xff] %v4968
    %v5115 = vld.sshfl [vmem:[#allocation1 + $0x20] sm:$0xff pattern:$0x75316420]
    %v5116 = vld.sshfl [vmem:[#allocation1 + $0x30] sm:$0xff pattern:$0x75316420]
    %5117 = vst [vmem:[#allocation1] ss:$2 sm:$0xff] %v4804
    %v5118 = vld.sshfl [vmem:[#allocation1] sm:$0xff pattern:$0x75316420]
    %5119 = vst [vmem:[%s4995] ss:$2 sm:$0xff] %v4969
    %5120 = vst [vmem:[%s4997] ss:$2 sm:$0xff] %v4807
    %5121 = vst [vmem:[%s4999] ss:$2 sm:$0xff] %v4970
    %5122 = vst [vmem:[%s5015] ss:$2 sm:$0xff] %v4810
    %5123 = vst [vmem:[%s5004] ss:$2 sm:$0xff] %v4971
    %v5124 = vld.sshfl [vmem:[#allocation1 + $0x10] sm:$0xff pattern:$0x75316420]
    %v5125 = vld.sshfl [vmem:[#allocation1 + $0x20] sm:$0xff pattern:$0x75316420]
    %v5126 = vld.sshfl [vmem:[#allocation1 + $0x30] sm:$0xff pattern:$0x75316420]
    %5127 = vst [vmem:[#allocation1] ss:$2 sm:$0xff] %v4813
    %5128 = vst [vmem:[%s4993] ss:$2 sm:$0xff] %v4972
    %5129 = vst [vmem:[%s4995] ss:$2 sm:$0xff] %v4816
    %5130 = vst [vmem:[%s4997] ss:$2 sm:$0xff] %v4973
    %5131 = vst [vmem:[%s4999] ss:$2 sm:$0xff] %v4819
    %v5132 = vld.sshfl [vmem:[#allocation1] sm:$0xff pattern:$0x75316420]
    %v5133 = vld.sshfl [vmem:[#allocation1 + $0x10] sm:$0xff pattern:$0x75316420]
    %v5134 = vld.sshfl [vmem:[#allocation1 + $0x20] sm:$0xff pattern:$0x75316420]
    %5135 = vst [vmem:[%s5004] ss:$2 sm:$0xff] %v4974
    %5136 = vst [vmem:[%s5006] ss:$2 sm:$0xff] %v4822
    %v5137 = vld.sshfl [vmem:[#allocation1 + $0x30] sm:$0xff pattern:$0x75316420]
    %5138 = vst [vmem:[#allocation1] ss:$2 sm:$0xff] %v4975
    %5139 = vst [vmem:[%s4993] ss:$2 sm:$0xff] %v4825
    %5140 = vst [vmem:[%s4995] ss:$2 sm:$0xff] %v4976
    %v5141 = vld.sshfl [vmem:[#allocation1] sm:$0xff pattern:$0x75316420]
    %v5142 = vld.sshfl [vmem:[#allocation1 + $0x10] sm:$0xff pattern:$0x75316420]
    %5143 = vst [vmem:[%s4999] ss:$2 sm:$0xff] %v4828
    %5144 = vst [vmem:[%s5015] ss:$2 sm:$0xff] %v4977
    %5145 = vst [vmem:[%s5004] ss:$2 sm:$0xff] %v4831
    %5146 = vst [vmem:[%s5006] ss:$2 sm:$0xff] %v4978
    %v5147 = vld.sshfl [vmem:[#allocation1 + $0x20] sm:$0xff pattern:$0x75316420]
    %v5148 = vld.sshfl [vmem:[#allocation1 + $0x30] sm:$0xff pattern:$0x75316420]
    %5149 = vst [vmem:[#allocation1] ss:$2 sm:$0xff] %v4834
    %v5150 = vld.sshfl [vmem:[#allocation1] sm:$0xff pattern:$0x75316420]
    %5151 = vst [vmem:[%s4995] ss:$2 sm:$0xff] %v4979
    %5152 = vst [vmem:[%s4997] ss:$2 sm:$0xff] %v4837
    %5153 = vst [vmem:[%s4999] ss:$2 sm:$0xff] %v4980
    %5154 = vst [vmem:[%s5015] ss:$2 sm:$0xff] %v4840
    %5155 = vst [vmem:[%s5004] ss:$2 sm:$0xff] %v4981
    %v5156 = vld.sshfl [vmem:[#allocation1 + $0x10] sm:$0xff pattern:$0x75316420]
    %v5157 = vld.sshfl [vmem:[#allocation1 + $0x20] sm:$0xff pattern:$0x75316420]
    %v5158 = vld.sshfl [vmem:[#allocation1 + $0x30] sm:$0xff pattern:$0x75316420]
    %5159 = vst [vmem:[#allocation1] ss:$2 sm:$0xff] %v4843
    %5160 = vst [vmem:[%s4993] ss:$2 sm:$0xff] %v4982
    %5161 = vst [vmem:[%s4995] ss:$2 sm:$0xff] %v4846
    %5162 = vst [vmem:[%s4997] ss:$2 sm:$0xff] %v4983
    %5163 = vst [vmem:[%s4999] ss:$2 sm:$0xff] %v4849
    %v5164 = vld.sshfl [vmem:[#allocation1] sm:$0xff pattern:$0x75316420]
    %v5165 = vld.sshfl [vmem:[#allocation1 + $0x10] sm:$0xff pattern:$0x75316420]
    %v5166 = vld.sshfl [vmem:[#allocation1 + $0x20] sm:$0xff pattern:$0x75316420]
    %5167 = vst [vmem:[%s5004] ss:$2 sm:$0xff] %v4984
    %5168 = vst [vmem:[%s5006] ss:$2 sm:$0xff] %v4852
    %v5169 = vld.sshfl [vmem:[#allocation1 + $0x30] sm:$0xff pattern:$0x75316420]
    %5170 = vst [vmem:[#allocation1] ss:$2 sm:$0xff] %v4985
    %5171 = vst [vmem:[%s4993] ss:$2 sm:$0xff] %v4855
    %5172 = vst [vmem:[%s4995] ss:$2 sm:$0xff] %v4986
    %v5173 = vld.sshfl [vmem:[#allocation1] sm:$0xff pattern:$0x75316420]
    %v5174 = vld.sshfl [vmem:[#allocation1 + $0x10] sm:$0xff pattern:$0x75316420]
    %5175 = vst [vmem:[%s4999] ss:$2 sm:$0xff] %v4858
    %5176 = vst [vmem:[%s5015] ss:$2 sm:$0xff] %v4987
    %5177 = vst [vmem:[%s5004] ss:$2 sm:$0xff] %v4861
    %5178 = vst [vmem:[%s5006] ss:$2 sm:$0xff] %v4988
    %v5179 = vld.sshfl [vmem:[#allocation1 + $0x20] sm:$0xff pattern:$0x75316420]
    %v5180 = vld.sshfl [vmem:[#allocation1 + $0x30] sm:$0xff pattern:$0x75316420]
    %5181 = vst [vmem:[#allocation1] ss:$2 sm:$0xff] %v4864
    %v5182 = vld.sshfl [vmem:[#allocation1] sm:$0xff pattern:$0x75316420]
    %5183 = vst [vmem:[%s4995] ss:$2 sm:$0xff] %v4989
    %5184 = vst [vmem:[%s4997] ss:$2 sm:$0xff] %v4867
    %5185 = vst [vmem:[%s4999] ss:$2 sm:$0xff] %v4990
    %5186 = vst [vmem:[%s5015] ss:$2 sm:$0xff] %v4870
    %5187 = vst [vmem:[%s5004] ss:$2 sm:$0xff] %v4991
    %v5188 = vld.sshfl [vmem:[#allocation1 + $0x10] sm:$0xff pattern:$0x75316420]
    %v5189 = vld.sshfl [vmem:[#allocation1 + $0x20] sm:$0xff pattern:$0x75316420]
    %v5190 = vld.sshfl [vmem:[#allocation1 + $0x30] sm:$0xff pattern:$0x75316420]
    %5192 = vrot.lane.b32.xlu0 0.0, 4
    %v5193 = vpop.permute.xlu0 %5192
    %5194 = vrot.lane.b32.xlu0 %v5001, 4
    %v5195 = vpop.permute.xlu0 %5194
    %5196 = vrot.lane.b32.xlu0 %v5002, 4
    %v5197 = vpop.permute.xlu0 %5196
    %5198 = vrot.lane.b32.xlu0 %v5003, 4
    %v5199 = vpop.permute.xlu0 %5198
    %5200 = vrot.lane.b32.xlu0 %v5008, 4
    %v5201 = vpop.permute.xlu0 %5200
    %5202 = vrot.lane.b32.xlu0 %v5012, 4
    %v5203 = vpop.permute.xlu0 %5202
    %5204 = vrot.lane.b32.xlu0 %v5013, 4
    %v5205 = vpop.permute.xlu0 %5204
    %5206 = vrot.lane.b32.xlu0 %v5019, 4
    %v5207 = vpop.permute.xlu0 %5206
    %5208 = vrot.lane.b32.xlu0 %v5020, 4
    %v5209 = vpop.permute.xlu0 %5208
    %5210 = vrot.lane.b32.xlu0 %v5022, 4
    %v5211 = vpop.permute.xlu0 %5210
    %5212 = vrot.lane.b32.xlu0 %v5028, 4
    %v5213 = vpop.permute.xlu0 %5212
    %5214 = vrot.lane.b32.xlu0 %v5029, 4
    %v5215 = vpop.permute.xlu0 %5214
    %5216 = vrot.lane.b32.xlu0 %v5030, 4
    %v5217 = vpop.permute.xlu0 %5216
    %5218 = vrot.lane.b32.xlu0 %v5036, 4
    %v5219 = vpop.permute.xlu0 %5218
    %5220 = vrot.lane.b32.xlu0 %v5037, 4
    %v5221 = vpop.permute.xlu0 %5220
    %5222 = vrot.lane.b32.xlu0 %v5038, 4
    %v5223 = vpop.permute.xlu0 %5222
    %5224 = vrot.lane.b32.xlu0 %v5041, 4
    %v5225 = vpop.permute.xlu0 %5224
    %5226 = vrot.lane.b32.xlu0 %v5045, 4
    %v5227 = vpop.permute.xlu0 %5226
    %5228 = vrot.lane.b32.xlu0 %v5046, 4
    %v5229 = vpop.permute.xlu0 %5228
    %5230 = vrot.lane.b32.xlu0 %v5051, 4
    %v5231 = vpop.permute.xlu0 %5230
    %5232 = vrot.lane.b32.xlu0 %v5052, 4
    %v5233 = vpop.permute.xlu0 %5232
    %5234 = vrot.lane.b32.xlu0 %v5054, 4
    %v5235 = vpop.permute.xlu0 %5234
    %5236 = vrot.lane.b32.xlu0 %v5060, 4
    %v5237 = vpop.permute.xlu0 %5236
    %5238 = vrot.lane.b32.xlu0 %v5061, 4
    %v5239 = vpop.permute.xlu0 %5238
    %5240 = vrot.lane.b32.xlu0 %v5062, 4
    %v5241 = vpop.permute.xlu0 %5240
    %5242 = vrot.lane.b32.xlu0 %v5068, 4
    %v5243 = vpop.permute.xlu0 %5242
    %5244 = vrot.lane.b32.xlu0 %v5069, 4
    %v5245 = vpop.permute.xlu0 %5244
    %5246 = vrot.lane.b32.xlu0 %v5070, 4
    %v5247 = vpop.permute.xlu0 %5246
    %5248 = vrot.lane.b32.xlu0 %v5073, 4
    %v5249 = vpop.permute.xlu0 %5248
    %5250 = vrot.lane.b32.xlu0 %v5077, 4
    %v5251 = vpop.permute.xlu0 %5250
    %5252 = vrot.lane.b32.xlu0 %v5078, 4
    %v5253 = vpop.permute.xlu0 %5252
    %5254 = vrot.lane.b32.xlu0 %v5083, 4
    %v5255 = vpop.permute.xlu0 %5254
    %5256 = vrot.lane.b32.xlu0 %v5084, 4
    %v5257 = vpop.permute.xlu0 %5256
    %5258 = vrot.lane.b32.xlu0 %v5086, 4
    %v5259 = vpop.permute.xlu0 %5258
    %5260 = vrot.lane.b32.xlu0 %v5092, 4
    %v5261 = vpop.permute.xlu0 %5260
    %5262 = vrot.lane.b32.xlu0 %v5093, 4
    %v5263 = vpop.permute.xlu0 %5262
    %5264 = vrot.lane.b32.xlu0 %v5094, 4
    %v5265 = vpop.permute.xlu0 %5264
    %5266 = vrot.lane.b32.xlu0 %v5100, 4
    %v5267 = vpop.permute.xlu0 %5266
    %5268 = vrot.lane.b32.xlu0 %v5101, 4
    %v5269 = vpop.permute.xlu0 %5268
    %5270 = vrot.lane.b32.xlu0 %v5102, 4
    %v5271 = vpop.permute.xlu0 %5270
    %5272 = vrot.lane.b32.xlu0 %v5105, 4
    %v5273 = vpop.permute.xlu0 %5272
    %5274 = vrot.lane.b32.xlu0 %v5109, 4
    %v5275 = vpop.permute.xlu0 %5274
    %5276 = vrot.lane.b32.xlu0 %v5110, 4
    %v5277 = vpop.permute.xlu0 %5276
    %5278 = vrot.lane.b32.xlu0 %v5115, 4
    %v5279 = vpop.permute.xlu0 %5278
    %5280 = vrot.lane.b32.xlu0 %v5116, 4
    %v5281 = vpop.permute.xlu0 %5280
    %5282 = vrot.lane.b32.xlu0 %v5118, 4
    %v5283 = vpop.permute.xlu0 %5282
    %5284 = vrot.lane.b32.xlu0 %v5124, 4
    %v5285 = vpop.permute.xlu0 %5284
    %5286 = vrot.lane.b32.xlu0 %v5125, 4
    %v5287 = vpop.permute.xlu0 %5286
    %5288 = vrot.lane.b32.xlu0 %v5126, 4
    %v5289 = vpop.permute.xlu0 %5288
    %5290 = vrot.lane.b32.xlu0 %v5132, 4
    %v5291 = vpop.permute.xlu0 %5290
    %5292 = vrot.lane.b32.xlu0 %v5133, 4
    %v5293 = vpop.permute.xlu0 %5292
    %5294 = vrot.lane.b32.xlu0 %v5134, 4
    %v5295 = vpop.permute.xlu0 %5294
    %5296 = vrot.lane.b32.xlu0 %v5137, 4
    %v5297 = vpop.permute.xlu0 %5296
    %5298 = vrot.lane.b32.xlu0 %v5141, 4
    %v5299 = vpop.permute.xlu0 %5298
    %5300 = vrot.lane.b32.xlu0 %v5142, 4
    %v5301 = vpop.permute.xlu0 %5300
    %5302 = vrot.lane.b32.xlu0 %v5147, 4
    %v5303 = vpop.permute.xlu0 %5302
    %5304 = vrot.lane.b32.xlu0 %v5148, 4
    %v5305 = vpop.permute.xlu0 %5304
    %5306 = vrot.lane.b32.xlu0 %v5150, 4
    %v5307 = vpop.permute.xlu0 %5306
    %5308 = vrot.lane.b32.xlu0 %v5156, 4
    %v5309 = vpop.permute.xlu0 %5308
    %5310 = vrot.lane.b32.xlu0 %v5157, 4
    %v5311 = vpop.permute.xlu0 %5310
    %5312 = vrot.lane.b32.xlu0 %v5158, 4
    %v5313 = vpop.permute.xlu0 %5312
    %5314 = vrot.lane.b32.xlu0 %v5164, 4
    %v5315 = vpop.permute.xlu0 %5314
    %5316 = vrot.lane.b32.xlu0 %v5165, 4
    %v5317 = vpop.permute.xlu0 %5316
    %5318 = vrot.lane.b32.xlu0 %v5166, 4
    %v5319 = vpop.permute.xlu0 %5318
    %5320 = vrot.lane.b32.xlu0 %v5169, 4
    %v5321 = vpop.permute.xlu0 %5320
    %5322 = vrot.lane.b32.xlu0 %v5173, 4
    %v5323 = vpop.permute.xlu0 %5322
    %5324 = vrot.lane.b32.xlu0 %v5174, 4
    %v5325 = vpop.permute.xlu0 %5324
    %5326 = vrot.lane.b32.xlu0 %v5179, 4
    %v5327 = vpop.permute.xlu0 %5326
    %5328 = vrot.lane.b32.xlu0 %v5180, 4
    %v5329 = vpop.permute.xlu0 %5328
    %5330 = vrot.lane.b32.xlu0 %v5182, 4
    %v5331 = vpop.permute.xlu0 %5330
    %5332 = vrot.lane.b32.xlu0 %v5188, 4
    %v5333 = vpop.permute.xlu0 %5332
    %5334 = vrot.lane.b32.xlu0 %v5189, 4
    %v5335 = vpop.permute.xlu0 %5334
    %5336 = vrot.lane.b32.xlu0 %v5190, 4
    %v5337 = vpop.permute.xlu0 %5336
    %v5411 = vsel %vm2040, 0.0, %v5193
    %v5412 = vsel %vm2040, %v3430, %v5193
    %v5413 = vsel %vm2040, %v3431, %v5193
    %v5414 = vsel %vm2040, %v3432, %v5193
    %v5415 = vsel %vm2040, %v3437, %v5195
    %v5416 = vsel %vm2040, %v3441, %v5197
    %v5417 = vsel %vm2040, %v3442, %v5199
    %v5418 = vsel %vm2040, %v3448, %v5201
    %v5419 = vsel %vm2040, %v3449, %v5203
    %v5420 = vsel %vm2040, %v3451, %v5205
    %v5421 = vsel %vm2040, %v3457, %v5207
    %v5422 = vsel %vm2040, %v3458, %v5209
    %v5423 = vsel %vm2040, %v3459, %v5211
    %v5424 = vsel %vm2040, %v3465, %v5213
    %v5425 = vsel %vm2040, %v3466, %v5215
    %v5426 = vsel %vm2040, %v3467, %v5217
    %v5427 = vsel %vm2040, %v3470, %v5219
    %v5428 = vsel %vm2040, %v3474, %v5221
    %v5429 = vsel %vm2040, %v3475, %v5223
    %v5430 = vsel %vm2040, %v3480, %v5225
    %v5431 = vsel %vm2040, %v3481, %v5227
    %v5432 = vsel %vm2040, %v3483, %v5229
    %v5433 = vsel %vm2040, %v3489, %v5231
    %v5434 = vsel %vm2040, %v3490, %v5233
    %v5435 = vsel %vm2040, %v3491, %v5235
    %v5436 = vsel %vm2040, %v3497, %v5237
    %v5437 = vsel %vm2040, %v3498, %v5239
    %v5438 = vsel %vm2040, %v3499, %v5241
    %v5439 = vsel %vm2040, %v3502, %v5243
    %v5440 = vsel %vm2040, %v3506, %v5245
    %v5441 = vsel %vm2040, %v3507, %v5247
    %v5442 = vsel %vm2040, %v3512, %v5249
    %v5443 = vsel %vm2040, %v3513, %v5251
    %v5444 = vsel %vm2040, %v3515, %v5253
    %v5445 = vsel %vm2040, %v3521, %v5255
    %v5446 = vsel %vm2040, %v3522, %v5257
    %v5447 = vsel %vm2040, %v3523, %v5259
    %v5448 = vsel %vm2040, %v3529, %v5261
    %v5449 = vsel %vm2040, %v3530, %v5263
    %v5450 = vsel %vm2040, %v3531, %v5265
    %v5451 = vsel %vm2040, %v3534, %v5193
    %v5452 = vsel %vm2040, %v3538, %v5193
    %v5453 = vsel %vm2040, %v3539, %v5193
    %v5454 = vsel %vm2040, %v3544, %v5193
    %v5455 = vsel %vm2040, %v3545, %v5193
    %v5456 = vsel %vm2040, %v3547, %v5193
    %v5457 = vsel %vm2040, %v3553, %v5267
    %v5458 = vsel %vm2040, %v3554, %v5269
    %v5459 = vsel %vm2040, %v3555, %v5271
    %v5460 = vsel %vm2040, %v3561, %v5273
    %v5461 = vsel %vm2040, %v3562, %v5275
    %v5462 = vsel %vm2040, %v3563, %v5277
    %v5463 = vsel %vm2040, %v3566, %v5279
    %v5464 = vsel %vm2040, %v3570, %v5281
    %v5465 = vsel %vm2040, %v3571, %v5283
    %v5466 = vsel %vm2040, %v3576, %v5285
    %v5467 = vsel %vm2040, %v3577, %v5287
    %v5468 = vsel %vm2040, %v3579, %v5289
    %v5469 = vsel %vm2040, %v3585, %v5291
    %v5470 = vsel %vm2040, %v3586, %v5293
    %v5471 = vsel %vm2040, %v3587, %v5295
    %v5472 = vsel %vm2040, %v3593, %v5297
    %v5473 = vsel %vm2040, %v3594, %v5299
    %v5474 = vsel %vm2040, %v3595, %v5301
    %v5475 = vsel %vm2040, %v3598, %v5303
    %v5476 = vsel %vm2040, %v3602, %v5305
    %v5477 = vsel %vm2040, %v3603, %v5307
    %v5478 = vsel %vm2040, %v3608, %v5309
    %v5479 = vsel %vm2040, %v3609, %v5311
    %v5480 = vsel %vm2040, %v3611, %v5313
    %v5481 = vsel %vm2040, %v3617, %v5315
    %v5482 = vsel %vm2040, %v3618, %v5317
    %v5483 = vsel %vm2040, %v3619, %v5319
    %v5484 = vsel %vm2040, %v3625, %v5321
    %v5485 = vsel %vm2040, %v3626, %v5323
    %v5486 = vsel %vm2040, %v3627, %v5325
    %v5487 = vsel %vm2040, %v3630, %v5327
    %v5488 = vsel %vm2040, %v3634, %v5329
    %v5489 = vsel %vm2040, %v3635, %v5331
    %v5490 = vsel %vm2040, %v3640, %v5333
    %v5491 = vsel %vm2040, %v3641, %v5335
    %v5492 = vsel %vm2040, %v3643, %v5337
    %v5493 = vsel %vm2040, %v3649, %v5193
    %v5494 = vsel %vm2040, %v3650, %v5193
    %v5495 = vsel %vm2040, %v3651, %v5193
    %v5496 = vmax.f32 %v5411, 0.0
    %v5497 = vmax.f32 %v5412, 0.0
    %v5498 = vmax.f32 %v5413, 0.0
    %v5499 = vmax.f32 %v5414, 0.0
    %v5500 = vmax.f32 %v5415, 0.0
    %v5501 = vmax.f32 %v5416, 0.0
    %v5502 = vmax.f32 %v5417, 0.0
    %v5503 = vmax.f32 %v5418, 0.0
    %v5504 = vmax.f32 %v5419, 0.0
    %v5505 = vmax.f32 %v5420, 0.0
    %v5506 = vmax.f32 %v5421, 0.0
    %v5507 = vmax.f32 %v5422, 0.0
    %v5508 = vmax.f32 %v5423, 0.0
    %v5509 = vmax.f32 %v5424, 0.0
    %v5510 = vmax.f32 %v5425, 0.0
    %v5511 = vmax.f32 %v5426, 0.0
    %v5512 = vmax.f32 %v5427, 0.0
    %v5513 = vmax.f32 %v5428, 0.0
    %v5514 = vmax.f32 %v5429, 0.0
    %v5515 = vmax.f32 %v5430, 0.0
    %v5516 = vmax.f32 %v5431, 0.0
    %v5517 = vmax.f32 %v5432, 0.0
    %v5518 = vmax.f32 %v5433, 0.0
    %v5519 = vmax.f32 %v5434, 0.0
    %v5520 = vmax.f32 %v5435, 0.0
    %v5521 = vmax.f32 %v5436, 0.0
    %v5522 = vmax.f32 %v5437, 0.0
    %v5523 = vmax.f32 %v5438, 0.0
    %v5524 = vmax.f32 %v5439, 0.0
    %v5525 = vmax.f32 %v5440, 0.0
    %v5526 = vmax.f32 %v5441, 0.0
    %v5527 = vmax.f32 %v5442, 0.0
    %v5528 = vmax.f32 %v5443, 0.0
    %v5529 = vmax.f32 %v5444, 0.0
    %v5530 = vmax.f32 %v5445, 0.0
    %v5531 = vmax.f32 %v5446, 0.0
    %v5532 = vmax.f32 %v5447, 0.0
    %v5533 = vmax.f32 %v5448, 0.0
    %v5534 = vmax.f32 %v5449, 0.0
    %v5535 = vmax.f32 %v5450, 0.0
    %v5536 = vmax.f32 %v5451, 0.0
    %v5537 = vmax.f32 %v5452, 0.0
    %v5538 = vmax.f32 %v5453, 0.0
    %v5539 = vmax.f32 %v5454, 0.0
    %v5540 = vmax.f32 %v5455, 0.0
    %v5541 = vmax.f32 %v5456, 0.0
    %v5542 = vmax.f32 %v5457, 0.0
    %v5543 = vmax.f32 %v5458, 0.0
    %v5544 = vmax.f32 %v5459, 0.0
    %v5545 = vmax.f32 %v5460, 0.0
    %v5546 = vmax.f32 %v5461, 0.0
    %v5547 = vmax.f32 %v5462, 0.0
    %v5548 = vmax.f32 %v5463, 0.0
    %v5549 = vmax.f32 %v5464, 0.0
    %v5550 = vmax.f32 %v5465, 0.0
    %v5551 = vmax.f32 %v5466, 0.0
    %v5552 = vmax.f32 %v5467, 0.0
    %v5553 = vmax.f32 %v5468, 0.0
    %v5554 = vmax.f32 %v5469, 0.0
    %v5555 = vmax.f32 %v5470, 0.0
    %v5556 = vmax.f32 %v5471, 0.0
    %v5557 = vmax.f32 %v5472, 0.0
    %v5558 = vmax.f32 %v5473, 0.0
    %v5559 = vmax.f32 %v5474, 0.0
    %v5560 = vmax.f32 %v5475, 0.0
    %v5561 = vmax.f32 %v5476, 0.0
    %v5562 = vmax.f32 %v5477, 0.0
    %v5563 = vmax.f32 %v5478, 0.0
    %v5564 = vmax.f32 %v5479, 0.0
    %v5565 = vmax.f32 %v5480, 0.0
    %v5566 = vmax.f32 %v5481, 0.0
    %v5567 = vmax.f32 %v5482, 0.0
    %v5568 = vmax.f32 %v5483, 0.0
    %v5569 = vmax.f32 %v5484, 0.0
    %v5570 = vmax.f32 %v5485, 0.0
    %v5571 = vmax.f32 %v5486, 0.0
    %v5572 = vmax.f32 %v5487, 0.0
    %v5573 = vmax.f32 %v5488, 0.0
    %v5574 = vmax.f32 %v5489, 0.0
    %v5575 = vmax.f32 %v5490, 0.0
    %v5576 = vmax.f32 %v5491, 0.0
    %v5577 = vmax.f32 %v5492, 0.0
    %v5578 = vmax.f32 %v5493, 0.0
    %v5579 = vmax.f32 %v5494, 0.0
    %v5580 = vmax.f32 %v5495, 0.0
    %v5581 = vsel %vm2380, %v5496, -inf
    %v5582 = vsel %vm2380, %v5497, -inf
    %v5583 = vmax.f32 %v5581, %v5582
    %v5584 = vsel %vm2380, %v5498, -inf
    %v5585 = vmax.f32 %v5581, %v5584
    %vm5586 = vcmask 60416
    %v5587 = vsel %vm5586, %v5496, -inf
    %v5588 = vsel %vm5586, %v5499, -inf
    %v5589 = vmax.f32 %v5587, %v5588
    %v5590 = vsel %vm2380, %v5500, -inf
    %v5591 = vsel %vm2380, %v5503, -inf
    %v5592 = vmax.f32 %v5590, %v5591
    %v5593 = vsel %vm2380, %v5501, -inf
    %v5594 = vsel %vm2380, %v5504, -inf
    %v5595 = vmax.f32 %v5593, %v5594
    %v5596 = vsel %vm5586, %v5502, -inf
    %v5597 = vsel %vm5586, %v5505, -inf
    %v5598 = vmax.f32 %v5596, %v5597
    %v5599 = vsel %vm2380, %v5506, -inf
    %v5600 = vsel %vm2380, %v5509, -inf
    %v5601 = vmax.f32 %v5599, %v5600
    %v5602 = vsel %vm2380, %v5507, -inf
    %v5603 = vsel %vm2380, %v5510, -inf
    %v5604 = vmax.f32 %v5602, %v5603
    %v5605 = vsel %vm5586, %v5508, -inf
    %v5606 = vsel %vm5586, %v5511, -inf
    %v5607 = vmax.f32 %v5605, %v5606
    %v5608 = vsel %vm2380, %v5512, -inf
    %v5609 = vsel %vm2380, %v5515, -inf
    %v5610 = vmax.f32 %v5608, %v5609
    %v5611 = vsel %vm2380, %v5513, -inf
    %v5612 = vsel %vm2380, %v5516, -inf
    %v5613 = vmax.f32 %v5611, %v5612
    %v5614 = vsel %vm5586, %v5514, -inf
    %v5615 = vsel %vm5586, %v5517, -inf
    %v5616 = vmax.f32 %v5614, %v5615
    %v5617 = vsel %vm2380, %v5518, -inf
    %v5618 = vsel %vm2380, %v5521, -inf
    %v5619 = vmax.f32 %v5617, %v5618
    %v5620 = vsel %vm2380, %v5519, -inf
    %v5621 = vsel %vm2380, %v5522, -inf
    %v5622 = vmax.f32 %v5620, %v5621
    %v5623 = vsel %vm5586, %v5520, -inf
    %v5624 = vsel %vm5586, %v5523, -inf
    %v5625 = vmax.f32 %v5623, %v5624
    %v5626 = vsel %vm2380, %v5524, -inf
    %v5627 = vsel %vm2380, %v5527, -inf
    %v5628 = vmax.f32 %v5626, %v5627
    %v5629 = vsel %vm2380, %v5525, -inf
    %v5630 = vsel %vm2380, %v5528, -inf
    %v5631 = vmax.f32 %v5629, %v5630
    %v5632 = vsel %vm5586, %v5526, -inf
    %v5633 = vsel %vm5586, %v5529, -inf
    %v5634 = vmax.f32 %v5632, %v5633
    %v5635 = vsel %vm2380, %v5530, -inf
    %v5636 = vsel %vm2380, %v5533, -inf
    %v5637 = vmax.f32 %v5635, %v5636
    %v5638 = vsel %vm2380, %v5531, -inf
    %v5639 = vsel %vm2380, %v5534, -inf
    %v5640 = vmax.f32 %v5638, %v5639
    %v5641 = vsel %vm5586, %v5532, -inf
    %v5642 = vsel %vm5586, %v5535, -inf
    %v5643 = vmax.f32 %v5641, %v5642
    %v5644 = vsel %vm2380, %v5536, -inf
    %v5645 = vmax.f32 %v5644, %v5581
    %v5646 = vsel %vm2380, %v5537, -inf
    %v5647 = vmax.f32 %v5646, %v5581
    %v5648 = vsel %vm5586, %v5538, -inf
    %v5649 = vmax.f32 %v5648, %v5587
    %v5650 = vsel %vm2380, %v5539, -inf
    %v5651 = vmax.f32 %v5581, %v5650
    %v5652 = vsel %vm2380, %v5540, -inf
    %v5653 = vmax.f32 %v5581, %v5652
    %v5654 = vsel %vm5586, %v5541, -inf
    %v5655 = vmax.f32 %v5587, %v5654
    %v5656 = vsel %vm2380, %v5542, -inf
    %v5657 = vsel %vm2380, %v5545, -inf
    %v5658 = vmax.f32 %v5656, %v5657
    %v5659 = vsel %vm2380, %v5543, -inf
    %v5660 = vsel %vm2380, %v5546, -inf
    %v5661 = vmax.f32 %v5659, %v5660
    %v5662 = vsel %vm5586, %v5544, -inf
    %v5663 = vsel %vm5586, %v5547, -inf
    %v5664 = vmax.f32 %v5662, %v5663
    %v5665 = vsel %vm2380, %v5548, -inf
    %v5666 = vsel %vm2380, %v5551, -inf
    %v5667 = vmax.f32 %v5665, %v5666
    %v5668 = vsel %vm2380, %v5549, -inf
    %v5669 = vsel %vm2380, %v5552, -inf
    %v5670 = vmax.f32 %v5668, %v5669
    %v5671 = vsel %vm5586, %v5550, -inf
    %v5672 = vsel %vm5586, %v5553, -inf
    %v5673 = vmax.f32 %v5671, %v5672
    %v5674 = vsel %vm2380, %v5554, -inf
    %v5675 = vsel %vm2380, %v5557, -inf
    %v5676 = vmax.f32 %v5674, %v5675
    %v5677 = vsel %vm2380, %v5555, -inf
    %v5678 = vsel %vm2380, %v5558, -inf
    %v5679 = vmax.f32 %v5677, %v5678
    %v5680 = vsel %vm5586, %v5556, -inf
    %v5681 = vsel %vm5586, %v5559, -inf
    %v5682 = vmax.f32 %v5680, %v5681
    %v5683 = vsel %vm2380, %v5560, -inf
    %v5684 = vsel %vm2380, %v5563, -inf
    %v5685 = vmax.f32 %v5683, %v5684
    %v5686 = vsel %vm2380, %v5561, -inf
    %v5687 = vsel %vm2380, %v5564, -inf
    %v5688 = vmax.f32 %v5686, %v5687
    %v5689 = vsel %vm5586, %v5562, -inf
    %v5690 = vsel %vm5586, %v5565, -inf
    %v5691 = vmax.f32 %v5689, %v5690
    %v5692 = vsel %vm2380, %v5566, -inf
    %v5693 = vsel %vm2380, %v5569, -inf
    %v5694 = vmax.f32 %v5692, %v5693
    %v5695 = vsel %vm2380, %v5567, -inf
    %v5696 = vsel %vm2380, %v5570, -inf
    %v5697 = vmax.f32 %v5695, %v5696
    %v5698 = vsel %vm5586, %v5568, -inf
    %v5699 = vsel %vm5586, %v5571, -inf
    %v5700 = vmax.f32 %v5698, %v5699
    %v5701 = vsel %vm2380, %v5572, -inf
    %v5702 = vsel %vm2380, %v5575, -inf
    %v5703 = vmax.f32 %v5701, %v5702
    %v5704 = vsel %vm2380, %v5573, -inf
    %v5705 = vsel %vm2380, %v5576, -inf
    %v5706 = vmax.f32 %v5704, %v5705
    %v5707 = vsel %vm5586, %v5574, -inf
    %v5708 = vsel %vm5586, %v5577, -inf
    %v5709 = vmax.f32 %v5707, %v5708
    %v5710 = vsel %vm2380, %v5578, -inf
    %v5711 = vmax.f32 %v5710, %v5581
    %v5712 = vsel %vm2380, %v5579, -inf
    %v5713 = vmax.f32 %v5712, %v5581
    %v5714 = vsel %vm5586, %v5580, -inf
    %v5715 = vmax.f32 %v5714, %v5587
    %v5716 = vld [vmem:[%s3] sm:$0xff]
    %v5717 = vld [vmem:[%s3 + $0x8] sm:$0xff]
    %v5718 = vld [vmem:[%s3 + $0x10] sm:$0xf]
    %v5719 = vmul.f32 %v5583, %v5716
    %v5720 = vmul.f32 %v5585, %v5717
    %v5721 = vmul.f32 %v5589, %v5718
    %v5722 = vmul.f32 %v5592, %v5716
    %v5723 = vmul.f32 %v5595, %v5717
    %v5724 = vmul.f32 %v5598, %v5718
    %v5725 = vmul.f32 %v5601, %v5716
    %v5726 = vmul.f32 %v5604, %v5717
    %v5727 = vmul.f32 %v5607, %v5718
    %v5728 = vmul.f32 %v5610, %v5716
    %v5729 = vmul.f32 %v5613, %v5717
    %v5730 = vmul.f32 %v5616, %v5718
    %v5731 = vmul.f32 %v5619, %v5716
    %v5732 = vmul.f32 %v5622, %v5717
    %v5733 = vmul.f32 %v5625, %v5718
    %v5734 = vmul.f32 %v5628, %v5716
    %v5735 = vmul.f32 %v5631, %v5717
    %v5736 = vmul.f32 %v5634, %v5718
    %v5737 = vmul.f32 %v5637, %v5716
    %v5738 = vmul.f32 %v5640, %v5717
    %v5739 = vmul.f32 %v5643, %v5718
    %v5740 = vmul.f32 %v5645, %v5716
    %v5741 = vmul.f32 %v5647, %v5717
    %v5742 = vmul.f32 %v5649, %v5718
    %v5743 = vmul.f32 %v5651, %v5716
    %v5744 = vmul.f32 %v5653, %v5717
    %v5745 = vmul.f32 %v5655, %v5718
    %v5746 = vmul.f32 %v5658, %v5716
    %v5747 = vmul.f32 %v5661, %v5717
    %v5748 = vmul.f32 %v5664, %v5718
    %v5749 = vmul.f32 %v5667, %v5716
    %v5750 = vmul.f32 %v5670, %v5717
    %v5751 = vmul.f32 %v5673, %v5718
    %v5752 = vmul.f32 %v5676, %v5716
    %v5753 = vmul.f32 %v5679, %v5717
    %v5754 = vmul.f32 %v5682, %v5718
    %v5755 = vmul.f32 %v5685, %v5716
    %v5756 = vmul.f32 %v5688, %v5717
    %v5757 = vmul.f32 %v5691, %v5718
    %v5758 = vmul.f32 %v5694, %v5716
    %v5759 = vmul.f32 %v5697, %v5717
    %v5760 = vmul.f32 %v5700, %v5718
    %v5761 = vmul.f32 %v5703, %v5716
    %v5762 = vmul.f32 %v5706, %v5717
    %v5763 = vmul.f32 %v5709, %v5718
    %v5764 = vmul.f32 %v5711, %v5716
    %v5765 = vmul.f32 %v5713, %v5717
    %v5766 = vmul.f32 %v5715, %v5718
    %vm5809 = vcmask 1046528
    %v5810 = vrot.slane 0.0, 1
    %v5811 = vsel %vm5809, %v5810, %v5810
    %v5812 = vrot.slane %v5719, 1
    %v5813 = vrot.slane %v5720, 1
    %v5814 = vsel %vm5809, %v5812, %v5813
    %v5815 = vrot.slane %v5721, 1
    %v5816 = vsel %vm5809, %v5813, %v5815
    %v5817 = vrot.slane %v5722, 1
    %v5818 = vrot.slane %v5723, 1
    %v5819 = vsel %vm5809, %v5817, %v5818
    %v5820 = vrot.slane %v5724, 1
    %v5821 = vsel %vm5809, %v5818, %v5820
    %v5822 = vrot.slane %v5725, 1
    %v5823 = vrot.slane %v5726, 1
    %v5824 = vsel %vm5809, %v5822, %v5823
    %v5825 = vrot.slane %v5727, 1
    %v5826 = vsel %vm5809, %v5823, %v5825
    %v5827 = vrot.slane %v5728, 1
    %v5828 = vrot.slane %v5729, 1
    %v5829 = vsel %vm5809, %v5827, %v5828
    %v5830 = vrot.slane %v5730, 1
    %v5831 = vsel %vm5809, %v5828, %v5830
    %v5832 = vrot.slane %v5731, 1
    %v5833 = vrot.slane %v5732, 1
    %v5834 = vsel %vm5809, %v5832, %v5833
    %v5835 = vrot.slane %v5733, 1
    %v5836 = vsel %vm5809, %v5833, %v5835
    %v5837 = vrot.slane %v5734, 1
    %v5838 = vrot.slane %v5735, 1
    %v5839 = vsel %vm5809, %v5837, %v5838
    %v5840 = vrot.slane %v5736, 1
    %v5841 = vsel %vm5809, %v5838, %v5840
    %v5842 = vrot.slane %v5737, 1
    %v5843 = vrot.slane %v5738, 1
    %v5844 = vsel %vm5809, %v5842, %v5843
    %v5845 = vrot.slane %v5739, 1
    %v5846 = vsel %vm5809, %v5843, %v5845
    %v5847 = vrot.slane %v5743, 1
    %v5848 = vrot.slane %v5744, 1
    %v5849 = vsel %vm5809, %v5847, %v5848
    %v5850 = vrot.slane %v5745, 1
    %v5851 = vsel %vm5809, %v5848, %v5850
    %v5852 = vrot.slane %v5746, 1
    %v5853 = vrot.slane %v5747, 1
    %v5854 = vsel %vm5809, %v5852, %v5853
    %v5855 = vrot.slane %v5748, 1
    %v5856 = vsel %vm5809, %v5853, %v5855
    %v5857 = vrot.slane %v5749, 1
    %v5858 = vrot.slane %v5750, 1
    %v5859 = vsel %vm5809, %v5857, %v5858
    %v5860 = vrot.slane %v5751, 1
    %v5861 = vsel %vm5809, %v5858, %v5860
    %v5862 = vrot.slane %v5752, 1
    %v5863 = vrot.slane %v5753, 1
    %v5864 = vsel %vm5809, %v5862, %v5863
    %v5865 = vrot.slane %v5754, 1
    %v5866 = vsel %vm5809, %v5863, %v5865
    %v5867 = vrot.slane %v5755, 1
    %v5868 = vrot.slane %v5756, 1
    %v5869 = vsel %vm5809, %v5867, %v5868
    %v5870 = vrot.slane %v5757, 1
    %v5871 = vsel %vm5809, %v5868, %v5870
    %v5872 = vrot.slane %v5758, 1
    %v5873 = vrot.slane %v5759, 1
    %v5874 = vsel %vm5809, %v5872, %v5873
    %v5875 = vrot.slane %v5760, 1
    %v5876 = vsel %vm5809, %v5873, %v5875
    %v5877 = vrot.slane %v5761, 1
    %v5878 = vrot.slane %v5762, 1
    %v5879 = vsel %vm5809, %v5877, %v5878
    %v5880 = vrot.slane %v5763, 1
    %v5881 = vsel %vm5809, %v5878, %v5880
    %5882 = vrot.lane.b32.xlu0 %v5811, 8
    %v5883 = vpop.permute.xlu0 %5882
    %5884 = vrot.lane.b32.xlu0 %v5810, 8
    %v5885 = vpop.permute.xlu0 %5884
    %5886 = vrot.lane.b32.xlu0 %v5814, 8
    %v5887 = vpop.permute.xlu0 %5886
    %5888 = vrot.lane.b32.xlu0 %v5816, 8
    %v5889 = vpop.permute.xlu0 %5888
    %5890 = vrot.lane.b32.xlu0 %v5815, 8
    %v5891 = vpop.permute.xlu0 %5890
    %5892 = vrot.lane.b32.xlu0 %v5819, 8
    %v5893 = vpop.permute.xlu0 %5892
    %5894 = vrot.lane.b32.xlu0 %v5821, 8
    %v5895 = vpop.permute.xlu0 %5894
    %5896 = vrot.lane.b32.xlu0 %v5820, 8
    %v5897 = vpop.permute.xlu0 %5896
    %5898 = vrot.lane.b32.xlu0 %v5824, 8
    %v5899 = vpop.permute.xlu0 %5898
    %5900 = vrot.lane.b32.xlu0 %v5826, 8
    %v5901 = vpop.permute.xlu0 %5900
    %5902 = vrot.lane.b32.xlu0 %v5825, 8
    %v5903 = vpop.permute.xlu0 %5902
    %5904 = vrot.lane.b32.xlu0 %v5829, 8
    %v5905 = vpop.permute.xlu0 %5904
    %5906 = vrot.lane.b32.xlu0 %v5831, 8
    %v5907 = vpop.permute.xlu0 %5906
    %5908 = vrot.lane.b32.xlu0 %v5830, 8
    %v5909 = vpop.permute.xlu0 %5908
    %5910 = vrot.lane.b32.xlu0 %v5834, 8
    %v5911 = vpop.permute.xlu0 %5910
    %5912 = vrot.lane.b32.xlu0 %v5836, 8
    %v5913 = vpop.permute.xlu0 %5912
    %5914 = vrot.lane.b32.xlu0 %v5835, 8
    %v5915 = vpop.permute.xlu0 %5914
    %5916 = vrot.lane.b32.xlu0 %v5839, 8
    %v5917 = vpop.permute.xlu0 %5916
    %5918 = vrot.lane.b32.xlu0 %v5841, 8
    %v5919 = vpop.permute.xlu0 %5918
    %5920 = vrot.lane.b32.xlu0 %v5840, 8
    %v5921 = vpop.permute.xlu0 %5920
    %5922 = vrot.lane.b32.xlu0 %v5844, 8
    %v5923 = vpop.permute.xlu0 %5922
    %5924 = vrot.lane.b32.xlu0 %v5846, 8
    %v5925 = vpop.permute.xlu0 %5924
    %5926 = vrot.lane.b32.xlu0 %v5845, 8
    %v5927 = vpop.permute.xlu0 %5926
    %5928 = vrot.lane.b32.xlu0 %v5849, 8
    %v5929 = vpop.permute.xlu0 %5928
    %5930 = vrot.lane.b32.xlu0 %v5851, 8
    %v5931 = vpop.permute.xlu0 %5930
    %5932 = vrot.lane.b32.xlu0 %v5850, 8
    %v5933 = vpop.permute.xlu0 %5932
    %5934 = vrot.lane.b32.xlu0 %v5854, 8
    %v5935 = vpop.permute.xlu0 %5934
    %5936 = vrot.lane.b32.xlu0 %v5856, 8
    %v5937 = vpop.permute.xlu0 %5936
    %5938 = vrot.lane.b32.xlu0 %v5855, 8
    %v5939 = vpop.permute.xlu0 %5938
    %5940 = vrot.lane.b32.xlu0 %v5859, 8
    %v5941 = vpop.permute.xlu0 %5940
    %5942 = vrot.lane.b32.xlu0 %v5861, 8
    %v5943 = vpop.permute.xlu0 %5942
    %5944 = vrot.lane.b32.xlu0 %v5860, 8
    %v5945 = vpop.permute.xlu0 %5944
    %5946 = vrot.lane.b32.xlu0 %v5864, 8
    %v5947 = vpop.permute.xlu0 %5946
    %5948 = vrot.lane.b32.xlu0 %v5866, 8
    %v5949 = vpop.permute.xlu0 %5948
    %5950 = vrot.lane.b32.xlu0 %v5865, 8
    %v5951 = vpop.permute.xlu0 %5950
    %5952 = vrot.lane.b32.xlu0 %v5869, 8
    %v5953 = vpop.permute.xlu0 %5952
    %5954 = vrot.lane.b32.xlu0 %v5871, 8
    %v5955 = vpop.permute.xlu0 %5954
    %5956 = vrot.lane.b32.xlu0 %v5870, 8
    %v5957 = vpop.permute.xlu0 %5956
    %5958 = vrot.lane.b32.xlu0 %v5874, 8
    %v5959 = vpop.permute.xlu0 %5958
    %5960 = vrot.lane.b32.xlu0 %v5876, 8
    %v5961 = vpop.permute.xlu0 %5960
    %5962 = vrot.lane.b32.xlu0 %v5875, 8
    %v5963 = vpop.permute.xlu0 %5962
    %5964 = vrot.lane.b32.xlu0 %v5879, 8
    %v5965 = vpop.permute.xlu0 %5964
    %5966 = vrot.lane.b32.xlu0 %v5881, 8
    %v5967 = vpop.permute.xlu0 %5966
    %5968 = vrot.lane.b32.xlu0 %v5880, 8
    %v5969 = vpop.permute.xlu0 %5968
    %vm6014 = vcmask 1045504
    %v6015 = vrot.slane 0.0, 2
    %v6016 = vsel %vm6014, %v6015, %v6015
    %v6017 = vrot.slane %v5719, 2
    %v6018 = vrot.slane %v5720, 2
    %v6019 = vsel %vm6014, %v6017, %v6018
    %v6020 = vrot.slane %v5721, 2
    %v6021 = vsel %vm6014, %v6018, %v6020
    %v6022 = vrot.slane %v5722, 2
    %v6023 = vrot.slane %v5723, 2
    %v6024 = vsel %vm6014, %v6022, %v6023
    %v6025 = vrot.slane %v5724, 2
    %v6026 = vsel %vm6014, %v6023, %v6025
    %v6027 = vrot.slane %v5725, 2
    %v6028 = vrot.slane %v5726, 2
    %v6029 = vsel %vm6014, %v6027, %v6028
    %v6030 = vrot.slane %v5727, 2
    %v6031 = vsel %vm6014, %v6028, %v6030
    %v6032 = vrot.slane %v5728, 2
    %v6033 = vrot.slane %v5729, 2
    %v6034 = vsel %vm6014, %v6032, %v6033
    %v6035 = vrot.slane %v5730, 2
    %v6036 = vsel %vm6014, %v6033, %v6035
    %v6037 = vrot.slane %v5731, 2
    %v6038 = vrot.slane %v5732, 2
    %v6039 = vsel %vm6014, %v6037, %v6038
    %v6040 = vrot.slane %v5733, 2
    %v6041 = vsel %vm6014, %v6038, %v6040
    %v6042 = vrot.slane %v5734, 2
    %v6043 = vrot.slane %v5735, 2
    %v6044 = vsel %vm6014, %v6042, %v6043
    %v6045 = vrot.slane %v5736, 2
    %v6046 = vsel %vm6014, %v6043, %v6045
    %v6047 = vrot.slane %v5737, 2
    %v6048 = vrot.slane %v5738, 2
    %v6049 = vsel %vm6014, %v6047, %v6048
    %v6050 = vrot.slane %v5739, 2
    %v6051 = vsel %vm6014, %v6048, %v6050
    %v6052 = vrot.slane %v5743, 2
    %v6053 = vrot.slane %v5744, 2
    %v6054 = vsel %vm6014, %v6052, %v6053
    %v6055 = vrot.slane %v5745, 2
    %v6056 = vsel %vm6014, %v6053, %v6055
    %v6057 = vrot.slane %v5746, 2
    %v6058 = vrot.slane %v5747, 2
    %v6059 = vsel %vm6014, %v6057, %v6058
    %v6060 = vrot.slane %v5748, 2
    %v6061 = vsel %vm6014, %v6058, %v6060
    %v6062 = vrot.slane %v5749, 2
    %v6063 = vrot.slane %v5750, 2
    %v6064 = vsel %vm6014, %v6062, %v6063
    %v6065 = vrot.slane %v5751, 2
    %v6066 = vsel %vm6014, %v6063, %v6065
    %v6067 = vrot.slane %v5752, 2
    %v6068 = vrot.slane %v5753, 2
    %v6069 = vsel %vm6014, %v6067, %v6068
    %v6070 = vrot.slane %v5754, 2
    %v6071 = vsel %vm6014, %v6068, %v6070
    %v6072 = vrot.slane %v5755, 2
    %v6073 = vrot.slane %v5756, 2
    %v6074 = vsel %vm6014, %v6072, %v6073
    %v6075 = vrot.slane %v5757, 2
    %v6076 = vsel %vm6014, %v6073, %v6075
    %v6077 = vrot.slane %v5758, 2
    %v6078 = vrot.slane %v5759, 2
    %v6079 = vsel %vm6014, %v6077, %v6078
    %v6080 = vrot.slane %v5760, 2
    %v6081 = vsel %vm6014, %v6078, %v6080
    %v6082 = vrot.slane %v5761, 2
    %v6083 = vrot.slane %v5762, 2
    %v6084 = vsel %vm6014, %v6082, %v6083
    %v6085 = vrot.slane %v5763, 2
    %v6086 = vsel %vm6014, %v6083, %v6085
    %6087 = vrot.lane.b32.xlu0 %v6016, 16
    %v6088 = vpop.permute.xlu0 %6087
    %6089 = vrot.lane.b32.xlu0 %v6015, 16
    %v6090 = vpop.permute.xlu0 %6089
    %6091 = vrot.lane.b32.xlu0 %v6019, 16
    %v6092 = vpop.permute.xlu0 %6091
    %6093 = vrot.lane.b32.xlu0 %v6021, 16
    %v6094 = vpop.permute.xlu0 %6093
    %6095 = vrot.lane.b32.xlu0 %v6020, 16
    %v6096 = vpop.permute.xlu0 %6095
    %6097 = vrot.lane.b32.xlu0 %v6024, 16
    %v6098 = vpop.permute.xlu0 %6097
    %6099 = vrot.lane.b32.xlu0 %v6026, 16
    %v6100 = vpop.permute.xlu0 %6099
    %6101 = vrot.lane.b32.xlu0 %v6025, 16
    %v6102 = vpop.permute.xlu0 %6101
    %6103 = vrot.lane.b32.xlu0 %v6029, 16
    %v6104 = vpop.permute.xlu0 %6103
    %6105 = vrot.lane.b32.xlu0 %v6031, 16
    %v6106 = vpop.permute.xlu0 %6105
    %6107 = vrot.lane.b32.xlu0 %v6030, 16
    %v6108 = vpop.permute.xlu0 %6107
    %6109 = vrot.lane.b32.xlu0 %v6034, 16
    %v6110 = vpop.permute.xlu0 %6109
    %6111 = vrot.lane.b32.xlu0 %v6036, 16
    %v6112 = vpop.permute.xlu0 %6111
    %6113 = vrot.lane.b32.xlu0 %v6035, 16
    %v6114 = vpop.permute.xlu0 %6113
    %6115 = vrot.lane.b32.xlu0 %v6039, 16
    %v6116 = vpop.permute.xlu0 %6115
    %6117 = vrot.lane.b32.xlu0 %v6041, 16
    %v6118 = vpop.permute.xlu0 %6117
    %6119 = vrot.lane.b32.xlu0 %v6040, 16
    %v6120 = vpop.permute.xlu0 %6119
    %6121 = vrot.lane.b32.xlu0 %v6044, 16
    %v6122 = vpop.permute.xlu0 %6121
    %6123 = vrot.lane.b32.xlu0 %v6046, 16
    %v6124 = vpop.permute.xlu0 %6123
    %6125 = vrot.lane.b32.xlu0 %v6045, 16
    %v6126 = vpop.permute.xlu0 %6125
    %6127 = vrot.lane.b32.xlu0 %v6049, 16
    %v6128 = vpop.permute.xlu0 %6127
    %6129 = vrot.lane.b32.xlu0 %v6051, 16
    %v6130 = vpop.permute.xlu0 %6129
    %6131 = vrot.lane.b32.xlu0 %v6050, 16
    %v6132 = vpop.permute.xlu0 %6131
    %6133 = vrot.lane.b32.xlu0 %v6054, 16
    %v6134 = vpop.permute.xlu0 %6133
    %6135 = vrot.lane.b32.xlu0 %v6056, 16
    %v6136 = vpop.permute.xlu0 %6135
    %6137 = vrot.lane.b32.xlu0 %v6055, 16
    %v6138 = vpop.permute.xlu0 %6137
    %6139 = vrot.lane.b32.xlu0 %v6059, 16
    %v6140 = vpop.permute.xlu0 %6139
    %6141 = vrot.lane.b32.xlu0 %v6061, 16
    %v6142 = vpop.permute.xlu0 %6141
    %6143 = vrot.lane.b32.xlu0 %v6060, 16
    %v6144 = vpop.permute.xlu0 %6143
    %6145 = vrot.lane.b32.xlu0 %v6064, 16
    %v6146 = vpop.permute.xlu0 %6145
    %6147 = vrot.lane.b32.xlu0 %v6066, 16
    %v6148 = vpop.permute.xlu0 %6147
    %6149 = vrot.lane.b32.xlu0 %v6065, 16
    %v6150 = vpop.permute.xlu0 %6149
    %6151 = vrot.lane.b32.xlu0 %v6069, 16
    %v6152 = vpop.permute.xlu0 %6151
    %6153 = vrot.lane.b32.xlu0 %v6071, 16
    %v6154 = vpop.permute.xlu0 %6153
    %6155 = vrot.lane.b32.xlu0 %v6070, 16
    %v6156 = vpop.permute.xlu0 %6155
    %6157 = vrot.lane.b32.xlu0 %v6074, 16
    %v6158 = vpop.permute.xlu0 %6157
    %6159 = vrot.lane.b32.xlu0 %v6076, 16
    %v6160 = vpop.permute.xlu0 %6159
    %6161 = vrot.lane.b32.xlu0 %v6075, 16
    %v6162 = vpop.permute.xlu0 %6161
    %6163 = vrot.lane.b32.xlu0 %v6079, 16
    %v6164 = vpop.permute.xlu0 %6163
    %6165 = vrot.lane.b32.xlu0 %v6081, 16
    %v6166 = vpop.permute.xlu0 %6165
    %6167 = vrot.lane.b32.xlu0 %v6080, 16
    %v6168 = vpop.permute.xlu0 %6167
    %6169 = vrot.lane.b32.xlu0 %v6084, 16
    %v6170 = vpop.permute.xlu0 %6169
    %6171 = vrot.lane.b32.xlu0 %v6086, 16
    %v6172 = vpop.permute.xlu0 %6171
    %6173 = vrot.lane.b32.xlu0 %v6085, 16
    %v6174 = vpop.permute.xlu0 %6173
    %6225 = vrot.lane.b32.xlu0 %v5719, 24
    %v6226 = vpop.permute.xlu0 %6225
    %6227 = vrot.lane.b32.xlu0 %v5720, 24
    %v6228 = vpop.permute.xlu0 %6227
    %6229 = vrot.lane.b32.xlu0 %v5721, 24
    %v6230 = vpop.permute.xlu0 %6229
    %6231 = vrot.lane.b32.xlu0 %v5722, 24
    %v6232 = vpop.permute.xlu0 %6231
    %6233 = vrot.lane.b32.xlu0 %v5723, 24
    %v6234 = vpop.permute.xlu0 %6233
    %6235 = vrot.lane.b32.xlu0 %v5724, 24
    %v6236 = vpop.permute.xlu0 %6235
    %6237 = vrot.lane.b32.xlu0 %v5725, 24
    %v6238 = vpop.permute.xlu0 %6237
    %6239 = vrot.lane.b32.xlu0 %v5726, 24
    %v6240 = vpop.permute.xlu0 %6239
    %6241 = vrot.lane.b32.xlu0 %v5727, 24
    %v6242 = vpop.permute.xlu0 %6241
    %6243 = vrot.lane.b32.xlu0 %v5728, 24
    %v6244 = vpop.permute.xlu0 %6243
    %6245 = vrot.lane.b32.xlu0 %v5729, 24
    %v6246 = vpop.permute.xlu0 %6245
    %6247 = vrot.lane.b32.xlu0 %v5730, 24
    %v6248 = vpop.permute.xlu0 %6247
    %6249 = vrot.lane.b32.xlu0 %v5731, 24
    %v6250 = vpop.permute.xlu0 %6249
    %6251 = vrot.lane.b32.xlu0 %v5732, 24
    %v6252 = vpop.permute.xlu0 %6251
    %6253 = vrot.lane.b32.xlu0 %v5733, 24
    %v6254 = vpop.permute.xlu0 %6253
    %6255 = vrot.lane.b32.xlu0 %v5734, 24
    %v6256 = vpop.permute.xlu0 %6255
    %6257 = vrot.lane.b32.xlu0 %v5735, 24
    %v6258 = vpop.permute.xlu0 %6257
    %6259 = vrot.lane.b32.xlu0 %v5736, 24
    %v6260 = vpop.permute.xlu0 %6259
    %6261 = vrot.lane.b32.xlu0 %v5737, 24
    %v6262 = vpop.permute.xlu0 %6261
    %6263 = vrot.lane.b32.xlu0 %v5738, 24
    %v6264 = vpop.permute.xlu0 %6263
    %6265 = vrot.lane.b32.xlu0 %v5739, 24
    %v6266 = vpop.permute.xlu0 %6265
    %6267 = vrot.lane.b32.xlu0 %v5740, 24
    %v6268 = vpop.permute.xlu0 %6267
    %6269 = vrot.lane.b32.xlu0 %v5741, 24
    %v6270 = vpop.permute.xlu0 %6269
    %6271 = vrot.lane.b32.xlu0 %v5742, 24
    %v6272 = vpop.permute.xlu0 %6271
    %6273 = vrot.lane.b32.xlu0 %v5743, 24
    %v6274 = vpop.permute.xlu0 %6273
    %6275 = vrot.lane.b32.xlu0 %v5744, 24
    %v6276 = vpop.permute.xlu0 %6275
    %6277 = vrot.lane.b32.xlu0 %v5745, 24
    %v6278 = vpop.permute.xlu0 %6277
    %6279 = vrot.lane.b32.xlu0 %v5746, 24
    %v6280 = vpop.permute.xlu0 %6279
    %6281 = vrot.lane.b32.xlu0 %v5747, 24
    %v6282 = vpop.permute.xlu0 %6281
    %6283 = vrot.lane.b32.xlu0 %v5748, 24
    %v6284 = vpop.permute.xlu0 %6283
    %6285 = vrot.lane.b32.xlu0 %v5749, 24
    %v6286 = vpop.permute.xlu0 %6285
    %6287 = vrot.lane.b32.xlu0 %v5750, 24
    %v6288 = vpop.permute.xlu0 %6287
    %6289 = vrot.lane.b32.xlu0 %v5751, 24
    %v6290 = vpop.permute.xlu0 %6289
    %6291 = vrot.lane.b32.xlu0 %v5752, 24
    %v6292 = vpop.permute.xlu0 %6291
    %6293 = vrot.lane.b32.xlu0 %v5753, 24
    %v6294 = vpop.permute.xlu0 %6293
    %6295 = vrot.lane.b32.xlu0 %v5754, 24
    %v6296 = vpop.permute.xlu0 %6295
    %6297 = vrot.lane.b32.xlu0 %v5755, 24
    %v6298 = vpop.permute.xlu0 %6297
    %6299 = vrot.lane.b32.xlu0 %v5756, 24
    %v6300 = vpop.permute.xlu0 %6299
    %6301 = vrot.lane.b32.xlu0 %v5757, 24
    %v6302 = vpop.permute.xlu0 %6301
    %6303 = vrot.lane.b32.xlu0 %v5758, 24
    %v6304 = vpop.permute.xlu0 %6303
    %6305 = vrot.lane.b32.xlu0 %v5759, 24
    %v6306 = vpop.permute.xlu0 %6305
    %6307 = vrot.lane.b32.xlu0 %v5760, 24
    %v6308 = vpop.permute.xlu0 %6307
    %6309 = vrot.lane.b32.xlu0 %v5761, 24
    %v6310 = vpop.permute.xlu0 %6309
    %6311 = vrot.lane.b32.xlu0 %v5762, 24
    %v6312 = vpop.permute.xlu0 %6311
    %6313 = vrot.lane.b32.xlu0 %v5763, 24
    %v6314 = vpop.permute.xlu0 %6313
    %6315 = vrot.lane.b32.xlu0 %v5764, 24
    %v6316 = vpop.permute.xlu0 %6315
    %6317 = vrot.lane.b32.xlu0 %v5765, 24
    %v6318 = vpop.permute.xlu0 %6317
    %6319 = vrot.lane.b32.xlu0 %v5766, 24
    %v6320 = vpop.permute.xlu0 %6319
    %v6369 = vrot.slane %v5740, 1
    %v6370 = vrot.slane %v5741, 1
    %v6371 = vsel %vm5809, %v6369, %v6370
    %v6372 = vrot.slane %v5742, 1
    %v6373 = vsel %vm5809, %v6370, %v6372
    %v6374 = vrot.slane %v5764, 1
    %v6375 = vrot.slane %v5765, 1
    %v6376 = vsel %vm5809, %v6374, %v6375
    %v6377 = vrot.slane %v5766, 1
    %v6378 = vsel %vm5809, %v6375, %v6377
    %6379 = vrot.lane.b32.xlu0 %v5814, 32
    %v6380 = vpop.permute.xlu0 %6379
    %6381 = vrot.lane.b32.xlu0 %v5816, 32
    %v6382 = vpop.permute.xlu0 %6381
    %6383 = vrot.lane.b32.xlu0 %v5815, 32
    %v6384 = vpop.permute.xlu0 %6383
    %6385 = vrot.lane.b32.xlu0 %v5819, 32
    %v6386 = vpop.permute.xlu0 %6385
    %6387 = vrot.lane.b32.xlu0 %v5821, 32
    %v6388 = vpop.permute.xlu0 %6387
    %6389 = vrot.lane.b32.xlu0 %v5820, 32
    %v6390 = vpop.permute.xlu0 %6389
    %6391 = vrot.lane.b32.xlu0 %v5824, 32
    %v6392 = vpop.permute.xlu0 %6391
    %6393 = vrot.lane.b32.xlu0 %v5826, 32
    %v6394 = vpop.permute.xlu0 %6393
    %6395 = vrot.lane.b32.xlu0 %v5825, 32
    %v6396 = vpop.permute.xlu0 %6395
    %6397 = vrot.lane.b32.xlu0 %v5829, 32
    %v6398 = vpop.permute.xlu0 %6397
    %6399 = vrot.lane.b32.xlu0 %v5831, 32
    %v6400 = vpop.permute.xlu0 %6399
    %6401 = vrot.lane.b32.xlu0 %v5830, 32
    %v6402 = vpop.permute.xlu0 %6401
    %6403 = vrot.lane.b32.xlu0 %v5834, 32
    %v6404 = vpop.permute.xlu0 %6403
    %6405 = vrot.lane.b32.xlu0 %v5836, 32
    %v6406 = vpop.permute.xlu0 %6405
    %6407 = vrot.lane.b32.xlu0 %v5835, 32
    %v6408 = vpop.permute.xlu0 %6407
    %6409 = vrot.lane.b32.xlu0 %v5839, 32
    %v6410 = vpop.permute.xlu0 %6409
    %6411 = vrot.lane.b32.xlu0 %v5841, 32
    %v6412 = vpop.permute.xlu0 %6411
    %6413 = vrot.lane.b32.xlu0 %v5840, 32
    %v6414 = vpop.permute.xlu0 %6413
    %6415 = vrot.lane.b32.xlu0 %v5844, 32
    %v6416 = vpop.permute.xlu0 %6415
    %6417 = vrot.lane.b32.xlu0 %v5846, 32
    %v6418 = vpop.permute.xlu0 %6417
    %6419 = vrot.lane.b32.xlu0 %v5845, 32
    %v6420 = vpop.permute.xlu0 %6419
    %6421 = vrot.lane.b32.xlu0 %v6371, 32
    %v6422 = vpop.permute.xlu0 %6421
    %6423 = vrot.lane.b32.xlu0 %v6373, 32
    %v6424 = vpop.permute.xlu0 %6423
    %6425 = vrot.lane.b32.xlu0 %v6372, 32
    %v6426 = vpop.permute.xlu0 %6425
    %6427 = vrot.lane.b32.xlu0 %v5849, 32
    %v6428 = vpop.permute.xlu0 %6427
    %6429 = vrot.lane.b32.xlu0 %v5851, 32
    %v6430 = vpop.permute.xlu0 %6429
    %6431 = vrot.lane.b32.xlu0 %v5850, 32
    %v6432 = vpop.permute.xlu0 %6431
    %6433 = vrot.lane.b32.xlu0 %v5854, 32
    %v6434 = vpop.permute.xlu0 %6433
    %6435 = vrot.lane.b32.xlu0 %v5856, 32
    %v6436 = vpop.permute.xlu0 %6435
    %6437 = vrot.lane.b32.xlu0 %v5855, 32
    %v6438 = vpop.permute.xlu0 %6437
    %6439 = vrot.lane.b32.xlu0 %v5859, 32
    %v6440 = vpop.permute.xlu0 %6439
    %6441 = vrot.lane.b32.xlu0 %v5861, 32
    %v6442 = vpop.permute.xlu0 %6441
    %6443 = vrot.lane.b32.xlu0 %v5860, 32
    %v6444 = vpop.permute.xlu0 %6443
    %6445 = vrot.lane.b32.xlu0 %v5864, 32
    %v6446 = vpop.permute.xlu0 %6445
    %6447 = vrot.lane.b32.xlu0 %v5866, 32
    %v6448 = vpop.permute.xlu0 %6447
    %6449 = vrot.lane.b32.xlu0 %v5865, 32
    %v6450 = vpop.permute.xlu0 %6449
    %6451 = vrot.lane.b32.xlu0 %v5869, 32
    %v6452 = vpop.permute.xlu0 %6451
    %6453 = vrot.lane.b32.xlu0 %v5871, 32
    %v6454 = vpop.permute.xlu0 %6453
    %6455 = vrot.lane.b32.xlu0 %v5870, 32
    %v6456 = vpop.permute.xlu0 %6455
    %6457 = vrot.lane.b32.xlu0 %v5874, 32
    %v6458 = vpop.permute.xlu0 %6457
    %6459 = vrot.lane.b32.xlu0 %v5876, 32
    %v6460 = vpop.permute.xlu0 %6459
    %6461 = vrot.lane.b32.xlu0 %v5875, 32
    %v6462 = vpop.permute.xlu0 %6461
    %6463 = vrot.lane.b32.xlu0 %v5879, 32
    %v6464 = vpop.permute.xlu0 %6463
    %6465 = vrot.lane.b32.xlu0 %v5881, 32
    %v6466 = vpop.permute.xlu0 %6465
    %6467 = vrot.lane.b32.xlu0 %v5880, 32
    %v6468 = vpop.permute.xlu0 %6467
    %6469 = vrot.lane.b32.xlu0 %v6376, 32
    %v6470 = vpop.permute.xlu0 %6469
    %6471 = vrot.lane.b32.xlu0 %v6378, 32
    %v6472 = vpop.permute.xlu0 %6471
    %6473 = vrot.lane.b32.xlu0 %v6377, 32
    %v6474 = vpop.permute.xlu0 %6473
    %v6523 = vrot.slane %v5740, 2
    %v6524 = vrot.slane %v5741, 2
    %v6525 = vsel %vm6014, %v6523, %v6524
    %v6526 = vrot.slane %v5742, 2
    %v6527 = vsel %vm6014, %v6524, %v6526
    %v6528 = vrot.slane %v5764, 2
    %v6529 = vrot.slane %v5765, 2
    %v6530 = vsel %vm6014, %v6528, %v6529
    %v6531 = vrot.slane %v5766, 2
    %v6532 = vsel %vm6014, %v6529, %v6531
    %6533 = vrot.lane.b32.xlu0 %v6019, 40
    %v6534 = vpop.permute.xlu0 %6533
    %6535 = vrot.lane.b32.xlu0 %v6021, 40
    %v6536 = vpop.permute.xlu0 %6535
    %6537 = vrot.lane.b32.xlu0 %v6020, 40
    %v6538 = vpop.permute.xlu0 %6537
    %6539 = vrot.lane.b32.xlu0 %v6024, 40
    %v6540 = vpop.permute.xlu0 %6539
    %6541 = vrot.lane.b32.xlu0 %v6026, 40
    %v6542 = vpop.permute.xlu0 %6541
    %6543 = vrot.lane.b32.xlu0 %v6025, 40
    %v6544 = vpop.permute.xlu0 %6543
    %6545 = vrot.lane.b32.xlu0 %v6029, 40
    %v6546 = vpop.permute.xlu0 %6545
    %6547 = vrot.lane.b32.xlu0 %v6031, 40
    %v6548 = vpop.permute.xlu0 %6547
    %6549 = vrot.lane.b32.xlu0 %v6030, 40
    %v6550 = vpop.permute.xlu0 %6549
    %6551 = vrot.lane.b32.xlu0 %v6034, 40
    %v6552 = vpop.permute.xlu0 %6551
    %6553 = vrot.lane.b32.xlu0 %v6036, 40
    %v6554 = vpop.permute.xlu0 %6553
    %6555 = vrot.lane.b32.xlu0 %v6035, 40
    %v6556 = vpop.permute.xlu0 %6555
    %6557 = vrot.lane.b32.xlu0 %v6039, 40
    %v6558 = vpop.permute.xlu0 %6557
    %6559 = vrot.lane.b32.xlu0 %v6041, 40
    %v6560 = vpop.permute.xlu0 %6559
    %6561 = vrot.lane.b32.xlu0 %v6040, 40
    %v6562 = vpop.permute.xlu0 %6561
    %6563 = vrot.lane.b32.xlu0 %v6044, 40
    %v6564 = vpop.permute.xlu0 %6563
    %6565 = vrot.lane.b32.xlu0 %v6046, 40
    %v6566 = vpop.permute.xlu0 %6565
    %6567 = vrot.lane.b32.xlu0 %v6045, 40
    %v6568 = vpop.permute.xlu0 %6567
    %6569 = vrot.lane.b32.xlu0 %v6049, 40
    %v6570 = vpop.permute.xlu0 %6569
    %6571 = vrot.lane.b32.xlu0 %v6051, 40
    %v6572 = vpop.permute.xlu0 %6571
    %6573 = vrot.lane.b32.xlu0 %v6050, 40
    %v6574 = vpop.permute.xlu0 %6573
    %6575 = vrot.lane.b32.xlu0 %v6525, 40
    %v6576 = vpop.permute.xlu0 %6575
    %6577 = vrot.lane.b32.xlu0 %v6527, 40
    %v6578 = vpop.permute.xlu0 %6577
    %6579 = vrot.lane.b32.xlu0 %v6526, 40
    %v6580 = vpop.permute.xlu0 %6579
    %6581 = vrot.lane.b32.xlu0 %v6054, 40
    %v6582 = vpop.permute.xlu0 %6581
    %6583 = vrot.lane.b32.xlu0 %v6056, 40
    %v6584 = vpop.permute.xlu0 %6583
    %6585 = vrot.lane.b32.xlu0 %v6055, 40
    %v6586 = vpop.permute.xlu0 %6585
    %6587 = vrot.lane.b32.xlu0 %v6059, 40
    %v6588 = vpop.permute.xlu0 %6587
    %6589 = vrot.lane.b32.xlu0 %v6061, 40
    %v6590 = vpop.permute.xlu0 %6589
    %6591 = vrot.lane.b32.xlu0 %v6060, 40
    %v6592 = vpop.permute.xlu0 %6591
    %6593 = vrot.lane.b32.xlu0 %v6064, 40
    %v6594 = vpop.permute.xlu0 %6593
    %6595 = vrot.lane.b32.xlu0 %v6066, 40
    %v6596 = vpop.permute.xlu0 %6595
    %6597 = vrot.lane.b32.xlu0 %v6065, 40
    %v6598 = vpop.permute.xlu0 %6597
    %6599 = vrot.lane.b32.xlu0 %v6069, 40
    %v6600 = vpop.permute.xlu0 %6599
    %6601 = vrot.lane.b32.xlu0 %v6071, 40
    %v6602 = vpop.permute.xlu0 %6601
    %6603 = vrot.lane.b32.xlu0 %v6070, 40
    %v6604 = vpop.permute.xlu0 %6603
    %6605 = vrot.lane.b32.xlu0 %v6074, 40
    %v6606 = vpop.permute.xlu0 %6605
    %6607 = vrot.lane.b32.xlu0 %v6076, 40
    %v6608 = vpop.permute.xlu0 %6607
    %6609 = vrot.lane.b32.xlu0 %v6075, 40
    %v6610 = vpop.permute.xlu0 %6609
    %6611 = vrot.lane.b32.xlu0 %v6079, 40
    %v6612 = vpop.permute.xlu0 %6611
    %6613 = vrot.lane.b32.xlu0 %v6081, 40
    %v6614 = vpop.permute.xlu0 %6613
    %6615 = vrot.lane.b32.xlu0 %v6080, 40
    %v6616 = vpop.permute.xlu0 %6615
    %6617 = vrot.lane.b32.xlu0 %v6084, 40
    %v6618 = vpop.permute.xlu0 %6617
    %6619 = vrot.lane.b32.xlu0 %v6086, 40
    %v6620 = vpop.permute.xlu0 %6619
    %6621 = vrot.lane.b32.xlu0 %v6085, 40
    %v6622 = vpop.permute.xlu0 %6621
    %6623 = vrot.lane.b32.xlu0 %v6530, 40
    %v6624 = vpop.permute.xlu0 %6623
    %6625 = vrot.lane.b32.xlu0 %v6532, 40
    %v6626 = vpop.permute.xlu0 %6625
    %6627 = vrot.lane.b32.xlu0 %v6531, 40
    %v6628 = vpop.permute.xlu0 %6627
    %6677 = vrot.lane.b32.xlu0 %v5722, 48
    %v6678 = vpop.permute.xlu0 %6677
    %6679 = vrot.lane.b32.xlu0 %v5723, 48
    %v6680 = vpop.permute.xlu0 %6679
    %6681 = vrot.lane.b32.xlu0 %v5724, 48
    %v6682 = vpop.permute.xlu0 %6681
    %6683 = vrot.lane.b32.xlu0 %v5725, 48
    %v6684 = vpop.permute.xlu0 %6683
    %6685 = vrot.lane.b32.xlu0 %v5726, 48
    %v6686 = vpop.permute.xlu0 %6685
    %6687 = vrot.lane.b32.xlu0 %v5727, 48
    %v6688 = vpop.permute.xlu0 %6687
    %6689 = vrot.lane.b32.xlu0 %v5728, 48
    %v6690 = vpop.permute.xlu0 %6689
    %6691 = vrot.lane.b32.xlu0 %v5729, 48
    %v6692 = vpop.permute.xlu0 %6691
    %6693 = vrot.lane.b32.xlu0 %v5730, 48
    %v6694 = vpop.permute.xlu0 %6693
    %6695 = vrot.lane.b32.xlu0 %v5731, 48
    %v6696 = vpop.permute.xlu0 %6695
    %6697 = vrot.lane.b32.xlu0 %v5732, 48
    %v6698 = vpop.permute.xlu0 %6697
    %6699 = vrot.lane.b32.xlu0 %v5733, 48
    %v6700 = vpop.permute.xlu0 %6699
    %6701 = vrot.lane.b32.xlu0 %v5734, 48
    %v6702 = vpop.permute.xlu0 %6701
    %6703 = vrot.lane.b32.xlu0 %v5735, 48
    %v6704 = vpop.permute.xlu0 %6703
    %6705 = vrot.lane.b32.xlu0 %v5736, 48
    %v6706 = vpop.permute.xlu0 %6705
    %6707 = vrot.lane.b32.xlu0 %v5737, 48
    %v6708 = vpop.permute.xlu0 %6707
    %6709 = vrot.lane.b32.xlu0 %v5738, 48
    %v6710 = vpop.permute.xlu0 %6709
    %6711 = vrot.lane.b32.xlu0 %v5739, 48
    %v6712 = vpop.permute.xlu0 %6711
    %6713 = vrot.lane.b32.xlu0 %v5740, 48
    %v6714 = vpop.permute.xlu0 %6713
    %6715 = vrot.lane.b32.xlu0 %v5741, 48
    %v6716 = vpop.permute.xlu0 %6715
    %6717 = vrot.lane.b32.xlu0 %v5742, 48
    %v6718 = vpop.permute.xlu0 %6717
    %6719 = vrot.lane.b32.xlu0 0.0, 48
    %v6720 = vpop.permute.xlu0 %6719
    %6721 = vrot.lane.b32.xlu0 %v5746, 48
    %v6722 = vpop.permute.xlu0 %6721
    %6723 = vrot.lane.b32.xlu0 %v5747, 48
    %v6724 = vpop.permute.xlu0 %6723
    %6725 = vrot.lane.b32.xlu0 %v5748, 48
    %v6726 = vpop.permute.xlu0 %6725
    %6727 = vrot.lane.b32.xlu0 %v5749, 48
    %v6728 = vpop.permute.xlu0 %6727
    %6729 = vrot.lane.b32.xlu0 %v5750, 48
    %v6730 = vpop.permute.xlu0 %6729
    %6731 = vrot.lane.b32.xlu0 %v5751, 48
    %v6732 = vpop.permute.xlu0 %6731
    %6733 = vrot.lane.b32.xlu0 %v5752, 48
    %v6734 = vpop.permute.xlu0 %6733
    %6735 = vrot.lane.b32.xlu0 %v5753, 48
    %v6736 = vpop.permute.xlu0 %6735
    %6737 = vrot.lane.b32.xlu0 %v5754, 48
    %v6738 = vpop.permute.xlu0 %6737
    %6739 = vrot.lane.b32.xlu0 %v5755, 48
    %v6740 = vpop.permute.xlu0 %6739
    %6741 = vrot.lane.b32.xlu0 %v5756, 48
    %v6742 = vpop.permute.xlu0 %6741
    %6743 = vrot.lane.b32.xlu0 %v5757, 48
    %v6744 = vpop.permute.xlu0 %6743
    %6745 = vrot.lane.b32.xlu0 %v5758, 48
    %v6746 = vpop.permute.xlu0 %6745
    %6747 = vrot.lane.b32.xlu0 %v5759, 48
    %v6748 = vpop.permute.xlu0 %6747
    %6749 = vrot.lane.b32.xlu0 %v5760, 48
    %v6750 = vpop.permute.xlu0 %6749
    %6751 = vrot.lane.b32.xlu0 %v5761, 48
    %v6752 = vpop.permute.xlu0 %6751
    %6753 = vrot.lane.b32.xlu0 %v5762, 48
    %v6754 = vpop.permute.xlu0 %6753
    %6755 = vrot.lane.b32.xlu0 %v5763, 48
    %v6756 = vpop.permute.xlu0 %6755
    %6757 = vrot.lane.b32.xlu0 %v5764, 48
    %v6758 = vpop.permute.xlu0 %6757
    %6759 = vrot.lane.b32.xlu0 %v5765, 48
    %v6760 = vpop.permute.xlu0 %6759
    %6761 = vrot.lane.b32.xlu0 %v5766, 48
    %v6762 = vpop.permute.xlu0 %6761
    %6806 = vrot.lane.b32.xlu0 %v5819, 56
    %v6807 = vpop.permute.xlu0 %6806
    %6808 = vrot.lane.b32.xlu0 %v5821, 56
    %v6809 = vpop.permute.xlu0 %6808
    %6810 = vrot.lane.b32.xlu0 %v5820, 56
    %v6811 = vpop.permute.xlu0 %6810
    %6812 = vrot.lane.b32.xlu0 %v5824, 56
    %v6813 = vpop.permute.xlu0 %6812
    %6814 = vrot.lane.b32.xlu0 %v5826, 56
    %v6815 = vpop.permute.xlu0 %6814
    %6816 = vrot.lane.b32.xlu0 %v5825, 56
    %v6817 = vpop.permute.xlu0 %6816
    %6818 = vrot.lane.b32.xlu0 %v5829, 56
    %v6819 = vpop.permute.xlu0 %6818
    %6820 = vrot.lane.b32.xlu0 %v5831, 56
    %v6821 = vpop.permute.xlu0 %6820
    %6822 = vrot.lane.b32.xlu0 %v5830, 56
    %v6823 = vpop.permute.xlu0 %6822
    %6824 = vrot.lane.b32.xlu0 %v5834, 56
    %v6825 = vpop.permute.xlu0 %6824
    %6826 = vrot.lane.b32.xlu0 %v5836, 56
    %v6827 = vpop.permute.xlu0 %6826
    %6828 = vrot.lane.b32.xlu0 %v5835, 56
    %v6829 = vpop.permute.xlu0 %6828
    %6830 = vrot.lane.b32.xlu0 %v5839, 56
    %v6831 = vpop.permute.xlu0 %6830
    %6832 = vrot.lane.b32.xlu0 %v5841, 56
    %v6833 = vpop.permute.xlu0 %6832
    %6834 = vrot.lane.b32.xlu0 %v5840, 56
    %v6835 = vpop.permute.xlu0 %6834
    %6836 = vrot.lane.b32.xlu0 %v5844, 56
    %v6837 = vpop.permute.xlu0 %6836
    %6838 = vrot.lane.b32.xlu0 %v5846, 56
    %v6839 = vpop.permute.xlu0 %6838
    %6840 = vrot.lane.b32.xlu0 %v5845, 56
    %v6841 = vpop.permute.xlu0 %6840
    %6842 = vrot.lane.b32.xlu0 %v6371, 56
    %v6843 = vpop.permute.xlu0 %6842
    %6844 = vrot.lane.b32.xlu0 %v6373, 56
    %v6845 = vpop.permute.xlu0 %6844
    %6846 = vrot.lane.b32.xlu0 %v6372, 56
    %v6847 = vpop.permute.xlu0 %6846
    %6848 = vrot.lane.b32.xlu0 %v5811, 56
    %v6849 = vpop.permute.xlu0 %6848
    %6850 = vrot.lane.b32.xlu0 %v5810, 56
    %v6851 = vpop.permute.xlu0 %6850
    %6852 = vrot.lane.b32.xlu0 %v5854, 56
    %v6853 = vpop.permute.xlu0 %6852
    %6854 = vrot.lane.b32.xlu0 %v5856, 56
    %v6855 = vpop.permute.xlu0 %6854
    %6856 = vrot.lane.b32.xlu0 %v5855, 56
    %v6857 = vpop.permute.xlu0 %6856
    %6858 = vrot.lane.b32.xlu0 %v5859, 56
    %v6859 = vpop.permute.xlu0 %6858
    %6860 = vrot.lane.b32.xlu0 %v5861, 56
    %v6861 = vpop.permute.xlu0 %6860
    %6862 = vrot.lane.b32.xlu0 %v5860, 56
    %v6863 = vpop.permute.xlu0 %6862
    %6864 = vrot.lane.b32.xlu0 %v5864, 56
    %v6865 = vpop.permute.xlu0 %6864
    %6866 = vrot.lane.b32.xlu0 %v5866, 56
    %v6867 = vpop.permute.xlu0 %6866
    %6868 = vrot.lane.b32.xlu0 %v5865, 56
    %v6869 = vpop.permute.xlu0 %6868
    %6870 = vrot.lane.b32.xlu0 %v5869, 56
    %v6871 = vpop.permute.xlu0 %6870
    %6872 = vrot.lane.b32.xlu0 %v5871, 56
    %v6873 = vpop.permute.xlu0 %6872
    %6874 = vrot.lane.b32.xlu0 %v5870, 56
    %v6875 = vpop.permute.xlu0 %6874
    %6876 = vrot.lane.b32.xlu0 %v5874, 56
    %v6877 = vpop.permute.xlu0 %6876
    %6878 = vrot.lane.b32.xlu0 %v5876, 56
    %v6879 = vpop.permute.xlu0 %6878
    %6880 = vrot.lane.b32.xlu0 %v5875, 56
    %v6881 = vpop.permute.xlu0 %6880
    %6882 = vrot.lane.b32.xlu0 %v5879, 56
    %v6883 = vpop.permute.xlu0 %6882
    %6884 = vrot.lane.b32.xlu0 %v5881, 56
    %v6885 = vpop.permute.xlu0 %6884
    %6886 = vrot.lane.b32.xlu0 %v5880, 56
    %v6887 = vpop.permute.xlu0 %6886
    %6888 = vrot.lane.b32.xlu0 %v6376, 56
    %v6889 = vpop.permute.xlu0 %6888
    %6890 = vrot.lane.b32.xlu0 %v6378, 56
    %v6891 = vpop.permute.xlu0 %6890
    %6892 = vrot.lane.b32.xlu0 %v6377, 56
    %v6893 = vpop.permute.xlu0 %6892
    %6938 = vrot.lane.b32.xlu0 %v6024, 64
    %v6939 = vpop.permute.xlu0 %6938
    %6940 = vrot.lane.b32.xlu0 %v6026, 64
    %v6941 = vpop.permute.xlu0 %6940
    %6942 = vrot.lane.b32.xlu0 %v6025, 64
    %v6943 = vpop.permute.xlu0 %6942
    %6944 = vrot.lane.b32.xlu0 %v6029, 64
    %v6945 = vpop.permute.xlu0 %6944
    %6946 = vrot.lane.b32.xlu0 %v6031, 64
    %v6947 = vpop.permute.xlu0 %6946
    %6948 = vrot.lane.b32.xlu0 %v6030, 64
    %v6949 = vpop.permute.xlu0 %6948
    %6950 = vrot.lane.b32.xlu0 %v6034, 64
    %v6951 = vpop.permute.xlu0 %6950
    %6952 = vrot.lane.b32.xlu0 %v6036, 64
    %v6953 = vpop.permute.xlu0 %6952
    %6954 = vrot.lane.b32.xlu0 %v6035, 64
    %v6955 = vpop.permute.xlu0 %6954
    %6956 = vrot.lane.b32.xlu0 %v6039, 64
    %v6957 = vpop.permute.xlu0 %6956
    %6958 = vrot.lane.b32.xlu0 %v6041, 64
    %v6959 = vpop.permute.xlu0 %6958
    %6960 = vrot.lane.b32.xlu0 %v6040, 64
    %v6961 = vpop.permute.xlu0 %6960
    %6962 = vrot.lane.b32.xlu0 %v6044, 64
    %v6963 = vpop.permute.xlu0 %6962
    %6964 = vrot.lane.b32.xlu0 %v6046, 64
    %v6965 = vpop.permute.xlu0 %6964
    %6966 = vrot.lane.b32.xlu0 %v6045, 64
    %v6967 = vpop.permute.xlu0 %6966
    %6968 = vrot.lane.b32.xlu0 %v6049, 64
    %v6969 = vpop.permute.xlu0 %6968
    %6970 = vrot.lane.b32.xlu0 %v6051, 64
    %v6971 = vpop.permute.xlu0 %6970
    %6972 = vrot.lane.b32.xlu0 %v6050, 64
    %v6973 = vpop.permute.xlu0 %6972
    %6974 = vrot.lane.b32.xlu0 %v6525, 64
    %v6975 = vpop.permute.xlu0 %6974
    %6976 = vrot.lane.b32.xlu0 %v6527, 64
    %v6977 = vpop.permute.xlu0 %6976
    %6978 = vrot.lane.b32.xlu0 %v6526, 64
    %v6979 = vpop.permute.xlu0 %6978
    %6980 = vrot.lane.b32.xlu0 %v6016, 64
    %v6981 = vpop.permute.xlu0 %6980
    %6982 = vrot.lane.b32.xlu0 %v6015, 64
    %v6983 = vpop.permute.xlu0 %6982
    %6984 = vrot.lane.b32.xlu0 %v6059, 64
    %v6985 = vpop.permute.xlu0 %6984
    %6986 = vrot.lane.b32.xlu0 %v6061, 64
    %v6987 = vpop.permute.xlu0 %6986
    %6988 = vrot.lane.b32.xlu0 %v6060, 64
    %v6989 = vpop.permute.xlu0 %6988
    %6990 = vrot.lane.b32.xlu0 %v6064, 64
    %v6991 = vpop.permute.xlu0 %6990
    %6992 = vrot.lane.b32.xlu0 %v6066, 64
    %v6993 = vpop.permute.xlu0 %6992
    %6994 = vrot.lane.b32.xlu0 %v6065, 64
    %v6995 = vpop.permute.xlu0 %6994
    %6996 = vrot.lane.b32.xlu0 %v6069, 64
    %v6997 = vpop.permute.xlu0 %6996
    %6998 = vrot.lane.b32.xlu0 %v6071, 64
    %v6999 = vpop.permute.xlu0 %6998
    %7000 = vrot.lane.b32.xlu0 %v6070, 64
    %v7001 = vpop.permute.xlu0 %7000
    %7002 = vrot.lane.b32.xlu0 %v6074, 64
    %v7003 = vpop.permute.xlu0 %7002
    %7004 = vrot.lane.b32.xlu0 %v6076, 64
    %v7005 = vpop.permute.xlu0 %7004
    %7006 = vrot.lane.b32.xlu0 %v6075, 64
    %v7007 = vpop.permute.xlu0 %7006
    %7008 = vrot.lane.b32.xlu0 %v6079, 64
    %v7009 = vpop.permute.xlu0 %7008
    %7010 = vrot.lane.b32.xlu0 %v6081, 64
    %v7011 = vpop.permute.xlu0 %7010
    %7012 = vrot.lane.b32.xlu0 %v6080, 64
    %v7013 = vpop.permute.xlu0 %7012
    %7014 = vrot.lane.b32.xlu0 %v6084, 64
    %v7015 = vpop.permute.xlu0 %7014
    %7016 = vrot.lane.b32.xlu0 %v6086, 64
    %v7017 = vpop.permute.xlu0 %7016
    %7018 = vrot.lane.b32.xlu0 %v6085, 64
    %v7019 = vpop.permute.xlu0 %7018
    %7020 = vrot.lane.b32.xlu0 %v6530, 64
    %v7021 = vpop.permute.xlu0 %7020
    %7022 = vrot.lane.b32.xlu0 %v6532, 64
    %v7023 = vpop.permute.xlu0 %7022
    %7024 = vrot.lane.b32.xlu0 %v6531, 64
    %v7025 = vpop.permute.xlu0 %7024
    %v7070 = vsel %vm2380, 0.0, %v5883
    %v7071 = vsel %vm2380, 0.0, %v5885
    %v7072 = vsel %vm2380, %v5719, %v5887
    %v7073 = vsel %vm2380, %v5720, %v5889
    %v7074 = vsel %vm2380, %v5721, %v5891
    %v7075 = vsel %vm2380, %v5722, %v5893
    %v7076 = vsel %vm2380, %v5723, %v5895
    %v7077 = vsel %vm2380, %v5724, %v5897
    %v7078 = vsel %vm2380, %v5725, %v5899
    %v7079 = vsel %vm2380, %v5726, %v5901
    %v7080 = vsel %vm2380, %v5727, %v5903
    %v7081 = vsel %vm2380, %v5728, %v5905
    %v7082 = vsel %vm2380, %v5729, %v5907
    %v7083 = vsel %vm2380, %v5730, %v5909
    %v7084 = vsel %vm2380, %v5731, %v5911
    %v7085 = vsel %vm2380, %v5732, %v5913
    %v7086 = vsel %vm2380, %v5733, %v5915
    %v7087 = vsel %vm2380, %v5734, %v5917
    %v7088 = vsel %vm2380, %v5735, %v5919
    %v7089 = vsel %vm2380, %v5736, %v5921
    %v7090 = vsel %vm2380, %v5737, %v5923
    %v7091 = vsel %vm2380, %v5738, %v5925
    %v7092 = vsel %vm2380, %v5739, %v5927
    %v7093 = vsel %vm2380, %v5743, %v5929
    %v7094 = vsel %vm2380, %v5744, %v5931
    %v7095 = vsel %vm2380, %v5745, %v5933
    %v7096 = vsel %vm2380, %v5746, %v5935
    %v7097 = vsel %vm2380, %v5747, %v5937
    %v7098 = vsel %vm2380, %v5748, %v5939
    %v7099 = vsel %vm2380, %v5749, %v5941
    %v7100 = vsel %vm2380, %v5750, %v5943
    %v7101 = vsel %vm2380, %v5751, %v5945
    %v7102 = vsel %vm2380, %v5752, %v5947
    %v7103 = vsel %vm2380, %v5753, %v5949
    %v7104 = vsel %vm2380, %v5754, %v5951
    %v7105 = vsel %vm2380, %v5755, %v5953
    %v7106 = vsel %vm2380, %v5756, %v5955
    %v7107 = vsel %vm2380, %v5757, %v5957
    %v7108 = vsel %vm2380, %v5758, %v5959
    %v7109 = vsel %vm2380, %v5759, %v5961
    %v7110 = vsel %vm2380, %v5760, %v5963
    %v7111 = vsel %vm2380, %v5761, %v5965
    %v7112 = vsel %vm2380, %v5762, %v5967
    %v7113 = vsel %vm2380, %v5763, %v5969
    %v7114 = vsel %vm4554, %v7070, %v6088
    %v7115 = vsel %vm4554, %v7071, %v6090
    %v7116 = vsel %vm4554, %v7072, %v6092
    %v7117 = vsel %vm4554, %v7073, %v6094
    %v7118 = vsel %vm4554, %v7074, %v6096
    %v7119 = vsel %vm4554, %v7075, %v6098
    %v7120 = vsel %vm4554, %v7076, %v6100
    %v7121 = vsel %vm4554, %v7077, %v6102
    %v7122 = vsel %vm4554, %v7078, %v6104
    %v7123 = vsel %vm4554, %v7079, %v6106
    %v7124 = vsel %vm4554, %v7080, %v6108
    %v7125 = vsel %vm4554, %v7081, %v6110
    %v7126 = vsel %vm4554, %v7082, %v6112
    %v7127 = vsel %vm4554, %v7083, %v6114
    %v7128 = vsel %vm4554, %v7084, %v6116
    %v7129 = vsel %vm4554, %v7085, %v6118
    %v7130 = vsel %vm4554, %v7086, %v6120
    %v7131 = vsel %vm4554, %v7087, %v6122
    %v7132 = vsel %vm4554, %v7088, %v6124
    %v7133 = vsel %vm4554, %v7089, %v6126
    %v7134 = vsel %vm4554, %v7090, %v6128
    %v7135 = vsel %vm4554, %v7091, %v6130
    %v7136 = vsel %vm4554, %v7092, %v6132
    %v7137 = vsel %vm4554, %v7093, %v6134
    %v7138 = vsel %vm4554, %v7094, %v6136
    %v7139 = vsel %vm4554, %v7095, %v6138
    %v7140 = vsel %vm4554, %v7096, %v6140
    %v7141 = vsel %vm4554, %v7097, %v6142
    %v7142 = vsel %vm4554, %v7098, %v6144
    %v7143 = vsel %vm4554, %v7099, %v6146
    %v7144 = vsel %vm4554, %v7100, %v6148
    %v7145 = vsel %vm4554, %v7101, %v6150
    %v7146 = vsel %vm4554, %v7102, %v6152
    %v7147 = vsel %vm4554, %v7103, %v6154
    %v7148 = vsel %vm4554, %v7104, %v6156
    %v7149 = vsel %vm4554, %v7105, %v6158
    %v7150 = vsel %vm4554, %v7106, %v6160
    %v7151 = vsel %vm4554, %v7107, %v6162
    %v7152 = vsel %vm4554, %v7108, %v6164
    %v7153 = vsel %vm4554, %v7109, %v6166
    %v7154 = vsel %vm4554, %v7110, %v6168
    %v7155 = vsel %vm4554, %v7111, %v6170
    %v7156 = vsel %vm4554, %v7112, %v6172
    %v7157 = vsel %vm4554, %v7113, %v6174
    %vm7158 = vcmask 195584
    %v7159 = vsel %vm7158, %v7114, %v6226
    %v7160 = vsel %vm7158, %v7114, %v6228
    %v7161 = vsel %vm7158, %v7115, %v6230
    %v7162 = vsel %vm7158, %v7116, %v6232
    %v7163 = vsel %vm7158, %v7117, %v6234
    %v7164 = vsel %vm7158, %v7118, %v6236
    %v7165 = vsel %vm7158, %v7119, %v6238
    %v7166 = vsel %vm7158, %v7120, %v6240
    %v7167 = vsel %vm7158, %v7121, %v6242
    %v7168 = vsel %vm7158, %v7122, %v6244
    %v7169 = vsel %vm7158, %v7123, %v6246
    %v7170 = vsel %vm7158, %v7124, %v6248
    %v7171 = vsel %vm7158, %v7125, %v6250
    %v7172 = vsel %vm7158, %v7126, %v6252
    %v7173 = vsel %vm7158, %v7127, %v6254
    %v7174 = vsel %vm7158, %v7128, %v6256
    %v7175 = vsel %vm7158, %v7129, %v6258
    %v7176 = vsel %vm7158, %v7130, %v6260
    %v7177 = vsel %vm7158, %v7131, %v6262
    %v7178 = vsel %vm7158, %v7132, %v6264
    %v7179 = vsel %vm7158, %v7133, %v6266
    %v7180 = vsel %vm7158, %v7134, %v6268
    %v7181 = vsel %vm7158, %v7135, %v6270
    %v7182 = vsel %vm7158, %v7136, %v6272
    %v7183 = vsel %vm7158, %v7114, %v6274
    %v7184 = vsel %vm7158, %v7114, %v6276
    %v7185 = vsel %vm7158, %v7115, %v6278
    %v7186 = vsel %vm7158, %v7137, %v6280
    %v7187 = vsel %vm7158, %v7138, %v6282
    %v7188 = vsel %vm7158, %v7139, %v6284
    %v7189 = vsel %vm7158, %v7140, %v6286
    %v7190 = vsel %vm7158, %v7141, %v6288
    %v7191 = vsel %vm7158, %v7142, %v6290
    %v7192 = vsel %vm7158, %v7143, %v6292
    %v7193 = vsel %vm7158, %v7144, %v6294
    %v7194 = vsel %vm7158, %v7145, %v6296
    %v7195 = vsel %vm7158, %v7146, %v6298
    %v7196 = vsel %vm7158, %v7147, %v6300
    %v7197 = vsel %vm7158, %v7148, %v6302
    %v7198 = vsel %vm7158, %v7149, %v6304
    %v7199 = vsel %vm7158, %v7150, %v6306
    %v7200 = vsel %vm7158, %v7151, %v6308
    %v7201 = vsel %vm7158, %v7152, %v6310
    %v7202 = vsel %vm7158, %v7153, %v6312
    %v7203 = vsel %vm7158, %v7154, %v6314
    %v7204 = vsel %vm7158, %v7155, %v6316
    %v7205 = vsel %vm7158, %v7156, %v6318
    %v7206 = vsel %vm7158, %v7157, %v6320
    %vm7207 = vcmask 261120
    %v7208 = vsel %vm7207, %v7159, %v6380
    %v7209 = vsel %vm7207, %v7160, %v6382
    %v7210 = vsel %vm7207, %v7161, %v6384
    %v7211 = vsel %vm7207, %v7162, %v6386
    %v7212 = vsel %vm7207, %v7163, %v6388
    %v7213 = vsel %vm7207, %v7164, %v6390
    %v7214 = vsel %vm7207, %v7165, %v6392
    %v7215 = vsel %vm7207, %v7166, %v6394
    %v7216 = vsel %vm7207, %v7167, %v6396
    %v7217 = vsel %vm7207, %v7168, %v6398
    %v7218 = vsel %vm7207, %v7169, %v6400
    %v7219 = vsel %vm7207, %v7170, %v6402
    %v7220 = vsel %vm7207, %v7171, %v6404
    %v7221 = vsel %vm7207, %v7172, %v6406
    %v7222 = vsel %vm7207, %v7173, %v6408
    %v7223 = vsel %vm7207, %v7174, %v6410
    %v7224 = vsel %vm7207, %v7175, %v6412
    %v7225 = vsel %vm7207, %v7176, %v6414
    %v7226 = vsel %vm7207, %v7177, %v6416
    %v7227 = vsel %vm7207, %v7178, %v6418
    %v7228 = vsel %vm7207, %v7179, %v6420
    %v7229 = vsel %vm7207, %v7180, %v6422
    %v7230 = vsel %vm7207, %v7181, %v6424
    %v7231 = vsel %vm7207, %v7182, %v6426
    %v7232 = vsel %vm7207, %v7183, %v6428
    %v7233 = vsel %vm7207, %v7184, %v6430
    %v7234 = vsel %vm7207, %v7185, %v6432
    %v7235 = vsel %vm7207, %v7186, %v6434
    %v7236 = vsel %vm7207, %v7187, %v6436
    %v7237 = vsel %vm7207, %v7188, %v6438
    %v7238 = vsel %vm7207, %v7189, %v6440
    %v7239 = vsel %vm7207, %v7190, %v6442
    %v7240 = vsel %vm7207, %v7191, %v6444
    %v7241 = vsel %vm7207, %v7192, %v6446
    %v7242 = vsel %vm7207, %v7193, %v6448
    %v7243 = vsel %vm7207, %v7194, %v6450
    %v7244 = vsel %vm7207, %v7195, %v6452
    %v7245 = vsel %vm7207, %v7196, %v6454
    %v7246 = vsel %vm7207, %v7197, %v6456
    %v7247 = vsel %vm7207, %v7198, %v6458
    %v7248 = vsel %vm7207, %v7199, %v6460
    %v7249 = vsel %vm7207, %v7200, %v6462
    %v7250 = vsel %vm7207, %v7201, %v6464
    %v7251 = vsel %vm7207, %v7202, %v6466
    %v7252 = vsel %vm7207, %v7203, %v6468
    %v7253 = vsel %vm7207, %v7204, %v6470
    %v7254 = vsel %vm7207, %v7205, %v6472
    %v7255 = vsel %vm7207, %v7206, %v6474
    %vm7256 = vcmask 326656
    %v7257 = vsel %vm7256, %v7208, %v6534
    %v7258 = vsel %vm7256, %v7209, %v6536
    %v7259 = vsel %vm7256, %v7210, %v6538
    %v7260 = vsel %vm7256, %v7211, %v6540
    %v7261 = vsel %vm7256, %v7212, %v6542
    %v7262 = vsel %vm7256, %v7213, %v6544
    %v7263 = vsel %vm7256, %v7214, %v6546
    %v7264 = vsel %vm7256, %v7215, %v6548
    %v7265 = vsel %vm7256, %v7216, %v6550
    %v7266 = vsel %vm7256, %v7217, %v6552
    %v7267 = vsel %vm7256, %v7218, %v6554
    %v7268 = vsel %vm7256, %v7219, %v6556
    %v7269 = vsel %vm7256, %v7220, %v6558
    %v7270 = vsel %vm7256, %v7221, %v6560
    %v7271 = vsel %vm7256, %v7222, %v6562
    %v7272 = vsel %vm7256, %v7223, %v6564
    %v7273 = vsel %vm7256, %v7224, %v6566
    %v7274 = vsel %vm7256, %v7225, %v6568
    %v7275 = vsel %vm7256, %v7226, %v6570
    %v7276 = vsel %vm7256, %v7227, %v6572
    %v7277 = vsel %vm7256, %v7228, %v6574
    %v7278 = vsel %vm7256, %v7229, %v6576
    %v7279 = vsel %vm7256, %v7230, %v6578
    %v7280 = vsel %vm7256, %v7231, %v6580
    %v7281 = vsel %vm7256, %v7232, %v6582
    %v7282 = vsel %vm7256, %v7233, %v6584
    %v7283 = vsel %vm7256, %v7234, %v6586
    %v7284 = vsel %vm7256, %v7235, %v6588
    %v7285 = vsel %vm7256, %v7236, %v6590
    %v7286 = vsel %vm7256, %v7237, %v6592
    %v7287 = vsel %vm7256, %v7238, %v6594
    %v7288 = vsel %vm7256, %v7239, %v6596
    %v7289 = vsel %vm7256, %v7240, %v6598
    %v7290 = vsel %vm7256, %v7241, %v6600
    %v7291 = vsel %vm7256, %v7242, %v6602
    %v7292 = vsel %vm7256, %v7243, %v6604
    %v7293 = vsel %vm7256, %v7244, %v6606
    %v7294 = vsel %vm7256, %v7245, %v6608
    %v7295 = vsel %vm7256, %v7246, %v6610
    %v7296 = vsel %vm7256, %v7247, %v6612
    %v7297 = vsel %vm7256, %v7248, %v6614
    %v7298 = vsel %vm7256, %v7249, %v6616
    %v7299 = vsel %vm7256, %v7250, %v6618
    %v7300 = vsel %vm7256, %v7251, %v6620
    %v7301 = vsel %vm7256, %v7252, %v6622
    %v7302 = vsel %vm7256, %v7253, %v6624
    %v7303 = vsel %vm7256, %v7254, %v6626
    %v7304 = vsel %vm7256, %v7255, %v6628
    %vm7305 = vcmask 392192
    %v7306 = vsel %vm7305, %v7257, %v6678
    %v7307 = vsel %vm7305, %v7258, %v6680
    %v7308 = vsel %vm7305, %v7259, %v6682
    %v7309 = vsel %vm7305, %v7260, %v6684
    %v7310 = vsel %vm7305, %v7261, %v6686
    %v7311 = vsel %vm7305, %v7262, %v6688
    %v7312 = vsel %vm7305, %v7263, %v6690
    %v7313 = vsel %vm7305, %v7264, %v6692
    %v7314 = vsel %vm7305, %v7265, %v6694
    %v7315 = vsel %vm7305, %v7266, %v6696
    %v7316 = vsel %vm7305, %v7267, %v6698
    %v7317 = vsel %vm7305, %v7268, %v6700
    %v7318 = vsel %vm7305, %v7269, %v6702
    %v7319 = vsel %vm7305, %v7270, %v6704
    %v7320 = vsel %vm7305, %v7271, %v6706
    %v7321 = vsel %vm7305, %v7272, %v6708
    %v7322 = vsel %vm7305, %v7273, %v6710
    %v7323 = vsel %vm7305, %v7274, %v6712
    %v7324 = vsel %vm7305, %v7275, %v6714
    %v7325 = vsel %vm7305, %v7276, %v6716
    %v7326 = vsel %vm7305, %v7277, %v6718
    %v7327 = vsel %vm7305, %v7278, %v6720
    %v7328 = vsel %vm7305, %v7279, %v6720
    %v7329 = vsel %vm7305, %v7280, %v6720
    %v7330 = vsel %vm7305, %v7281, %v6722
    %v7331 = vsel %vm7305, %v7282, %v6724
    %v7332 = vsel %vm7305, %v7283, %v6726
    %v7333 = vsel %vm7305, %v7284, %v6728
    %v7334 = vsel %vm7305, %v7285, %v6730
    %v7335 = vsel %vm7305, %v7286, %v6732
    %v7336 = vsel %vm7305, %v7287, %v6734
    %v7337 = vsel %vm7305, %v7288, %v6736
    %v7338 = vsel %vm7305, %v7289, %v6738
    %v7339 = vsel %vm7305, %v7290, %v6740
    %v7340 = vsel %vm7305, %v7291, %v6742
    %v7341 = vsel %vm7305, %v7292, %v6744
    %v7342 = vsel %vm7305, %v7293, %v6746
    %v7343 = vsel %vm7305, %v7294, %v6748
    %v7344 = vsel %vm7305, %v7295, %v6750
    %v7345 = vsel %vm7305, %v7296, %v6752
    %v7346 = vsel %vm7305, %v7297, %v6754
    %v7347 = vsel %vm7305, %v7298, %v6756
    %v7348 = vsel %vm7305, %v7299, %v6758
    %v7349 = vsel %vm7305, %v7300, %v6760
    %v7350 = vsel %vm7305, %v7301, %v6762
    %v7351 = vsel %vm7305, %v7302, %v6720
    %v7352 = vsel %vm7305, %v7303, %v6720
    %v7353 = vsel %vm7305, %v7304, %v6720
    %vm7354 = vcmask 457728
    %v7355 = vsel %vm7354, %v7306, %v6807
    %v7356 = vsel %vm7354, %v7307, %v6809
    %v7357 = vsel %vm7354, %v7308, %v6811
    %v7358 = vsel %vm7354, %v7309, %v6813
    %v7359 = vsel %vm7354, %v7310, %v6815
    %v7360 = vsel %vm7354, %v7311, %v6817
    %v7361 = vsel %vm7354, %v7312, %v6819
    %v7362 = vsel %vm7354, %v7313, %v6821
    %v7363 = vsel %vm7354, %v7314, %v6823
    %v7364 = vsel %vm7354, %v7315, %v6825
    %v7365 = vsel %vm7354, %v7316, %v6827
    %v7366 = vsel %vm7354, %v7317, %v6829
    %v7367 = vsel %vm7354, %v7318, %v6831
    %v7368 = vsel %vm7354, %v7319, %v6833
    %v7369 = vsel %vm7354, %v7320, %v6835
    %v7370 = vsel %vm7354, %v7321, %v6837
    %v7371 = vsel %vm7354, %v7322, %v6839
    %v7372 = vsel %vm7354, %v7323, %v6841
    %v7373 = vsel %vm7354, %v7324, %v6843
    %v7374 = vsel %vm7354, %v7325, %v6845
    %v7375 = vsel %vm7354, %v7326, %v6847
    %v7376 = vsel %vm7354, %v7327, %v6849
    %v7377 = vsel %vm7354, %v7328, %v6849
    %v7378 = vsel %vm7354, %v7329, %v6851
    %v7379 = vsel %vm7354, %v7330, %v6853
    %v7380 = vsel %vm7354, %v7331, %v6855
    %v7381 = vsel %vm7354, %v7332, %v6857
    %v7382 = vsel %vm7354, %v7333, %v6859
    %v7383 = vsel %vm7354, %v7334, %v6861
    %v7384 = vsel %vm7354, %v7335, %v6863
    %v7385 = vsel %vm7354, %v7336, %v6865
    %v7386 = vsel %vm7354, %v7337, %v6867
    %v7387 = vsel %vm7354, %v7338, %v6869
    %v7388 = vsel %vm7354, %v7339, %v6871
    %v7389 = vsel %vm7354, %v7340, %v6873
    %v7390 = vsel %vm7354, %v7341, %v6875
    %v7391 = vsel %vm7354, %v7342, %v6877
    %v7392 = vsel %vm7354, %v7343, %v6879
    %v7393 = vsel %vm7354, %v7344, %v6881
    %v7394 = vsel %vm7354, %v7345, %v6883
    %v7395 = vsel %vm7354, %v7346, %v6885
    %v7396 = vsel %vm7354, %v7347, %v6887
    %v7397 = vsel %vm7354, %v7348, %v6889
    %v7398 = vsel %vm7354, %v7349, %v6891
    %v7399 = vsel %vm7354, %v7350, %v6893
    %v7400 = vsel %vm7354, %v7351, %v6849
    %v7401 = vsel %vm7354, %v7352, %v6849
    %v7402 = vsel %vm7354, %v7353, %v6851
    %vm7403 = vcmask 523264
    %v7404 = vsel %vm7403, %v7355, %v6939
    %v7405 = vsel %vm7403, %v7356, %v6941
    %v7406 = vsel %vm7403, %v7357, %v6943
    %v7407 = vsel %vm7403, %v7358, %v6945
    %v7408 = vsel %vm7403, %v7359, %v6947
    %v7409 = vsel %vm7403, %v7360, %v6949
    %v7410 = vsel %vm7403, %v7361, %v6951
    %v7411 = vsel %vm7403, %v7362, %v6953
    %v7412 = vsel %vm7403, %v7363, %v6955
    %v7413 = vsel %vm7403, %v7364, %v6957
    %v7414 = vsel %vm7403, %v7365, %v6959
    %v7415 = vsel %vm7403, %v7366, %v6961
    %v7416 = vsel %vm7403, %v7367, %v6963
    %v7417 = vsel %vm7403, %v7368, %v6965
    %v7418 = vsel %vm7403, %v7369, %v6967
    %v7419 = vsel %vm7403, %v7370, %v6969
    %v7420 = vsel %vm7403, %v7371, %v6971
    %v7421 = vsel %vm7403, %v7372, %v6973
    %v7422 = vsel %vm7403, %v7373, %v6975
    %v7423 = vsel %vm7403, %v7374, %v6977
    %v7424 = vsel %vm7403, %v7375, %v6979
    %v7425 = vsel %vm7403, %v7376, %v6981
    %v7426 = vsel %vm7403, %v7377, %v6981
    %v7427 = vsel %vm7403, %v7378, %v6983
    %v7428 = vsel %vm7403, %v7379, %v6985
    %v7429 = vsel %vm7403, %v7380, %v6987
    %v7430 = vsel %vm7403, %v7381, %v6989
    %v7431 = vsel %vm7403, %v7382, %v6991
    %v7432 = vsel %vm7403, %v7383, %v6993
    %v7433 = vsel %vm7403, %v7384, %v6995
    %v7434 = vsel %vm7403, %v7385, %v6997
    %v7435 = vsel %vm7403, %v7386, %v6999
    %v7436 = vsel %vm7403, %v7387, %v7001
    %v7437 = vsel %vm7403, %v7388, %v7003
    %v7438 = vsel %vm7403, %v7389, %v7005
    %v7439 = vsel %vm7403, %v7390, %v7007
    %v7440 = vsel %vm7403, %v7391, %v7009
    %v7441 = vsel %vm7403, %v7392, %v7011
    %v7442 = vsel %vm7403, %v7393, %v7013
    %v7443 = vsel %vm7403, %v7394, %v7015
    %v7444 = vsel %vm7403, %v7395, %v7017
    %v7445 = vsel %vm7403, %v7396, %v7019
    %v7446 = vsel %vm7403, %v7397, %v7021
    %v7447 = vsel %vm7403, %v7398, %v7023
    %v7448 = vsel %vm7403, %v7399, %v7025
    %v7449 = vsel %vm7403, %v7400, %v6981
    %v7450 = vsel %vm7403, %v7401, %v6981
    %v7451 = vsel %vm7403, %v7402, %v6983
    %vm7452 = vcmask 588800
    %v7453 = vsel %vm7452, %v7404, 1.0
    %v7454 = vsel %vm7452, %v7405, 1.0
    %v7455 = vsel %vm7452, %v7406, 1.0
    %v7456 = vsel %vm7452, %v7407, 1.0
    %v7457 = vsel %vm7452, %v7408, 1.0
    %v7458 = vsel %vm7452, %v7409, 1.0
    %v7459 = vsel %vm7452, %v7410, 1.0
    %v7460 = vsel %vm7452, %v7411, 1.0
    %v7461 = vsel %vm7452, %v7412, 1.0
    %v7462 = vsel %vm7452, %v7413, 1.0
    %v7463 = vsel %vm7452, %v7414, 1.0
    %v7464 = vsel %vm7452, %v7415, 1.0
    %v7465 = vsel %vm7452, %v7416, 1.0
    %v7466 = vsel %vm7452, %v7417, 1.0
    %v7467 = vsel %vm7452, %v7418, 1.0
    %v7468 = vsel %vm7452, %v7419, 1.0
    %v7469 = vsel %vm7452, %v7420, 1.0
    %v7470 = vsel %vm7452, %v7421, 1.0
    %v7471 = vsel %vm7452, %v7422, 1.0
    %v7472 = vsel %vm7452, %v7423, 1.0
    %v7473 = vsel %vm7452, %v7424, 1.0
    %v7474 = vsel %vm7452, %v7425, 1.0
    %v7475 = vsel %vm7452, %v7426, 1.0
    %v7476 = vsel %vm7452, %v7427, 1.0
    %v7477 = vsel %vm7452, %v7428, 1.0
    %v7478 = vsel %vm7452, %v7429, 1.0
    %v7479 = vsel %vm7452, %v7430, 1.0
    %v7480 = vsel %vm7452, %v7431, 1.0
    %v7481 = vsel %vm7452, %v7432, 1.0
    %v7482 = vsel %vm7452, %v7433, 1.0
    %v7483 = vsel %vm7452, %v7434, 1.0
    %v7484 = vsel %vm7452, %v7435, 1.0
    %v7485 = vsel %vm7452, %v7436, 1.0
    %v7486 = vsel %vm7452, %v7437, 1.0
    %v7487 = vsel %vm7452, %v7438, 1.0
    %v7488 = vsel %vm7452, %v7439, 1.0
    %v7489 = vsel %vm7452, %v7440, 1.0
    %v7490 = vsel %vm7452, %v7441, 1.0
    %v7491 = vsel %vm7452, %v7442, 1.0
    %v7492 = vsel %vm7452, %v7443, 1.0
    %v7493 = vsel %vm7452, %v7444, 1.0
    %v7494 = vsel %vm7452, %v7445, 1.0
    %v7495 = vsel %vm7452, %v7446, 1.0
    %v7496 = vsel %vm7452, %v7447, 1.0
    %v7497 = vsel %vm7452, %v7448, 1.0
    %v7498 = vsel %vm7452, %v7449, 1.0
    %v7499 = vsel %vm7452, %v7450, 1.0
    %v7500 = vsel %vm7452, %v7451, 1.0
    %v7501 = vld [vmem:[%s4] sm:$0xff]
    %v7502 = vld [vmem:[%s4 + $0x8] sm:$0xff]
    %v7503 = vld [vmem:[%s4 + $0x10] sm:$0xff]
    %v7504 = vld [vmem:[%s4 + $0x18] sm:$0xff]
    %v7505 = vld [vmem:[%s4 + $0x20] sm:$0xff]
    %v7506 = vld [vmem:[%s4 + $0x28] sm:$0xff]
    %v7507 = vld [vmem:[%s4 + $0x30] sm:$0xff]
    %v7508 = vld [vmem:[%s4 + $0x38] sm:$0xff]
    %v7509 = vld [vmem:[%s4 + $0x40] sm:$0xff]
    %v7510 = vld [vmem:[%s4 + $0x48] sm:$0x1]
    %v7559 = vrot.slane %v7453, 2
    %v7560 = vrot.slane %v7453, 4
    %v7561 = vrot.slane %v7453, 6
    %v7562 = vrot.slane %v7454, 2
    %v7563 = vrot.slane %v7454, 4
    %v7564 = vrot.slane %v7454, 6
    %v7565 = vrot.slane %v7456, 2
    %v7566 = vrot.slane %v7456, 4
    %v7567 = vrot.slane %v7456, 6
    %v7568 = vrot.slane %v7457, 2
    %v7569 = vrot.slane %v7457, 4
    %v7570 = vrot.slane %v7457, 6
    %v7571 = vrot.slane %v7459, 2
    %v7572 = vrot.slane %v7459, 4
    %v7573 = vrot.slane %v7459, 6
    %v7574 = vrot.slane %v7460, 2
    %v7575 = vrot.slane %v7460, 4
    %v7576 = vrot.slane %v7460, 6
    %v7577 = vrot.slane %v7462, 2
    %v7578 = vrot.slane %v7462, 4
    %v7579 = vrot.slane %v7462, 6
    %v7580 = vrot.slane %v7463, 2
    %v7581 = vrot.slane %v7463, 4
    %v7582 = vrot.slane %v7463, 6
    %v7583 = vrot.slane %v7465, 2
    %v7584 = vrot.slane %v7465, 4
    %v7585 = vrot.slane %v7465, 6
    %v7586 = vrot.slane %v7466, 2
    %v7587 = vrot.slane %v7466, 4
    %v7588 = vrot.slane %v7466, 6
    %v7589 = vrot.slane %v7468, 2
    %v7590 = vrot.slane %v7468, 4
    %v7591 = vrot.slane %v7468, 6
    %v7592 = vrot.slane %v7469, 2
    %v7593 = vrot.slane %v7469, 4
    %v7594 = vrot.slane %v7469, 6
    %v7595 = vrot.slane %v7471, 2
    %v7596 = vrot.slane %v7471, 4
    %v7597 = vrot.slane %v7471, 6
    %v7598 = vrot.slane %v7472, 2
    %v7599 = vrot.slane %v7472, 4
    %v7600 = vrot.slane %v7472, 6
    %v7601 = vrot.slane %v7474, 2
    %v7602 = vrot.slane %v7474, 4
    %v7603 = vrot.slane %v7474, 6
    %v7604 = vrot.slane %v7475, 2
    %v7605 = vrot.slane %v7475, 4
    %v7606 = vrot.slane %v7475, 6
    %v7607 = vrot.slane %v7477, 2
    %v7608 = vrot.slane %v7477, 4
    %v7609 = vrot.slane %v7477, 6
    %v7610 = vrot.slane %v7478, 2
    %v7611 = vrot.slane %v7478, 4
    %v7612 = vrot.slane %v7478, 6
    %v7613 = vrot.slane %v7480, 2
    %v7614 = vrot.slane %v7480, 4
    %v7615 = vrot.slane %v7480, 6
    %v7616 = vrot.slane %v7481, 2
    %v7617 = vrot.slane %v7481, 4
    %v7618 = vrot.slane %v7481, 6
    %v7619 = vrot.slane %v7483, 2
    %v7620 = vrot.slane %v7483, 4
    %v7621 = vrot.slane %v7483, 6
    %v7622 = vrot.slane %v7484, 2
    %v7623 = vrot.slane %v7484, 4
    %v7624 = vrot.slane %v7484, 6
    %v7625 = vrot.slane %v7486, 2
    %v7626 = vrot.slane %v7486, 4
    %v7627 = vrot.slane %v7486, 6
    %v7628 = vrot.slane %v7487, 2
    %v7629 = vrot.slane %v7487, 4
    %v7630 = vrot.slane %v7487, 6
    %v7631 = vrot.slane %v7489, 2
    %v7632 = vrot.slane %v7489, 4
    %v7633 = vrot.slane %v7489, 6
    %v7634 = vrot.slane %v7490, 2
    %v7635 = vrot.slane %v7490, 4
    %v7636 = vrot.slane %v7490, 6
    %v7637 = vrot.slane %v7492, 2
    %v7638 = vrot.slane %v7492, 4
    %v7639 = vrot.slane %v7492, 6
    %v7640 = vrot.slane %v7493, 2
    %v7641 = vrot.slane %v7493, 4
    %v7642 = vrot.slane %v7493, 6
    %v7643 = vrot.slane %v7495, 2
    %v7644 = vrot.slane %v7495, 4
    %v7645 = vrot.slane %v7495, 6
    %v7646 = vrot.slane %v7496, 2
    %v7647 = vrot.slane %v7496, 4
    %v7648 = vrot.slane %v7496, 6
    %v7649 = vrot.slane %v7498, 2
    %v7650 = vrot.slane %v7498, 4
    %v7651 = vrot.slane %v7498, 6
    %v7652 = vrot.slane %v7499, 2
    %v7653 = vrot.slane %v7499, 4
    %v7654 = vrot.slane %v7499, 6
    %7655 = vst [vmem:[#allocation1] ss:$4 sm:$0xff] %v7453
    %s7656 = scalar_lea.vmem [#allocation1], 1
    %7657 = vst [vmem:[%s7656] ss:$4 sm:$0xff] %v7559
    %s7658 = scalar_lea.vmem [#allocation1], 2
    %7659 = vst [vmem:[%s7658] ss:$4 sm:$0xff] %v7560
    %s7660 = scalar_lea.vmem [#allocation1], 3
    %7661 = vst [vmem:[%s7660] ss:$4 sm:$0xff] %v7561
    %s7662 = scalar_lea.vmem [#allocation1], 32
    %7663 = vst [vmem:[%s7662] ss:$4 sm:$0xff] %v7454
    %s7664 = scalar_lea.vmem [#allocation1], 33
    %7665 = vst [vmem:[%s7664] ss:$4 sm:$0xff] %v7562
    %s7666 = scalar_lea.vmem [#allocation1], 34
    %7667 = vst [vmem:[%s7666] ss:$4 sm:$0xff] %v7563
    %s7668 = scalar_lea.vmem [#allocation1], 35
    %7669 = vst [vmem:[%s7668] ss:$4 sm:$0xff] %v7564
    %v7670 = vld.sshfl [vmem:[#allocation1] sm:$0xff pattern:$0x73625140]
    %v7671 = vld.sshfl [vmem:[#allocation1 + $0x20] sm:$0xff pattern:$0x73625140]
    %7672 = vst [vmem:[#allocation1] ss:$4 sm:$0xff] %v7455
    %7673 = vst [vmem:[%s7656] ss:$4 sm:$0xff] %v7456
    %7674 = vst [vmem:[%s7658] ss:$4 sm:$0xff] %v7565
    %7675 = vst [vmem:[%s7660] ss:$4 sm:$0xff] %v7566
    %7676 = vst [vmem:[%s7662] ss:$4 sm:$0xff] %v7567
    %7677 = vst [vmem:[%s7664] ss:$4 sm:$0xff] %v7457
    %7678 = vst [vmem:[%s7666] ss:$4 sm:$0xff] %v7568
    %7679 = vst [vmem:[%s7668] ss:$4 sm:$0xff] %v7569
    %v7680 = vld.sshfl [vmem:[#allocation1] sm:$0xff pattern:$0x73625140]
    %v7681 = vld.sshfl [vmem:[#allocation1 + $0x20] sm:$0xff pattern:$0x73625140]
    %7682 = vst [vmem:[#allocation1] ss:$4 sm:$0xff] %v7570
    %7683 = vst [vmem:[%s7656] ss:$4 sm:$0xff] %v7458
    %7684 = vst [vmem:[%s7658] ss:$4 sm:$0xff] %v7459
    %7685 = vst [vmem:[%s7660] ss:$4 sm:$0xff] %v7571
    %7686 = vst [vmem:[%s7662] ss:$4 sm:$0xff] %v7572
    %7687 = vst [vmem:[%s7664] ss:$4 sm:$0xff] %v7573
    %7688 = vst [vmem:[%s7666] ss:$4 sm:$0xff] %v7460
    %7689 = vst [vmem:[%s7668] ss:$4 sm:$0xff] %v7574
    %v7690 = vld.sshfl [vmem:[#allocation1] sm:$0xff pattern:$0x73625140]
    %v7691 = vld.sshfl [vmem:[#allocation1 + $0x20] sm:$0xff pattern:$0x73625140]
    %7692 = vst [vmem:[#allocation1] ss:$4 sm:$0xff] %v7575
    %7693 = vst [vmem:[%s7656] ss:$4 sm:$0xff] %v7576
    %7694 = vst [vmem:[%s7658] ss:$4 sm:$0xff] %v7461
    %7695 = vst [vmem:[%s7660] ss:$4 sm:$0xff] %v7462
    %7696 = vst [vmem:[%s7662] ss:$4 sm:$0xff] %v7577
    %7697 = vst [vmem:[%s7664] ss:$4 sm:$0xff] %v7578
    %7698 = vst [vmem:[%s7666] ss:$4 sm:$0xff] %v7579
    %7699 = vst [vmem:[%s7668] ss:$4 sm:$0xff] %v7463
    %v7700 = vld.sshfl [vmem:[#allocation1] sm:$0xff pattern:$0x73625140]
    %v7701 = vld.sshfl [vmem:[#allocation1 + $0x20] sm:$0xff pattern:$0x73625140]
    %7702 = vst [vmem:[#allocation1] ss:$4 sm:$0xff] %v7580
    %7703 = vst [vmem:[%s7656] ss:$4 sm:$0xff] %v7581
    %7704 = vst [vmem:[%s7658] ss:$4 sm:$0xff] %v7582
    %7705 = vst [vmem:[%s7660] ss:$4 sm:$0xff] %v7464
    %7706 = vst [vmem:[%s7662] ss:$4 sm:$0xff] %v7465
    %7707 = vst [vmem:[%s7664] ss:$4 sm:$0xff] %v7583
    %7708 = vst [vmem:[%s7666] ss:$4 sm:$0xff] %v7584
    %7709 = vst [vmem:[%s7668] ss:$4 sm:$0xff] %v7585
    %v7710 = vld.sshfl [vmem:[#allocation1] sm:$0xff pattern:$0x73625140]
    %v7711 = vld.sshfl [vmem:[#allocation1 + $0x20] sm:$0xff pattern:$0x73625140]
    %7712 = vst [vmem:[#allocation1] ss:$4 sm:$0xff] %v7466
    %7713 = vst [vmem:[%s7656] ss:$4 sm:$0xff] %v7586
    %7714 = vst [vmem:[%s7658] ss:$4 sm:$0xff] %v7587
    %7715 = vst [vmem:[%s7660] ss:$4 sm:$0xff] %v7588
    %7716 = vst [vmem:[%s7662] ss:$4 sm:$0xff] %v7467
    %7717 = vst [vmem:[%s7664] ss:$4 sm:$0xff] %v7468
    %7718 = vst [vmem:[%s7666] ss:$4 sm:$0xff] %v7589
    %7719 = vst [vmem:[%s7668] ss:$4 sm:$0xff] %v7590
    %v7720 = vld.sshfl [vmem:[#allocation1] sm:$0xff pattern:$0x73625140]
    %v7721 = vld.sshfl [vmem:[#allocation1 + $0x20] sm:$0xff pattern:$0x73625140]
    %7722 = vst [vmem:[#allocation1] ss:$4 sm:$0xff] %v7591
    %7723 = vst [vmem:[%s7656] ss:$4 sm:$0xff] %v7469
    %7724 = vst [vmem:[%s7658] ss:$4 sm:$0xff] %v7592
    %7725 = vst [vmem:[%s7660] ss:$4 sm:$0xff] %v7593
    %7726 = vst [vmem:[%s7662] ss:$4 sm:$0xff] %v7594
    %7727 = vst [vmem:[%s7664] ss:$4 sm:$0xff] %v7470
    %7728 = vst [vmem:[%s7666] ss:$4 sm:$0xff] %v7471
    %7729 = vst [vmem:[%s7668] ss:$4 sm:$0xff] %v7595
    %v7730 = vld.sshfl [vmem:[#allocation1] sm:$0xff pattern:$0x73625140]
    %v7731 = vld.sshfl [vmem:[#allocation1 + $0x20] sm:$0xff pattern:$0x73625140]
    %7732 = vst [vmem:[#allocation1] ss:$4 sm:$0xff] %v7596
    %7733 = vst [vmem:[%s7656] ss:$4 sm:$0xff] %v7597
    %7734 = vst [vmem:[%s7658] ss:$4 sm:$0xff] %v7472
    %7735 = vst [vmem:[%s7660] ss:$4 sm:$0xff] %v7598
    %7736 = vst [vmem:[%s7662] ss:$4 sm:$0xff] %v7599
    %7737 = vst [vmem:[%s7664] ss:$4 sm:$0xff] %v7600
    %7738 = vst [vmem:[%s7666] ss:$4 sm:$0xff] %v7473
    %7739 = vst [vmem:[%s7668] ss:$4 sm:$0xff] %v7474
    %v7740 = vld.sshfl [vmem:[#allocation1] sm:$0xff pattern:$0x73625140]
    %v7741 = vld.sshfl [vmem:[#allocation1 + $0x20] sm:$0xff pattern:$0x73625140]
    %7742 = vst [vmem:[#allocation1] ss:$4 sm:$0xff] %v7601
    %7743 = vst [vmem:[%s7656] ss:$4 sm:$0xff] %v7602
    %7744 = vst [vmem:[%s7658] ss:$4 sm:$0xff] %v7603
    %7745 = vst [vmem:[%s7660] ss:$4 sm:$0xff] %v7475
    %7746 = vst [vmem:[%s7662] ss:$4 sm:$0xff] %v7604
    %7747 = vst [vmem:[%s7664] ss:$4 sm:$0xff] %v7605
    %7748 = vst [vmem:[%s7666] ss:$4 sm:$0xff] %v7606
    %7749 = vst [vmem:[%s7668] ss:$4 sm:$0xff] %v7476
    %v7750 = vld.sshfl [vmem:[#allocation1] sm:$0xff pattern:$0x73625140]
    %v7751 = vld.sshfl [vmem:[#allocation1 + $0x20] sm:$0xff pattern:$0x73625140]
    %7752 = vst [vmem:[#allocation1] ss:$4 sm:$0xff] %v7477
    %7753 = vst [vmem:[%s7656] ss:$4 sm:$0xff] %v7607
    %7754 = vst [vmem:[%s7658] ss:$4 sm:$0xff] %v7608
    %7755 = vst [vmem:[%s7660] ss:$4 sm:$0xff] %v7609
    %7756 = vst [vmem:[%s7662] ss:$4 sm:$0xff] %v7478
    %7757 = vst [vmem:[%s7664] ss:$4 sm:$0xff] %v7610
    %7758 = vst [vmem:[%s7666] ss:$4 sm:$0xff] %v7611
    %7759 = vst [vmem:[%s7668] ss:$4 sm:$0xff] %v7612
    %v7760 = vld.sshfl [vmem:[#allocation1] sm:$0xff pattern:$0x73625140]
    %v7761 = vld.sshfl [vmem:[#allocation1 + $0x20] sm:$0xff pattern:$0x73625140]
    %7762 = vst [vmem:[#allocation1] ss:$4 sm:$0xff] %v7479
    %7763 = vst [vmem:[%s7656] ss:$4 sm:$0xff] %v7480
    %7764 = vst [vmem:[%s7658] ss:$4 sm:$0xff] %v7613
    %7765 = vst [vmem:[%s7660] ss:$4 sm:$0xff] %v7614
    %7766 = vst [vmem:[%s7662] ss:$4 sm:$0xff] %v7615
    %7767 = vst [vmem:[%s7664] ss:$4 sm:$0xff] %v7481
    %7768 = vst [vmem:[%s7666] ss:$4 sm:$0xff] %v7616
    %7769 = vst [vmem:[%s7668] ss:$4 sm:$0xff] %v7617
    %v7770 = vld.sshfl [vmem:[#allocation1] sm:$0xff pattern:$0x73625140]
    %v7771 = vld.sshfl [vmem:[#allocation1 + $0x20] sm:$0xff pattern:$0x73625140]
    %7772 = vst [vmem:[#allocation1] ss:$4 sm:$0xff] %v7618
    %7773 = vst [vmem:[%s7656] ss:$4 sm:$0xff] %v7482
    %7774 = vst [vmem:[%s7658] ss:$4 sm:$0xff] %v7483
    %7775 = vst [vmem:[%s7660] ss:$4 sm:$0xff] %v7619
    %7776 = vst [vmem:[%s7662] ss:$4 sm:$0xff] %v7620
    %7777 = vst [vmem:[%s7664] ss:$4 sm:$0xff] %v7621
    %7778 = vst [vmem:[%s7666] ss:$4 sm:$0xff] %v7484
    %7779 = vst [vmem:[%s7668] ss:$4 sm:$0xff] %v7622
    %v7780 = vld.sshfl [vmem:[#allocation1] sm:$0xff pattern:$0x73625140]
    %v7781 = vld.sshfl [vmem:[#allocation1 + $0x20] sm:$0xff pattern:$0x73625140]
    %7782 = vst [vmem:[#allocation1] ss:$4 sm:$0xff] %v7623
    %7783 = vst [vmem:[%s7656] ss:$4 sm:$0xff] %v7624
    %7784 = vst [vmem:[%s7658] ss:$4 sm:$0xff] %v7485
    %7785 = vst [vmem:[%s7660] ss:$4 sm:$0xff] %v7486
    %7786 = vst [vmem:[%s7662] ss:$4 sm:$0xff] %v7625
    %7787 = vst [vmem:[%s7664] ss:$4 sm:$0xff] %v7626
    %7788 = vst [vmem:[%s7666] ss:$4 sm:$0xff] %v7627
    %7789 = vst [vmem:[%s7668] ss:$4 sm:$0xff] %v7487
    %v7790 = vld.sshfl [vmem:[#allocation1] sm:$0xff pattern:$0x73625140]
    %v7791 = vld.sshfl [vmem:[#allocation1 + $0x20] sm:$0xff pattern:$0x73625140]
    %7792 = vst [vmem:[#allocation1] ss:$4 sm:$0xff] %v7628
    %7793 = vst [vmem:[%s7656] ss:$4 sm:$0xff] %v7629
    %7794 = vst [vmem:[%s7658] ss:$4 sm:$0xff] %v7630
    %7795 = vst [vmem:[%s7660] ss:$4 sm:$0xff] %v7488
    %7796 = vst [vmem:[%s7662] ss:$4 sm:$0xff] %v7489
    %7797 = vst [vmem:[%s7664] ss:$4 sm:$0xff] %v7631
    %7798 = vst [vmem:[%s7666] ss:$4 sm:$0xff] %v7632
    %7799 = vst [vmem:[%s7668] ss:$4 sm:$0xff] %v7633
    %v7800 = vld.sshfl [vmem:[#allocation1] sm:$0xff pattern:$0x73625140]
    %v7801 = vld.sshfl [vmem:[#allocation1 + $0x20] sm:$0xff pattern:$0x73625140]
    %7802 = vst [vmem:[#allocation1] ss:$4 sm:$0xff] %v7490
    %7803 = vst [vmem:[%s7656] ss:$4 sm:$0xff] %v7634
    %7804 = vst [vmem:[%s7658] ss:$4 sm:$0xff] %v7635
    %7805 = vst [vmem:[%s7660] ss:$4 sm:$0xff] %v7636
    %7806 = vst [vmem:[%s7662] ss:$4 sm:$0xff] %v7491
    %7807 = vst [vmem:[%s7664] ss:$4 sm:$0xff] %v7492
    %7808 = vst [vmem:[%s7666] ss:$4 sm:$0xff] %v7637
    %7809 = vst [vmem:[%s7668] ss:$4 sm:$0xff] %v7638
    %v7810 = vld.sshfl [vmem:[#allocation1] sm:$0xff pattern:$0x73625140]
    %v7811 = vld.sshfl [vmem:[#allocation1 + $0x20] sm:$0xff pattern:$0x73625140]
    %7812 = vst [vmem:[#allocation1] ss:$4 sm:$0xff] %v7639
    %7813 = vst [vmem:[%s7656] ss:$4 sm:$0xff] %v7493
    %7814 = vst [vmem:[%s7658] ss:$4 sm:$0xff] %v7640
    %7815 = vst [vmem:[%s7660] ss:$4 sm:$0xff] %v7641
    %7816 = vst [vmem:[%s7662] ss:$4 sm:$0xff] %v7642
    %7817 = vst [vmem:[%s7664] ss:$4 sm:$0xff] %v7494
    %7818 = vst [vmem:[%s7666] ss:$4 sm:$0xff] %v7495
    %7819 = vst [vmem:[%s7668] ss:$4 sm:$0xff] %v7643
    %v7820 = vld.sshfl [vmem:[#allocation1] sm:$0xff pattern:$0x73625140]
    %v7821 = vld.sshfl [vmem:[#allocation1 + $0x20] sm:$0xff pattern:$0x73625140]
    %7822 = vst [vmem:[#allocation1] ss:$4 sm:$0xff] %v7644
    %7823 = vst [vmem:[%s7656] ss:$4 sm:$0xff] %v7645
    %7824 = vst [vmem:[%s7658] ss:$4 sm:$0xff] %v7496
    %7825 = vst [vmem:[%s7660] ss:$4 sm:$0xff] %v7646
    %7826 = vst [vmem:[%s7662] ss:$4 sm:$0xff] %v7647
    %7827 = vst [vmem:[%s7664] ss:$4 sm:$0xff] %v7648
    %7828 = vst [vmem:[%s7666] ss:$4 sm:$0xff] %v7497
    %7829 = vst [vmem:[%s7668] ss:$4 sm:$0xff] %v7498
    %v7830 = vld.sshfl [vmem:[#allocation1] sm:$0xff pattern:$0x73625140]
    %v7831 = vld.sshfl [vmem:[#allocation1 + $0x20] sm:$0xff pattern:$0x73625140]
    %7832 = vst [vmem:[#allocation1] ss:$4 sm:$0xff] %v7649
    %7833 = vst [vmem:[%s7656] ss:$4 sm:$0xff] %v7650
    %7834 = vst [vmem:[%s7658] ss:$4 sm:$0xff] %v7651
    %7835 = vst [vmem:[%s7660] ss:$4 sm:$0xff] %v7499
    %7836 = vst [vmem:[%s7662] ss:$4 sm:$0xff] %v7652
    %7837 = vst [vmem:[%s7664] ss:$4 sm:$0xff] %v7653
    %7838 = vst [vmem:[%s7666] ss:$4 sm:$0xff] %v7654
    %7839 = vst [vmem:[%s7668] ss:$4 sm:$0xff] %v7500
    %v7840 = vld.sshfl [vmem:[#allocation1] sm:$0xff pattern:$0x73625140]
    %v7841 = vld.sshfl [vmem:[#allocation1 + $0x20] sm:$0xff pattern:$0x73625140]
    %vm7842 = vcmask 596992
    %v7843 = vsel %vm7842, %v7670, 0
    %v7845 = vsel %vm7842, %v7671, 0
    %v7847 = vsel %vm7842, %v7680, 0
    %v7849 = vsel %vm7842, %v7681, 0
    %v7851 = vsel %vm7842, %v7690, 0
    %v7853 = vsel %vm7842, %v7691, 0
    %v7855 = vsel %vm7842, %v7700, 0
    %v7857 = vsel %vm7842, %v7701, 0
    %v7859 = vsel %vm7842, %v7710, 0
    %v7861 = vsel %vm7842, %v7711, 0
    %v7863 = vsel %vm7842, %v7720, 0
    %v7865 = vsel %vm7842, %v7721, 0
    %v7867 = vsel %vm7842, %v7730, 0
    %v7869 = vsel %vm7842, %v7731, 0
    %v7871 = vsel %vm7842, %v7740, 0
    %v7873 = vsel %vm7842, %v7741, 0
    %v7875 = vsel %vm7842, %v7750, 0
    %v7877 = vsel %vm7842, %v7751, 0
    %v7879 = vsel %vm7842, %v7760, 0
    %v7881 = vsel %vm7842, %v7761, 0
    %v7883 = vsel %vm7842, %v7770, 0
    %v7885 = vsel %vm7842, %v7771, 0
    %v7887 = vsel %vm7842, %v7780, 0
    %v7889 = vsel %vm7842, %v7781, 0
    %v7891 = vsel %vm7842, %v7790, 0
    %v7893 = vsel %vm7842, %v7791, 0
    %v7895 = vsel %vm7842, %v7800, 0
    %v7897 = vsel %vm7842, %v7801, 0
    %v7899 = vsel %vm7842, %v7810, 0
    %v7901 = vsel %vm7842, %v7811, 0
    %v7903 = vsel %vm7842, %v7820, 0
    %v7905 = vsel %vm7842, %v7821, 0
    %v7907 = vsel %vm7842, %v7830, 0
    %v7909 = vsel %vm7842, %v7831, 0
    %v7911 = vsel %vm7842, %v7840, 0
    %v7913 = vsel %vm7842, %v7841, 0
    %vm7915 = vcmask 1040384
    %v7917 = vsel %vm7915, %v7510, 0
    %7919 = vmatpush.msra.mxu0 0.0
    %7920 = vmatpush.msra.mxu0 0.0
    %7921 = vmatpush.msra.mxu0 0.0
    %7922 = vmatpush.msra.mxu0 0.0
    %7923 = vmatpush.msra.mxu0 0.0
    %7924 = vmatpush.msra.mxu0 0.0
    %7925 = vmatpush.msra.mxu0 %v7917
    %7926 = vmatpush.msra.mxu0 %v7509
    %7927 = vmatpush.msra.mxu0 %v7508
    %7928 = vmatpush.msra.mxu0 %v7507
    %7929 = vmatpush.msra.mxu0 %v7506
    %7930 = vmatpush.msra.mxu0 %v7505
    %7931 = vmatpush.msra.mxu0 %v7504
    %7932 = vmatpush.msra.mxu0 %v7503
    %7933 = vmatpush.msra.mxu0 %v7502
    %7934 = vmatpush.msra.mxu0 %v7501
    %7935 = vmatmul.f32.gmra.mxu0 %v7843
    %v7936 = vpop.f32.mrf.mxu0
    %v7937 = vadd.f32 0.0, %v7936
    %7938 = vmatmul.f32.gmra.mxu0 %v7845
    %v7939 = vpop.f32.mrf.mxu0
    %v7940 = vadd.f32 0.0, %v7939
    %7941 = vmatmul.f32.gmra.mxu0 %v7847
    %v7942 = vpop.f32.mrf.mxu0
    %v7943 = vadd.f32 0.0, %v7942
    %7944 = vmatmul.f32.gmra.mxu0 %v7849
    %v7945 = vpop.f32.mrf.mxu0
    %v7946 = vadd.f32 0.0, %v7945
    %7947 = vmatmul.f32.gmra.mxu0 %v7851
    %v7948 = vpop.f32.mrf.mxu0
    %v7949 = vadd.f32 0.0, %v7948
    %7950 = vmatmul.f32.gmra.mxu0 %v7853
    %v7951 = vpop.f32.mrf.mxu0
    %v7952 = vadd.f32 0.0, %v7951
    %7953 = vmatmul.f32.gmra.mxu0 %v7855
    %v7954 = vpop.f32.mrf.mxu0
    %v7955 = vadd.f32 0.0, %v7954
    %7956 = vmatmul.f32.gmra.mxu0 %v7857
    %v7957 = vpop.f32.mrf.mxu0
    %v7958 = vadd.f32 0.0, %v7957
    %7959 = vmatmul.f32.gmra.mxu0 %v7859
    %v7960 = vpop.f32.mrf.mxu0
    %v7961 = vadd.f32 0.0, %v7960
    %7962 = vmatmul.f32.gmra.mxu0 %v7861
    %v7963 = vpop.f32.mrf.mxu0
    %v7964 = vadd.f32 0.0, %v7963
    %7965 = vmatmul.f32.gmra.mxu0 %v7863
    %v7966 = vpop.f32.mrf.mxu0
    %v7967 = vadd.f32 0.0, %v7966
    %7968 = vmatmul.f32.gmra.mxu0 %v7865
    %v7969 = vpop.f32.mrf.mxu0
    %v7970 = vadd.f32 0.0, %v7969
    %7971 = vmatmul.f32.gmra.mxu0 %v7867
    %v7972 = vpop.f32.mrf.mxu0
    %v7973 = vadd.f32 0.0, %v7972
    %7974 = vmatmul.f32.gmra.mxu0 %v7869
    %v7975 = vpop.f32.mrf.mxu0
    %v7976 = vadd.f32 0.0, %v7975
    %7977 = vmatmul.f32.gmra.mxu0 %v7871
    %v7978 = vpop.f32.mrf.mxu0
    %v7979 = vadd.f32 0.0, %v7978
    %7980 = vmatmul.f32.gmra.mxu0 %v7873
    %v7981 = vpop.f32.mrf.mxu0
    %v7982 = vadd.f32 0.0, %v7981
    %7983 = vmatmul.f32.gmra.mxu0 %v7875
    %v7984 = vpop.f32.mrf.mxu0
    %v7985 = vadd.f32 0.0, %v7984
    %7986 = vmatmul.f32.gmra.mxu0 %v7877
    %v7987 = vpop.f32.mrf.mxu0
    %v7988 = vadd.f32 0.0, %v7987
    %7989 = vmatmul.f32.gmra.mxu0 %v7879
    %v7990 = vpop.f32.mrf.mxu0
    %v7991 = vadd.f32 0.0, %v7990
    %7992 = vmatmul.f32.gmra.mxu0 %v7881
    %v7993 = vpop.f32.mrf.mxu0
    %v7994 = vadd.f32 0.0, %v7993
    %7995 = vmatmul.f32.gmra.mxu0 %v7883
    %v7996 = vpop.f32.mrf.mxu0
    %v7997 = vadd.f32 0.0, %v7996
    %7998 = vmatmul.f32.gmra.mxu0 %v7885
    %v7999 = vpop.f32.mrf.mxu0
    %v8000 = vadd.f32 0.0, %v7999
    %8001 = vmatmul.f32.gmra.mxu0 %v7887
    %v8002 = vpop.f32.mrf.mxu0
    %v8003 = vadd.f32 0.0, %v8002
    %8004 = vmatmul.f32.gmra.mxu0 %v7889
    %v8005 = vpop.f32.mrf.mxu0
    %v8006 = vadd.f32 0.0, %v8005
    %8007 = vmatmul.f32.gmra.mxu0 %v7891
    %v8008 = vpop.f32.mrf.mxu0
    %v8009 = vadd.f32 0.0, %v8008
    %8010 = vmatmul.f32.gmra.mxu0 %v7893
    %v8011 = vpop.f32.mrf.mxu0
    %v8012 = vadd.f32 0.0, %v8011
    %8013 = vmatmul.f32.gmra.mxu0 %v7895
    %v8014 = vpop.f32.mrf.mxu0
    %v8015 = vadd.f32 0.0, %v8014
    %8016 = vmatmul.f32.gmra.mxu0 %v7897
    %v8017 = vpop.f32.mrf.mxu0
    %v8018 = vadd.f32 0.0, %v8017
    %8019 = vmatmul.f32.gmra.mxu0 %v7899
    %v8020 = vpop.f32.mrf.mxu0
    %v8021 = vadd.f32 0.0, %v8020
    %8022 = vmatmul.f32.gmra.mxu0 %v7901
    %v8023 = vpop.f32.mrf.mxu0
    %v8024 = vadd.f32 0.0, %v8023
    %8025 = vmatmul.f32.gmra.mxu0 %v7903
    %v8026 = vpop.f32.mrf.mxu0
    %v8027 = vadd.f32 0.0, %v8026
    %8028 = vmatmul.f32.gmra.mxu0 %v7905
    %v8029 = vpop.f32.mrf.mxu0
    %v8030 = vadd.f32 0.0, %v8029
    %8031 = vmatmul.f32.gmra.mxu0 %v7907
    %v8032 = vpop.f32.mrf.mxu0
    %v8033 = vadd.f32 0.0, %v8032
    %8034 = vmatmul.f32.gmra.mxu0 %v7909
    %v8035 = vpop.f32.mrf.mxu0
    %v8036 = vadd.f32 0.0, %v8035
    %8037 = vmatmul.f32.gmra.mxu0 %v7911
    %v8038 = vpop.f32.mrf.mxu0
    %v8039 = vadd.f32 0.0, %v8038
    %8040 = vmatmul.f32.gmra.mxu0 %v7913
    %v8041 = vpop.f32.mrf.mxu0
    %v8042 = vadd.f32 0.0, %v8041
    %8043 = vdwg.mxu0
    %v8080 = vrot.slane %v7937, 2
    %v8081 = vrot.slane %v7937, 4
    %v8082 = vrot.slane %v7937, 6
    %v8083 = vrot.slane %v7940, 2
    %v8084 = vrot.slane %v7940, 4
    %v8085 = vrot.slane %v7940, 6
    %v8086 = vrot.slane %v7943, 2
    %v8087 = vrot.slane %v7943, 4
    %v8088 = vrot.slane %v7943, 6
    %v8089 = vrot.slane %v7946, 2
    %v8090 = vrot.slane %v7946, 4
    %v8091 = vrot.slane %v7946, 6
    %v8092 = vrot.slane %v7949, 2
    %v8093 = vrot.slane %v7949, 4
    %v8094 = vrot.slane %v7949, 6
    %v8095 = vrot.slane %v7952, 2
    %v8096 = vrot.slane %v7952, 4
    %v8097 = vrot.slane %v7952, 6
    %v8098 = vrot.slane %v7955, 2
    %v8099 = vrot.slane %v7955, 4
    %v8100 = vrot.slane %v7955, 6
    %v8101 = vrot.slane %v7958, 2
    %v8102 = vrot.slane %v7958, 4
    %v8103 = vrot.slane %v7958, 6
    %v8104 = vrot.slane %v7961, 2
    %v8105 = vrot.slane %v7961, 4
    %v8106 = vrot.slane %v7961, 6
    %v8107 = vrot.slane %v7964, 2
    %v8108 = vrot.slane %v7964, 4
    %v8109 = vrot.slane %v7964, 6
    %v8110 = vrot.slane %v7967, 2
    %v8111 = vrot.slane %v7967, 4
    %v8112 = vrot.slane %v7967, 6
    %v8113 = vrot.slane %v7970, 2
    %v8114 = vrot.slane %v7970, 4
    %v8115 = vrot.slane %v7970, 6
    %v8116 = vrot.slane %v7973, 2
    %v8117 = vrot.slane %v7973, 4
    %v8118 = vrot.slane %v7973, 6
    %v8119 = vrot.slane %v7976, 2
    %v8120 = vrot.slane %v7976, 4
    %v8121 = vrot.slane %v7976, 6
    %v8122 = vrot.slane %v7979, 2
    %v8123 = vrot.slane %v7979, 4
    %v8124 = vrot.slane %v7979, 6
    %v8125 = vrot.slane %v7982, 2
    %v8126 = vrot.slane %v7982, 4
    %v8127 = vrot.slane %v7982, 6
    %v8128 = vrot.slane %v7985, 2
    %v8129 = vrot.slane %v7985, 4
    %v8130 = vrot.slane %v7985, 6
    %v8131 = vrot.slane %v7988, 2
    %v8132 = vrot.slane %v7988, 4
    %v8133 = vrot.slane %v7988, 6
    %v8134 = vrot.slane %v7991, 2
    %v8135 = vrot.slane %v7991, 4
    %v8136 = vrot.slane %v7991, 6
    %v8137 = vrot.slane %v7994, 2
    %v8138 = vrot.slane %v7994, 4
    %v8139 = vrot.slane %v7994, 6
    %v8140 = vrot.slane %v7997, 2
    %v8141 = vrot.slane %v7997, 4
    %v8142 = vrot.slane %v7997, 6
    %v8143 = vrot.slane %v8000, 2
    %v8144 = vrot.slane %v8000, 4
    %v8145 = vrot.slane %v8000, 6
    %v8146 = vrot.slane %v8003, 2
    %v8147 = vrot.slane %v8003, 4
    %v8148 = vrot.slane %v8003, 6
    %v8149 = vrot.slane %v8006, 2
    %v8150 = vrot.slane %v8006, 4
    %v8151 = vrot.slane %v8006, 6
    %v8152 = vrot.slane %v8009, 2
    %v8153 = vrot.slane %v8009, 4
    %v8154 = vrot.slane %v8009, 6
    %v8155 = vrot.slane %v8012, 2
    %v8156 = vrot.slane %v8012, 4
    %v8157 = vrot.slane %v8012, 6
    %v8158 = vrot.slane %v8015, 2
    %v8159 = vrot.slane %v8015, 4
    %v8160 = vrot.slane %v8015, 6
    %v8161 = vrot.slane %v8018, 2
    %v8162 = vrot.slane %v8018, 4
    %v8163 = vrot.slane %v8018, 6
    %v8164 = vrot.slane %v8021, 2
    %v8165 = vrot.slane %v8021, 4
    %v8166 = vrot.slane %v8021, 6
    %v8167 = vrot.slane %v8024, 2
    %v8168 = vrot.slane %v8024, 4
    %v8169 = vrot.slane %v8024, 6
    %v8170 = vrot.slane %v8027, 2
    %v8171 = vrot.slane %v8027, 4
    %v8172 = vrot.slane %v8027, 6
    %v8173 = vrot.slane %v8030, 2
    %v8174 = vrot.slane %v8030, 4
    %v8175 = vrot.slane %v8030, 6
    %v8176 = vrot.slane %v8033, 2
    %v8177 = vrot.slane %v8033, 4
    %v8178 = vrot.slane %v8033, 6
    %v8179 = vrot.slane %v8036, 2
    %v8180 = vrot.slane %v8036, 4
    %v8181 = vrot.slane %v8036, 6
    %v8182 = vrot.slane %v8039, 2
    %v8183 = vrot.slane %v8039, 4
    %v8184 = vrot.slane %v8039, 6
    %v8185 = vrot.slane %v8042, 2
    %v8186 = vrot.slane %v8042, 4
    %v8187 = vrot.slane %v8042, 6
    %v8296 = vmax.f32 %v7937, 0.0
    %v8297 = vmax.f32 %v8080, 0.0
    %v8298 = vmax.f32 %v8081, 0.0
    %v8299 = vmax.f32 %v8082, 0.0
    %v8300 = vmax.f32 %v7940, 0.0
    %v8301 = vmax.f32 %v8083, 0.0
    %v8302 = vmax.f32 %v8084, 0.0
    %v8303 = vmax.f32 %v8085, 0.0
    %v8304 = vmax.f32 %v7943, 0.0
    %v8305 = vmax.f32 %v8086, 0.0
    %v8306 = vmax.f32 %v8087, 0.0
    %v8307 = vmax.f32 %v8088, 0.0
    %v8308 = vmax.f32 %v7946, 0.0
    %v8309 = vmax.f32 %v8089, 0.0
    %v8310 = vmax.f32 %v8090, 0.0
    %v8311 = vmax.f32 %v8091, 0.0
    %v8312 = vmax.f32 %v7949, 0.0
    %v8313 = vmax.f32 %v8092, 0.0
    %v8314 = vmax.f32 %v8093, 0.0
    %v8315 = vmax.f32 %v8094, 0.0
    %v8316 = vmax.f32 %v7952, 0.0
    %v8317 = vmax.f32 %v8095, 0.0
    %v8318 = vmax.f32 %v8096, 0.0
    %v8319 = vmax.f32 %v8097, 0.0
    %v8320 = vmax.f32 %v7955, 0.0
    %v8321 = vmax.f32 %v8098, 0.0
    %v8322 = vmax.f32 %v8099, 0.0
    %v8323 = vmax.f32 %v8100, 0.0
    %v8324 = vmax.f32 %v7958, 0.0
    %v8325 = vmax.f32 %v8101, 0.0
    %v8326 = vmax.f32 %v8102, 0.0
    %v8327 = vmax.f32 %v8103, 0.0
    %v8328 = vmax.f32 %v7961, 0.0
    %v8329 = vmax.f32 %v8104, 0.0
    %v8330 = vmax.f32 %v8105, 0.0
    %v8331 = vmax.f32 %v8106, 0.0
    %v8332 = vmax.f32 %v7964, 0.0
    %v8333 = vmax.f32 %v8107, 0.0
    %v8334 = vmax.f32 %v8108, 0.0
    %v8335 = vmax.f32 %v8109, 0.0
    %v8336 = vmax.f32 %v7967, 0.0
    %v8337 = vmax.f32 %v8110, 0.0
    %v8338 = vmax.f32 %v8111, 0.0
    %v8339 = vmax.f32 %v8112, 0.0
    %v8340 = vmax.f32 %v7970, 0.0
    %v8341 = vmax.f32 %v8113, 0.0
    %v8342 = vmax.f32 %v8114, 0.0
    %v8343 = vmax.f32 %v8115, 0.0
    %v8344 = vmax.f32 %v7973, 0.0
    %v8345 = vmax.f32 %v8116, 0.0
    %v8346 = vmax.f32 %v8117, 0.0
    %v8347 = vmax.f32 %v8118, 0.0
    %v8348 = vmax.f32 %v7976, 0.0
    %v8349 = vmax.f32 %v8119, 0.0
    %v8350 = vmax.f32 %v8120, 0.0
    %v8351 = vmax.f32 %v8121, 0.0
    %v8352 = vmax.f32 %v7979, 0.0
    %v8353 = vmax.f32 %v8122, 0.0
    %v8354 = vmax.f32 %v8123, 0.0
    %v8355 = vmax.f32 %v8124, 0.0
    %v8356 = vmax.f32 %v7982, 0.0
    %v8357 = vmax.f32 %v8125, 0.0
    %v8358 = vmax.f32 %v8126, 0.0
    %v8359 = vmax.f32 %v8127, 0.0
    %v8360 = vmax.f32 %v7985, 0.0
    %v8361 = vmax.f32 %v8128, 0.0
    %v8362 = vmax.f32 %v8129, 0.0
    %v8363 = vmax.f32 %v8130, 0.0
    %v8364 = vmax.f32 %v7988, 0.0
    %v8365 = vmax.f32 %v8131, 0.0
    %v8366 = vmax.f32 %v8132, 0.0
    %v8367 = vmax.f32 %v8133, 0.0
    %v8368 = vmax.f32 %v7991, 0.0
    %v8369 = vmax.f32 %v8134, 0.0
    %v8370 = vmax.f32 %v8135, 0.0
    %v8371 = vmax.f32 %v8136, 0.0
    %v8372 = vmax.f32 %v7994, 0.0
    %v8373 = vmax.f32 %v8137, 0.0
    %v8374 = vmax.f32 %v8138, 0.0
    %v8375 = vmax.f32 %v8139, 0.0
    %v8376 = vmax.f32 %v7997, 0.0
    %v8377 = vmax.f32 %v8140, 0.0
    %v8378 = vmax.f32 %v8141, 0.0
    %v8379 = vmax.f32 %v8142, 0.0
    %v8380 = vmax.f32 %v8000, 0.0
    %v8381 = vmax.f32 %v8143, 0.0
    %v8382 = vmax.f32 %v8144, 0.0
    %v8383 = vmax.f32 %v8145, 0.0
    %v8384 = vmax.f32 %v8003, 0.0
    %v8385 = vmax.f32 %v8146, 0.0
    %v8386 = vmax.f32 %v8147, 0.0
    %v8387 = vmax.f32 %v8148, 0.0
    %v8388 = vmax.f32 %v8006, 0.0
    %v8389 = vmax.f32 %v8149, 0.0
    %v8390 = vmax.f32 %v8150, 0.0
    %v8391 = vmax.f32 %v8151, 0.0
    %v8392 = vmax.f32 %v8009, 0.0
    %v8393 = vmax.f32 %v8152, 0.0
    %v8394 = vmax.f32 %v8153, 0.0
    %v8395 = vmax.f32 %v8154, 0.0
    %v8396 = vmax.f32 %v8012, 0.0
    %v8397 = vmax.f32 %v8155, 0.0
    %v8398 = vmax.f32 %v8156, 0.0
    %v8399 = vmax.f32 %v8157, 0.0
    %v8400 = vmax.f32 %v8015, 0.0
    %v8401 = vmax.f32 %v8158, 0.0
    %v8402 = vmax.f32 %v8159, 0.0
    %v8403 = vmax.f32 %v8160, 0.0
    %v8404 = vmax.f32 %v8018, 0.0
    %v8405 = vmax.f32 %v8161, 0.0
    %v8406 = vmax.f32 %v8162, 0.0
    %v8407 = vmax.f32 %v8163, 0.0
    %v8408 = vmax.f32 %v8021, 0.0
    %v8409 = vmax.f32 %v8164, 0.0
    %v8410 = vmax.f32 %v8165, 0.0
    %v8411 = vmax.f32 %v8166, 0.0
    %v8412 = vmax.f32 %v8024, 0.0
    %v8413 = vmax.f32 %v8167, 0.0
    %v8414 = vmax.f32 %v8168, 0.0
    %v8415 = vmax.f32 %v8169, 0.0
    %v8416 = vmax.f32 %v8027, 0.0
    %v8417 = vmax.f32 %v8170, 0.0
    %v8418 = vmax.f32 %v8171, 0.0
    %v8419 = vmax.f32 %v8172, 0.0
    %v8420 = vmax.f32 %v8030, 0.0
    %v8421 = vmax.f32 %v8173, 0.0
    %v8422 = vmax.f32 %v8174, 0.0
    %v8423 = vmax.f32 %v8175, 0.0
    %v8424 = vmax.f32 %v8033, 0.0
    %v8425 = vmax.f32 %v8176, 0.0
    %v8426 = vmax.f32 %v8177, 0.0
    %v8427 = vmax.f32 %v8178, 0.0
    %v8428 = vmax.f32 %v8036, 0.0
    %v8429 = vmax.f32 %v8179, 0.0
    %v8430 = vmax.f32 %v8180, 0.0
    %v8431 = vmax.f32 %v8181, 0.0
    %v8432 = vmax.f32 %v8039, 0.0
    %v8433 = vmax.f32 %v8182, 0.0
    %v8434 = vmax.f32 %v8183, 0.0
    %v8435 = vmax.f32 %v8184, 0.0
    %v8436 = vmax.f32 %v8042, 0.0
    %v8437 = vmax.f32 %v8185, 0.0
    %v8438 = vmax.f32 %v8186, 0.0
    %v8439 = vmax.f32 %v8187, 0.0
    %vm8440 = vcmask 123904
    %v8441 = vsel %vm8440, %v8296, -inf
    %v8442 = vsel %vm8440, %v8305, -inf
    %v8443 = vmax.f32 %v8441, %v8442
    %v8444 = vsel %vm8440, %v8297, -inf
    %v8445 = vsel %vm8440, %v8306, -inf
    %v8446 = vmax.f32 %v8444, %v8445
    %v8447 = vsel %vm8440, %v8298, -inf
    %v8448 = vsel %vm8440, %v8307, -inf
    %v8449 = vmax.f32 %v8447, %v8448
    %v8450 = vsel %vm8440, %v8299, -inf
    %v8451 = vsel %vm8440, %v8308, -inf
    %v8452 = vmax.f32 %v8450, %v8451
    %v8453 = vsel %vm8440, %v8300, -inf
    %v8454 = vsel %vm8440, %v8309, -inf
    %v8455 = vmax.f32 %v8453, %v8454
    %v8456 = vsel %vm8440, %v8301, -inf
    %v8457 = vsel %vm8440, %v8310, -inf
    %v8458 = vmax.f32 %v8456, %v8457
    %v8459 = vsel %vm8440, %v8302, -inf
    %v8460 = vsel %vm8440, %v8311, -inf
    %v8461 = vmax.f32 %v8459, %v8460
    %v8462 = vsel %vm8440, %v8303, -inf
    %v8463 = vsel %vm8440, %v8312, -inf
    %v8464 = vmax.f32 %v8462, %v8463
    %v8465 = vsel %vm8440, %v8304, -inf
    %v8466 = vsel %vm8440, %v8313, -inf
    %v8467 = vmax.f32 %v8465, %v8466
    %v8468 = vsel %vm8440, %v8314, -inf
    %v8469 = vsel %vm8440, %v8323, -inf
    %v8470 = vmax.f32 %v8468, %v8469
    %v8471 = vsel %vm8440, %v8315, -inf
    %v8472 = vsel %vm8440, %v8324, -inf
    %v8473 = vmax.f32 %v8471, %v8472
    %v8474 = vsel %vm8440, %v8316, -inf
    %v8475 = vsel %vm8440, %v8325, -inf
    %v8476 = vmax.f32 %v8474, %v8475
    %v8477 = vsel %vm8440, %v8317, -inf
    %v8478 = vsel %vm8440, %v8326, -inf
    %v8479 = vmax.f32 %v8477, %v8478
    %v8480 = vsel %vm8440, %v8318, -inf
    %v8481 = vsel %vm8440, %v8327, -inf
    %v8482 = vmax.f32 %v8480, %v8481
    %v8483 = vsel %vm8440, %v8319, -inf
    %v8484 = vsel %vm8440, %v8328, -inf
    %v8485 = vmax.f32 %v8483, %v8484
    %v8486 = vsel %vm8440, %v8320, -inf
    %v8487 = vsel %vm8440, %v8329, -inf
    %v8488 = vmax.f32 %v8486, %v8487
    %v8489 = vsel %vm8440, %v8321, -inf
    %v8490 = vsel %vm8440, %v8330, -inf
    %v8491 = vmax.f32 %v8489, %v8490
    %v8492 = vsel %vm8440, %v8322, -inf
    %v8493 = vsel %vm8440, %v8331, -inf
    %v8494 = vmax.f32 %v8492, %v8493
    %v8495 = vsel %vm8440, %v8332, -inf
    %v8496 = vsel %vm8440, %v8341, -inf
    %v8497 = vmax.f32 %v8495, %v8496
    %v8498 = vsel %vm8440, %v8333, -inf
    %v8499 = vsel %vm8440, %v8342, -inf
    %v8500 = vmax.f32 %v8498, %v8499
    %v8501 = vsel %vm8440, %v8334, -inf
    %v8502 = vsel %vm8440, %v8343, -inf
    %v8503 = vmax.f32 %v8501, %v8502
    %v8504 = vsel %vm8440, %v8335, -inf
    %v8505 = vsel %vm8440, %v8344, -inf
    %v8506 = vmax.f32 %v8504, %v8505
    %v8507 = vsel %vm8440, %v8336, -inf
    %v8508 = vsel %vm8440, %v8345, -inf
    %v8509 = vmax.f32 %v8507, %v8508
    %v8510 = vsel %vm8440, %v8337, -inf
    %v8511 = vsel %vm8440, %v8346, -inf
    %v8512 = vmax.f32 %v8510, %v8511
    %v8513 = vsel %vm8440, %v8338, -inf
    %v8514 = vsel %vm8440, %v8347, -inf
    %v8515 = vmax.f32 %v8513, %v8514
    %v8516 = vsel %vm8440, %v8339, -inf
    %v8517 = vsel %vm8440, %v8348, -inf
    %v8518 = vmax.f32 %v8516, %v8517
    %v8519 = vsel %vm8440, %v8340, -inf
    %v8520 = vsel %vm8440, %v8349, -inf
    %v8521 = vmax.f32 %v8519, %v8520
    %v8522 = vsel %vm8440, %v8350, -inf
    %v8523 = vsel %vm8440, %v8359, -inf
    %v8524 = vmax.f32 %v8522, %v8523
    %v8525 = vsel %vm8440, %v8351, -inf
    %v8526 = vsel %vm8440, %v8360, -inf
    %v8527 = vmax.f32 %v8525, %v8526
    %v8528 = vsel %vm8440, %v8352, -inf
    %v8529 = vsel %vm8440, %v8361, -inf
    %v8530 = vmax.f32 %v8528, %v8529
    %v8531 = vsel %vm8440, %v8353, -inf
    %v8532 = vsel %vm8440, %v8362, -inf
    %v8533 = vmax.f32 %v8531, %v8532
    %v8534 = vsel %vm8440, %v8354, -inf
    %v8535 = vsel %vm8440, %v8363, -inf
    %v8536 = vmax.f32 %v8534, %v8535
    %v8537 = vsel %vm8440, %v8355, -inf
    %v8538 = vsel %vm8440, %v8364, -inf
    %v8539 = vmax.f32 %v8537, %v8538
    %v8540 = vsel %vm8440, %v8356, -inf
    %v8541 = vsel %vm8440, %v8365, -inf
    %v8542 = vmax.f32 %v8540, %v8541
    %v8543 = vsel %vm8440, %v8357, -inf
    %v8544 = vsel %vm8440, %v8366, -inf
    %v8545 = vmax.f32 %v8543, %v8544
    %v8546 = vsel %vm8440, %v8358, -inf
    %v8547 = vsel %vm8440, %v8367, -inf
    %v8548 = vmax.f32 %v8546, %v8547
    %v8549 = vsel %vm8440, %v8368, -inf
    %v8550 = vsel %vm8440, %v8377, -inf
    %v8551 = vmax.f32 %v8549, %v8550
    %v8552 = vsel %vm8440, %v8369, -inf
    %v8553 = vsel %vm8440, %v8378, -inf
    %v8554 = vmax.f32 %v8552, %v8553
    %v8555 = vsel %vm8440, %v8370, -inf
    %v8556 = vsel %vm8440, %v8379, -inf
    %v8557 = vmax.f32 %v8555, %v8556
    %v8558 = vsel %vm8440, %v8371, -inf
    %v8559 = vsel %vm8440, %v8380, -inf
    %v8560 = vmax.f32 %v8558, %v8559
    %v8561 = vsel %vm8440, %v8372, -inf
    %v8562 = vsel %vm8440, %v8381, -inf
    %v8563 = vmax.f32 %v8561, %v8562
    %v8564 = vsel %vm8440, %v8373, -inf
    %v8565 = vsel %vm8440, %v8382, -inf
    %v8566 = vmax.f32 %v8564, %v8565
    %v8567 = vsel %vm8440, %v8374, -inf
    %v8568 = vsel %vm8440, %v8383, -inf
    %v8569 = vmax.f32 %v8567, %v8568
    %v8570 = vsel %vm8440, %v8375, -inf
    %v8571 = vsel %vm8440, %v8384, -inf
    %v8572 = vmax.f32 %v8570, %v8571
    %v8573 = vsel %vm8440, %v8376, -inf
    %v8574 = vsel %vm8440, %v8385, -inf
    %v8575 = vmax.f32 %v8573, %v8574
    %v8576 = vsel %vm8440, %v8386, -inf
    %v8577 = vsel %vm8440, %v8395, -inf
    %v8578 = vmax.f32 %v8576, %v8577
    %v8579 = vsel %vm8440, %v8387, -inf
    %v8580 = vsel %vm8440, %v8396, -inf
    %v8581 = vmax.f32 %v8579, %v8580
    %v8582 = vsel %vm8440, %v8388, -inf
    %v8583 = vsel %vm8440, %v8397, -inf
    %v8584 = vmax.f32 %v8582, %v8583
    %v8585 = vsel %vm8440, %v8389, -inf
    %v8586 = vsel %vm8440, %v8398, -inf
    %v8587 = vmax.f32 %v8585, %v8586
    %v8588 = vsel %vm8440, %v8390, -inf
    %v8589 = vsel %vm8440, %v8399, -inf
    %v8590 = vmax.f32 %v8588, %v8589
    %v8591 = vsel %vm8440, %v8391, -inf
    %v8592 = vsel %vm8440, %v8400, -inf
    %v8593 = vmax.f32 %v8591, %v8592
    %v8594 = vsel %vm8440, %v8392, -inf
    %v8595 = vsel %vm8440, %v8401, -inf
    %v8596 = vmax.f32 %v8594, %v8595
    %v8597 = vsel %vm8440, %v8393, -inf
    %v8598 = vsel %vm8440, %v8402, -inf
    %v8599 = vmax.f32 %v8597, %v8598
    %v8600 = vsel %vm8440, %v8394, -inf
    %v8601 = vsel %vm8440, %v8403, -inf
    %v8602 = vmax.f32 %v8600, %v8601
    %v8603 = vsel %vm8440, %v8404, -inf
    %v8604 = vsel %vm8440, %v8413, -inf
    %v8605 = vmax.f32 %v8603, %v8604
    %v8606 = vsel %vm8440, %v8405, -inf
    %v8607 = vsel %vm8440, %v8414, -inf
    %v8608 = vmax.f32 %v8606, %v8607
    %v8609 = vsel %vm8440, %v8406, -inf
    %v8610 = vsel %vm8440, %v8415, -inf
    %v8611 = vmax.f32 %v8609, %v8610
    %v8612 = vsel %vm8440, %v8407, -inf
    %v8613 = vsel %vm8440, %v8416, -inf
    %v8614 = vmax.f32 %v8612, %v8613
    %v8615 = vsel %vm8440, %v8408, -inf
    %v8616 = vsel %vm8440, %v8417, -inf
    %v8617 = vmax.f32 %v8615, %v8616
    %v8618 = vsel %vm8440, %v8409, -inf
    %v8619 = vsel %vm8440, %v8418, -inf
    %v8620 = vmax.f32 %v8618, %v8619
    %v8621 = vsel %vm8440, %v8410, -inf
    %v8622 = vsel %vm8440, %v8419, -inf
    %v8623 = vmax.f32 %v8621, %v8622
    %v8624 = vsel %vm8440, %v8411, -inf
    %v8625 = vsel %vm8440, %v8420, -inf
    %v8626 = vmax.f32 %v8624, %v8625
    %v8627 = vsel %vm8440, %v8412, -inf
    %v8628 = vsel %vm8440, %v8421, -inf
    %v8629 = vmax.f32 %v8627, %v8628
    %v8630 = vsel %vm8440, %v8422, -inf
    %v8631 = vsel %vm8440, %v8431, -inf
    %v8632 = vmax.f32 %v8630, %v8631
    %v8633 = vsel %vm8440, %v8423, -inf
    %v8634 = vsel %vm8440, %v8432, -inf
    %v8635 = vmax.f32 %v8633, %v8634
    %v8636 = vsel %vm8440, %v8424, -inf
    %v8637 = vsel %vm8440, %v8433, -inf
    %v8638 = vmax.f32 %v8636, %v8637
    %v8639 = vsel %vm8440, %v8425, -inf
    %v8640 = vsel %vm8440, %v8434, -inf
    %v8641 = vmax.f32 %v8639, %v8640
    %v8642 = vsel %vm8440, %v8426, -inf
    %v8643 = vsel %vm8440, %v8435, -inf
    %v8644 = vmax.f32 %v8642, %v8643
    %v8645 = vsel %vm8440, %v8427, -inf
    %v8646 = vsel %vm8440, %v8436, -inf
    %v8647 = vmax.f32 %v8645, %v8646
    %v8648 = vsel %vm8440, %v8428, -inf
    %v8649 = vsel %vm8440, %v8437, -inf
    %v8650 = vmax.f32 %v8648, %v8649
    %v8651 = vsel %vm8440, %v8429, -inf
    %v8652 = vsel %vm8440, %v8438, -inf
    %v8653 = vmax.f32 %v8651, %v8652
    %v8654 = vsel %vm8440, %v8430, -inf
    %v8655 = vsel %vm8440, %v8439, -inf
    %v8656 = vmax.f32 %v8654, %v8655
    %v8665 = vrot.slane %v8443, 7
    %v8666 = vrot.slane %v8665, 2
    %v8667 = vrot.slane %v8470, 7
    %v8668 = vrot.slane %v8667, 2
    %v8669 = vrot.slane %v8497, 7
    %v8670 = vrot.slane %v8669, 2
    %v8671 = vrot.slane %v8524, 7
    %v8672 = vrot.slane %v8671, 2
    %v8673 = vrot.slane %v8551, 7
    %v8674 = vrot.slane %v8673, 2
    %v8675 = vrot.slane %v8578, 7
    %v8676 = vrot.slane %v8675, 2
    %v8677 = vrot.slane %v8605, 7
    %v8678 = vrot.slane %v8677, 2
    %v8679 = vrot.slane %v8632, 7
    %v8680 = vrot.slane %v8679, 2
    %v8689 = vmax.f32 %v8443, %v8666
    %v8690 = vmax.f32 %v8470, %v8668
    %v8691 = vmax.f32 %v8497, %v8670
    %v8692 = vmax.f32 %v8524, %v8672
    %v8693 = vmax.f32 %v8551, %v8674
    %v8694 = vmax.f32 %v8578, %v8676
    %v8695 = vmax.f32 %v8605, %v8678
    %v8696 = vmax.f32 %v8632, %v8680
    %v8705 = vrot.slane %v8446, 7
    %v8706 = vrot.slane %v8705, 2
    %v8707 = vrot.slane %v8473, 7
    %v8708 = vrot.slane %v8707, 2
    %v8709 = vrot.slane %v8500, 7
    %v8710 = vrot.slane %v8709, 2
    %v8711 = vrot.slane %v8527, 7
    %v8712 = vrot.slane %v8711, 2
    %v8713 = vrot.slane %v8554, 7
    %v8714 = vrot.slane %v8713, 2
    %v8715 = vrot.slane %v8581, 7
    %v8716 = vrot.slane %v8715, 2
    %v8717 = vrot.slane %v8608, 7
    %v8718 = vrot.slane %v8717, 2
    %v8719 = vrot.slane %v8635, 7
    %v8720 = vrot.slane %v8719, 2
    %v8729 = vmax.f32 %v8446, %v8706
    %v8730 = vmax.f32 %v8473, %v8708
    %v8731 = vmax.f32 %v8500, %v8710
    %v8732 = vmax.f32 %v8527, %v8712
    %v8733 = vmax.f32 %v8554, %v8714
    %v8734 = vmax.f32 %v8581, %v8716
    %v8735 = vmax.f32 %v8608, %v8718
    %v8736 = vmax.f32 %v8635, %v8720
    %v8745 = vrot.slane %v8449, 7
    %v8746 = vrot.slane %v8745, 2
    %v8747 = vrot.slane %v8476, 7
    %v8748 = vrot.slane %v8747, 2
    %v8749 = vrot.slane %v8503, 7
    %v8750 = vrot.slane %v8749, 2
    %v8751 = vrot.slane %v8530, 7
    %v8752 = vrot.slane %v8751, 2
    %v8753 = vrot.slane %v8557, 7
    %v8754 = vrot.slane %v8753, 2
    %v8755 = vrot.slane %v8584, 7
    %v8756 = vrot.slane %v8755, 2
    %v8757 = vrot.slane %v8611, 7
    %v8758 = vrot.slane %v8757, 2
    %v8759 = vrot.slane %v8638, 7
    %v8760 = vrot.slane %v8759, 2
    %v8769 = vmax.f32 %v8449, %v8746
    %v8770 = vmax.f32 %v8476, %v8748
    %v8771 = vmax.f32 %v8503, %v8750
    %v8772 = vmax.f32 %v8530, %v8752
    %v8773 = vmax.f32 %v8557, %v8754
    %v8774 = vmax.f32 %v8584, %v8756
    %v8775 = vmax.f32 %v8611, %v8758
    %v8776 = vmax.f32 %v8638, %v8760
    %v8785 = vrot.slane %v8452, 7
    %v8786 = vrot.slane %v8785, 2
    %v8787 = vrot.slane %v8479, 7
    %v8788 = vrot.slane %v8787, 2
    %v8789 = vrot.slane %v8506, 7
    %v8790 = vrot.slane %v8789, 2
    %v8791 = vrot.slane %v8533, 7
    %v8792 = vrot.slane %v8791, 2
    %v8793 = vrot.slane %v8560, 7
    %v8794 = vrot.slane %v8793, 2
    %v8795 = vrot.slane %v8587, 7
    %v8796 = vrot.slane %v8795, 2
    %v8797 = vrot.slane %v8614, 7
    %v8798 = vrot.slane %v8797, 2
    %v8799 = vrot.slane %v8641, 7
    %v8800 = vrot.slane %v8799, 2
    %v8809 = vmax.f32 %v8452, %v8786
    %v8810 = vmax.f32 %v8479, %v8788
    %v8811 = vmax.f32 %v8506, %v8790
    %v8812 = vmax.f32 %v8533, %v8792
    %v8813 = vmax.f32 %v8560, %v8794
    %v8814 = vmax.f32 %v8587, %v8796
    %v8815 = vmax.f32 %v8614, %v8798
    %v8816 = vmax.f32 %v8641, %v8800
    %v8825 = vrot.slane %v8455, 7
    %v8826 = vrot.slane %v8825, 2
    %v8827 = vrot.slane %v8482, 7
    %v8828 = vrot.slane %v8827, 2
    %v8829 = vrot.slane %v8509, 7
    %v8830 = vrot.slane %v8829, 2
    %v8831 = vrot.slane %v8536, 7
    %v8832 = vrot.slane %v8831, 2
    %v8833 = vrot.slane %v8563, 7
    %v8834 = vrot.slane %v8833, 2
    %v8835 = vrot.slane %v8590, 7
    %v8836 = vrot.slane %v8835, 2
    %v8837 = vrot.slane %v8617, 7
    %v8838 = vrot.slane %v8837, 2
    %v8839 = vrot.slane %v8644, 7
    %v8840 = vrot.slane %v8839, 2
    %v8849 = vmax.f32 %v8455, %v8826
    %v8850 = vmax.f32 %v8482, %v8828
    %v8851 = vmax.f32 %v8509, %v8830
    %v8852 = vmax.f32 %v8536, %v8832
    %v8853 = vmax.f32 %v8563, %v8834
    %v8854 = vmax.f32 %v8590, %v8836
    %v8855 = vmax.f32 %v8617, %v8838
    %v8856 = vmax.f32 %v8644, %v8840
    %v8865 = vrot.slane %v8458, 7
    %v8866 = vrot.slane %v8865, 2
    %v8867 = vrot.slane %v8485, 7
    %v8868 = vrot.slane %v8867, 2
    %v8869 = vrot.slane %v8512, 7
    %v8870 = vrot.slane %v8869, 2
    %v8871 = vrot.slane %v8539, 7
    %v8872 = vrot.slane %v8871, 2
    %v8873 = vrot.slane %v8566, 7
    %v8874 = vrot.slane %v8873, 2
    %v8875 = vrot.slane %v8593, 7
    %v8876 = vrot.slane %v8875, 2
    %v8877 = vrot.slane %v8620, 7
    %v8878 = vrot.slane %v8877, 2
    %v8879 = vrot.slane %v8647, 7
    %v8880 = vrot.slane %v8879, 2
    %v8889 = vmax.f32 %v8458, %v8866
    %v8890 = vmax.f32 %v8485, %v8868
    %v8891 = vmax.f32 %v8512, %v8870
    %v8892 = vmax.f32 %v8539, %v8872
    %v8893 = vmax.f32 %v8566, %v8874
    %v8894 = vmax.f32 %v8593, %v8876
    %v8895 = vmax.f32 %v8620, %v8878
    %v8896 = vmax.f32 %v8647, %v8880
    %v8905 = vrot.slane %v8461, 7
    %v8906 = vrot.slane %v8905, 2
    %v8907 = vrot.slane %v8488, 7
    %v8908 = vrot.slane %v8907, 2
    %v8909 = vrot.slane %v8515, 7
    %v8910 = vrot.slane %v8909, 2
    %v8911 = vrot.slane %v8542, 7
    %v8912 = vrot.slane %v8911, 2
    %v8913 = vrot.slane %v8569, 7
    %v8914 = vrot.slane %v8913, 2
    %v8915 = vrot.slane %v8596, 7
    %v8916 = vrot.slane %v8915, 2
    %v8917 = vrot.slane %v8623, 7
    %v8918 = vrot.slane %v8917, 2
    %v8919 = vrot.slane %v8650, 7
    %v8920 = vrot.slane %v8919, 2
    %v8929 = vmax.f32 %v8461, %v8906
    %v8930 = vmax.f32 %v8488, %v8908
    %v8931 = vmax.f32 %v8515, %v8910
    %v8932 = vmax.f32 %v8542, %v8912
    %v8933 = vmax.f32 %v8569, %v8914
    %v8934 = vmax.f32 %v8596, %v8916
    %v8935 = vmax.f32 %v8623, %v8918
    %v8936 = vmax.f32 %v8650, %v8920
    %v8945 = vrot.slane %v8464, 7
    %v8946 = vrot.slane %v8945, 2
    %v8947 = vrot.slane %v8491, 7
    %v8948 = vrot.slane %v8947, 2
    %v8949 = vrot.slane %v8518, 7
    %v8950 = vrot.slane %v8949, 2
    %v8951 = vrot.slane %v8545, 7
    %v8952 = vrot.slane %v8951, 2
    %v8953 = vrot.slane %v8572, 7
    %v8954 = vrot.slane %v8953, 2
    %v8955 = vrot.slane %v8599, 7
    %v8956 = vrot.slane %v8955, 2
    %v8957 = vrot.slane %v8626, 7
    %v8958 = vrot.slane %v8957, 2
    %v8959 = vrot.slane %v8653, 7
    %v8960 = vrot.slane %v8959, 2
    %v8969 = vmax.f32 %v8464, %v8946
    %v8970 = vmax.f32 %v8491, %v8948
    %v8971 = vmax.f32 %v8518, %v8950
    %v8972 = vmax.f32 %v8545, %v8952
    %v8973 = vmax.f32 %v8572, %v8954
    %v8974 = vmax.f32 %v8599, %v8956
    %v8975 = vmax.f32 %v8626, %v8958
    %v8976 = vmax.f32 %v8653, %v8960
    %v8985 = vrot.slane %v8467, 7
    %v8986 = vrot.slane %v8985, 2
    %v8987 = vrot.slane %v8494, 7
    %v8988 = vrot.slane %v8987, 2
    %v8989 = vrot.slane %v8521, 7
    %v8990 = vrot.slane %v8989, 2
    %v8991 = vrot.slane %v8548, 7
    %v8992 = vrot.slane %v8991, 2
    %v8993 = vrot.slane %v8575, 7
    %v8994 = vrot.slane %v8993, 2
    %v8995 = vrot.slane %v8602, 7
    %v8996 = vrot.slane %v8995, 2
    %v8997 = vrot.slane %v8629, 7
    %v8998 = vrot.slane %v8997, 2
    %v8999 = vrot.slane %v8656, 7
    %v9000 = vrot.slane %v8999, 2
    %v9009 = vmax.f32 %v8467, %v8986
    %v9010 = vmax.f32 %v8494, %v8988
    %v9011 = vmax.f32 %v8521, %v8990
    %v9012 = vmax.f32 %v8548, %v8992
    %v9013 = vmax.f32 %v8575, %v8994
    %v9014 = vmax.f32 %v8602, %v8996
    %v9015 = vmax.f32 %v8629, %v8998
    %v9016 = vmax.f32 %v8656, %v9000
    %v9025 = vperm.slane %v8689, 0
    %v9026 = vperm.slane %v8690, 0
    %v9027 = vperm.slane %v8691, 0
    %v9028 = vperm.slane %v8692, 0
    %v9029 = vperm.slane %v8693, 0
    %v9030 = vperm.slane %v8694, 0
    %v9031 = vperm.slane %v8695, 0
    %v9032 = vperm.slane %v8696, 0
    %vm9033 = vcmask 1041409
    %v9034 = vsel %vm9033, %v9026, %v9025
    %vm9035 = vcmask 1042434
    %v9036 = vsel %vm9035, %v9027, %v9034
    %vm9037 = vcmask 1043459
    %v9038 = vsel %vm9037, %v9028, %v9036
    %v9039 = vsel %vm9033, %v9030, %v9029
    %v9040 = vsel %vm9035, %v9031, %v9039
    %v9041 = vsel %vm9037, %v9032, %v9040
    %v9052 = vperm.slane %v8729, 0
    %v9053 = vperm.slane %v8730, 0
    %v9054 = vperm.slane %v8731, 0
    %v9055 = vperm.slane %v8732, 0
    %v9056 = vperm.slane %v8733, 0
    %v9057 = vperm.slane %v8734, 0
    %v9058 = vperm.slane %v8735, 0
    %v9059 = vperm.slane %v8736, 0
    %v9060 = vsel %vm9033, %v9053, %v9052
    %v9061 = vsel %vm9035, %v9054, %v9060
    %v9062 = vsel %vm9037, %v9055, %v9061
    %v9063 = vsel %vm9033, %v9057, %v9056
    %v9064 = vsel %vm9035, %v9058, %v9063
    %v9065 = vsel %vm9037, %v9059, %v9064
    %9066 = vrot.lane.b32.xlu0 %v9062, 16
    %v9067 = vpop.permute.xlu0 %9066
    %9068 = vrot.lane.b32.xlu0 %v9065, 16
    %v9069 = vpop.permute.xlu0 %9068
    %v9080 = vperm.slane %v8769, 0
    %v9081 = vperm.slane %v8770, 0
    %v9082 = vperm.slane %v8771, 0
    %v9083 = vperm.slane %v8772, 0
    %v9084 = vperm.slane %v8773, 0
    %v9085 = vperm.slane %v8774, 0
    %v9086 = vperm.slane %v8775, 0
    %v9087 = vperm.slane %v8776, 0
    %v9088 = vsel %vm9033, %v9081, %v9080
    %v9089 = vsel %vm9035, %v9082, %v9088
    %v9090 = vsel %vm9037, %v9083, %v9089
    %v9091 = vsel %vm9033, %v9085, %v9084
    %v9092 = vsel %vm9035, %v9086, %v9091
    %v9093 = vsel %vm9037, %v9087, %v9092
    %9094 = vrot.lane.b32.xlu0 %v9090, 32
    %v9095 = vpop.permute.xlu0 %9094
    %9096 = vrot.lane.b32.xlu0 %v9093, 32
    %v9097 = vpop.permute.xlu0 %9096
    %v9108 = vperm.slane %v8809, 0
    %v9109 = vperm.slane %v8810, 0
    %v9110 = vperm.slane %v8811, 0
    %v9111 = vperm.slane %v8812, 0
    %v9112 = vperm.slane %v8813, 0
    %v9113 = vperm.slane %v8814, 0
    %v9114 = vperm.slane %v8815, 0
    %v9115 = vperm.slane %v8816, 0
    %v9116 = vsel %vm9033, %v9109, %v9108
    %v9117 = vsel %vm9035, %v9110, %v9116
    %v9118 = vsel %vm9037, %v9111, %v9117
    %v9119 = vsel %vm9033, %v9113, %v9112
    %v9120 = vsel %vm9035, %v9114, %v9119
    %v9121 = vsel %vm9037, %v9115, %v9120
    %9122 = vrot.lane.b32.xlu0 %v9118, 48
    %v9123 = vpop.permute.xlu0 %9122
    %9124 = vrot.lane.b32.xlu0 %v9121, 48
    %v9125 = vpop.permute.xlu0 %9124
    %v9136 = vperm.slane %v8849, 0
    %v9137 = vperm.slane %v8850, 0
    %v9138 = vperm.slane %v8851, 0
    %v9139 = vperm.slane %v8852, 0
    %v9140 = vperm.slane %v8853, 0
    %v9141 = vperm.slane %v8854, 0
    %v9142 = vperm.slane %v8855, 0
    %v9143 = vperm.slane %v8856, 0
    %v9144 = vsel %vm9033, %v9137, %v9136
    %v9145 = vsel %vm9035, %v9138, %v9144
    %v9146 = vsel %vm9037, %v9139, %v9145
    %v9147 = vsel %vm9033, %v9141, %v9140
    %v9148 = vsel %vm9035, %v9142, %v9147
    %v9149 = vsel %vm9037, %v9143, %v9148
    %9150 = vrot.lane.b32.xlu0 %v9146, 64
    %v9151 = vpop.permute.xlu0 %9150
    %9152 = vrot.lane.b32.xlu0 %v9149, 64
    %v9153 = vpop.permute.xlu0 %9152
    %v9164 = vperm.slane %v8889, 0
    %v9165 = vperm.slane %v8890, 0
    %v9166 = vperm.slane %v8891, 0
    %v9167 = vperm.slane %v8892, 0
    %v9168 = vperm.slane %v8893, 0
    %v9169 = vperm.slane %v8894, 0
    %v9170 = vperm.slane %v8895, 0
    %v9171 = vperm.slane %v8896, 0
    %v9172 = vsel %vm9033, %v9165, %v9164
    %v9173 = vsel %vm9035, %v9166, %v9172
    %v9174 = vsel %vm9037, %v9167, %v9173
    %v9175 = vsel %vm9033, %v9169, %v9168
    %v9176 = vsel %vm9035, %v9170, %v9175
    %v9177 = vsel %vm9037, %v9171, %v9176
    %9178 = vrot.lane.b32.xlu0 %v9174, 80
    %v9179 = vpop.permute.xlu0 %9178
    %9180 = vrot.lane.b32.xlu0 %v9177, 80
    %v9181 = vpop.permute.xlu0 %9180
    %v9192 = vperm.slane %v8929, 0
    %v9193 = vperm.slane %v8930, 0
    %v9194 = vperm.slane %v8931, 0
    %v9195 = vperm.slane %v8932, 0
    %v9196 = vperm.slane %v8933, 0
    %v9197 = vperm.slane %v8934, 0
    %v9198 = vperm.slane %v8935, 0
    %v9199 = vperm.slane %v8936, 0
    %v9200 = vsel %vm9033, %v9193, %v9192
    %v9201 = vsel %vm9035, %v9194, %v9200
    %v9202 = vsel %vm9037, %v9195, %v9201
    %v9203 = vsel %vm9033, %v9197, %v9196
    %v9204 = vsel %vm9035, %v9198, %v9203
    %v9205 = vsel %vm9037, %v9199, %v9204
    %9206 = vrot.lane.b32.xlu0 %v9202, 96
    %v9207 = vpop.permute.xlu0 %9206
    %9208 = vrot.lane.b32.xlu0 %v9205, 96
    %v9209 = vpop.permute.xlu0 %9208
    %v9220 = vperm.slane %v8969, 0
    %v9221 = vperm.slane %v8970, 0
    %v9222 = vperm.slane %v8971, 0
    %v9223 = vperm.slane %v8972, 0
    %v9224 = vperm.slane %v8973, 0
    %v9225 = vperm.slane %v8974, 0
    %v9226 = vperm.slane %v8975, 0
    %v9227 = vperm.slane %v8976, 0
    %v9228 = vsel %vm9033, %v9221, %v9220
    %v9229 = vsel %vm9035, %v9222, %v9228
    %v9230 = vsel %vm9037, %v9223, %v9229
    %v9231 = vsel %vm9033, %v9225, %v9224
    %v9232 = vsel %vm9035, %v9226, %v9231
    %v9233 = vsel %vm9037, %v9227, %v9232
    %9234 = vrot.lane.b32.xlu0 %v9230, 112
    %v9235 = vpop.permute.xlu0 %9234
    %9236 = vrot.lane.b32.xlu0 %v9233, 112
    %v9237 = vpop.permute.xlu0 %9236
    %v9248 = vperm.slane %v9009, 0
    %v9249 = vperm.slane %v9010, 0
    %v9250 = vperm.slane %v9011, 0
    %v9251 = vperm.slane %v9012, 0
    %v9252 = vperm.slane %v9013, 0
    %v9253 = vperm.slane %v9014, 0
    %v9254 = vperm.slane %v9015, 0
    %v9255 = vperm.slane %v9016, 0
    %v9256 = vsel %vm9033, %v9249, %v9248
    %v9257 = vsel %vm9035, %v9250, %v9256
    %v9258 = vsel %vm9037, %v9251, %v9257
    %v9259 = vsel %vm9033, %v9253, %v9252
    %v9260 = vsel %vm9035, %v9254, %v9259
    %v9261 = vsel %vm9037, %v9255, %v9260
    %v9262 = vsel %vm4554, %v9038, %v9067
    %v9263 = vsel %vm4554, %v9041, %v9069
    %v9264 = vsel %vm7207, %v9262, %v9095
    %v9265 = vsel %vm7207, %v9263, %v9097
    %v9266 = vsel %vm7305, %v9264, %v9123
    %v9267 = vsel %vm7305, %v9265, %v9125
    %v9268 = vsel %vm7403, %v9266, %v9151
    %v9269 = vsel %vm7403, %v9267, %v9153
    %vm9270 = vcmask 654336
    %v9271 = vsel %vm9270, %v9268, %v9179
    %v9272 = vsel %vm9270, %v9269, %v9181
    %vm9273 = vcmask 785408
    %v9274 = vsel %vm9273, %v9271, %v9207
    %v9275 = vsel %vm9273, %v9272, %v9209
    %vm9276 = vcmask 916480
    %v9277 = vsel %vm9276, %v9274, %v9235
    %v9278 = vsel %vm9276, %v9275, %v9237
    %v9281 = vrot.slane %v9258, 4
    %v9282 = vrot.slane %v9261, 4
    %vm9283 = vcmask 1043456
    %v9284 = vsel %vm9283, %v9277, %v9281
    %v9285 = vsel %vm9283, %v9278, %v9282
    %vm9288 = vcmask 130052
    %vm9289 = vmor %vm9288, %vm9283
    %9290 = vst.msk [vmem:[#allocation2] sm:$0xff] %vm9289, %v9284
    %9291 = vst.msk [vmem:[#allocation2 + $0x8] sm:$0xff] %vm9289, %v9285
    // Predicated region
    $region22: #{tpu_custom_call.1} parent=1 // pred_check
      _
    $region23: #{tpu_custom_call.1} parent=1 // pred_check_branch
      %9293 = sbr.rel (0) target = $region25
    $region24: #{tpu_custom_call.1} parent=1 // pred_region
      %9295 = vsyncadd [#allocation3], 0
      %s9296 = sshll.u32 [#allocation2], 4
      %s9297 = int_to_ptr.vmem [resolvable:$true] %s9296
      %s9298 = sshll.u32 %s5, 4
      %s9299 = int_to_ptr.hbm [resolvable:$true] %s9298
      %9304 = dma.vmem_to_hbm [thread:$0]  %s9297, 256, %s9299, [#allocation3], 128, 128, 8
    $region25: #{tpu_custom_call.1} parent=1 // pred_fallthru
      _
    // Predicated region
    $region26: #{tpu_custom_call.1} parent=1 // pred_check
      _
    $region27: #{tpu_custom_call.1} parent=1 // pred_check_branch
      %9306 = sbr.rel (0) target = $region29
    $region28: #{tpu_custom_call.1} parent=1 // pred_region
      %9308 = dma.done [#allocation3], 256
    $region29: #{tpu_custom_call.1} parent=1 // pred_fallthru
      _
    %9309 = vsyncpa [#allocation3], 1

</llo_original>
